<compile_context>
chip_gen: v6e
topology: v6e:2x2x1
jax: 0.10.0
libtpu: 0.0.40
codegen_flags: <defaults>
</compile_context>

<pallas_src>
import functools

import jax
import jax.numpy as jnp
import numpy as np
from jax.experimental import pallas as pl
from jax.experimental.pallas import tpu as pltpu


# ----------------------------------------------------------------------------
# In-kernel helpers
# ----------------------------------------------------------------------------
def _mish(y):
    # mish(y) = y * tanh(softplus(y)); exact f32 (no approximate reciprocal).
    # exp clamp: tanh(softplus(y)) == 1.0 in f32 for y >= 20.
    sp = jnp.log(1.0 + jnp.exp(jnp.minimum(y, 20.0)))
    return y * jnp.tanh(sp)


def _epilogue(acc, b_ref, h, w, cout):
    return _mish(acc + b_ref[...]).reshape(h, w, cout)


def _conv3x3_s1(x, pad_ref, w_ref, b_ref, *, out_w=None):
    """3x3 / stride-1 / pad-1 conv + folded-BN bias + Mish as one im2col dot.

    x:       (h, w_valid, ci) f32 value.
    pad_ref: bf16 staging buffer whose borders are already zero.
    out_w:   working output width (>= w_valid, multiple of 8); the extra
             columns are computed from the buffer's (zero) spare columns and
             ignored downstream.
    """
    h, w_valid, ci = x.shape
    ow = w_valid if out_w is None else out_w
    cout = w_ref.shape[-1]
    pad_ref[1:h + 1, 1:w_valid + 1, 0:ci] = x.astype(pad_ref.dtype)
    wins = [pad_ref[kh:kh + h, kw:kw + ow, 0:ci]
            for kh in range(3) for kw in range(3)]
    patch = jnp.concatenate(wins, axis=-1).astype(jnp.bfloat16)
    acc = jnp.dot(patch.reshape(h * ow, 9 * ci), w_ref[...],
                  preferred_element_type=jnp.float32)
    return _epilogue(acc, b_ref, h, ow, cout)


def _conv3x3_s2(x, pad_ref, w_ref, b_ref):
    """3x3 / stride-2 / pad-1 conv + bias + Mish (full-res stem conv).

    Only 3 stride-2 column gathers (one per kw, covering all rows) are issued;
    the per-tap row decimation is a cheap leading-dim reshape.
    """
    h, w, ci = x.shape
    oh, ow = h // 2, w // 2
    cout = w_ref.shape[-1]
    pad_ref[1:h + 1, 1:w + 1, 0:ci] = x.astype(pad_ref.dtype)   # f32 buffer
    cols = [pad_ref[0:h + 2, pl.ds(kw, ow, 2), 0:ci] for kw in range(3)]
    wins = []
    for kh in range(3):
        for kw in range(3):
            win = cols[kw][kh:kh + h].reshape(oh, 2, ow, ci)[:, 0]
            wins.append(win)
    patch = jnp.concatenate(wins, axis=-1).astype(jnp.bfloat16)
    acc = jnp.dot(patch.reshape(oh * ow, 9 * ci), w_ref[...],
                  preferred_element_type=jnp.float32)
    return _epilogue(acc, b_ref, oh, ow, cout)


def _conv1x1(x, w_ref, b_ref):
    """1x1 conv + bias + Mish; x is already the channel-concatenated input."""
    h, w, ci = x.shape
    cout = w_ref.shape[-1]
    acc = jnp.dot(x.reshape(h * w, ci).astype(jnp.bfloat16), w_ref[...],
                  preferred_element_type=jnp.float32)
    return _epilogue(acc, b_ref, h, w, cout)


def _maxpool2x2(y, mp_ref):
    """2x2 / stride-2 max pool of an f32 value (exact)."""
    h, w, c = y.shape
    oh, ow = h // 2, w // 2
    yr = y.reshape(oh, 2, w, c)                       # leading-dim split (free)
    yh = jnp.maximum(yr[:, 0], yr[:, 1])              # (oh, w, c)
    mp_ref[0:oh, 0:w, 0:c] = yh
    return jnp.maximum(mp_ref[0:oh, pl.ds(0, ow, 2), 0:c],
                       mp_ref[0:oh, pl.ds(1, ow, 2), 0:c])


# ----------------------------------------------------------------------------
# The fused tinybone kernel (one grid step == one image)
# ----------------------------------------------------------------------------
def _tinybone_kernel(x_ref,
                     w_m1a, b_m1a, w_m1b, b_m1b,
                     w_c11, b_c11, w_c12, b_c12, w_c13, b_c13, w_c14, b_c14,
                     w_c21, b_c21, w_c22, b_c22, w_c23, b_c23, w_c24, b_c24,
                     o_ref, buf_full, buf_half, buf_quar, mp, *, H, W):
    H2, W2 = H // 2, W // 2
    H4, W4 = H // 4, W // 4
    w4w = ((W4 + 7) // 8) * 8          # tile-aligned working width at H/4

    # Zero each staging buffer once per image: borders provide the conv zero
    # padding, and every conv fully overwrites the interior region it reads.
    buf_full[...] = jnp.zeros(buf_full.shape, buf_full.dtype)
    buf_half[...] = jnp.zeros(buf_half.shape, buf_half.dtype)
    buf_quar[...] = jnp.zeros(buf_quar.shape, buf_quar.dtype)

    # ---- stem ----
    # m1a: wrapper already packed the image to (H, W, 9*Cin) -> single dot.
    patches = x_ref[0]                                          # (H, W, 9*Cin)
    k0 = patches.shape[-1]
    acc = jnp.dot(patches.reshape(H * W, k0).astype(jnp.bfloat16), w_m1a[...],
                  preferred_element_type=jnp.float32)
    y = _epilogue(acc, b_m1a, H, W, w_m1a.shape[-1])            # (H, W, 32)
    y = _conv3x3_s2(y, buf_full, w_m1b, b_m1b)                  # (H2, W2, 64)

    # ---- CSPOSA(64) ----
    x1 = _conv3x3_s1(y,  buf_half, w_c11, b_c11)                # (H2, W2, 64)
    x2 = _conv3x3_s1(x1, buf_half, w_c12, b_c12)                # (H2, W2, 32)
    x3 = _conv3x3_s1(x2, buf_half, w_c13, b_c13)                # (H2, W2, 32)
    x4 = _conv1x1(jnp.concatenate([x3, x2], axis=-1), w_c14, b_c14)
    p = jnp.concatenate([_maxpool2x2(x4, mp), _maxpool2x2(x1, mp)], axis=-1)

    # ---- CSPOSA(128) ---- (working width w4w; only [:, :W4] is valid)
    z1 = _conv3x3_s1(p, buf_quar, w_c21, b_c21, out_w=w4w)
    z2 = _conv3x3_s1(z1[:, 0:W4, :], buf_quar, w_c22, b_c22, out_w=w4w)
    z3 = _conv3x3_s1(z2[:, 0:W4, :], buf_quar, w_c23, b_c23, out_w=w4w)
    z4 = _conv1x1(jnp.concatenate([z3, z2], axis=-1), w_c24, b_c24)

    # final concat([z4, z1]) + 2x2 maxpool, written as two 128-lane slabs
    o_ref[0, :, :, 0:128] = _maxpool2x2(z4[:, 0:W4, :], mp)
    o_ref[0, :, :, 128:256] = _maxpool2x2(z1[:, 0:W4, :], mp)


# ----------------------------------------------------------------------------
# Wrapper
# ----------------------------------------------------------------------------
_LAYERS = (("m1a", 1), ("m1b", 4), ("o1c1", 4), ("o1c2", 4), ("o1c3", 4),
           ("o1c4", 4), ("o2c1", 16), ("o2c2", 16), ("o2c3", 16), ("o2c4", 16))


def tinybone_forward(rad_nchw, params):
    """rad_nchw: (B, Cin, H, W) f32 -> (B, 256, H//8, W//8) f32 (NCHW)."""
    x = jnp.transpose(rad_nchw, (0, 2, 3, 1)).astype(jnp.float32)   # -> NHWC
    B, H, W, cin = x.shape
    assert H % 8 == 0 and W % 16 == 0, "needs H % 8 == 0 and W % 16 == 0"
    oh, ow = H // 8, W // 8
    w4w = ((W // 4 + 7) // 8) * 8

    # Stem space-to-depth in the wrapper: the Cin=4 conv becomes one K=9*Cin
    # MXU dot inside the kernel (no nearly-empty K=4 pushes).
    xp = jnp.pad(x, ((0, 0), (1, 1), (1, 1), (0, 0)))
    x_p = jnp.concatenate([xp[:, kh:kh + H, kw:kw + W, :]
                           for kh in range(3) for kw in range(3)], axis=-1)

    args = [x_p]
    in_specs = [pl.BlockSpec((1, H, W, 9 * cin), lambda b: (b, 0, 0, 0))]
    flops = 0
    transcendentals = 0
    w_bytes = 0
    for name, div in _LAYERS:
        wk = params[name]["wk"]
        bk = params[name]["b"]
        args += [wk, bk]
        in_specs += [pl.BlockSpec(wk.shape, lambda b: (0, 0)),
                     pl.BlockSpec(bk.shape, lambda b: (0, 0))]
        kk, cout = wk.shape
        n_pix = (H * W) // div
        flops += 2 * kk * cout * n_pix
        transcendentals += 2 * cout * n_pix
        w_bytes += wk.size * wk.dtype.itemsize + bk.size * bk.dtype.itemsize

    scratch_defs = [
        ((H + 2, W + 2, max(32, cin)), jnp.float32),     # stem / stride-2 stage
        ((H // 2 + 2, W // 2 + 2, 64), jnp.bfloat16),    # CSPOSA(64) stage
        ((H // 4 + 2, w4w + 2, 128), jnp.bfloat16),      # CSPOSA(128) stage
        ((H // 4, W // 2, 128), jnp.float32),            # maxpool column stage
    ]
    scratch_bytes = sum(int(np.prod(s)) * np.dtype(d).itemsize
                        for s, d in scratch_defs)
    in_bytes = int(x_p.size) * x_p.dtype.itemsize
    out_bytes = B * oh * ow * 256 * 4
    act_bytes = H * W * 64 * 4
    vmem_limit = int(min(64 * 2 ** 20,
                         2 * (in_bytes // B + out_bytes // B + w_bytes)
                         + scratch_bytes + 16 * act_bytes + 4 * 2 ** 20))

    out = pl.pallas_call(
        functools.partial(_tinybone_kernel, H=H, W=W),
        out_shape=jax.ShapeDtypeStruct((B, oh, ow, 256), jnp.float32),
        grid_spec=pltpu.PrefetchScalarGridSpec(
            num_scalar_prefetch=0,
            grid=(B,),
            in_specs=in_specs,
            out_specs=pl.BlockSpec((1, oh, ow, 256), lambda b: (b, 0, 0, 0)),
            scratch_shapes=[pltpu.VMEM(s, d) for s, d in scratch_defs]),
        compiler_params=pltpu.CompilerParams(
            dimension_semantics=("parallel",),
            vmem_limit_bytes=vmem_limit),
        cost_estimate=pl.CostEstimate(
            flops=int(B * flops),
            transcendentals=int(B * transcendentals),
            bytes_accessed=int(in_bytes + out_bytes + w_bytes)),
    )(*args)
    return jnp.transpose(out, (0, 3, 1, 2))                          # -> NCHW


# ----------------------------------------------------------------------------
# Deterministic synthetic parameters (BN folded, bf16 weights)
# ----------------------------------------------------------------------------
def make_cbm_params(key, cin, cout, k):
    kconv, kgamma, kbeta = jax.random.split(key, 3)
    w = jax.random.normal(kconv, (k, k, cin, cout), jnp.float32)
    w = w * (2.0 / (k * k * cin)) ** 0.5
    gamma = 1.0 + 0.1 * jax.random.normal(kgamma, (cout,), jnp.float32)
    beta = 0.1 * jax.random.normal(kbeta, (cout,), jnp.float32)
    # TODO(synk): BatchNorm is folded in eval/inference mode (running stats at
    # init: mean=0, var=1); training-mode batch statistics are not reproduced.
    eps = 1e-4
    scale = gamma / jnp.sqrt(1.0 + eps)
    w_folded = (w * scale[None, None, None, :]).astype(jnp.bfloat16)
    return dict(k=k,
                w4=w_folded,                                 # (k,k,ci,co) ref
                wk=w_folded.reshape(k * k * cin, cout),      # kernel layout
                b=beta.reshape(1, cout).astype(jnp.float32))


def make_tinybone_params(key, in_filters):
    keys = jax.random.split(key, 10)
    f1, f2 = 64, 128
    return {
        "m1a": make_cbm_params(keys[0], in_filters, 32, 3),
        "m1b": make_cbm_params(keys[1], 32, 64, 3),
        "o1c1": make_cbm_params(keys[2], f1, f1, 3),
        "o1c2": make_cbm_params(keys[3], f1, f1 // 2, 3),
        "o1c3": make_cbm_params(keys[4], f1 // 2, f1 // 2, 3),
        "o1c4": make_cbm_params(keys[5], f1, f1, 1),
        "o2c1": make_cbm_params(keys[6], f2, f2, 3),
        "o2c2": make_cbm_params(keys[7], f2, f2 // 2, 3),
        "o2c3": make_cbm_params(keys[8], f2 // 2, f2 // 2, 3),
        "o2c4": make_cbm_params(keys[9], f2, f2, 1),
    }


# ----------------------------------------------------------------------------
# Pure-JAX reference (same bf16-in / f32-acc precision; torch-style Mish)
# ----------------------------------------------------------------------------
def _ref_cbm(x, lp, stride):
    k = lp["k"]
    y = jax.lax.conv_general_dilated(
        x.astype(jnp.bfloat16), lp["w4"],
        window_strides=(stride, stride),
        padding=[(k // 2, k // 2), (k // 2, k // 2)],
        dimension_numbers=("NHWC", "HWIO", "NHWC"),
        preferred_element_type=jnp.float32)
    y = y + lp["b"].reshape(1, 1, 1, -1)
    return y * jnp.tanh(jax.nn.softplus(y))


def _ref_maxpool(x):
    return jax.lax.reduce_window(x, -jnp.inf, jax.lax.max,
                                 (1, 2, 2, 1), (1, 2, 2, 1), "VALID")


def _ref_tinybone(rad_nchw, params):
    x = jnp.transpose(rad_nchw, (0, 2, 3, 1))
    x = _ref_cbm(x, params["m1a"], 1)
    x = _ref_cbm(x, params["m1b"], 2)
    x1 = _ref_cbm(x, params["o1c1"], 1)
    x2 = _ref_cbm(x1, params["o1c2"], 1)
    x3 = _ref_cbm(x2, params["o1c3"], 1)
    x4 = _ref_cbm(jnp.concatenate([x3, x2], axis=-1), params["o1c4"], 1)
    x = _ref_maxpool(jnp.concatenate([x4, x1], axis=-1))
    z1 = _ref_cbm(x, params["o2c1"], 1)
    z2 = _ref_cbm(z1, params["o2c2"], 1)
    z3 = _ref_cbm(z2, params["o2c3"], 1)
    z4 = _ref_cbm(jnp.concatenate([z3, z2], axis=-1), params["o2c4"], 1)
    x = _ref_maxpool(jnp.concatenate([z4, z1], axis=-1))
    return jnp.transpose(x, (0, 3, 1, 2))


# ----------------------------------------------------------------------------
if __name__ == "__main__":
    B, C_in, H, W = 2, 4, 16, 16
    rad = jax.random.normal(jax.random.PRNGKey(0), (B, C_in, H, W), jnp.float32)
    params = make_tinybone_params(jax.random.PRNGKey(42), C_in)

    fwd = jax.jit(functools.partial(tinybone_forward, params=params))
    out = jax.block_until_ready(fwd(rad))

    expected_shape = (B, 256, H // 8, W // 8)
    assert out.shape == expected_shape, (out.shape, expected_shape)

    ref = jax.block_until_ready(_ref_tinybone(rad, params))
    np.testing.assert_allclose(np.asarray(out), np.asarray(ref),
                               rtol=1e-2, atol=1e-2)

    print("KERNEL_OK")
</pallas_src>

<mosaic_0001>
module attributes {stable_mosaic.version = 11 : i64} {
  func.func @_tinybone_kernel(%arg0: i32, %arg1: memref<1x16x16x36xf32, #tpu.memory_space<vmem>>, %arg2: memref<36x32xbf16, #tpu.memory_space<vmem>>, %arg3: memref<1x32xf32, #tpu.memory_space<vmem>>, %arg4: memref<288x64xbf16, #tpu.memory_space<vmem>>, %arg5: memref<1x64xf32, #tpu.memory_space<vmem>>, %arg6: memref<576x64xbf16, #tpu.memory_space<vmem>>, %arg7: memref<1x64xf32, #tpu.memory_space<vmem>>, %arg8: memref<576x32xbf16, #tpu.memory_space<vmem>>, %arg9: memref<1x32xf32, #tpu.memory_space<vmem>>, %arg10: memref<288x32xbf16, #tpu.memory_space<vmem>>, %arg11: memref<1x32xf32, #tpu.memory_space<vmem>>, %arg12: memref<64x64xbf16, #tpu.memory_space<vmem>>, %arg13: memref<1x64xf32, #tpu.memory_space<vmem>>, %arg14: memref<1152x128xbf16, #tpu.memory_space<vmem>>, %arg15: memref<1x128xf32, #tpu.memory_space<vmem>>, %arg16: memref<1152x64xbf16, #tpu.memory_space<vmem>>, %arg17: memref<1x64xf32, #tpu.memory_space<vmem>>, %arg18: memref<576x64xbf16, #tpu.memory_space<vmem>>, %arg19: memref<1x64xf32, #tpu.memory_space<vmem>>, %arg20: memref<128x128xbf16, #tpu.memory_space<vmem>>, %arg21: memref<1x128xf32, #tpu.memory_space<vmem>>, %arg22: memref<1x2x2x256xf32, #tpu.memory_space<vmem>>, %arg23: memref<18x18x32xf32, #tpu.memory_space<vmem>>, %arg24: memref<10x10x64xbf16, #tpu.memory_space<vmem>>, %arg25: memref<6x10x128xbf16, #tpu.memory_space<vmem>>, %arg26: memref<4x8x128xf32, #tpu.memory_space<vmem>>) attributes {dimension_semantics = [#tpu.dimension_semantics<parallel>], iteration_bounds = array<i64: 2>, scalar_prefetch = 0 : i64, scratch_operands = 4 : i64, tpu.core_type = #tpu.core_type<tc>, window_params = [{transform_indices = @transform_0, window_bounds = array<i64: 1, 16, 16, 36>}, {pipeline_mode = #tpu.pipeline_mode<synchronous>, transform_indices = @transform_1, window_bounds = array<i64: 36, 32>}, {pipeline_mode = #tpu.pipeline_mode<synchronous>, transform_indices = @transform_2, window_bounds = array<i64: 1, 32>}, {pipeline_mode = #tpu.pipeline_mode<synchronous>, transform_indices = @transform_3, window_bounds = array<i64: 288, 64>}, {pipeline_mode = #tpu.pipeline_mode<synchronous>, transform_indices = @transform_4, window_bounds = array<i64: 1, 64>}, {pipeline_mode = #tpu.pipeline_mode<synchronous>, transform_indices = @transform_5, window_bounds = array<i64: 576, 64>}, {pipeline_mode = #tpu.pipeline_mode<synchronous>, transform_indices = @transform_6, window_bounds = array<i64: 1, 64>}, {pipeline_mode = #tpu.pipeline_mode<synchronous>, transform_indices = @transform_7, window_bounds = array<i64: 576, 32>}, {pipeline_mode = #tpu.pipeline_mode<synchronous>, transform_indices = @transform_8, window_bounds = array<i64: 1, 32>}, {pipeline_mode = #tpu.pipeline_mode<synchronous>, transform_indices = @transform_9, window_bounds = array<i64: 288, 32>}, {pipeline_mode = #tpu.pipeline_mode<synchronous>, transform_indices = @transform_10, window_bounds = array<i64: 1, 32>}, {pipeline_mode = #tpu.pipeline_mode<synchronous>, transform_indices = @transform_11, window_bounds = array<i64: 64, 64>}, {pipeline_mode = #tpu.pipeline_mode<synchronous>, transform_indices = @transform_12, window_bounds = array<i64: 1, 64>}, {pipeline_mode = #tpu.pipeline_mode<synchronous>, transform_indices = @transform_13, window_bounds = array<i64: 1152, 128>}, {pipeline_mode = #tpu.pipeline_mode<synchronous>, transform_indices = @transform_14, window_bounds = array<i64: 1, 128>}, {pipeline_mode = #tpu.pipeline_mode<synchronous>, transform_indices = @transform_15, window_bounds = array<i64: 1152, 64>}, {pipeline_mode = #tpu.pipeline_mode<synchronous>, transform_indices = @transform_16, window_bounds = array<i64: 1, 64>}, {pipeline_mode = #tpu.pipeline_mode<synchronous>, transform_indices = @transform_17, window_bounds = array<i64: 576, 64>}, {pipeline_mode = #tpu.pipeline_mode<synchronous>, transform_indices = @transform_18, window_bounds = array<i64: 1, 64>}, {pipeline_mode = #tpu.pipeline_mode<synchronous>, transform_indices = @transform_19, window_bounds = array<i64: 128, 128>}, {pipeline_mode = #tpu.pipeline_mode<synchronous>, transform_indices = @transform_20, window_bounds = array<i64: 1, 128>}, {transform_indices = @transform_21, window_bounds = array<i64: 1, 2, 2, 256>}]} {
    %cst = arith.constant 0.000000e+00 : f32
    %0 = vector.broadcast %cst : f32 to vector<18x18x32xf32>
    %c0 = arith.constant 0 : index
    %c0_0 = arith.constant 0 : index
    %c0_1 = arith.constant 0 : index
    %1 = vector.load %arg23[%c0, %c0_0, %c0_1] : memref<18x18x32xf32, #tpu.memory_space<vmem>>, vector<18x18x32xf32>
    tpu.vector_store %arg23[%c0, %c0_0, %c0_1], %0 {strides = array<i32>} : memref<18x18x32xf32, #tpu.memory_space<vmem>>, vector<18x18x32xf32>,
    %cst_2 = arith.constant 0.000000e+00 : bf16
    %2 = vector.broadcast %cst_2 : bf16 to vector<10x10x64xbf16>
    %c0_3 = arith.constant 0 : index
    %c0_4 = arith.constant 0 : index
    %c0_5 = arith.constant 0 : index
    %3 = vector.load %arg24[%c0_3, %c0_4, %c0_5] : memref<10x10x64xbf16, #tpu.memory_space<vmem>>, vector<10x10x64xbf16>
    tpu.vector_store %arg24[%c0_3, %c0_4, %c0_5], %2 {strides = array<i32>} : memref<10x10x64xbf16, #tpu.memory_space<vmem>>, vector<10x10x64xbf16>,
    %cst_6 = arith.constant 0.000000e+00 : bf16
    %4 = vector.broadcast %cst_6 : bf16 to vector<6x10x128xbf16>
    %c0_7 = arith.constant 0 : index
    %c0_8 = arith.constant 0 : index
    %c0_9 = arith.constant 0 : index
    %5 = vector.load %arg25[%c0_7, %c0_8, %c0_9] : memref<6x10x128xbf16, #tpu.memory_space<vmem>>, vector<6x10x128xbf16>
    tpu.vector_store %arg25[%c0_7, %c0_8, %c0_9], %4 {strides = array<i32>} : memref<6x10x128xbf16, #tpu.memory_space<vmem>>, vector<6x10x128xbf16>,
    %c0_10 = arith.constant 0 : index
    %c0_11 = arith.constant 0 : index
    %c0_12 = arith.constant 0 : index
    %c0_13 = arith.constant 0 : index
    %6 = vector.load %arg1[%c0_10, %c0_11, %c0_12, %c0_13] : memref<1x16x16x36xf32, #tpu.memory_space<vmem>>, vector<1x16x16x36xf32>
    %7 = vector.shape_cast %6 : vector<1x16x16x36xf32> to vector<16x16x36xf32>
    %8 = vector.shape_cast %7 : vector<16x16x36xf32> to vector<256x36xf32>
    %9 = arith.truncf %8 : vector<256x36xf32> to vector<256x36xbf16>
    %c0_14 = arith.constant 0 : index
    %c0_15 = arith.constant 0 : index
    %10 = vector.load %arg2[%c0_14, %c0_15] : memref<36x32xbf16, #tpu.memory_space<vmem>>, vector<36x32xbf16>
    %cst_16 = arith.constant dense<0.000000e+00> : vector<256x32xf32>
    %11 = tpu.matmul %9, %10, %cst_16 {dimension_numbers = #tpu.dot_dimension_numbers<[1], [0], [0], [1], [0, 0, 1, 1], [], []>} : vector<256x36xbf16>, vector<36x32xbf16>, vector<256x32xf32> -> vector<256x32xf32>
    %c0_17 = arith.constant 0 : index
    %c0_18 = arith.constant 0 : index
    %12 = vector.load %arg3[%c0_17, %c0_18] : memref<1x32xf32, #tpu.memory_space<vmem>>, vector<1x32xf32>
    %13 = vector.broadcast %12 : vector<1x32xf32> to vector<256x32xf32>
    %14 = arith.addf %11, %13 : vector<256x32xf32>
    %cst_19 = arith.constant 2.000000e+01 : f32
    %15 = vector.broadcast %cst_19 : f32 to vector<256x32xf32>
    %16 = arith.minimumf %14, %15 : vector<256x32xf32>
    %17 = math.exp %16 : vector<256x32xf32>
    %cst_20 = arith.constant 1.000000e+00 : f32
    %18 = vector.broadcast %cst_20 : f32 to vector<256x32xf32>
    %19 = arith.addf %18, %17 : vector<256x32xf32>
    %20 = math.log %19 : vector<256x32xf32>
    %21 = math.tanh %20 : vector<256x32xf32>
    %22 = arith.mulf %14, %21 : vector<256x32xf32>
    %23 = vector.shape_cast %22 : vector<256x32xf32> to vector<16x16x32xf32>
    %c1 = arith.constant 1 : index
    %c1_21 = arith.constant 1 : index
    %c0_22 = arith.constant 0 : index
    %24 = vector.load %arg23[%c1, %c1_21, %c0_22] : memref<18x18x32xf32, #tpu.memory_space<vmem>>, vector<16x16x32xf32>
    tpu.vector_store %arg23[%c1, %c1_21, %c0_22], %23 {strides = array<i32>} : memref<18x18x32xf32, #tpu.memory_space<vmem>>, vector<16x16x32xf32>,
    %c0_23 = arith.constant 0 : index
    %c0_24 = arith.constant 0 : index
    %c0_25 = arith.constant 0 : index
    %25 = tpu.strided_load %arg23[%c0_23, %c0_24, %c0_25] {strides = array<i32: 1, 2, 1>} : memref<18x18x32xf32, #tpu.memory_space<vmem>>, vector<18x8x32xf32>
    %c0_26 = arith.constant 0 : index
    %c1_27 = arith.constant 1 : index
    %c0_28 = arith.constant 0 : index
    %26 = tpu.strided_load %arg23[%c0_26, %c1_27, %c0_28] {strides = array<i32: 1, 2, 1>} : memref<18x18x32xf32, #tpu.memory_space<vmem>>, vector<18x8x32xf32>
    %c0_29 = arith.constant 0 : index
    %c2 = arith.constant 2 : index
    %c0_30 = arith.constant 0 : index
    %27 = tpu.strided_load %arg23[%c0_29, %c2, %c0_30] {strides = array<i32: 1, 2, 1>} : memref<18x18x32xf32, #tpu.memory_space<vmem>>, vector<18x8x32xf32>
    %28 = vector.extract_strided_slice %25 {offsets = [0, 0, 0], sizes = [16, 8, 32], strides = [1, 1, 1]} : vector<18x8x32xf32> to vector<16x8x32xf32>
    %29 = vector.shape_cast %28 : vector<16x8x32xf32> to vector<8x2x8x32xf32>
    %30 = vector.extract_strided_slice %29 {offsets = [0, 0, 0, 0], sizes = [8, 1, 8, 32], strides = [1, 1, 1, 1]} : vector<8x2x8x32xf32> to vector<8x1x8x32xf32>
    %31 = vector.shape_cast %30 : vector<8x1x8x32xf32> to vector<8x8x32xf32>
    %32 = vector.extract_strided_slice %26 {offsets = [0, 0, 0], sizes = [16, 8, 32], strides = [1, 1, 1]} : vector<18x8x32xf32> to vector<16x8x32xf32>
    %33 = vector.shape_cast %32 : vector<16x8x32xf32> to vector<8x2x8x32xf32>
    %34 = vector.extract_strided_slice %33 {offsets = [0, 0, 0, 0], sizes = [8, 1, 8, 32], strides = [1, 1, 1, 1]} : vector<8x2x8x32xf32> to vector<8x1x8x32xf32>
    %35 = vector.shape_cast %34 : vector<8x1x8x32xf32> to vector<8x8x32xf32>
    %36 = vector.extract_strided_slice %27 {offsets = [0, 0, 0], sizes = [16, 8, 32], strides = [1, 1, 1]} : vector<18x8x32xf32> to vector<16x8x32xf32>
    %37 = vector.shape_cast %36 : vector<16x8x32xf32> to vector<8x2x8x32xf32>
    %38 = vector.extract_strided_slice %37 {offsets = [0, 0, 0, 0], sizes = [8, 1, 8, 32], strides = [1, 1, 1, 1]} : vector<8x2x8x32xf32> to vector<8x1x8x32xf32>
    %39 = vector.shape_cast %38 : vector<8x1x8x32xf32> to vector<8x8x32xf32>
    %40 = vector.extract_strided_slice %25 {offsets = [1, 0, 0], sizes = [16, 8, 32], strides = [1, 1, 1]} : vector<18x8x32xf32> to vector<16x8x32xf32>
    %41 = vector.shape_cast %40 : vector<16x8x32xf32> to vector<8x2x8x32xf32>
    %42 = vector.extract_strided_slice %41 {offsets = [0, 0, 0, 0], sizes = [8, 1, 8, 32], strides = [1, 1, 1, 1]} : vector<8x2x8x32xf32> to vector<8x1x8x32xf32>
    %43 = vector.shape_cast %42 : vector<8x1x8x32xf32> to vector<8x8x32xf32>
    %44 = vector.extract_strided_slice %26 {offsets = [1, 0, 0], sizes = [16, 8, 32], strides = [1, 1, 1]} : vector<18x8x32xf32> to vector<16x8x32xf32>
    %45 = vector.shape_cast %44 : vector<16x8x32xf32> to vector<8x2x8x32xf32>
    %46 = vector.extract_strided_slice %45 {offsets = [0, 0, 0, 0], sizes = [8, 1, 8, 32], strides = [1, 1, 1, 1]} : vector<8x2x8x32xf32> to vector<8x1x8x32xf32>
    %47 = vector.shape_cast %46 : vector<8x1x8x32xf32> to vector<8x8x32xf32>
    %48 = vector.extract_strided_slice %27 {offsets = [1, 0, 0], sizes = [16, 8, 32], strides = [1, 1, 1]} : vector<18x8x32xf32> to vector<16x8x32xf32>
    %49 = vector.shape_cast %48 : vector<16x8x32xf32> to vector<8x2x8x32xf32>
    %50 = vector.extract_strided_slice %49 {offsets = [0, 0, 0, 0], sizes = [8, 1, 8, 32], strides = [1, 1, 1, 1]} : vector<8x2x8x32xf32> to vector<8x1x8x32xf32>
    %51 = vector.shape_cast %50 : vector<8x1x8x32xf32> to vector<8x8x32xf32>
    %52 = vector.extract_strided_slice %25 {offsets = [2, 0, 0], sizes = [16, 8, 32], strides = [1, 1, 1]} : vector<18x8x32xf32> to vector<16x8x32xf32>
    %53 = vector.shape_cast %52 : vector<16x8x32xf32> to vector<8x2x8x32xf32>
    %54 = vector.extract_strided_slice %53 {offsets = [0, 0, 0, 0], sizes = [8, 1, 8, 32], strides = [1, 1, 1, 1]} : vector<8x2x8x32xf32> to vector<8x1x8x32xf32>
    %55 = vector.shape_cast %54 : vector<8x1x8x32xf32> to vector<8x8x32xf32>
    %56 = vector.extract_strided_slice %26 {offsets = [2, 0, 0], sizes = [16, 8, 32], strides = [1, 1, 1]} : vector<18x8x32xf32> to vector<16x8x32xf32>
    %57 = vector.shape_cast %56 : vector<16x8x32xf32> to vector<8x2x8x32xf32>
    %58 = vector.extract_strided_slice %57 {offsets = [0, 0, 0, 0], sizes = [8, 1, 8, 32], strides = [1, 1, 1, 1]} : vector<8x2x8x32xf32> to vector<8x1x8x32xf32>
    %59 = vector.shape_cast %58 : vector<8x1x8x32xf32> to vector<8x8x32xf32>
    %60 = vector.extract_strided_slice %27 {offsets = [2, 0, 0], sizes = [16, 8, 32], strides = [1, 1, 1]} : vector<18x8x32xf32> to vector<16x8x32xf32>
    %61 = vector.shape_cast %60 : vector<16x8x32xf32> to vector<8x2x8x32xf32>
    %62 = vector.extract_strided_slice %61 {offsets = [0, 0, 0, 0], sizes = [8, 1, 8, 32], strides = [1, 1, 1, 1]} : vector<8x2x8x32xf32> to vector<8x1x8x32xf32>
    %63 = vector.shape_cast %62 : vector<8x1x8x32xf32> to vector<8x8x32xf32>
    %64 = tpu.concatenate %31, %35, %39, %43, %47, %51, %55, %59, %63 in 2 : vector<8x8x32xf32>, vector<8x8x32xf32>, vector<8x8x32xf32>, vector<8x8x32xf32>, vector<8x8x32xf32>, vector<8x8x32xf32>, vector<8x8x32xf32>, vector<8x8x32xf32>, vector<8x8x32xf32> -> vector<8x8x288xf32>
    %65 = arith.truncf %64 : vector<8x8x288xf32> to vector<8x8x288xbf16>
    %66 = vector.shape_cast %65 : vector<8x8x288xbf16> to vector<64x288xbf16>
    %c0_31 = arith.constant 0 : index
    %c0_32 = arith.constant 0 : index
    %67 = vector.load %arg4[%c0_31, %c0_32] : memref<288x64xbf16, #tpu.memory_space<vmem>>, vector<288x64xbf16>
    %cst_33 = arith.constant dense<0.000000e+00> : vector<64x64xf32>
    %68 = tpu.matmul %66, %67, %cst_33 {dimension_numbers = #tpu.dot_dimension_numbers<[1], [0], [0], [1], [0, 0, 1, 1], [], []>} : vector<64x288xbf16>, vector<288x64xbf16>, vector<64x64xf32> -> vector<64x64xf32>
    %c0_34 = arith.constant 0 : index
    %c0_35 = arith.constant 0 : index
    %69 = vector.load %arg5[%c0_34, %c0_35] : memref<1x64xf32, #tpu.memory_space<vmem>>, vector<1x64xf32>
    %70 = vector.broadcast %69 : vector<1x64xf32> to vector<64x64xf32>
    %71 = arith.addf %68, %70 : vector<64x64xf32>
    %cst_36 = arith.constant 2.000000e+01 : f32
    %72 = vector.broadcast %cst_36 : f32 to vector<64x64xf32>
    %73 = arith.minimumf %71, %72 : vector<64x64xf32>
    %74 = math.exp %73 : vector<64x64xf32>
    %cst_37 = arith.constant 1.000000e+00 : f32
    %75 = vector.broadcast %cst_37 : f32 to vector<64x64xf32>
    %76 = arith.addf %75, %74 : vector<64x64xf32>
    %77 = math.log %76 : vector<64x64xf32>
    %78 = math.tanh %77 : vector<64x64xf32>
    %79 = arith.mulf %71, %78 : vector<64x64xf32>
    %80 = vector.shape_cast %79 : vector<64x64xf32> to vector<8x8x64xf32>
    %81 = arith.truncf %80 : vector<8x8x64xf32> to vector<8x8x64xbf16>
    %c1_38 = arith.constant 1 : index
    %c1_39 = arith.constant 1 : index
    %c0_40 = arith.constant 0 : index
    %82 = vector.load %arg24[%c1_38, %c1_39, %c0_40] : memref<10x10x64xbf16, #tpu.memory_space<vmem>>, vector<8x8x64xbf16>
    tpu.vector_store %arg24[%c1_38, %c1_39, %c0_40], %81 {strides = array<i32>} : memref<10x10x64xbf16, #tpu.memory_space<vmem>>, vector<8x8x64xbf16>,
    %c0_41 = arith.constant 0 : index
    %c0_42 = arith.constant 0 : index
    %c0_43 = arith.constant 0 : index
    %83 = vector.load %arg24[%c0_41, %c0_42, %c0_43] : memref<10x10x64xbf16, #tpu.memory_space<vmem>>, vector<8x8x64xbf16>
    %c0_44 = arith.constant 0 : index
    %c1_45 = arith.constant 1 : index
    %c0_46 = arith.constant 0 : index
    %84 = vector.load %arg24[%c0_44, %c1_45, %c0_46] : memref<10x10x64xbf16, #tpu.memory_space<vmem>>, vector<8x8x64xbf16>
    %c0_47 = arith.constant 0 : index
    %c2_48 = arith.constant 2 : index
    %c0_49 = arith.constant 0 : index
    %85 = vector.load %arg24[%c0_47, %c2_48, %c0_49] : memref<10x10x64xbf16, #tpu.memory_space<vmem>>, vector<8x8x64xbf16>
    %c1_50 = arith.constant 1 : index
    %c0_51 = arith.constant 0 : index
    %c0_52 = arith.constant 0 : index
    %86 = vector.load %arg24[%c1_50, %c0_51, %c0_52] : memref<10x10x64xbf16, #tpu.memory_space<vmem>>, vector<8x8x64xbf16>
    %c1_53 = arith.constant 1 : index
    %c1_54 = arith.constant 1 : index
    %c0_55 = arith.constant 0 : index
    %87 = vector.load %arg24[%c1_53, %c1_54, %c0_55] : memref<10x10x64xbf16, #tpu.memory_space<vmem>>, vector<8x8x64xbf16>
    %c1_56 = arith.constant 1 : index
    %c2_57 = arith.constant 2 : index
    %c0_58 = arith.constant 0 : index
    %88 = vector.load %arg24[%c1_56, %c2_57, %c0_58] : memref<10x10x64xbf16, #tpu.memory_space<vmem>>, vector<8x8x64xbf16>
    %c2_59 = arith.constant 2 : index
    %c0_60 = arith.constant 0 : index
    %c0_61 = arith.constant 0 : index
    %89 = vector.load %arg24[%c2_59, %c0_60, %c0_61] : memref<10x10x64xbf16, #tpu.memory_space<vmem>>, vector<8x8x64xbf16>
    %c2_62 = arith.constant 2 : index
    %c1_63 = arith.constant 1 : index
    %c0_64 = arith.constant 0 : index
    %90 = vector.load %arg24[%c2_62, %c1_63, %c0_64] : memref<10x10x64xbf16, #tpu.memory_space<vmem>>, vector<8x8x64xbf16>
    %c2_65 = arith.constant 2 : index
    %c2_66 = arith.constant 2 : index
    %c0_67 = arith.constant 0 : index
    %91 = vector.load %arg24[%c2_65, %c2_66, %c0_67] : memref<10x10x64xbf16, #tpu.memory_space<vmem>>, vector<8x8x64xbf16>
    %92 = tpu.concatenate %83, %84, %85, %86, %87, %88, %89, %90, %91 in 2 : vector<8x8x64xbf16>, vector<8x8x64xbf16>, vector<8x8x64xbf16>, vector<8x8x64xbf16>, vector<8x8x64xbf16>, vector<8x8x64xbf16>, vector<8x8x64xbf16>, vector<8x8x64xbf16>, vector<8x8x64xbf16> -> vector<8x8x576xbf16>
    %93 = vector.shape_cast %92 : vector<8x8x576xbf16> to vector<64x576xbf16>
    %c0_68 = arith.constant 0 : index
    %c0_69 = arith.constant 0 : index
    %94 = vector.load %arg6[%c0_68, %c0_69] : memref<576x64xbf16, #tpu.memory_space<vmem>>, vector<576x64xbf16>
    %cst_70 = arith.constant dense<0.000000e+00> : vector<64x64xf32>
    %95 = tpu.matmul %93, %94, %cst_70 {dimension_numbers = #tpu.dot_dimension_numbers<[1], [0], [0], [1], [0, 0, 1, 1], [], []>} : vector<64x576xbf16>, vector<576x64xbf16>, vector<64x64xf32> -> vector<64x64xf32>
    %c0_71 = arith.constant 0 : index
    %c0_72 = arith.constant 0 : index
    %96 = vector.load %arg7[%c0_71, %c0_72] : memref<1x64xf32, #tpu.memory_space<vmem>>, vector<1x64xf32>
    %97 = vector.broadcast %96 : vector<1x64xf32> to vector<64x64xf32>
    %98 = arith.addf %95, %97 : vector<64x64xf32>
    %cst_73 = arith.constant 2.000000e+01 : f32
    %99 = vector.broadcast %cst_73 : f32 to vector<64x64xf32>
    %100 = arith.minimumf %98, %99 : vector<64x64xf32>
    %101 = math.exp %100 : vector<64x64xf32>
    %cst_74 = arith.constant 1.000000e+00 : f32
    %102 = vector.broadcast %cst_74 : f32 to vector<64x64xf32>
    %103 = arith.addf %102, %101 : vector<64x64xf32>
    %104 = math.log %103 : vector<64x64xf32>
    %105 = math.tanh %104 : vector<64x64xf32>
    %106 = arith.mulf %98, %105 : vector<64x64xf32>
    %107 = vector.shape_cast %106 : vector<64x64xf32> to vector<8x8x64xf32>
    %108 = arith.truncf %107 : vector<8x8x64xf32> to vector<8x8x64xbf16>
    %c1_75 = arith.constant 1 : index
    %c1_76 = arith.constant 1 : index
    %c0_77 = arith.constant 0 : index
    %109 = vector.load %arg24[%c1_75, %c1_76, %c0_77] : memref<10x10x64xbf16, #tpu.memory_space<vmem>>, vector<8x8x64xbf16>
    tpu.vector_store %arg24[%c1_75, %c1_76, %c0_77], %108 {strides = array<i32>} : memref<10x10x64xbf16, #tpu.memory_space<vmem>>, vector<8x8x64xbf16>,
    %c0_78 = arith.constant 0 : index
    %c0_79 = arith.constant 0 : index
    %c0_80 = arith.constant 0 : index
    %110 = vector.load %arg24[%c0_78, %c0_79, %c0_80] : memref<10x10x64xbf16, #tpu.memory_space<vmem>>, vector<8x8x64xbf16>
    %c0_81 = arith.constant 0 : index
    %c1_82 = arith.constant 1 : index
    %c0_83 = arith.constant 0 : index
    %111 = vector.load %arg24[%c0_81, %c1_82, %c0_83] : memref<10x10x64xbf16, #tpu.memory_space<vmem>>, vector<8x8x64xbf16>
    %c0_84 = arith.constant 0 : index
    %c2_85 = arith.constant 2 : index
    %c0_86 = arith.constant 0 : index
    %112 = vector.load %arg24[%c0_84, %c2_85, %c0_86] : memref<10x10x64xbf16, #tpu.memory_space<vmem>>, vector<8x8x64xbf16>
    %c1_87 = arith.constant 1 : index
    %c0_88 = arith.constant 0 : index
    %c0_89 = arith.constant 0 : index
    %113 = vector.load %arg24[%c1_87, %c0_88, %c0_89] : memref<10x10x64xbf16, #tpu.memory_space<vmem>>, vector<8x8x64xbf16>
    %c1_90 = arith.constant 1 : index
    %c1_91 = arith.constant 1 : index
    %c0_92 = arith.constant 0 : index
    %114 = vector.load %arg24[%c1_90, %c1_91, %c0_92] : memref<10x10x64xbf16, #tpu.memory_space<vmem>>, vector<8x8x64xbf16>
    %c1_93 = arith.constant 1 : index
    %c2_94 = arith.constant 2 : index
    %c0_95 = arith.constant 0 : index
    %115 = vector.load %arg24[%c1_93, %c2_94, %c0_95] : memref<10x10x64xbf16, #tpu.memory_space<vmem>>, vector<8x8x64xbf16>
    %c2_96 = arith.constant 2 : index
    %c0_97 = arith.constant 0 : index
    %c0_98 = arith.constant 0 : index
    %116 = vector.load %arg24[%c2_96, %c0_97, %c0_98] : memref<10x10x64xbf16, #tpu.memory_space<vmem>>, vector<8x8x64xbf16>
    %c2_99 = arith.constant 2 : index
    %c1_100 = arith.constant 1 : index
    %c0_101 = arith.constant 0 : index
    %117 = vector.load %arg24[%c2_99, %c1_100, %c0_101] : memref<10x10x64xbf16, #tpu.memory_space<vmem>>, vector<8x8x64xbf16>
    %c2_102 = arith.constant 2 : index
    %c2_103 = arith.constant 2 : index
    %c0_104 = arith.constant 0 : index
    %118 = vector.load %arg24[%c2_102, %c2_103, %c0_104] : memref<10x10x64xbf16, #tpu.memory_space<vmem>>, vector<8x8x64xbf16>
    %119 = tpu.concatenate %110, %111, %112, %113, %114, %115, %116, %117, %118 in 2 : vector<8x8x64xbf16>, vector<8x8x64xbf16>, vector<8x8x64xbf16>, vector<8x8x64xbf16>, vector<8x8x64xbf16>, vector<8x8x64xbf16>, vector<8x8x64xbf16>, vector<8x8x64xbf16>, vector<8x8x64xbf16> -> vector<8x8x576xbf16>
    %120 = vector.shape_cast %119 : vector<8x8x576xbf16> to vector<64x576xbf16>
    %c0_105 = arith.constant 0 : index
    %c0_106 = arith.constant 0 : index
    %121 = vector.load %arg8[%c0_105, %c0_106] : memref<576x32xbf16, #tpu.memory_space<vmem>>, vector<576x32xbf16>
    %cst_107 = arith.constant dense<0.000000e+00> : vector<64x32xf32>
    %122 = tpu.matmul %120, %121, %cst_107 {dimension_numbers = #tpu.dot_dimension_numbers<[1], [0], [0], [1], [0, 0, 1, 1], [], []>} : vector<64x576xbf16>, vector<576x32xbf16>, vector<64x32xf32> -> vector<64x32xf32>
    %c0_108 = arith.constant 0 : index
    %c0_109 = arith.constant 0 : index
    %123 = vector.load %arg9[%c0_108, %c0_109] : memref<1x32xf32, #tpu.memory_space<vmem>>, vector<1x32xf32>
    %124 = vector.broadcast %123 : vector<1x32xf32> to vector<64x32xf32>
    %125 = arith.addf %122, %124 : vector<64x32xf32>
    %cst_110 = arith.constant 2.000000e+01 : f32
    %126 = vector.broadcast %cst_110 : f32 to vector<64x32xf32>
    %127 = arith.minimumf %125, %126 : vector<64x32xf32>
    %128 = math.exp %127 : vector<64x32xf32>
    %cst_111 = arith.constant 1.000000e+00 : f32
    %129 = vector.broadcast %cst_111 : f32 to vector<64x32xf32>
    %130 = arith.addf %129, %128 : vector<64x32xf32>
    %131 = math.log %130 : vector<64x32xf32>
    %132 = math.tanh %131 : vector<64x32xf32>
    %133 = arith.mulf %125, %132 : vector<64x32xf32>
    %134 = vector.shape_cast %133 : vector<64x32xf32> to vector<8x8x32xf32>
    %135 = arith.truncf %134 : vector<8x8x32xf32> to vector<8x8x32xbf16>
    %c1_112 = arith.constant 1 : index
    %c1_113 = arith.constant 1 : index
    %c0_114 = arith.constant 0 : index
    %136 = vector.load %arg24[%c1_112, %c1_113, %c0_114] : memref<10x10x64xbf16, #tpu.memory_space<vmem>>, vector<8x8x32xbf16>
    tpu.vector_store %arg24[%c1_112, %c1_113, %c0_114], %135 {strides = array<i32>} : memref<10x10x64xbf16, #tpu.memory_space<vmem>>, vector<8x8x32xbf16>,
    %c0_115 = arith.constant 0 : index
    %c0_116 = arith.constant 0 : index
    %c0_117 = arith.constant 0 : index
    %137 = vector.load %arg24[%c0_115, %c0_116, %c0_117] : memref<10x10x64xbf16, #tpu.memory_space<vmem>>, vector<8x8x32xbf16>
    %c0_118 = arith.constant 0 : index
    %c1_119 = arith.constant 1 : index
    %c0_120 = arith.constant 0 : index
    %138 = vector.load %arg24[%c0_118, %c1_119, %c0_120] : memref<10x10x64xbf16, #tpu.memory_space<vmem>>, vector<8x8x32xbf16>
    %c0_121 = arith.constant 0 : index
    %c2_122 = arith.constant 2 : index
    %c0_123 = arith.constant 0 : index
    %139 = vector.load %arg24[%c0_121, %c2_122, %c0_123] : memref<10x10x64xbf16, #tpu.memory_space<vmem>>, vector<8x8x32xbf16>
    %c1_124 = arith.constant 1 : index
    %c0_125 = arith.constant 0 : index
    %c0_126 = arith.constant 0 : index
    %140 = vector.load %arg24[%c1_124, %c0_125, %c0_126] : memref<10x10x64xbf16, #tpu.memory_space<vmem>>, vector<8x8x32xbf16>
    %c1_127 = arith.constant 1 : index
    %c1_128 = arith.constant 1 : index
    %c0_129 = arith.constant 0 : index
    %141 = vector.load %arg24[%c1_127, %c1_128, %c0_129] : memref<10x10x64xbf16, #tpu.memory_space<vmem>>, vector<8x8x32xbf16>
    %c1_130 = arith.constant 1 : index
    %c2_131 = arith.constant 2 : index
    %c0_132 = arith.constant 0 : index
    %142 = vector.load %arg24[%c1_130, %c2_131, %c0_132] : memref<10x10x64xbf16, #tpu.memory_space<vmem>>, vector<8x8x32xbf16>
    %c2_133 = arith.constant 2 : index
    %c0_134 = arith.constant 0 : index
    %c0_135 = arith.constant 0 : index
    %143 = vector.load %arg24[%c2_133, %c0_134, %c0_135] : memref<10x10x64xbf16, #tpu.memory_space<vmem>>, vector<8x8x32xbf16>
    %c2_136 = arith.constant 2 : index
    %c1_137 = arith.constant 1 : index
    %c0_138 = arith.constant 0 : index
    %144 = vector.load %arg24[%c2_136, %c1_137, %c0_138] : memref<10x10x64xbf16, #tpu.memory_space<vmem>>, vector<8x8x32xbf16>
    %c2_139 = arith.constant 2 : index
    %c2_140 = arith.constant 2 : index
    %c0_141 = arith.constant 0 : index
    %145 = vector.load %arg24[%c2_139, %c2_140, %c0_141] : memref<10x10x64xbf16, #tpu.memory_space<vmem>>, vector<8x8x32xbf16>
    %146 = tpu.concatenate %137, %138, %139, %140, %141, %142, %143, %144, %145 in 2 : vector<8x8x32xbf16>, vector<8x8x32xbf16>, vector<8x8x32xbf16>, vector<8x8x32xbf16>, vector<8x8x32xbf16>, vector<8x8x32xbf16>, vector<8x8x32xbf16>, vector<8x8x32xbf16>, vector<8x8x32xbf16> -> vector<8x8x288xbf16>
    %147 = vector.shape_cast %146 : vector<8x8x288xbf16> to vector<64x288xbf16>
    %c0_142 = arith.constant 0 : index
    %c0_143 = arith.constant 0 : index
    %148 = vector.load %arg10[%c0_142, %c0_143] : memref<288x32xbf16, #tpu.memory_space<vmem>>, vector<288x32xbf16>
    %cst_144 = arith.constant dense<0.000000e+00> : vector<64x32xf32>
    %149 = tpu.matmul %147, %148, %cst_144 {dimension_numbers = #tpu.dot_dimension_numbers<[1], [0], [0], [1], [0, 0, 1, 1], [], []>} : vector<64x288xbf16>, vector<288x32xbf16>, vector<64x32xf32> -> vector<64x32xf32>
    %c0_145 = arith.constant 0 : index
    %c0_146 = arith.constant 0 : index
    %150 = vector.load %arg11[%c0_145, %c0_146] : memref<1x32xf32, #tpu.memory_space<vmem>>, vector<1x32xf32>
    %151 = vector.broadcast %150 : vector<1x32xf32> to vector<64x32xf32>
    %152 = arith.addf %149, %151 : vector<64x32xf32>
    %cst_147 = arith.constant 2.000000e+01 : f32
    %153 = vector.broadcast %cst_147 : f32 to vector<64x32xf32>
    %154 = arith.minimumf %152, %153 : vector<64x32xf32>
    %155 = math.exp %154 : vector<64x32xf32>
    %cst_148 = arith.constant 1.000000e+00 : f32
    %156 = vector.broadcast %cst_148 : f32 to vector<64x32xf32>
    %157 = arith.addf %156, %155 : vector<64x32xf32>
    %158 = math.log %157 : vector<64x32xf32>
    %159 = math.tanh %158 : vector<64x32xf32>
    %160 = arith.mulf %152, %159 : vector<64x32xf32>
    %161 = vector.shape_cast %160 : vector<64x32xf32> to vector<8x8x32xf32>
    %162 = tpu.concatenate %161, %134 in 2 : vector<8x8x32xf32>, vector<8x8x32xf32> -> vector<8x8x64xf32>
    %163 = vector.shape_cast %162 : vector<8x8x64xf32> to vector<64x64xf32>
    %164 = arith.truncf %163 : vector<64x64xf32> to vector<64x64xbf16>
    %c0_149 = arith.constant 0 : index
    %c0_150 = arith.constant 0 : index
    %165 = vector.load %arg12[%c0_149, %c0_150] : memref<64x64xbf16, #tpu.memory_space<vmem>>, vector<64x64xbf16>
    %cst_151 = arith.constant dense<0.000000e+00> : vector<64x64xf32>
    %166 = tpu.matmul %164, %165, %cst_151 {dimension_numbers = #tpu.dot_dimension_numbers<[1], [0], [0], [1], [0, 0, 1, 1], [], []>} : vector<64x64xbf16>, vector<64x64xbf16>, vector<64x64xf32> -> vector<64x64xf32>
    %c0_152 = arith.constant 0 : index
    %c0_153 = arith.constant 0 : index
    %167 = vector.load %arg13[%c0_152, %c0_153] : memref<1x64xf32, #tpu.memory_space<vmem>>, vector<1x64xf32>
    %168 = vector.broadcast %167 : vector<1x64xf32> to vector<64x64xf32>
    %169 = arith.addf %166, %168 : vector<64x64xf32>
    %cst_154 = arith.constant 2.000000e+01 : f32
    %170 = vector.broadcast %cst_154 : f32 to vector<64x64xf32>
    %171 = arith.minimumf %169, %170 : vector<64x64xf32>
    %172 = math.exp %171 : vector<64x64xf32>
    %cst_155 = arith.constant 1.000000e+00 : f32
    %173 = vector.broadcast %cst_155 : f32 to vector<64x64xf32>
    %174 = arith.addf %173, %172 : vector<64x64xf32>
    %175 = math.log %174 : vector<64x64xf32>
    %176 = math.tanh %175 : vector<64x64xf32>
    %177 = arith.mulf %169, %176 : vector<64x64xf32>
    %178 = vector.shape_cast %177 : vector<64x64xf32> to vector<8x8x64xf32>
    %179 = vector.shape_cast %178 : vector<8x8x64xf32> to vector<4x2x8x64xf32>
    %180 = vector.extract_strided_slice %179 {offsets = [0, 0, 0, 0], sizes = [4, 1, 8, 64], strides = [1, 1, 1, 1]} : vector<4x2x8x64xf32> to vector<4x1x8x64xf32>
    %181 = vector.shape_cast %180 : vector<4x1x8x64xf32> to vector<4x8x64xf32>
    %182 = vector.extract_strided_slice %179 {offsets = [0, 1, 0, 0], sizes = [4, 1, 8, 64], strides = [1, 1, 1, 1]} : vector<4x2x8x64xf32> to vector<4x1x8x64xf32>
    %183 = vector.shape_cast %182 : vector<4x1x8x64xf32> to vector<4x8x64xf32>
    %184 = arith.maximumf %181, %183 : vector<4x8x64xf32>
    %c0_156 = arith.constant 0 : index
    %c0_157 = arith.constant 0 : index
    %c0_158 = arith.constant 0 : index
    %185 = vector.load %arg26[%c0_156, %c0_157, %c0_158] : memref<4x8x128xf32, #tpu.memory_space<vmem>>, vector<4x8x64xf32>
    tpu.vector_store %arg26[%c0_156, %c0_157, %c0_158], %184 {strides = array<i32>} : memref<4x8x128xf32, #tpu.memory_space<vmem>>, vector<4x8x64xf32>,
    %c0_159 = arith.constant 0 : index
    %c0_160 = arith.constant 0 : index
    %c0_161 = arith.constant 0 : index
    %186 = tpu.strided_load %arg26[%c0_159, %c0_160, %c0_161] {strides = array<i32: 1, 2, 1>} : memref<4x8x128xf32, #tpu.memory_space<vmem>>, vector<4x4x64xf32>
    %c0_162 = arith.constant 0 : index
    %c1_163 = arith.constant 1 : index
    %c0_164 = arith.constant 0 : index
    %187 = tpu.strided_load %arg26[%c0_162, %c1_163, %c0_164] {strides = array<i32: 1, 2, 1>} : memref<4x8x128xf32, #tpu.memory_space<vmem>>, vector<4x4x64xf32>
    %188 = arith.maximumf %186, %187 : vector<4x4x64xf32>
    %189 = vector.shape_cast %107 : vector<8x8x64xf32> to vector<4x2x8x64xf32>
    %190 = vector.extract_strided_slice %189 {offsets = [0, 0, 0, 0], sizes = [4, 1, 8, 64], strides = [1, 1, 1, 1]} : vector<4x2x8x64xf32> to vector<4x1x8x64xf32>
    %191 = vector.shape_cast %190 : vector<4x1x8x64xf32> to vector<4x8x64xf32>
    %192 = vector.extract_strided_slice %189 {offsets = [0, 1, 0, 0], sizes = [4, 1, 8, 64], strides = [1, 1, 1, 1]} : vector<4x2x8x64xf32> to vector<4x1x8x64xf32>
    %193 = vector.shape_cast %192 : vector<4x1x8x64xf32> to vector<4x8x64xf32>
    %194 = arith.maximumf %191, %193 : vector<4x8x64xf32>
    %c0_165 = arith.constant 0 : index
    %c0_166 = arith.constant 0 : index
    %c0_167 = arith.constant 0 : index
    %195 = vector.load %arg26[%c0_165, %c0_166, %c0_167] : memref<4x8x128xf32, #tpu.memory_space<vmem>>, vector<4x8x64xf32>
    tpu.vector_store %arg26[%c0_165, %c0_166, %c0_167], %194 {strides = array<i32>} : memref<4x8x128xf32, #tpu.memory_space<vmem>>, vector<4x8x64xf32>,
    %c0_168 = arith.constant 0 : index
    %c0_169 = arith.constant 0 : index
    %c0_170 = arith.constant 0 : index
    %196 = tpu.strided_load %arg26[%c0_168, %c0_169, %c0_170] {strides = array<i32: 1, 2, 1>} : memref<4x8x128xf32, #tpu.memory_space<vmem>>, vector<4x4x64xf32>
    %c0_171 = arith.constant 0 : index
    %c1_172 = arith.constant 1 : index
    %c0_173 = arith.constant 0 : index
    %197 = tpu.strided_load %arg26[%c0_171, %c1_172, %c0_173] {strides = array<i32: 1, 2, 1>} : memref<4x8x128xf32, #tpu.memory_space<vmem>>, vector<4x4x64xf32>
    %198 = arith.maximumf %196, %197 : vector<4x4x64xf32>
    %199 = tpu.concatenate %188, %198 in 2 : vector<4x4x64xf32>, vector<4x4x64xf32> -> vector<4x4x128xf32>
    %200 = arith.truncf %199 : vector<4x4x128xf32> to vector<4x4x128xbf16>
    %c1_174 = arith.constant 1 : index
    %c1_175 = arith.constant 1 : index
    %c0_176 = arith.constant 0 : index
    %201 = vector.load %arg25[%c1_174, %c1_175, %c0_176] : memref<6x10x128xbf16, #tpu.memory_space<vmem>>, vector<4x4x128xbf16>
    tpu.vector_store %arg25[%c1_174, %c1_175, %c0_176], %200 {strides = array<i32>} : memref<6x10x128xbf16, #tpu.memory_space<vmem>>, vector<4x4x128xbf16>,
    %c0_177 = arith.constant 0 : index
    %c0_178 = arith.constant 0 : index
    %c0_179 = arith.constant 0 : index
    %202 = vector.load %arg25[%c0_177, %c0_178, %c0_179] : memref<6x10x128xbf16, #tpu.memory_space<vmem>>, vector<4x8x128xbf16>
    %c0_180 = arith.constant 0 : index
    %c1_181 = arith.constant 1 : index
    %c0_182 = arith.constant 0 : index
    %203 = vector.load %arg25[%c0_180, %c1_181, %c0_182] : memref<6x10x128xbf16, #tpu.memory_space<vmem>>, vector<4x8x128xbf16>
    %c0_183 = arith.constant 0 : index
    %c2_184 = arith.constant 2 : index
    %c0_185 = arith.constant 0 : index
    %204 = vector.load %arg25[%c0_183, %c2_184, %c0_185] : memref<6x10x128xbf16, #tpu.memory_space<vmem>>, vector<4x8x128xbf16>
    %c1_186 = arith.constant 1 : index
    %c0_187 = arith.constant 0 : index
    %c0_188 = arith.constant 0 : index
    %205 = vector.load %arg25[%c1_186, %c0_187, %c0_188] : memref<6x10x128xbf16, #tpu.memory_space<vmem>>, vector<4x8x128xbf16>
    %c1_189 = arith.constant 1 : index
    %c1_190 = arith.constant 1 : index
    %c0_191 = arith.constant 0 : index
    %206 = vector.load %arg25[%c1_189, %c1_190, %c0_191] : memref<6x10x128xbf16, #tpu.memory_space<vmem>>, vector<4x8x128xbf16>
    %c1_192 = arith.constant 1 : index
    %c2_193 = arith.constant 2 : index
    %c0_194 = arith.constant 0 : index
    %207 = vector.load %arg25[%c1_192, %c2_193, %c0_194] : memref<6x10x128xbf16, #tpu.memory_space<vmem>>, vector<4x8x128xbf16>
    %c2_195 = arith.constant 2 : index
    %c0_196 = arith.constant 0 : index
    %c0_197 = arith.constant 0 : index
    %208 = vector.load %arg25[%c2_195, %c0_196, %c0_197] : memref<6x10x128xbf16, #tpu.memory_space<vmem>>, vector<4x8x128xbf16>
    %c2_198 = arith.constant 2 : index
    %c1_199 = arith.constant 1 : index
    %c0_200 = arith.constant 0 : index
    %209 = vector.load %arg25[%c2_198, %c1_199, %c0_200] : memref<6x10x128xbf16, #tpu.memory_space<vmem>>, vector<4x8x128xbf16>
    %c2_201 = arith.constant 2 : index
    %c2_202 = arith.constant 2 : index
    %c0_203 = arith.constant 0 : index
    %210 = vector.load %arg25[%c2_201, %c2_202, %c0_203] : memref<6x10x128xbf16, #tpu.memory_space<vmem>>, vector<4x8x128xbf16>
    %211 = tpu.concatenate %202, %203, %204, %205, %206, %207, %208, %209, %210 in 2 : vector<4x8x128xbf16>, vector<4x8x128xbf16>, vector<4x8x128xbf16>, vector<4x8x128xbf16>, vector<4x8x128xbf16>, vector<4x8x128xbf16>, vector<4x8x128xbf16>, vector<4x8x128xbf16>, vector<4x8x128xbf16> -> vector<4x8x1152xbf16>
    %212 = vector.shape_cast %211 : vector<4x8x1152xbf16> to vector<32x1152xbf16>
    %c0_204 = arith.constant 0 : index
    %c0_205 = arith.constant 0 : index
    %213 = vector.load %arg14[%c0_204, %c0_205] : memref<1152x128xbf16, #tpu.memory_space<vmem>>, vector<1152x128xbf16>
    %cst_206 = arith.constant dense<0.000000e+00> : vector<32x128xf32>
    %214 = tpu.matmul %212, %213, %cst_206 {dimension_numbers = #tpu.dot_dimension_numbers<[1], [0], [0], [1], [0, 0, 1, 1], [], []>} : vector<32x1152xbf16>, vector<1152x128xbf16>, vector<32x128xf32> -> vector<32x128xf32>
    %c0_207 = arith.constant 0 : index
    %c0_208 = arith.constant 0 : index
    %215 = vector.load %arg15[%c0_207, %c0_208] : memref<1x128xf32, #tpu.memory_space<vmem>>, vector<1x128xf32>
    %216 = vector.broadcast %215 : vector<1x128xf32> to vector<32x128xf32>
    %217 = arith.addf %214, %216 : vector<32x128xf32>
    %cst_209 = arith.constant 2.000000e+01 : f32
    %218 = vector.broadcast %cst_209 : f32 to vector<32x128xf32>
    %219 = arith.minimumf %217, %218 : vector<32x128xf32>
    %220 = math.exp %219 : vector<32x128xf32>
    %cst_210 = arith.constant 1.000000e+00 : f32
    %221 = vector.broadcast %cst_210 : f32 to vector<32x128xf32>
    %222 = arith.addf %221, %220 : vector<32x128xf32>
    %223 = math.log %222 : vector<32x128xf32>
    %224 = math.tanh %223 : vector<32x128xf32>
    %225 = arith.mulf %217, %224 : vector<32x128xf32>
    %226 = vector.shape_cast %225 : vector<32x128xf32> to vector<4x8x128xf32>
    %227 = vector.extract_strided_slice %226 {offsets = [0, 0, 0], sizes = [4, 4, 128], strides = [1, 1, 1]} : vector<4x8x128xf32> to vector<4x4x128xf32>
    %228 = arith.truncf %227 : vector<4x4x128xf32> to vector<4x4x128xbf16>
    %c1_211 = arith.constant 1 : index
    %c1_212 = arith.constant 1 : index
    %c0_213 = arith.constant 0 : index
    %229 = vector.load %arg25[%c1_211, %c1_212, %c0_213] : memref<6x10x128xbf16, #tpu.memory_space<vmem>>, vector<4x4x128xbf16>
    tpu.vector_store %arg25[%c1_211, %c1_212, %c0_213], %228 {strides = array<i32>} : memref<6x10x128xbf16, #tpu.memory_space<vmem>>, vector<4x4x128xbf16>,
    %c0_214 = arith.constant 0 : index
    %c0_215 = arith.constant 0 : index
    %c0_216 = arith.constant 0 : index
    %230 = vector.load %arg25[%c0_214, %c0_215, %c0_216] : memref<6x10x128xbf16, #tpu.memory_space<vmem>>, vector<4x8x128xbf16>
    %c0_217 = arith.constant 0 : index
    %c1_218 = arith.constant 1 : index
    %c0_219 = arith.constant 0 : index
    %231 = vector.load %arg25[%c0_217, %c1_218, %c0_219] : memref<6x10x128xbf16, #tpu.memory_space<vmem>>, vector<4x8x128xbf16>
    %c0_220 = arith.constant 0 : index
    %c2_221 = arith.constant 2 : index
    %c0_222 = arith.constant 0 : index
    %232 = vector.load %arg25[%c0_220, %c2_221, %c0_222] : memref<6x10x128xbf16, #tpu.memory_space<vmem>>, vector<4x8x128xbf16>
    %c1_223 = arith.constant 1 : index
    %c0_224 = arith.constant 0 : index
    %c0_225 = arith.constant 0 : index
    %233 = vector.load %arg25[%c1_223, %c0_224, %c0_225] : memref<6x10x128xbf16, #tpu.memory_space<vmem>>, vector<4x8x128xbf16>
    %c1_226 = arith.constant 1 : index
    %c1_227 = arith.constant 1 : index
    %c0_228 = arith.constant 0 : index
    %234 = vector.load %arg25[%c1_226, %c1_227, %c0_228] : memref<6x10x128xbf16, #tpu.memory_space<vmem>>, vector<4x8x128xbf16>
    %c1_229 = arith.constant 1 : index
    %c2_230 = arith.constant 2 : index
    %c0_231 = arith.constant 0 : index
    %235 = vector.load %arg25[%c1_229, %c2_230, %c0_231] : memref<6x10x128xbf16, #tpu.memory_space<vmem>>, vector<4x8x128xbf16>
    %c2_232 = arith.constant 2 : index
    %c0_233 = arith.constant 0 : index
    %c0_234 = arith.constant 0 : index
    %236 = vector.load %arg25[%c2_232, %c0_233, %c0_234] : memref<6x10x128xbf16, #tpu.memory_space<vmem>>, vector<4x8x128xbf16>
    %c2_235 = arith.constant 2 : index
    %c1_236 = arith.constant 1 : index
    %c0_237 = arith.constant 0 : index
    %237 = vector.load %arg25[%c2_235, %c1_236, %c0_237] : memref<6x10x128xbf16, #tpu.memory_space<vmem>>, vector<4x8x128xbf16>
    %c2_238 = arith.constant 2 : index
    %c2_239 = arith.constant 2 : index
    %c0_240 = arith.constant 0 : index
    %238 = vector.load %arg25[%c2_238, %c2_239, %c0_240] : memref<6x10x128xbf16, #tpu.memory_space<vmem>>, vector<4x8x128xbf16>
    %239 = tpu.concatenate %230, %231, %232, %233, %234, %235, %236, %237, %238 in 2 : vector<4x8x128xbf16>, vector<4x8x128xbf16>, vector<4x8x128xbf16>, vector<4x8x128xbf16>, vector<4x8x128xbf16>, vector<4x8x128xbf16>, vector<4x8x128xbf16>, vector<4x8x128xbf16>, vector<4x8x128xbf16> -> vector<4x8x1152xbf16>
    %240 = vector.shape_cast %239 : vector<4x8x1152xbf16> to vector<32x1152xbf16>
    %c0_241 = arith.constant 0 : index
    %c0_242 = arith.constant 0 : index
    %241 = vector.load %arg16[%c0_241, %c0_242] : memref<1152x64xbf16, #tpu.memory_space<vmem>>, vector<1152x64xbf16>
    %cst_243 = arith.constant dense<0.000000e+00> : vector<32x64xf32>
    %242 = tpu.matmul %240, %241, %cst_243 {dimension_numbers = #tpu.dot_dimension_numbers<[1], [0], [0], [1], [0, 0, 1, 1], [], []>} : vector<32x1152xbf16>, vector<1152x64xbf16>, vector<32x64xf32> -> vector<32x64xf32>
    %c0_244 = arith.constant 0 : index
    %c0_245 = arith.constant 0 : index
    %243 = vector.load %arg17[%c0_244, %c0_245] : memref<1x64xf32, #tpu.memory_space<vmem>>, vector<1x64xf32>
    %244 = vector.broadcast %243 : vector<1x64xf32> to vector<32x64xf32>
    %245 = arith.addf %242, %244 : vector<32x64xf32>
    %cst_246 = arith.constant 2.000000e+01 : f32
    %246 = vector.broadcast %cst_246 : f32 to vector<32x64xf32>
    %247 = arith.minimumf %245, %246 : vector<32x64xf32>
    %248 = math.exp %247 : vector<32x64xf32>
    %cst_247 = arith.constant 1.000000e+00 : f32
    %249 = vector.broadcast %cst_247 : f32 to vector<32x64xf32>
    %250 = arith.addf %249, %248 : vector<32x64xf32>
    %251 = math.log %250 : vector<32x64xf32>
    %252 = math.tanh %251 : vector<32x64xf32>
    %253 = arith.mulf %245, %252 : vector<32x64xf32>
    %254 = vector.shape_cast %253 : vector<32x64xf32> to vector<4x8x64xf32>
    %255 = vector.extract_strided_slice %254 {offsets = [0, 0, 0], sizes = [4, 4, 64], strides = [1, 1, 1]} : vector<4x8x64xf32> to vector<4x4x64xf32>
    %256 = arith.truncf %255 : vector<4x4x64xf32> to vector<4x4x64xbf16>
    %c1_248 = arith.constant 1 : index
    %c1_249 = arith.constant 1 : index
    %c0_250 = arith.constant 0 : index
    %257 = vector.load %arg25[%c1_248, %c1_249, %c0_250] : memref<6x10x128xbf16, #tpu.memory_space<vmem>>, vector<4x4x64xbf16>
    tpu.vector_store %arg25[%c1_248, %c1_249, %c0_250], %256 {strides = array<i32>} : memref<6x10x128xbf16, #tpu.memory_space<vmem>>, vector<4x4x64xbf16>,
    %c0_251 = arith.constant 0 : index
    %c0_252 = arith.constant 0 : index
    %c0_253 = arith.constant 0 : index
    %258 = vector.load %arg25[%c0_251, %c0_252, %c0_253] : memref<6x10x128xbf16, #tpu.memory_space<vmem>>, vector<4x8x64xbf16>
    %c0_254 = arith.constant 0 : index
    %c1_255 = arith.constant 1 : index
    %c0_256 = arith.constant 0 : index
    %259 = vector.load %arg25[%c0_254, %c1_255, %c0_256] : memref<6x10x128xbf16, #tpu.memory_space<vmem>>, vector<4x8x64xbf16>
    %c0_257 = arith.constant 0 : index
    %c2_258 = arith.constant 2 : index
    %c0_259 = arith.constant 0 : index
    %260 = vector.load %arg25[%c0_257, %c2_258, %c0_259] : memref<6x10x128xbf16, #tpu.memory_space<vmem>>, vector<4x8x64xbf16>
    %c1_260 = arith.constant 1 : index
    %c0_261 = arith.constant 0 : index
    %c0_262 = arith.constant 0 : index
    %261 = vector.load %arg25[%c1_260, %c0_261, %c0_262] : memref<6x10x128xbf16, #tpu.memory_space<vmem>>, vector<4x8x64xbf16>
    %c1_263 = arith.constant 1 : index
    %c1_264 = arith.constant 1 : index
    %c0_265 = arith.constant 0 : index
    %262 = vector.load %arg25[%c1_263, %c1_264, %c0_265] : memref<6x10x128xbf16, #tpu.memory_space<vmem>>, vector<4x8x64xbf16>
    %c1_266 = arith.constant 1 : index
    %c2_267 = arith.constant 2 : index
    %c0_268 = arith.constant 0 : index
    %263 = vector.load %arg25[%c1_266, %c2_267, %c0_268] : memref<6x10x128xbf16, #tpu.memory_space<vmem>>, vector<4x8x64xbf16>
    %c2_269 = arith.constant 2 : index
    %c0_270 = arith.constant 0 : index
    %c0_271 = arith.constant 0 : index
    %264 = vector.load %arg25[%c2_269, %c0_270, %c0_271] : memref<6x10x128xbf16, #tpu.memory_space<vmem>>, vector<4x8x64xbf16>
    %c2_272 = arith.constant 2 : index
    %c1_273 = arith.constant 1 : index
    %c0_274 = arith.constant 0 : index
    %265 = vector.load %arg25[%c2_272, %c1_273, %c0_274] : memref<6x10x128xbf16, #tpu.memory_space<vmem>>, vector<4x8x64xbf16>
    %c2_275 = arith.constant 2 : index
    %c2_276 = arith.constant 2 : index
    %c0_277 = arith.constant 0 : index
    %266 = vector.load %arg25[%c2_275, %c2_276, %c0_277] : memref<6x10x128xbf16, #tpu.memory_space<vmem>>, vector<4x8x64xbf16>
    %267 = tpu.concatenate %258, %259, %260, %261, %262, %263, %264, %265, %266 in 2 : vector<4x8x64xbf16>, vector<4x8x64xbf16>, vector<4x8x64xbf16>, vector<4x8x64xbf16>, vector<4x8x64xbf16>, vector<4x8x64xbf16>, vector<4x8x64xbf16>, vector<4x8x64xbf16>, vector<4x8x64xbf16> -> vector<4x8x576xbf16>
    %268 = vector.shape_cast %267 : vector<4x8x576xbf16> to vector<32x576xbf16>
    %c0_278 = arith.constant 0 : index
    %c0_279 = arith.constant 0 : index
    %269 = vector.load %arg18[%c0_278, %c0_279] : memref<576x64xbf16, #tpu.memory_space<vmem>>, vector<576x64xbf16>
    %cst_280 = arith.constant dense<0.000000e+00> : vector<32x64xf32>
    %270 = tpu.matmul %268, %269, %cst_280 {dimension_numbers = #tpu.dot_dimension_numbers<[1], [0], [0], [1], [0, 0, 1, 1], [], []>} : vector<32x576xbf16>, vector<576x64xbf16>, vector<32x64xf32> -> vector<32x64xf32>
    %c0_281 = arith.constant 0 : index
    %c0_282 = arith.constant 0 : index
    %271 = vector.load %arg19[%c0_281, %c0_282] : memref<1x64xf32, #tpu.memory_space<vmem>>, vector<1x64xf32>
    %272 = vector.broadcast %271 : vector<1x64xf32> to vector<32x64xf32>
    %273 = arith.addf %270, %272 : vector<32x64xf32>
    %cst_283 = arith.constant 2.000000e+01 : f32
    %274 = vector.broadcast %cst_283 : f32 to vector<32x64xf32>
    %275 = arith.minimumf %273, %274 : vector<32x64xf32>
    %276 = math.exp %275 : vector<32x64xf32>
    %cst_284 = arith.constant 1.000000e+00 : f32
    %277 = vector.broadcast %cst_284 : f32 to vector<32x64xf32>
    %278 = arith.addf %277, %276 : vector<32x64xf32>
    %279 = math.log %278 : vector<32x64xf32>
    %280 = math.tanh %279 : vector<32x64xf32>
    %281 = arith.mulf %273, %280 : vector<32x64xf32>
    %282 = vector.shape_cast %281 : vector<32x64xf32> to vector<4x8x64xf32>
    %283 = tpu.concatenate %282, %254 in 2 : vector<4x8x64xf32>, vector<4x8x64xf32> -> vector<4x8x128xf32>
    %284 = vector.shape_cast %283 : vector<4x8x128xf32> to vector<32x128xf32>
    %285 = arith.truncf %284 : vector<32x128xf32> to vector<32x128xbf16>
    %c0_285 = arith.constant 0 : index
    %c0_286 = arith.constant 0 : index
    %286 = vector.load %arg20[%c0_285, %c0_286] : memref<128x128xbf16, #tpu.memory_space<vmem>>, vector<128x128xbf16>
    %cst_287 = arith.constant dense<0.000000e+00> : vector<32x128xf32>
    %287 = tpu.matmul %285, %286, %cst_287 {dimension_numbers = #tpu.dot_dimension_numbers<[1], [0], [0], [1], [0, 0, 1, 1], [], []>} : vector<32x128xbf16>, vector<128x128xbf16>, vector<32x128xf32> -> vector<32x128xf32>
    %c0_288 = arith.constant 0 : index
    %c0_289 = arith.constant 0 : index
    %288 = vector.load %arg21[%c0_288, %c0_289] : memref<1x128xf32, #tpu.memory_space<vmem>>, vector<1x128xf32>
    %289 = vector.broadcast %288 : vector<1x128xf32> to vector<32x128xf32>
    %290 = arith.addf %287, %289 : vector<32x128xf32>
    %cst_290 = arith.constant 2.000000e+01 : f32
    %291 = vector.broadcast %cst_290 : f32 to vector<32x128xf32>
    %292 = arith.minimumf %290, %291 : vector<32x128xf32>
    %293 = math.exp %292 : vector<32x128xf32>
    %cst_291 = arith.constant 1.000000e+00 : f32
    %294 = vector.broadcast %cst_291 : f32 to vector<32x128xf32>
    %295 = arith.addf %294, %293 : vector<32x128xf32>
    %296 = math.log %295 : vector<32x128xf32>
    %297 = math.tanh %296 : vector<32x128xf32>
    %298 = arith.mulf %290, %297 : vector<32x128xf32>
    %299 = vector.shape_cast %298 : vector<32x128xf32> to vector<4x8x128xf32>
    %300 = vector.extract_strided_slice %299 {offsets = [0, 0, 0], sizes = [4, 4, 128], strides = [1, 1, 1]} : vector<4x8x128xf32> to vector<4x4x128xf32>
    %301 = vector.shape_cast %300 : vector<4x4x128xf32> to vector<2x2x4x128xf32>
    %302 = vector.extract_strided_slice %301 {offsets = [0, 0, 0, 0], sizes = [2, 1, 4, 128], strides = [1, 1, 1, 1]} : vector<2x2x4x128xf32> to vector<2x1x4x128xf32>
    %303 = vector.shape_cast %302 : vector<2x1x4x128xf32> to vector<2x4x128xf32>
    %304 = vector.extract_strided_slice %301 {offsets = [0, 1, 0, 0], sizes = [2, 1, 4, 128], strides = [1, 1, 1, 1]} : vector<2x2x4x128xf32> to vector<2x1x4x128xf32>
    %305 = vector.shape_cast %304 : vector<2x1x4x128xf32> to vector<2x4x128xf32>
    %306 = arith.maximumf %303, %305 : vector<2x4x128xf32>
    %c0_292 = arith.constant 0 : index
    %c0_293 = arith.constant 0 : index
    %c0_294 = arith.constant 0 : index
    %307 = vector.load %arg26[%c0_292, %c0_293, %c0_294] : memref<4x8x128xf32, #tpu.memory_space<vmem>>, vector<2x4x128xf32>
    tpu.vector_store %arg26[%c0_292, %c0_293, %c0_294], %306 {strides = array<i32>} : memref<4x8x128xf32, #tpu.memory_space<vmem>>, vector<2x4x128xf32>,
    %c0_295 = arith.constant 0 : index
    %c0_296 = arith.constant 0 : index
    %c0_297 = arith.constant 0 : index
    %308 = tpu.strided_load %arg26[%c0_295, %c0_296, %c0_297] {strides = array<i32: 1, 2, 1>} : memref<4x8x128xf32, #tpu.memory_space<vmem>>, vector<2x2x128xf32>
    %c0_298 = arith.constant 0 : index
    %c1_299 = arith.constant 1 : index
    %c0_300 = arith.constant 0 : index
    %309 = tpu.strided_load %arg26[%c0_298, %c1_299, %c0_300] {strides = array<i32: 1, 2, 1>} : memref<4x8x128xf32, #tpu.memory_space<vmem>>, vector<2x2x128xf32>
    %310 = arith.maximumf %308, %309 : vector<2x2x128xf32>
    %c0_301 = arith.constant 0 : index
    %c0_302 = arith.constant 0 : index
    %c0_303 = arith.constant 0 : index
    %c0_304 = arith.constant 0 : index
    %311 = vector.load %arg22[%c0_301, %c0_302, %c0_303, %c0_304] : memref<1x2x2x256xf32, #tpu.memory_space<vmem>>, vector<1x2x2x128xf32>
    %312 = vector.shape_cast %311 : vector<1x2x2x128xf32> to vector<2x2x128xf32>
    %313 = vector.shape_cast %310 : vector<2x2x128xf32> to vector<1x2x2x128xf32>
    tpu.vector_store %arg22[%c0_301, %c0_302, %c0_303, %c0_304], %313 {strides = array<i32>} : memref<1x2x2x256xf32, #tpu.memory_space<vmem>>, vector<1x2x2x128xf32>,
    %314 = vector.extract_strided_slice %226 {offsets = [0, 0, 0], sizes = [4, 4, 128], strides = [1, 1, 1]} : vector<4x8x128xf32> to vector<4x4x128xf32>
    %315 = vector.shape_cast %314 : vector<4x4x128xf32> to vector<2x2x4x128xf32>
    %316 = vector.extract_strided_slice %315 {offsets = [0, 0, 0, 0], sizes = [2, 1, 4, 128], strides = [1, 1, 1, 1]} : vector<2x2x4x128xf32> to vector<2x1x4x128xf32>
    %317 = vector.shape_cast %316 : vector<2x1x4x128xf32> to vector<2x4x128xf32>
    %318 = vector.extract_strided_slice %315 {offsets = [0, 1, 0, 0], sizes = [2, 1, 4, 128], strides = [1, 1, 1, 1]} : vector<2x2x4x128xf32> to vector<2x1x4x128xf32>
    %319 = vector.shape_cast %318 : vector<2x1x4x128xf32> to vector<2x4x128xf32>
    %320 = arith.maximumf %317, %319 : vector<2x4x128xf32>
    %c0_305 = arith.constant 0 : index
    %c0_306 = arith.constant 0 : index
    %c0_307 = arith.constant 0 : index
    %321 = vector.load %arg26[%c0_305, %c0_306, %c0_307] : memref<4x8x128xf32, #tpu.memory_space<vmem>>, vector<2x4x128xf32>
    tpu.vector_store %arg26[%c0_305, %c0_306, %c0_307], %320 {strides = array<i32>} : memref<4x8x128xf32, #tpu.memory_space<vmem>>, vector<2x4x128xf32>,
    %c0_308 = arith.constant 0 : index
    %c0_309 = arith.constant 0 : index
    %c0_310 = arith.constant 0 : index
    %322 = tpu.strided_load %arg26[%c0_308, %c0_309, %c0_310] {strides = array<i32: 1, 2, 1>} : memref<4x8x128xf32, #tpu.memory_space<vmem>>, vector<2x2x128xf32>
    %c0_311 = arith.constant 0 : index
    %c1_312 = arith.constant 1 : index
    %c0_313 = arith.constant 0 : index
    %323 = tpu.strided_load %arg26[%c0_311, %c1_312, %c0_313] {strides = array<i32: 1, 2, 1>} : memref<4x8x128xf32, #tpu.memory_space<vmem>>, vector<2x2x128xf32>
    %324 = arith.maximumf %322, %323 : vector<2x2x128xf32>
    %c0_314 = arith.constant 0 : index
    %c0_315 = arith.constant 0 : index
    %c0_316 = arith.constant 0 : index
    %c128 = arith.constant 128 : index
    %325 = vector.load %arg22[%c0_314, %c0_315, %c0_316, %c128] : memref<1x2x2x256xf32, #tpu.memory_space<vmem>>, vector<1x2x2x128xf32>
    %326 = vector.shape_cast %325 : vector<1x2x2x128xf32> to vector<2x2x128xf32>
    %327 = vector.shape_cast %324 : vector<2x2x128xf32> to vector<1x2x2x128xf32>
    tpu.vector_store %arg22[%c0_314, %c0_315, %c0_316, %c128], %327 {strides = array<i32>} : memref<1x2x2x256xf32, #tpu.memory_space<vmem>>, vector<1x2x2x128xf32>,
    return
  }
  func.func @transform_0(%arg0: i32) -> (i32, i32, i32, i32) {
    %c0_i32 = arith.constant 0 : i32
    %c0_i32_0 = arith.constant 0 : i32
    %c0_i32_1 = arith.constant 0 : i32
    %c0_i32_2 = arith.constant 0 : i32
    return %arg0, %c0_i32, %c0_i32_0, %c0_i32_1 : i32, i32, i32, i32
  }
  func.func @transform_1(%arg0: i32) -> (i32, i32) {
    %c0_i32 = arith.constant 0 : i32
    %c0_i32_0 = arith.constant 0 : i32
    %c0_i32_1 = arith.constant 0 : i32
    return %c0_i32, %c0_i32_0 : i32, i32
  }
  func.func @transform_2(%arg0: i32) -> (i32, i32) {
    %c0_i32 = arith.constant 0 : i32
    %c0_i32_0 = arith.constant 0 : i32
    %c0_i32_1 = arith.constant 0 : i32
    return %c0_i32, %c0_i32_0 : i32, i32
  }
  func.func @transform_3(%arg0: i32) -> (i32, i32) {
    %c0_i32 = arith.constant 0 : i32
    %c0_i32_0 = arith.constant 0 : i32
    %c0_i32_1 = arith.constant 0 : i32
    return %c0_i32, %c0_i32_0 : i32, i32
  }
  func.func @transform_4(%arg0: i32) -> (i32, i32) {
    %c0_i32 = arith.constant 0 : i32
    %c0_i32_0 = arith.constant 0 : i32
    %c0_i32_1 = arith.constant 0 : i32
    return %c0_i32, %c0_i32_0 : i32, i32
  }
  func.func @transform_5(%arg0: i32) -> (i32, i32) {
    %c0_i32 = arith.constant 0 : i32
    %c0_i32_0 = arith.constant 0 : i32
    %c0_i32_1 = arith.constant 0 : i32
    return %c0_i32, %c0_i32_0 : i32, i32
  }
  func.func @transform_6(%arg0: i32) -> (i32, i32) {
    %c0_i32 = arith.constant 0 : i32
    %c0_i32_0 = arith.constant 0 : i32
    %c0_i32_1 = arith.constant 0 : i32
    return %c0_i32, %c0_i32_0 : i32, i32
  }
  func.func @transform_7(%arg0: i32) -> (i32, i32) {
    %c0_i32 = arith.constant 0 : i32
    %c0_i32_0 = arith.constant 0 : i32
    %c0_i32_1 = arith.constant 0 : i32
    return %c0_i32, %c0_i32_0 : i32, i32
  }
  func.func @transform_8(%arg0: i32) -> (i32, i32) {
    %c0_i32 = arith.constant 0 : i32
    %c0_i32_0 = arith.constant 0 : i32
    %c0_i32_1 = arith.constant 0 : i32
    return %c0_i32, %c0_i32_0 : i32, i32
  }
  func.func @transform_9(%arg0: i32) -> (i32, i32) {
    %c0_i32 = arith.constant 0 : i32
    %c0_i32_0 = arith.constant 0 : i32
    %c0_i32_1 = arith.constant 0 : i32
    return %c0_i32, %c0_i32_0 : i32, i32
  }
  func.func @transform_10(%arg0: i32) -> (i32, i32) {
    %c0_i32 = arith.constant 0 : i32
    %c0_i32_0 = arith.constant 0 : i32
    %c0_i32_1 = arith.constant 0 : i32
    return %c0_i32, %c0_i32_0 : i32, i32
  }
  func.func @transform_11(%arg0: i32) -> (i32, i32) {
    %c0_i32 = arith.constant 0 : i32
    %c0_i32_0 = arith.constant 0 : i32
    %c0_i32_1 = arith.constant 0 : i32
    return %c0_i32, %c0_i32_0 : i32, i32
  }
  func.func @transform_12(%arg0: i32) -> (i32, i32) {
    %c0_i32 = arith.constant 0 : i32
    %c0_i32_0 = arith.constant 0 : i32
    %c0_i32_1 = arith.constant 0 : i32
    return %c0_i32, %c0_i32_0 : i32, i32
  }
  func.func @transform_13(%arg0: i32) -> (i32, i32) {
    %c0_i32 = arith.constant 0 : i32
    %c0_i32_0 = arith.constant 0 : i32
    %c0_i32_1 = arith.constant 0 : i32
    return %c0_i32, %c0_i32_0 : i32, i32
  }
  func.func @transform_14(%arg0: i32) -> (i32, i32) {
    %c0_i32 = arith.constant 0 : i32
    %c0_i32_0 = arith.constant 0 : i32
    %c0_i32_1 = arith.constant 0 : i32
    return %c0_i32, %c0_i32_0 : i32, i32
  }
  func.func @transform_15(%arg0: i32) -> (i32, i32) {
    %c0_i32 = arith.constant 0 : i32
    %c0_i32_0 = arith.constant 0 : i32
    %c0_i32_1 = arith.constant 0 : i32
    return %c0_i32, %c0_i32_0 : i32, i32
  }
  func.func @transform_16(%arg0: i32) -> (i32, i32) {
    %c0_i32 = arith.constant 0 : i32
    %c0_i32_0 = arith.constant 0 : i32
    %c0_i32_1 = arith.constant 0 : i32
    return %c0_i32, %c0_i32_0 : i32, i32
  }
  func.func @transform_17(%arg0: i32) -> (i32, i32) {
    %c0_i32 = arith.constant 0 : i32
    %c0_i32_0 = arith.constant 0 : i32
    %c0_i32_1 = arith.constant 0 : i32
    return %c0_i32, %c0_i32_0 : i32, i32
  }
  func.func @transform_18(%arg0: i32) -> (i32, i32) {
    %c0_i32 = arith.constant 0 : i32
    %c0_i32_0 = arith.constant 0 : i32
    %c0_i32_1 = arith.constant 0 : i32
    return %c0_i32, %c0_i32_0 : i32, i32
  }
  func.func @transform_19(%arg0: i32) -> (i32, i32) {
    %c0_i32 = arith.constant 0 : i32
    %c0_i32_0 = arith.constant 0 : i32
    %c0_i32_1 = arith.constant 0 : i32
    return %c0_i32, %c0_i32_0 : i32, i32
  }
  func.func @transform_20(%arg0: i32) -> (i32, i32) {
    %c0_i32 = arith.constant 0 : i32
    %c0_i32_0 = arith.constant 0 : i32
    %c0_i32_1 = arith.constant 0 : i32
    return %c0_i32, %c0_i32_0 : i32, i32
  }
  func.func @transform_21(%arg0: i32) -> (i32, i32, i32, i32) {
    %c0_i32 = arith.constant 0 : i32
    %c0_i32_0 = arith.constant 0 : i32
    %c0_i32_1 = arith.constant 0 : i32
    %c0_i32_2 = arith.constant 0 : i32
    return %arg0, %c0_i32, %c0_i32_0, %c0_i32_1 : i32, i32, i32, i32
  }
}

</mosaic_0001>

<llo_original>
// kernel: tinybone_forward.1
$region0: #{tinybone_forward.1}
  #allocation0 [shape = 'u32[]', space=smem, size = 0x4, offset = 0x4, fixed_abs, tag = 'smem constant byte address 0x4 - core index']
  #allocation1 [shape = 'u32[144,128]{1,0:T(1,128)}', space=vmem, size = 0x12000, scoped, tag = 'internal scratch']
  #allocation2 [shape = 'f32[18,18,32]{2,1,0:T(8,128)}', space=vmem, size = 0x36000, scoped, tag = 'scratch operand']
  #allocation3 [shape = 'bf16[10,10,64]{2,1,0:T(8,128)(2,1)}', space=vmem, size = 0xa000, scoped, tag = 'scratch operand']
  #allocation4 [shape = 'bf16[6,10,128]{2,1,0:T(8,128)(2,1)}', space=vmem, size = 0x6000, scoped, tag = 'scratch operand']
  #allocation5 [shape = 'f32[4,8,128]{2,1,0:T(8,128)}', space=vmem, size = 0x4000, scoped, tag = 'scratch operand']
  %s0 = inlined_call_operand.vmem [shape: f32[2,16,16,36], index: 0, kind: input, shape index: {}]
  %s1 = inlined_call_operand.vmem [shape: bf16[36,32], index: 1, kind: input, shape index: {}]
  %s2 = inlined_call_operand.vmem [shape: f32[1,32], index: 2, kind: input, shape index: {}]
  %s3 = inlined_call_operand.vmem [shape: bf16[288,64], index: 3, kind: input, shape index: {}]
  %s4 = inlined_call_operand.vmem [shape: f32[1,64], index: 4, kind: input, shape index: {}]
  %s5 = inlined_call_operand.vmem [shape: bf16[576,64], index: 5, kind: input, shape index: {}]
  %s6 = inlined_call_operand.vmem [shape: f32[1,64], index: 6, kind: input, shape index: {}]
  %s7 = inlined_call_operand.vmem [shape: bf16[576,32], index: 7, kind: input, shape index: {}]
  %s8 = inlined_call_operand.vmem [shape: f32[1,32], index: 8, kind: input, shape index: {}]
  %s9 = inlined_call_operand.vmem [shape: bf16[288,32], index: 9, kind: input, shape index: {}]
  %s10 = inlined_call_operand.vmem [shape: f32[1,32], index: 10, kind: input, shape index: {}]
  %s11 = inlined_call_operand.vmem [shape: bf16[64,64], index: 11, kind: input, shape index: {}]
  %s12 = inlined_call_operand.vmem [shape: f32[1,64], index: 12, kind: input, shape index: {}]
  %s13 = inlined_call_operand.vmem [shape: bf16[1152,128], index: 13, kind: input, shape index: {}]
  %s14 = inlined_call_operand.vmem [shape: f32[1,128], index: 14, kind: input, shape index: {}]
  %s15 = inlined_call_operand.vmem [shape: bf16[1152,64], index: 15, kind: input, shape index: {}]
  %s16 = inlined_call_operand.vmem [shape: f32[1,64], index: 16, kind: input, shape index: {}]
  %s17 = inlined_call_operand.vmem [shape: bf16[576,64], index: 17, kind: input, shape index: {}]
  %s18 = inlined_call_operand.vmem [shape: f32[1,64], index: 18, kind: input, shape index: {}]
  %s19 = inlined_call_operand.vmem [shape: bf16[128,128], index: 19, kind: input, shape index: {}]
  %s20 = inlined_call_operand.vmem [shape: f32[1,128], index: 20, kind: input, shape index: {}]
  %s21 = inlined_call_operand.hbm [shape: f32[2,2,2,256], index: 21, kind: output, shape index: {}]
  %s22 = sld [smem:[#allocation0]]
  $region117: #{tinybone_forward.1} parent=0
    _
  %s24 = ssub.s32 1, %s22
  %s25 = scalar_select 0, %s24, %s22
  $region1: #{tinybone_forward.1} parent=0
    #allocation6 [shape = 'u8[8192]{0}', space=vmem, size = 0x2000, scoped, tag = 'output window, operand 0']
    #allocation7 [shape = 's32[2]{0}', space=sflag, size = 0x8, scoped, tag = 'scoped memory for tinybone_forward.1']
    %26 = vsyncpa [#allocation7], 0
    %s27 = scalar_lea.sflag [#allocation7], 1
    %28 = vsyncpa %s27, 0
    loop: start=0, step=1, limit=4
    $region2: #{tinybone_forward.1} parent=1 // loop_pre_header
      _
    $region3: #{tinybone_forward.1} parent=1 // loop_header
      %s30 = sphi 0, %s34
      %p31 = scmp.ge.s32.totalorder %s30, 4
      %s40 = sphi 0, %s42
      %s43 = sphi 0, %s40
      %s44 = sphi 0, %s43
      %s60 = sphi 0, %s44
      %s64 = sphi 0, %s64
      %s66 = sphi 0, %s64
      %s67 = sphi 0, %s66
      %s81 = sphi 0, %s67
      %s85 = sphi 0, %s85
      %s87 = sphi 0, %s85
      %s88 = sphi 0, %s87
      %s102 = sphi 0, %s88
      %s106 = sphi 0, %s106
      %s108 = sphi 0, %s106
      %s109 = sphi 0, %s108
      %s123 = sphi 0, %s109
      %s127 = sphi 0, %s127
      %s129 = sphi 0, %s127
      %s130 = sphi 0, %s129
      %s144 = sphi 0, %s130
      %s148 = sphi 0, %s148
      %s150 = sphi 0, %s148
      %s151 = sphi 0, %s150
      %s165 = sphi 0, %s151
      %s169 = sphi 0, %s169
      %s171 = sphi 0, %s169
      %s172 = sphi 0, %s171
      %s186 = sphi 0, %s172
      %s190 = sphi 0, %s190
      %s192 = sphi 0, %s190
      %s193 = sphi 0, %s192
      %s207 = sphi 0, %s193
      %s211 = sphi 0, %s211
      %s213 = sphi 0, %s211
      %s214 = sphi 0, %s213
      %s228 = sphi 0, %s214
      %s232 = sphi 0, %s232
      %s234 = sphi 0, %s232
      %s235 = sphi 0, %s234
      %s249 = sphi 0, %s235
      %s253 = sphi 0, %s253
      %s255 = sphi 0, %s253
      %s256 = sphi 0, %s255
      %s270 = sphi 0, %s256
      %s274 = sphi 0, %s274
      %s276 = sphi 0, %s274
      %s277 = sphi 0, %s276
      %s291 = sphi 0, %s277
      %s295 = sphi 0, %s295
      %s297 = sphi 0, %s295
      %s298 = sphi 0, %s297
      %s312 = sphi 0, %s298
      %s316 = sphi 0, %s316
      %s318 = sphi 0, %s316
      %s319 = sphi 0, %s318
      %s333 = sphi 0, %s319
      %s337 = sphi 0, %s337
      %s339 = sphi 0, %s337
      %s340 = sphi 0, %s339
      %s354 = sphi 0, %s340
      %s358 = sphi 0, %s358
      %s360 = sphi 0, %s358
      %s361 = sphi 0, %s360
      %s375 = sphi 0, %s361
      %s379 = sphi 0, %s379
      %s381 = sphi 0, %s379
      %s382 = sphi 0, %s381
      %s396 = sphi 0, %s382
      %s400 = sphi 0, %s400
      %s402 = sphi 0, %s400
      %s403 = sphi 0, %s402
      %s417 = sphi 0, %s403
      %s421 = sphi 0, %s421
      %s423 = sphi 0, %s421
      %s424 = sphi 0, %s423
      %s438 = sphi 0, %s424
      %s442 = sphi 0, %s442
      %s444 = sphi 0, %s442
      %s445 = sphi 0, %s444
      %s459 = sphi 0, %s445
      %s463 = sphi 0, %s463
      %s465 = sphi 0, %s463
      %s466 = sphi 0, %s465
      %s480 = sphi 0, %s466
      %s486 = sphi 0, %s488
      %s489 = sphi 0, %s486
      %s490 = sphi 0, %s489
      %s506 = sphi 0, %s490
    $region4: #{tinybone_forward.1} parent=1 // loop_header_branch
      %33 = sbr.rel (%p31) target = $region8
    $region5: #{tinybone_forward.1} parent=1 // loop_body
      %s35 = ssub.s32 %s30, 1
      %s36 = ssub.s32 %s30, 2
      %s37 = sadd.s32 %s30, 1
      %s38 = ssub.s32 %s30, %s37
      %p39 = scmp.eq.s32.totalorder %s38, 0
      %s41 = sadd.s32 %s40, 1
      %s42 = scalar_select %p39, %s40, %s41
      %p45 = pneg %p39
      %p46 = scmp.eq.s32.totalorder %s30, 1
      %p47 = por %p45, %p46
      %p48 = scmp.ne.s32.totalorder %s40, %s43
      %p49 = scmp.eq.s32.totalorder %s30, 0
      %p50 = por %p48, %p49
      %p51 = scmp.ne.s32.totalorder %s40, %s43
      %p52 = scmp.eq.s32.totalorder %s35, 1
      %p53 = por %p51, %p52
      %p54 = scmp.ne.s32.totalorder %s43, %s44
      %p55 = scmp.eq.s32.totalorder %s35, 0
      %p56 = por %p54, %p55
      %p57 = scmp.ne.s32.totalorder %s43, %s44
      %p58 = scmp.eq.s32.totalorder %s36, 1
      %p59 = por %p57, %p58
      %p61 = scmp.ne.s32.totalorder %s44, %s60
      %p62 = scmp.eq.s32.totalorder %s36, 0
      %p63 = por %p61, %p62
      %s65 = sadd.s32 %s64, 1
      %p68 = scmp.eq.s32.totalorder %s30, 1
      %p69 = scmp.ne.s32.totalorder %s64, %s66
      %p70 = scmp.eq.s32.totalorder %s30, 0
      %p71 = por %p69, %p70
      %p72 = scmp.ne.s32.totalorder %s64, %s66
      %p73 = scmp.eq.s32.totalorder %s35, 1
      %p74 = por %p72, %p73
      %p75 = scmp.ne.s32.totalorder %s66, %s67
      %p76 = scmp.eq.s32.totalorder %s35, 0
      %p77 = por %p75, %p76
      %p78 = scmp.ne.s32.totalorder %s66, %s67
      %p79 = scmp.eq.s32.totalorder %s36, 1
      %p80 = por %p78, %p79
      %p82 = scmp.ne.s32.totalorder %s67, %s81
      %p83 = scmp.eq.s32.totalorder %s36, 0
      %p84 = por %p82, %p83
      %s86 = sadd.s32 %s85, 1
      %p89 = scmp.eq.s32.totalorder %s30, 1
      %p90 = scmp.ne.s32.totalorder %s85, %s87
      %p91 = scmp.eq.s32.totalorder %s30, 0
      %p92 = por %p90, %p91
      %p93 = scmp.ne.s32.totalorder %s85, %s87
      %p94 = scmp.eq.s32.totalorder %s35, 1
      %p95 = por %p93, %p94
      %p96 = scmp.ne.s32.totalorder %s87, %s88
      %p97 = scmp.eq.s32.totalorder %s35, 0
      %p98 = por %p96, %p97
      %p99 = scmp.ne.s32.totalorder %s87, %s88
      %p100 = scmp.eq.s32.totalorder %s36, 1
      %p101 = por %p99, %p100
      %p103 = scmp.ne.s32.totalorder %s88, %s102
      %p104 = scmp.eq.s32.totalorder %s36, 0
      %p105 = por %p103, %p104
      %s107 = sadd.s32 %s106, 1
      %p110 = scmp.eq.s32.totalorder %s30, 1
      %p111 = scmp.ne.s32.totalorder %s106, %s108
      %p112 = scmp.eq.s32.totalorder %s30, 0
      %p113 = por %p111, %p112
      %p114 = scmp.ne.s32.totalorder %s106, %s108
      %p115 = scmp.eq.s32.totalorder %s35, 1
      %p116 = por %p114, %p115
      %p117 = scmp.ne.s32.totalorder %s108, %s109
      %p118 = scmp.eq.s32.totalorder %s35, 0
      %p119 = por %p117, %p118
      %p120 = scmp.ne.s32.totalorder %s108, %s109
      %p121 = scmp.eq.s32.totalorder %s36, 1
      %p122 = por %p120, %p121
      %p124 = scmp.ne.s32.totalorder %s109, %s123
      %p125 = scmp.eq.s32.totalorder %s36, 0
      %p126 = por %p124, %p125
      %s128 = sadd.s32 %s127, 1
      %p131 = scmp.eq.s32.totalorder %s30, 1
      %p132 = scmp.ne.s32.totalorder %s127, %s129
      %p133 = scmp.eq.s32.totalorder %s30, 0
      %p134 = por %p132, %p133
      %p135 = scmp.ne.s32.totalorder %s127, %s129
      %p136 = scmp.eq.s32.totalorder %s35, 1
      %p137 = por %p135, %p136
      %p138 = scmp.ne.s32.totalorder %s129, %s130
      %p139 = scmp.eq.s32.totalorder %s35, 0
      %p140 = por %p138, %p139
      %p141 = scmp.ne.s32.totalorder %s129, %s130
      %p142 = scmp.eq.s32.totalorder %s36, 1
      %p143 = por %p141, %p142
      %p145 = scmp.ne.s32.totalorder %s130, %s144
      %p146 = scmp.eq.s32.totalorder %s36, 0
      %p147 = por %p145, %p146
      %s149 = sadd.s32 %s148, 1
      %p152 = scmp.eq.s32.totalorder %s30, 1
      %p153 = scmp.ne.s32.totalorder %s148, %s150
      %p154 = scmp.eq.s32.totalorder %s30, 0
      %p155 = por %p153, %p154
      %p156 = scmp.ne.s32.totalorder %s148, %s150
      %p157 = scmp.eq.s32.totalorder %s35, 1
      %p158 = por %p156, %p157
      %p159 = scmp.ne.s32.totalorder %s150, %s151
      %p160 = scmp.eq.s32.totalorder %s35, 0
      %p161 = por %p159, %p160
      %p162 = scmp.ne.s32.totalorder %s150, %s151
      %p163 = scmp.eq.s32.totalorder %s36, 1
      %p164 = por %p162, %p163
      %p166 = scmp.ne.s32.totalorder %s151, %s165
      %p167 = scmp.eq.s32.totalorder %s36, 0
      %p168 = por %p166, %p167
      %s170 = sadd.s32 %s169, 1
      %p173 = scmp.eq.s32.totalorder %s30, 1
      %p174 = scmp.ne.s32.totalorder %s169, %s171
      %p175 = scmp.eq.s32.totalorder %s30, 0
      %p176 = por %p174, %p175
      %p177 = scmp.ne.s32.totalorder %s169, %s171
      %p178 = scmp.eq.s32.totalorder %s35, 1
      %p179 = por %p177, %p178
      %p180 = scmp.ne.s32.totalorder %s171, %s172
      %p181 = scmp.eq.s32.totalorder %s35, 0
      %p182 = por %p180, %p181
      %p183 = scmp.ne.s32.totalorder %s171, %s172
      %p184 = scmp.eq.s32.totalorder %s36, 1
      %p185 = por %p183, %p184
      %p187 = scmp.ne.s32.totalorder %s172, %s186
      %p188 = scmp.eq.s32.totalorder %s36, 0
      %p189 = por %p187, %p188
      %s191 = sadd.s32 %s190, 1
      %p194 = scmp.eq.s32.totalorder %s30, 1
      %p195 = scmp.ne.s32.totalorder %s190, %s192
      %p196 = scmp.eq.s32.totalorder %s30, 0
      %p197 = por %p195, %p196
      %p198 = scmp.ne.s32.totalorder %s190, %s192
      %p199 = scmp.eq.s32.totalorder %s35, 1
      %p200 = por %p198, %p199
      %p201 = scmp.ne.s32.totalorder %s192, %s193
      %p202 = scmp.eq.s32.totalorder %s35, 0
      %p203 = por %p201, %p202
      %p204 = scmp.ne.s32.totalorder %s192, %s193
      %p205 = scmp.eq.s32.totalorder %s36, 1
      %p206 = por %p204, %p205
      %p208 = scmp.ne.s32.totalorder %s193, %s207
      %p209 = scmp.eq.s32.totalorder %s36, 0
      %p210 = por %p208, %p209
      %s212 = sadd.s32 %s211, 1
      %p215 = scmp.eq.s32.totalorder %s30, 1
      %p216 = scmp.ne.s32.totalorder %s211, %s213
      %p217 = scmp.eq.s32.totalorder %s30, 0
      %p218 = por %p216, %p217
      %p219 = scmp.ne.s32.totalorder %s211, %s213
      %p220 = scmp.eq.s32.totalorder %s35, 1
      %p221 = por %p219, %p220
      %p222 = scmp.ne.s32.totalorder %s213, %s214
      %p223 = scmp.eq.s32.totalorder %s35, 0
      %p224 = por %p222, %p223
      %p225 = scmp.ne.s32.totalorder %s213, %s214
      %p226 = scmp.eq.s32.totalorder %s36, 1
      %p227 = por %p225, %p226
      %p229 = scmp.ne.s32.totalorder %s214, %s228
      %p230 = scmp.eq.s32.totalorder %s36, 0
      %p231 = por %p229, %p230
      %s233 = sadd.s32 %s232, 1
      %p236 = scmp.eq.s32.totalorder %s30, 1
      %p237 = scmp.ne.s32.totalorder %s232, %s234
      %p238 = scmp.eq.s32.totalorder %s30, 0
      %p239 = por %p237, %p238
      %p240 = scmp.ne.s32.totalorder %s232, %s234
      %p241 = scmp.eq.s32.totalorder %s35, 1
      %p242 = por %p240, %p241
      %p243 = scmp.ne.s32.totalorder %s234, %s235
      %p244 = scmp.eq.s32.totalorder %s35, 0
      %p245 = por %p243, %p244
      %p246 = scmp.ne.s32.totalorder %s234, %s235
      %p247 = scmp.eq.s32.totalorder %s36, 1
      %p248 = por %p246, %p247
      %p250 = scmp.ne.s32.totalorder %s235, %s249
      %p251 = scmp.eq.s32.totalorder %s36, 0
      %p252 = por %p250, %p251
      %s254 = sadd.s32 %s253, 1
      %p257 = scmp.eq.s32.totalorder %s30, 1
      %p258 = scmp.ne.s32.totalorder %s253, %s255
      %p259 = scmp.eq.s32.totalorder %s30, 0
      %p260 = por %p258, %p259
      %p261 = scmp.ne.s32.totalorder %s253, %s255
      %p262 = scmp.eq.s32.totalorder %s35, 1
      %p263 = por %p261, %p262
      %p264 = scmp.ne.s32.totalorder %s255, %s256
      %p265 = scmp.eq.s32.totalorder %s35, 0
      %p266 = por %p264, %p265
      %p267 = scmp.ne.s32.totalorder %s255, %s256
      %p268 = scmp.eq.s32.totalorder %s36, 1
      %p269 = por %p267, %p268
      %p271 = scmp.ne.s32.totalorder %s256, %s270
      %p272 = scmp.eq.s32.totalorder %s36, 0
      %p273 = por %p271, %p272
      %s275 = sadd.s32 %s274, 1
      %p278 = scmp.eq.s32.totalorder %s30, 1
      %p279 = scmp.ne.s32.totalorder %s274, %s276
      %p280 = scmp.eq.s32.totalorder %s30, 0
      %p281 = por %p279, %p280
      %p282 = scmp.ne.s32.totalorder %s274, %s276
      %p283 = scmp.eq.s32.totalorder %s35, 1
      %p284 = por %p282, %p283
      %p285 = scmp.ne.s32.totalorder %s276, %s277
      %p286 = scmp.eq.s32.totalorder %s35, 0
      %p287 = por %p285, %p286
      %p288 = scmp.ne.s32.totalorder %s276, %s277
      %p289 = scmp.eq.s32.totalorder %s36, 1
      %p290 = por %p288, %p289
      %p292 = scmp.ne.s32.totalorder %s277, %s291
      %p293 = scmp.eq.s32.totalorder %s36, 0
      %p294 = por %p292, %p293
      %s296 = sadd.s32 %s295, 1
      %p299 = scmp.eq.s32.totalorder %s30, 1
      %p300 = scmp.ne.s32.totalorder %s295, %s297
      %p301 = scmp.eq.s32.totalorder %s30, 0
      %p302 = por %p300, %p301
      %p303 = scmp.ne.s32.totalorder %s295, %s297
      %p304 = scmp.eq.s32.totalorder %s35, 1
      %p305 = por %p303, %p304
      %p306 = scmp.ne.s32.totalorder %s297, %s298
      %p307 = scmp.eq.s32.totalorder %s35, 0
      %p308 = por %p306, %p307
      %p309 = scmp.ne.s32.totalorder %s297, %s298
      %p310 = scmp.eq.s32.totalorder %s36, 1
      %p311 = por %p309, %p310
      %p313 = scmp.ne.s32.totalorder %s298, %s312
      %p314 = scmp.eq.s32.totalorder %s36, 0
      %p315 = por %p313, %p314
      %s317 = sadd.s32 %s316, 1
      %p320 = scmp.eq.s32.totalorder %s30, 1
      %p321 = scmp.ne.s32.totalorder %s316, %s318
      %p322 = scmp.eq.s32.totalorder %s30, 0
      %p323 = por %p321, %p322
      %p324 = scmp.ne.s32.totalorder %s316, %s318
      %p325 = scmp.eq.s32.totalorder %s35, 1
      %p326 = por %p324, %p325
      %p327 = scmp.ne.s32.totalorder %s318, %s319
      %p328 = scmp.eq.s32.totalorder %s35, 0
      %p329 = por %p327, %p328
      %p330 = scmp.ne.s32.totalorder %s318, %s319
      %p331 = scmp.eq.s32.totalorder %s36, 1
      %p332 = por %p330, %p331
      %p334 = scmp.ne.s32.totalorder %s319, %s333
      %p335 = scmp.eq.s32.totalorder %s36, 0
      %p336 = por %p334, %p335
      %s338 = sadd.s32 %s337, 1
      %p341 = scmp.eq.s32.totalorder %s30, 1
      %p342 = scmp.ne.s32.totalorder %s337, %s339
      %p343 = scmp.eq.s32.totalorder %s30, 0
      %p344 = por %p342, %p343
      %p345 = scmp.ne.s32.totalorder %s337, %s339
      %p346 = scmp.eq.s32.totalorder %s35, 1
      %p347 = por %p345, %p346
      %p348 = scmp.ne.s32.totalorder %s339, %s340
      %p349 = scmp.eq.s32.totalorder %s35, 0
      %p350 = por %p348, %p349
      %p351 = scmp.ne.s32.totalorder %s339, %s340
      %p352 = scmp.eq.s32.totalorder %s36, 1
      %p353 = por %p351, %p352
      %p355 = scmp.ne.s32.totalorder %s340, %s354
      %p356 = scmp.eq.s32.totalorder %s36, 0
      %p357 = por %p355, %p356
      %s359 = sadd.s32 %s358, 1
      %p362 = scmp.eq.s32.totalorder %s30, 1
      %p363 = scmp.ne.s32.totalorder %s358, %s360
      %p364 = scmp.eq.s32.totalorder %s30, 0
      %p365 = por %p363, %p364
      %p366 = scmp.ne.s32.totalorder %s358, %s360
      %p367 = scmp.eq.s32.totalorder %s35, 1
      %p368 = por %p366, %p367
      %p369 = scmp.ne.s32.totalorder %s360, %s361
      %p370 = scmp.eq.s32.totalorder %s35, 0
      %p371 = por %p369, %p370
      %p372 = scmp.ne.s32.totalorder %s360, %s361
      %p373 = scmp.eq.s32.totalorder %s36, 1
      %p374 = por %p372, %p373
      %p376 = scmp.ne.s32.totalorder %s361, %s375
      %p377 = scmp.eq.s32.totalorder %s36, 0
      %p378 = por %p376, %p377
      %s380 = sadd.s32 %s379, 1
      %p383 = scmp.eq.s32.totalorder %s30, 1
      %p384 = scmp.ne.s32.totalorder %s379, %s381
      %p385 = scmp.eq.s32.totalorder %s30, 0
      %p386 = por %p384, %p385
      %p387 = scmp.ne.s32.totalorder %s379, %s381
      %p388 = scmp.eq.s32.totalorder %s35, 1
      %p389 = por %p387, %p388
      %p390 = scmp.ne.s32.totalorder %s381, %s382
      %p391 = scmp.eq.s32.totalorder %s35, 0
      %p392 = por %p390, %p391
      %p393 = scmp.ne.s32.totalorder %s381, %s382
      %p394 = scmp.eq.s32.totalorder %s36, 1
      %p395 = por %p393, %p394
      %p397 = scmp.ne.s32.totalorder %s382, %s396
      %p398 = scmp.eq.s32.totalorder %s36, 0
      %p399 = por %p397, %p398
      %s401 = sadd.s32 %s400, 1
      %p404 = scmp.eq.s32.totalorder %s30, 1
      %p405 = scmp.ne.s32.totalorder %s400, %s402
      %p406 = scmp.eq.s32.totalorder %s30, 0
      %p407 = por %p405, %p406
      %p408 = scmp.ne.s32.totalorder %s400, %s402
      %p409 = scmp.eq.s32.totalorder %s35, 1
      %p410 = por %p408, %p409
      %p411 = scmp.ne.s32.totalorder %s402, %s403
      %p412 = scmp.eq.s32.totalorder %s35, 0
      %p413 = por %p411, %p412
      %p414 = scmp.ne.s32.totalorder %s402, %s403
      %p415 = scmp.eq.s32.totalorder %s36, 1
      %p416 = por %p414, %p415
      %p418 = scmp.ne.s32.totalorder %s403, %s417
      %p419 = scmp.eq.s32.totalorder %s36, 0
      %p420 = por %p418, %p419
      %s422 = sadd.s32 %s421, 1
      %p425 = scmp.eq.s32.totalorder %s30, 1
      %p426 = scmp.ne.s32.totalorder %s421, %s423
      %p427 = scmp.eq.s32.totalorder %s30, 0
      %p428 = por %p426, %p427
      %p429 = scmp.ne.s32.totalorder %s421, %s423
      %p430 = scmp.eq.s32.totalorder %s35, 1
      %p431 = por %p429, %p430
      %p432 = scmp.ne.s32.totalorder %s423, %s424
      %p433 = scmp.eq.s32.totalorder %s35, 0
      %p434 = por %p432, %p433
      %p435 = scmp.ne.s32.totalorder %s423, %s424
      %p436 = scmp.eq.s32.totalorder %s36, 1
      %p437 = por %p435, %p436
      %p439 = scmp.ne.s32.totalorder %s424, %s438
      %p440 = scmp.eq.s32.totalorder %s36, 0
      %p441 = por %p439, %p440
      %s443 = sadd.s32 %s442, 1
      %p446 = scmp.eq.s32.totalorder %s30, 1
      %p447 = scmp.ne.s32.totalorder %s442, %s444
      %p448 = scmp.eq.s32.totalorder %s30, 0
      %p449 = por %p447, %p448
      %p450 = scmp.ne.s32.totalorder %s442, %s444
      %p451 = scmp.eq.s32.totalorder %s35, 1
      %p452 = por %p450, %p451
      %p453 = scmp.ne.s32.totalorder %s444, %s445
      %p454 = scmp.eq.s32.totalorder %s35, 0
      %p455 = por %p453, %p454
      %p456 = scmp.ne.s32.totalorder %s444, %s445
      %p457 = scmp.eq.s32.totalorder %s36, 1
      %p458 = por %p456, %p457
      %p460 = scmp.ne.s32.totalorder %s445, %s459
      %p461 = scmp.eq.s32.totalorder %s36, 0
      %p462 = por %p460, %p461
      %s464 = sadd.s32 %s463, 1
      %p467 = scmp.eq.s32.totalorder %s30, 1
      %p468 = scmp.ne.s32.totalorder %s463, %s465
      %p469 = scmp.eq.s32.totalorder %s30, 0
      %p470 = por %p468, %p469
      %p471 = scmp.ne.s32.totalorder %s463, %s465
      %p472 = scmp.eq.s32.totalorder %s35, 1
      %p473 = por %p471, %p472
      %p474 = scmp.ne.s32.totalorder %s465, %s466
      %p475 = scmp.eq.s32.totalorder %s35, 0
      %p476 = por %p474, %p475
      %p477 = scmp.ne.s32.totalorder %s465, %s466
      %p478 = scmp.eq.s32.totalorder %s36, 1
      %p479 = por %p477, %p478
      %p481 = scmp.ne.s32.totalorder %s466, %s480
      %p482 = scmp.eq.s32.totalorder %s36, 0
      %p483 = por %p481, %p482
      %s484 = ssub.s32 %s30, %s37
      %p485 = scmp.eq.s32.totalorder %s484, 0
      %s487 = sadd.s32 %s486, 1
      %s488 = scalar_select %p485, %s486, %s487
      %p491 = pneg %p485
      %p492 = scmp.eq.s32.totalorder %s30, 1
      %p493 = por %p491, %p492
      %p494 = scmp.ne.s32.totalorder %s486, %s489
      %p495 = scmp.eq.s32.totalorder %s30, 0
      %p496 = por %p494, %p495
      %p497 = scmp.ne.s32.totalorder %s486, %s489
      %p498 = scmp.eq.s32.totalorder %s35, 1
      %p499 = por %p497, %p498
      %p500 = scmp.ne.s32.totalorder %s489, %s490
      %p501 = scmp.eq.s32.totalorder %s35, 0
      %p502 = por %p500, %p501
      %p503 = scmp.ne.s32.totalorder %s489, %s490
      %p504 = scmp.eq.s32.totalorder %s36, 1
      %p505 = por %p503, %p504
      %p507 = scmp.ne.s32.totalorder %s490, %s506
      %p508 = scmp.eq.s32.totalorder %s36, 0
      %p509 = por %p507, %p508
      %p510 = scmp.le.s32.totalorder 1, %s30
      %p511 = scmp.lt.s32.totalorder %s30, 3
      %p512 = pnand %p510, %p511
      %p513 = pneg %p512
      // Predicated region
      $region9: #{tinybone_forward.1} parent=5 // pred_check
        _
      $region10: #{tinybone_forward.1} parent=5 // pred_check_branch
        %515 = sbr.rel (%p512) target = $region12
      $region11: #{tinybone_forward.1} parent=5 // pred_region
        %s516 = ssub.s32 %s30, 1
        // Predicated region
        $region13: #{tinybone_forward.1} parent=11 // pred_check
          %p517 = pneg %p77
        $region14: #{tinybone_forward.1} parent=11 // pred_check_branch
          %519 = sbr.rel (%p517) target = $region16
        $region15: #{tinybone_forward.1} parent=11 // pred_region
          _
        $region16: #{tinybone_forward.1} parent=11 // pred_fallthru
          _
        // Predicated region
        $region17: #{tinybone_forward.1} parent=11 // pred_check
          %p520 = pneg %p98
        $region18: #{tinybone_forward.1} parent=11 // pred_check_branch
          %522 = sbr.rel (%p520) target = $region20
        $region19: #{tinybone_forward.1} parent=11 // pred_region
          _
        $region20: #{tinybone_forward.1} parent=11 // pred_fallthru
          _
        // Predicated region
        $region21: #{tinybone_forward.1} parent=11 // pred_check
          %p523 = pneg %p119
        $region22: #{tinybone_forward.1} parent=11 // pred_check_branch
          %525 = sbr.rel (%p523) target = $region24
        $region23: #{tinybone_forward.1} parent=11 // pred_region
          _
        $region24: #{tinybone_forward.1} parent=11 // pred_fallthru
          _
        // Predicated region
        $region25: #{tinybone_forward.1} parent=11 // pred_check
          %p526 = pneg %p140
        $region26: #{tinybone_forward.1} parent=11 // pred_check_branch
          %528 = sbr.rel (%p526) target = $region28
        $region27: #{tinybone_forward.1} parent=11 // pred_region
          _
        $region28: #{tinybone_forward.1} parent=11 // pred_fallthru
          _
        // Predicated region
        $region29: #{tinybone_forward.1} parent=11 // pred_check
          %p529 = pneg %p161
        $region30: #{tinybone_forward.1} parent=11 // pred_check_branch
          %531 = sbr.rel (%p529) target = $region32
        $region31: #{tinybone_forward.1} parent=11 // pred_region
          _
        $region32: #{tinybone_forward.1} parent=11 // pred_fallthru
          _
        // Predicated region
        $region33: #{tinybone_forward.1} parent=11 // pred_check
          %p532 = pneg %p182
        $region34: #{tinybone_forward.1} parent=11 // pred_check_branch
          %534 = sbr.rel (%p532) target = $region36
        $region35: #{tinybone_forward.1} parent=11 // pred_region
          _
        $region36: #{tinybone_forward.1} parent=11 // pred_fallthru
          _
        // Predicated region
        $region37: #{tinybone_forward.1} parent=11 // pred_check
          %p535 = pneg %p203
        $region38: #{tinybone_forward.1} parent=11 // pred_check_branch
          %537 = sbr.rel (%p535) target = $region40
        $region39: #{tinybone_forward.1} parent=11 // pred_region
          _
        $region40: #{tinybone_forward.1} parent=11 // pred_fallthru
          _
        // Predicated region
        $region41: #{tinybone_forward.1} parent=11 // pred_check
          %p538 = pneg %p224
        $region42: #{tinybone_forward.1} parent=11 // pred_check_branch
          %540 = sbr.rel (%p538) target = $region44
        $region43: #{tinybone_forward.1} parent=11 // pred_region
          _
        $region44: #{tinybone_forward.1} parent=11 // pred_fallthru
          _
        // Predicated region
        $region45: #{tinybone_forward.1} parent=11 // pred_check
          %p541 = pneg %p245
        $region46: #{tinybone_forward.1} parent=11 // pred_check_branch
          %543 = sbr.rel (%p541) target = $region48
        $region47: #{tinybone_forward.1} parent=11 // pred_region
          _
        $region48: #{tinybone_forward.1} parent=11 // pred_fallthru
          _
        // Predicated region
        $region49: #{tinybone_forward.1} parent=11 // pred_check
          %p544 = pneg %p266
        $region50: #{tinybone_forward.1} parent=11 // pred_check_branch
          %546 = sbr.rel (%p544) target = $region52
        $region51: #{tinybone_forward.1} parent=11 // pred_region
          _
        $region52: #{tinybone_forward.1} parent=11 // pred_fallthru
          _
        // Predicated region
        $region53: #{tinybone_forward.1} parent=11 // pred_check
          %p547 = pneg %p287
        $region54: #{tinybone_forward.1} parent=11 // pred_check_branch
          %549 = sbr.rel (%p547) target = $region56
        $region55: #{tinybone_forward.1} parent=11 // pred_region
          _
        $region56: #{tinybone_forward.1} parent=11 // pred_fallthru
          _
        // Predicated region
        $region57: #{tinybone_forward.1} parent=11 // pred_check
          %p550 = pneg %p308
        $region58: #{tinybone_forward.1} parent=11 // pred_check_branch
          %552 = sbr.rel (%p550) target = $region60
        $region59: #{tinybone_forward.1} parent=11 // pred_region
          _
        $region60: #{tinybone_forward.1} parent=11 // pred_fallthru
          _
        // Predicated region
        $region61: #{tinybone_forward.1} parent=11 // pred_check
          %p553 = pneg %p329
        $region62: #{tinybone_forward.1} parent=11 // pred_check_branch
          %555 = sbr.rel (%p553) target = $region64
        $region63: #{tinybone_forward.1} parent=11 // pred_region
          _
        $region64: #{tinybone_forward.1} parent=11 // pred_fallthru
          _
        // Predicated region
        $region65: #{tinybone_forward.1} parent=11 // pred_check
          %p556 = pneg %p350
        $region66: #{tinybone_forward.1} parent=11 // pred_check_branch
          %558 = sbr.rel (%p556) target = $region68
        $region67: #{tinybone_forward.1} parent=11 // pred_region
          _
        $region68: #{tinybone_forward.1} parent=11 // pred_fallthru
          _
        // Predicated region
        $region69: #{tinybone_forward.1} parent=11 // pred_check
          %p559 = pneg %p371
        $region70: #{tinybone_forward.1} parent=11 // pred_check_branch
          %561 = sbr.rel (%p559) target = $region72
        $region71: #{tinybone_forward.1} parent=11 // pred_region
          _
        $region72: #{tinybone_forward.1} parent=11 // pred_fallthru
          _
        // Predicated region
        $region73: #{tinybone_forward.1} parent=11 // pred_check
          %p562 = pneg %p392
        $region74: #{tinybone_forward.1} parent=11 // pred_check_branch
          %564 = sbr.rel (%p562) target = $region76
        $region75: #{tinybone_forward.1} parent=11 // pred_region
          _
        $region76: #{tinybone_forward.1} parent=11 // pred_fallthru
          _
        // Predicated region
        $region77: #{tinybone_forward.1} parent=11 // pred_check
          %p565 = pneg %p413
        $region78: #{tinybone_forward.1} parent=11 // pred_check_branch
          %567 = sbr.rel (%p565) target = $region80
        $region79: #{tinybone_forward.1} parent=11 // pred_region
          _
        $region80: #{tinybone_forward.1} parent=11 // pred_fallthru
          _
        // Predicated region
        $region81: #{tinybone_forward.1} parent=11 // pred_check
          %p568 = pneg %p434
        $region82: #{tinybone_forward.1} parent=11 // pred_check_branch
          %570 = sbr.rel (%p568) target = $region84
        $region83: #{tinybone_forward.1} parent=11 // pred_region
          _
        $region84: #{tinybone_forward.1} parent=11 // pred_fallthru
          _
        // Predicated region
        $region85: #{tinybone_forward.1} parent=11 // pred_check
          %p571 = pneg %p455
        $region86: #{tinybone_forward.1} parent=11 // pred_check_branch
          %573 = sbr.rel (%p571) target = $region88
        $region87: #{tinybone_forward.1} parent=11 // pred_region
          _
        $region88: #{tinybone_forward.1} parent=11 // pred_fallthru
          _
        // Predicated region
        $region89: #{tinybone_forward.1} parent=11 // pred_check
          %p574 = pneg %p476
        $region90: #{tinybone_forward.1} parent=11 // pred_check_branch
          %576 = sbr.rel (%p574) target = $region92
        $region91: #{tinybone_forward.1} parent=11 // pred_region
          _
        $region92: #{tinybone_forward.1} parent=11 // pred_fallthru
          _
      $region12: #{tinybone_forward.1} parent=5 // pred_fallthru
        _
      %p577 = scmp.lt.s32.totalorder %s30, 2
      // Predicated region
      $region93: #{tinybone_forward.1} parent=5 // pred_check
        %p578 = pneg %p577
      $region94: #{tinybone_forward.1} parent=5 // pred_check_branch
        %580 = sbr.rel (%p578) target = $region96
      $region95: #{tinybone_forward.1} parent=5 // pred_region
        // Predicated region
        $region97: #{tinybone_forward.1} parent=95 // pred_check
          %p581 = pneg %p50
        $region98: #{tinybone_forward.1} parent=95 // pred_check_branch
          %583 = sbr.rel (%p581) target = $region100
        $region99: #{tinybone_forward.1} parent=95 // pred_region
          %p584 = scmp.lt.s32.totalorder %s30, 1
          %s585 = scalar_select %p584, %s30, 1
          %s586 = smul.addr %s585, 32
          %s587 = smul.addr %s586, 8
          %s588 = scalar_lea.vmem %s0, %s587
        $region100: #{tinybone_forward.1} parent=95 // pred_fallthru
          _
      $region96: #{tinybone_forward.1} parent=5 // pred_fallthru
        _
      %p589 = scmp.le.s32.totalorder 1, %s30
      %p590 = scmp.lt.s32.totalorder %s30, 3
      %p591 = pnand %p589, %p590
      %p592 = pneg %p591
      // Predicated region
      $region101: #{tinybone_forward.1} parent=5 // pred_check
        _
      $region102: #{tinybone_forward.1} parent=5 // pred_check_branch
        %594 = sbr.rel (%p591) target = $region104
      $region103: #{tinybone_forward.1} parent=5 // pred_region
        %s595 = ssub.s32 %s30, 1
        %p596 = scmp.lt.s32.totalorder %s35, 1
        %s597 = scalar_select %p596, %s35, 1
        %s598 = smul.addr %s597, 32
        %s599 = smul.addr %s598, 8
        %s600 = scalar_lea.vmem %s0, %s599
        %p601 = pneg %p56
        %p602 = pneg %p53
        %p603 = pneg %p77
        %p604 = pneg %p74
        %p605 = pneg %p98
        %p606 = pneg %p95
        %p607 = pneg %p119
        %p608 = pneg %p116
        %p609 = pneg %p140
        %p610 = pneg %p137
        %p611 = pneg %p161
        %p612 = pneg %p158
        %p613 = pneg %p182
        %p614 = pneg %p179
        %p615 = pneg %p203
        %p616 = pneg %p200
        %p617 = pneg %p224
        %p618 = pneg %p221
        %p619 = pneg %p245
        %p620 = pneg %p242
        %p621 = pneg %p266
        %p622 = pneg %p263
        %p623 = pneg %p287
        %p624 = pneg %p284
        %p625 = pneg %p308
        %p626 = pneg %p305
        %p627 = pneg %p329
        %p628 = pneg %p326
        %p629 = pneg %p350
        %p630 = pneg %p347
        %p631 = pneg %p371
        %p632 = pneg %p368
        %p633 = pneg %p392
        %p634 = pneg %p389
        %p635 = pneg %p413
        %p636 = pneg %p410
        %p637 = pneg %p434
        %p638 = pneg %p431
        %p639 = pneg %p455
        %p640 = pneg %p452
        %p641 = pneg %p476
        %p642 = pneg %p473
        %p643 = pneg %p502
        %p644 = pneg %p499
        %s645 = sand.u32 %s489, 1
        %s646 = scalar_lea.sflag [#allocation7], %s645
        %s647 = sand.u32 %s489, 1
        %s648 = smul.addr %s647, 8
        %s649 = scalar_lea.vmem [#allocation6], %s648
        %p650 = scmp.lt.s32.totalorder %s35, 1
        %s651 = scalar_select %p650, %s35, 1
        %s652 = smul.addr %s651, 32
        %s653 = smul.addr %s652, 8
        %s654 = scalar_lea.vmem %s0, %s653
        %vm656 = vcmask 261120
        %657 = vst.msk [vmem:[#allocation2] sm:$0xff] %vm656, 0.0
        %658 = vst.msk [vmem:[#allocation2 + $0x8] sm:$0xff] %vm656, 0.0
        %vm659 = vcmask 254976
        %660 = vst.msk [vmem:[#allocation2 + $0x10] sm:$0x3] %vm659, 0.0
        %661 = vst.msk [vmem:[#allocation2 + $0x18] sm:$0xff] %vm656, 0.0
        %662 = vst.msk [vmem:[#allocation2 + $0x20] sm:$0xff] %vm656, 0.0
        %663 = vst.msk [vmem:[#allocation2 + $0x28] sm:$0x3] %vm659, 0.0
        %664 = vst.msk [vmem:[#allocation2 + $0x30] sm:$0xff] %vm656, 0.0
        %665 = vst.msk [vmem:[#allocation2 + $0x38] sm:$0xff] %vm656, 0.0
        %666 = vst.msk [vmem:[#allocation2 + $0x40] sm:$0x3] %vm659, 0.0
        %667 = vst.msk [vmem:[#allocation2 + $0x48] sm:$0xff] %vm656, 0.0
        %668 = vst.msk [vmem:[#allocation2 + $0x50] sm:$0xff] %vm656, 0.0
        %669 = vst.msk [vmem:[#allocation2 + $0x58] sm:$0x3] %vm659, 0.0
        %670 = vst.msk [vmem:[#allocation2 + $0x60] sm:$0xff] %vm656, 0.0
        %671 = vst.msk [vmem:[#allocation2 + $0x68] sm:$0xff] %vm656, 0.0
        %672 = vst.msk [vmem:[#allocation2 + $0x70] sm:$0x3] %vm659, 0.0
        %673 = vst.msk [vmem:[#allocation2 + $0x78] sm:$0xff] %vm656, 0.0
        %674 = vst.msk [vmem:[#allocation2 + $0x80] sm:$0xff] %vm656, 0.0
        %675 = vst.msk [vmem:[#allocation2 + $0x88] sm:$0x3] %vm659, 0.0
        %676 = vst.msk [vmem:[#allocation2 + $0x90] sm:$0xff] %vm656, 0.0
        %677 = vst.msk [vmem:[#allocation2 + $0x98] sm:$0xff] %vm656, 0.0
        %678 = vst.msk [vmem:[#allocation2 + $0xa0] sm:$0x3] %vm659, 0.0
        %679 = vst.msk [vmem:[#allocation2 + $0xa8] sm:$0xff] %vm656, 0.0
        %680 = vst.msk [vmem:[#allocation2 + $0xb0] sm:$0xff] %vm656, 0.0
        %681 = vst.msk [vmem:[#allocation2 + $0xb8] sm:$0x3] %vm659, 0.0
        %682 = vst.msk [vmem:[#allocation2 + $0xc0] sm:$0xff] %vm656, 0.0
        %683 = vst.msk [vmem:[#allocation2 + $0xc8] sm:$0xff] %vm656, 0.0
        %684 = vst.msk [vmem:[#allocation2 + $0xd0] sm:$0x3] %vm659, 0.0
        %685 = vst.msk [vmem:[#allocation2 + $0xd8] sm:$0xff] %vm656, 0.0
        %686 = vst.msk [vmem:[#allocation2 + $0xe0] sm:$0xff] %vm656, 0.0
        %687 = vst.msk [vmem:[#allocation2 + $0xe8] sm:$0x3] %vm659, 0.0
        %688 = vst.msk [vmem:[#allocation2 + $0xf0] sm:$0xff] %vm656, 0.0
        %689 = vst.msk [vmem:[#allocation2 + $0xf8] sm:$0xff] %vm656, 0.0
        %690 = vst.msk [vmem:[#allocation2 + $0x100] sm:$0x3] %vm659, 0.0
        %691 = vst.msk [vmem:[#allocation2 + $0x108] sm:$0xff] %vm656, 0.0
        %692 = vst.msk [vmem:[#allocation2 + $0x110] sm:$0xff] %vm656, 0.0
        %693 = vst.msk [vmem:[#allocation2 + $0x118] sm:$0x3] %vm659, 0.0
        %694 = vst.msk [vmem:[#allocation2 + $0x120] sm:$0xff] %vm656, 0.0
        %695 = vst.msk [vmem:[#allocation2 + $0x128] sm:$0xff] %vm656, 0.0
        %696 = vst.msk [vmem:[#allocation2 + $0x130] sm:$0x3] %vm659, 0.0
        %697 = vst.msk [vmem:[#allocation2 + $0x138] sm:$0xff] %vm656, 0.0
        %698 = vst.msk [vmem:[#allocation2 + $0x140] sm:$0xff] %vm656, 0.0
        %699 = vst.msk [vmem:[#allocation2 + $0x148] sm:$0x3] %vm659, 0.0
        %700 = vst.msk [vmem:[#allocation2 + $0x150] sm:$0xff] %vm656, 0.0
        %701 = vst.msk [vmem:[#allocation2 + $0x158] sm:$0xff] %vm656, 0.0
        %702 = vst.msk [vmem:[#allocation2 + $0x160] sm:$0x3] %vm659, 0.0
        %703 = vst.msk [vmem:[#allocation2 + $0x168] sm:$0xff] %vm656, 0.0
        %704 = vst.msk [vmem:[#allocation2 + $0x170] sm:$0xff] %vm656, 0.0
        %705 = vst.msk [vmem:[#allocation2 + $0x178] sm:$0x3] %vm659, 0.0
        %706 = vst.msk [vmem:[#allocation2 + $0x180] sm:$0xff] %vm656, 0.0
        %707 = vst.msk [vmem:[#allocation2 + $0x188] sm:$0xff] %vm656, 0.0
        %708 = vst.msk [vmem:[#allocation2 + $0x190] sm:$0x3] %vm659, 0.0
        %709 = vst.msk [vmem:[#allocation2 + $0x198] sm:$0xff] %vm656, 0.0
        %710 = vst.msk [vmem:[#allocation2 + $0x1a0] sm:$0xff] %vm656, 0.0
        %711 = vst.msk [vmem:[#allocation2 + $0x1a8] sm:$0x3] %vm659, 0.0
        %vm712 = vcmask 519168
        %713 = vst.msk [vmem:[#allocation3] sm:$0xf] %vm712, 0
        %vm714 = vcmask 516096
        %715 = vst.msk [vmem:[#allocation3 + $0x4] sm:$0x1] %vm714, 0
        %716 = vst.msk [vmem:[#allocation3 + $0x8] sm:$0xf] %vm712, 0
        %717 = vst.msk [vmem:[#allocation3 + $0xc] sm:$0x1] %vm714, 0
        %718 = vst.msk [vmem:[#allocation3 + $0x10] sm:$0xf] %vm712, 0
        %719 = vst.msk [vmem:[#allocation3 + $0x14] sm:$0x1] %vm714, 0
        %720 = vst.msk [vmem:[#allocation3 + $0x18] sm:$0xf] %vm712, 0
        %721 = vst.msk [vmem:[#allocation3 + $0x1c] sm:$0x1] %vm714, 0
        %722 = vst.msk [vmem:[#allocation3 + $0x20] sm:$0xf] %vm712, 0
        %723 = vst.msk [vmem:[#allocation3 + $0x24] sm:$0x1] %vm714, 0
        %724 = vst.msk [vmem:[#allocation3 + $0x28] sm:$0xf] %vm712, 0
        %725 = vst.msk [vmem:[#allocation3 + $0x2c] sm:$0x1] %vm714, 0
        %726 = vst.msk [vmem:[#allocation3 + $0x30] sm:$0xf] %vm712, 0
        %727 = vst.msk [vmem:[#allocation3 + $0x34] sm:$0x1] %vm714, 0
        %728 = vst.msk [vmem:[#allocation3 + $0x38] sm:$0xf] %vm712, 0
        %729 = vst.msk [vmem:[#allocation3 + $0x3c] sm:$0x1] %vm714, 0
        %730 = vst.msk [vmem:[#allocation3 + $0x40] sm:$0xf] %vm712, 0
        %731 = vst.msk [vmem:[#allocation3 + $0x44] sm:$0x1] %vm714, 0
        %732 = vst.msk [vmem:[#allocation3 + $0x48] sm:$0xf] %vm712, 0
        %733 = vst.msk [vmem:[#allocation3 + $0x4c] sm:$0x1] %vm714, 0
        %734 = vst [vmem:[#allocation4] sm:$0xf] 0
        %735 = vst [vmem:[#allocation4 + $0x4] sm:$0x1] 0
        %736 = vst [vmem:[#allocation4 + $0x8] sm:$0xf] 0
        %737 = vst [vmem:[#allocation4 + $0xc] sm:$0x1] 0
        %738 = vst [vmem:[#allocation4 + $0x10] sm:$0xf] 0
        %739 = vst [vmem:[#allocation4 + $0x14] sm:$0x1] 0
        %740 = vst [vmem:[#allocation4 + $0x18] sm:$0xf] 0
        %741 = vst [vmem:[#allocation4 + $0x1c] sm:$0x1] 0
        %742 = vst [vmem:[#allocation4 + $0x20] sm:$0xf] 0
        %743 = vst [vmem:[#allocation4 + $0x24] sm:$0x1] 0
        %744 = vst [vmem:[#allocation4 + $0x28] sm:$0xf] 0
        %745 = vst [vmem:[#allocation4 + $0x2c] sm:$0x1] 0
        %v746 = vld [vmem:[%s654] sm:$0xff]
        %v747 = vld [vmem:[%s654 + $0x8] sm:$0xff]
        %v748 = vld [vmem:[%s654 + $0x10] sm:$0xff]
        %v749 = vld [vmem:[%s654 + $0x18] sm:$0xff]
        %v750 = vld [vmem:[%s654 + $0x20] sm:$0xff]
        %v751 = vld [vmem:[%s654 + $0x28] sm:$0xff]
        %v752 = vld [vmem:[%s654 + $0x30] sm:$0xff]
        %v753 = vld [vmem:[%s654 + $0x38] sm:$0xff]
        %v754 = vld [vmem:[%s654 + $0x40] sm:$0xff]
        %v755 = vld [vmem:[%s654 + $0x48] sm:$0xff]
        %v756 = vld [vmem:[%s654 + $0x50] sm:$0xff]
        %v757 = vld [vmem:[%s654 + $0x58] sm:$0xff]
        %v758 = vld [vmem:[%s654 + $0x60] sm:$0xff]
        %v759 = vld [vmem:[%s654 + $0x68] sm:$0xff]
        %v760 = vld [vmem:[%s654 + $0x70] sm:$0xff]
        %v761 = vld [vmem:[%s654 + $0x78] sm:$0xff]
        %v762 = vld [vmem:[%s654 + $0x80] sm:$0xff]
        %v763 = vld [vmem:[%s654 + $0x88] sm:$0xff]
        %v764 = vld [vmem:[%s654 + $0x90] sm:$0xff]
        %v765 = vld [vmem:[%s654 + $0x98] sm:$0xff]
        %v766 = vld [vmem:[%s654 + $0xa0] sm:$0xff]
        %v767 = vld [vmem:[%s654 + $0xa8] sm:$0xff]
        %v768 = vld [vmem:[%s654 + $0xb0] sm:$0xff]
        %v769 = vld [vmem:[%s654 + $0xb8] sm:$0xff]
        %v770 = vld [vmem:[%s654 + $0xc0] sm:$0xff]
        %v771 = vld [vmem:[%s654 + $0xc8] sm:$0xff]
        %v772 = vld [vmem:[%s654 + $0xd0] sm:$0xff]
        %v773 = vld [vmem:[%s654 + $0xd8] sm:$0xff]
        %v774 = vld [vmem:[%s654 + $0xe0] sm:$0xff]
        %v775 = vld [vmem:[%s654 + $0xe8] sm:$0xff]
        %v776 = vld [vmem:[%s654 + $0xf0] sm:$0xff]
        %v777 = vld [vmem:[%s654 + $0xf8] sm:$0xff]
        %v778 = vpack.c.bf16 %v747, %v746
        %v779 = vpack.c.bf16 %v749, %v748
        %v780 = vpack.c.bf16 %v751, %v750
        %v781 = vpack.c.bf16 %v753, %v752
        %v782 = vpack.c.bf16 %v755, %v754
        %v783 = vpack.c.bf16 %v757, %v756
        %v784 = vpack.c.bf16 %v759, %v758
        %v785 = vpack.c.bf16 %v761, %v760
        %v786 = vpack.c.bf16 %v763, %v762
        %v787 = vpack.c.bf16 %v765, %v764
        %v788 = vpack.c.bf16 %v767, %v766
        %v789 = vpack.c.bf16 %v769, %v768
        %v790 = vpack.c.bf16 %v771, %v770
        %v791 = vpack.c.bf16 %v773, %v772
        %v792 = vpack.c.bf16 %v775, %v774
        %v793 = vpack.c.bf16 %v777, %v776
        %v794 = vld [vmem:[%s1] sm:$0xf]
        %v795 = vld [vmem:[%s1 + $0x4] sm:$0xf]
        %v796 = vld [vmem:[%s1 + $0x8] sm:$0xf]
        %v797 = vld [vmem:[%s1 + $0xc] sm:$0xf]
        %v798 = vld [vmem:[%s1 + $0x10] sm:$0x3]
        %v799 = vld [vmem:[%s2] sm:$0x1]
        %v801 = vlaneseq
        %v802 = vshrl.u32 %v801, 7
        %v803 = vsub.s32 0, %v802
        %v804 = vrot.slane %v799, %v803
        %v811 = vunpack.c.l.b16 %v794
        %v812 = vunpack.c.l.b16 %v795
        %v813 = vunpack.c.l.b16 %v796
        %v814 = vunpack.c.l.b16 %v797
        %v815 = vunpack.c.l.b16 %v798
        %v816 = vpack.c.b16 %v812, %v811
        %v817 = vpack.c.b16 %v814, %v813
        %v818 = vpack.c.b16 %v815, %v815
        %vm821 = vcmask 293888
        %v823 = vsel %vm821, %v778, 0
        %v826 = vsel %vm821, %v779, 0
        %v829 = vsel %vm821, %v780, 0
        %v832 = vsel %vm821, %v781, 0
        %v835 = vsel %vm821, %v782, 0
        %v838 = vsel %vm821, %v783, 0
        %v841 = vsel %vm821, %v784, 0
        %v844 = vsel %vm821, %v785, 0
        %v847 = vsel %vm821, %v786, 0
        %v850 = vsel %vm821, %v787, 0
        %v853 = vsel %vm821, %v788, 0
        %v856 = vsel %vm821, %v789, 0
        %v859 = vsel %vm821, %v790, 0
        %v862 = vsel %vm821, %v791, 0
        %v865 = vsel %vm821, %v792, 0
        %v868 = vsel %vm821, %v793, 0
        %vm870 = vcmask 1041408
        %v872 = vsel %vm870, %v818, 0
        %874 = vmatprep.subr.bf16.mxu0 0
        %875 = vmatpush1.bf16.msra.mxu0 0
        %876 = vmatprep.subr.bf16.mxu0 0
        %877 = vmatpush1.bf16.msra.mxu0 0
        %878 = vmatprep.subr.bf16.mxu0 0
        %879 = vmatpush1.bf16.msra.mxu0 0
        %880 = vmatprep.subr.bf16.mxu0 0
        %881 = vmatpush1.bf16.msra.mxu0 0
        %882 = vmatprep.subr.bf16.mxu0 0
        %883 = vmatpush1.bf16.msra.mxu0 0
        %884 = vmatprep.subr.bf16.mxu0 0
        %885 = vmatpush1.bf16.msra.mxu0 %v872
        %886 = vmatprep.subr.bf16.mxu0 0
        %887 = vmatpush1.bf16.msra.mxu0 %v817
        %888 = vmatprep.subr.bf16.mxu0 0
        %889 = vmatpush1.bf16.msra.mxu0 %v816
        %890 = vmatprep.subr.bf16.mxu0 0
        %891 = vmatpush2.bf16.msra.mxu0 0
        %892 = vmatprep.subr.bf16.mxu0 0
        %893 = vmatpush2.bf16.msra.mxu0 0
        %894 = vmatprep.subr.bf16.mxu0 0
        %895 = vmatpush2.bf16.msra.mxu0 0
        %896 = vmatprep.subr.bf16.mxu0 0
        %897 = vmatpush2.bf16.msra.mxu0 0
        %898 = vmatprep.subr.bf16.mxu0 0
        %899 = vmatpush2.bf16.msra.mxu0 0
        %900 = vmatprep.subr.bf16.mxu0 0
        %901 = vmatpush2.bf16.msra.mxu0 0
        %902 = vmatprep.subr.bf16.mxu0 0
        %903 = vmatpush2.bf16.msra.mxu0 0
        %904 = vmatprep.subr.bf16.mxu0 0
        %905 = vmatpush2.bf16.msra.mxu0 0
        %906 = vmatprep.mubr.bf16.mxu0 0
        %907 = vmatmul.mubr.bf16.gmra.mxu0 %v823
        %v908 = vpop.f32.mrf.mxu0
        %v909 = vadd.f32 %v804, %v908
        %v910 = vpop.f32.mrf.mxu0
        %v911 = vpop.f32.mrf.mxu0
        %v912 = vadd.f32 %v804, %v911
        %v913 = vpop.f32.mrf.mxu0
        %914 = vmatprep.mubr.bf16.mxu0 0
        %915 = vmatmul.mubr.bf16.gmra.mxu0 %v826
        %v916 = vpop.f32.mrf.mxu0
        %v917 = vadd.f32 %v804, %v916
        %v918 = vpop.f32.mrf.mxu0
        %v919 = vpop.f32.mrf.mxu0
        %v920 = vadd.f32 %v804, %v919
        %v921 = vpop.f32.mrf.mxu0
        %922 = vmatprep.mubr.bf16.mxu0 0
        %923 = vmatmul.mubr.bf16.gmra.mxu0 %v829
        %v924 = vpop.f32.mrf.mxu0
        %v925 = vadd.f32 %v804, %v924
        %v926 = vpop.f32.mrf.mxu0
        %v927 = vpop.f32.mrf.mxu0
        %v928 = vadd.f32 %v804, %v927
        %v929 = vpop.f32.mrf.mxu0
        %930 = vmatprep.mubr.bf16.mxu0 0
        %931 = vmatmul.mubr.bf16.gmra.mxu0 %v832
        %v932 = vpop.f32.mrf.mxu0
        %v933 = vadd.f32 %v804, %v932
        %v934 = vpop.f32.mrf.mxu0
        %v935 = vpop.f32.mrf.mxu0
        %v936 = vadd.f32 %v804, %v935
        %v937 = vpop.f32.mrf.mxu0
        %938 = vmatprep.mubr.bf16.mxu0 0
        %939 = vmatmul.mubr.bf16.gmra.mxu0 %v835
        %v940 = vpop.f32.mrf.mxu0
        %v941 = vadd.f32 %v804, %v940
        %v942 = vpop.f32.mrf.mxu0
        %v943 = vpop.f32.mrf.mxu0
        %v944 = vadd.f32 %v804, %v943
        %v945 = vpop.f32.mrf.mxu0
        %946 = vmatprep.mubr.bf16.mxu0 0
        %947 = vmatmul.mubr.bf16.gmra.mxu0 %v838
        %v948 = vpop.f32.mrf.mxu0
        %v949 = vadd.f32 %v804, %v948
        %v950 = vpop.f32.mrf.mxu0
        %v951 = vpop.f32.mrf.mxu0
        %v952 = vadd.f32 %v804, %v951
        %v953 = vpop.f32.mrf.mxu0
        %954 = vmatprep.mubr.bf16.mxu0 0
        %955 = vmatmul.mubr.bf16.gmra.mxu0 %v841
        %v956 = vpop.f32.mrf.mxu0
        %v957 = vadd.f32 %v804, %v956
        %v958 = vpop.f32.mrf.mxu0
        %v959 = vpop.f32.mrf.mxu0
        %v960 = vadd.f32 %v804, %v959
        %v961 = vpop.f32.mrf.mxu0
        %962 = vmatprep.mubr.bf16.mxu0 0
        %963 = vmatmul.mubr.bf16.gmra.mxu0 %v844
        %v964 = vpop.f32.mrf.mxu0
        %v965 = vadd.f32 %v804, %v964
        %v966 = vpop.f32.mrf.mxu0
        %v967 = vpop.f32.mrf.mxu0
        %v968 = vadd.f32 %v804, %v967
        %v969 = vpop.f32.mrf.mxu0
        %970 = vmatprep.mubr.bf16.mxu0 0
        %971 = vmatmul.mubr.bf16.gmra.mxu0 %v847
        %v972 = vpop.f32.mrf.mxu0
        %v973 = vadd.f32 %v804, %v972
        %v974 = vpop.f32.mrf.mxu0
        %v975 = vpop.f32.mrf.mxu0
        %v976 = vadd.f32 %v804, %v975
        %v977 = vpop.f32.mrf.mxu0
        %978 = vmatprep.mubr.bf16.mxu0 0
        %979 = vmatmul.mubr.bf16.gmra.mxu0 %v850
        %v980 = vpop.f32.mrf.mxu0
        %v981 = vadd.f32 %v804, %v980
        %v982 = vpop.f32.mrf.mxu0
        %v983 = vpop.f32.mrf.mxu0
        %v984 = vadd.f32 %v804, %v983
        %v985 = vpop.f32.mrf.mxu0
        %986 = vmatprep.mubr.bf16.mxu0 0
        %987 = vmatmul.mubr.bf16.gmra.mxu0 %v853
        %v988 = vpop.f32.mrf.mxu0
        %v989 = vadd.f32 %v804, %v988
        %v990 = vpop.f32.mrf.mxu0
        %v991 = vpop.f32.mrf.mxu0
        %v992 = vadd.f32 %v804, %v991
        %v993 = vpop.f32.mrf.mxu0
        %994 = vmatprep.mubr.bf16.mxu0 0
        %995 = vmatmul.mubr.bf16.gmra.mxu0 %v856
        %v996 = vpop.f32.mrf.mxu0
        %v997 = vadd.f32 %v804, %v996
        %v998 = vpop.f32.mrf.mxu0
        %v999 = vpop.f32.mrf.mxu0
        %v1000 = vadd.f32 %v804, %v999
        %v1001 = vpop.f32.mrf.mxu0
        %1002 = vmatprep.mubr.bf16.mxu0 0
        %1003 = vmatmul.mubr.bf16.gmra.mxu0 %v859
        %v1004 = vpop.f32.mrf.mxu0
        %v1005 = vadd.f32 %v804, %v1004
        %v1006 = vpop.f32.mrf.mxu0
        %v1007 = vpop.f32.mrf.mxu0
        %v1008 = vadd.f32 %v804, %v1007
        %v1009 = vpop.f32.mrf.mxu0
        %1010 = vmatprep.mubr.bf16.mxu0 0
        %1011 = vmatmul.mubr.bf16.gmra.mxu0 %v862
        %v1012 = vpop.f32.mrf.mxu0
        %v1013 = vadd.f32 %v804, %v1012
        %v1014 = vpop.f32.mrf.mxu0
        %v1015 = vpop.f32.mrf.mxu0
        %v1016 = vadd.f32 %v804, %v1015
        %v1017 = vpop.f32.mrf.mxu0
        %1018 = vmatprep.mubr.bf16.mxu0 0
        %1019 = vmatmul.mubr.bf16.gmra.mxu0 %v865
        %v1020 = vpop.f32.mrf.mxu0
        %v1021 = vadd.f32 %v804, %v1020
        %v1022 = vpop.f32.mrf.mxu0
        %v1023 = vpop.f32.mrf.mxu0
        %v1024 = vadd.f32 %v804, %v1023
        %v1025 = vpop.f32.mrf.mxu0
        %1026 = vmatprep.mubr.bf16.mxu0 0
        %1027 = vmatmul.mubr.bf16.gmra.mxu0 %v868
        %v1028 = vpop.f32.mrf.mxu0
        %v1029 = vadd.f32 %v804, %v1028
        %v1030 = vpop.f32.mrf.mxu0
        %v1031 = vpop.f32.mrf.mxu0
        %v1032 = vadd.f32 %v804, %v1031
        %v1033 = vpop.f32.mrf.mxu0
        %1034 = vdwg.mxu0
        %v1035 = vmin.f32 %v909, 20.0
        %v1036 = vmin.f32 %v912, 20.0
        %v1037 = vmin.f32 %v917, 20.0
        %v1038 = vmin.f32 %v920, 20.0
        %v1039 = vmin.f32 %v925, 20.0
        %v1040 = vmin.f32 %v928, 20.0
        %v1041 = vmin.f32 %v933, 20.0
        %v1042 = vmin.f32 %v936, 20.0
        %v1043 = vmin.f32 %v941, 20.0
        %v1044 = vmin.f32 %v944, 20.0
        %v1045 = vmin.f32 %v949, 20.0
        %v1046 = vmin.f32 %v952, 20.0
        %v1047 = vmin.f32 %v957, 20.0
        %v1048 = vmin.f32 %v960, 20.0
        %v1049 = vmin.f32 %v965, 20.0
        %v1050 = vmin.f32 %v968, 20.0
        %v1051 = vmin.f32 %v973, 20.0
        %v1052 = vmin.f32 %v976, 20.0
        %v1053 = vmin.f32 %v981, 20.0
        %v1054 = vmin.f32 %v984, 20.0
        %v1055 = vmin.f32 %v989, 20.0
        %v1056 = vmin.f32 %v992, 20.0
        %v1057 = vmin.f32 %v997, 20.0
        %v1058 = vmin.f32 %v1000, 20.0
        %v1059 = vmin.f32 %v1005, 20.0
        %v1060 = vmin.f32 %v1008, 20.0
        %v1061 = vmin.f32 %v1013, 20.0
        %v1062 = vmin.f32 %v1016, 20.0
        %v1063 = vmin.f32 %v1021, 20.0
        %v1064 = vmin.f32 %v1024, 20.0
        %v1065 = vmin.f32 %v1029, 20.0
        %v1066 = vmin.f32 %v1032, 20.0
        %v1067 = vmul.f32 %v1035, 1.442695
        %v1068 = vpow.pop %v1067
        %v1069 = vmul.f32 %v1036, 1.442695
        %v1070 = vpow.pop %v1069
        %v1071 = vmul.f32 %v1037, 1.442695
        %v1072 = vpow.pop %v1071
        %v1073 = vmul.f32 %v1038, 1.442695
        %v1074 = vpow.pop %v1073
        %v1075 = vmul.f32 %v1039, 1.442695
        %v1076 = vpow.pop %v1075
        %v1077 = vmul.f32 %v1040, 1.442695
        %v1078 = vpow.pop %v1077
        %v1079 = vmul.f32 %v1041, 1.442695
        %v1080 = vpow.pop %v1079
        %v1081 = vmul.f32 %v1042, 1.442695
        %v1082 = vpow.pop %v1081
        %v1083 = vmul.f32 %v1043, 1.442695
        %v1084 = vpow.pop %v1083
        %v1085 = vmul.f32 %v1044, 1.442695
        %v1086 = vpow.pop %v1085
        %v1087 = vmul.f32 %v1045, 1.442695
        %v1088 = vpow.pop %v1087
        %v1089 = vmul.f32 %v1046, 1.442695
        %v1090 = vpow.pop %v1089
        %v1091 = vmul.f32 %v1047, 1.442695
        %v1092 = vpow.pop %v1091
        %v1093 = vmul.f32 %v1048, 1.442695
        %v1094 = vpow.pop %v1093
        %v1095 = vmul.f32 %v1049, 1.442695
        %v1096 = vpow.pop %v1095
        %v1097 = vmul.f32 %v1050, 1.442695
        %v1098 = vpow.pop %v1097
        %v1099 = vmul.f32 %v1051, 1.442695
        %v1100 = vpow.pop %v1099
        %v1101 = vmul.f32 %v1052, 1.442695
        %v1102 = vpow.pop %v1101
        %v1103 = vmul.f32 %v1053, 1.442695
        %v1104 = vpow.pop %v1103
        %v1105 = vmul.f32 %v1054, 1.442695
        %v1106 = vpow.pop %v1105
        %v1107 = vmul.f32 %v1055, 1.442695
        %v1108 = vpow.pop %v1107
        %v1109 = vmul.f32 %v1056, 1.442695
        %v1110 = vpow.pop %v1109
        %v1111 = vmul.f32 %v1057, 1.442695
        %v1112 = vpow.pop %v1111
        %v1113 = vmul.f32 %v1058, 1.442695
        %v1114 = vpow.pop %v1113
        %v1115 = vmul.f32 %v1059, 1.442695
        %v1116 = vpow.pop %v1115
        %v1117 = vmul.f32 %v1060, 1.442695
        %v1118 = vpow.pop %v1117
        %v1119 = vmul.f32 %v1061, 1.442695
        %v1120 = vpow.pop %v1119
        %v1121 = vmul.f32 %v1062, 1.442695
        %v1122 = vpow.pop %v1121
        %v1123 = vmul.f32 %v1063, 1.442695
        %v1124 = vpow.pop %v1123
        %v1125 = vmul.f32 %v1064, 1.442695
        %v1126 = vpow.pop %v1125
        %v1127 = vmul.f32 %v1065, 1.442695
        %v1128 = vpow.pop %v1127
        %v1129 = vmul.f32 %v1066, 1.442695
        %v1130 = vpow.pop %v1129
        %v1131 = vadd.f32 %v1068, 1.0
        %v1132 = vadd.f32 %v1070, 1.0
        %v1133 = vadd.f32 %v1072, 1.0
        %v1134 = vadd.f32 %v1074, 1.0
        %v1135 = vadd.f32 %v1076, 1.0
        %v1136 = vadd.f32 %v1078, 1.0
        %v1137 = vadd.f32 %v1080, 1.0
        %v1138 = vadd.f32 %v1082, 1.0
        %v1139 = vadd.f32 %v1084, 1.0
        %v1140 = vadd.f32 %v1086, 1.0
        %v1141 = vadd.f32 %v1088, 1.0
        %v1142 = vadd.f32 %v1090, 1.0
        %v1143 = vadd.f32 %v1092, 1.0
        %v1144 = vadd.f32 %v1094, 1.0
        %v1145 = vadd.f32 %v1096, 1.0
        %v1146 = vadd.f32 %v1098, 1.0
        %v1147 = vadd.f32 %v1100, 1.0
        %v1148 = vadd.f32 %v1102, 1.0
        %v1149 = vadd.f32 %v1104, 1.0
        %v1150 = vadd.f32 %v1106, 1.0
        %v1151 = vadd.f32 %v1108, 1.0
        %v1152 = vadd.f32 %v1110, 1.0
        %v1153 = vadd.f32 %v1112, 1.0
        %v1154 = vadd.f32 %v1114, 1.0
        %v1155 = vadd.f32 %v1116, 1.0
        %v1156 = vadd.f32 %v1118, 1.0
        %v1157 = vadd.f32 %v1120, 1.0
        %v1158 = vadd.f32 %v1122, 1.0
        %v1159 = vadd.f32 %v1124, 1.0
        %v1160 = vadd.f32 %v1126, 1.0
        %v1161 = vadd.f32 %v1128, 1.0
        %v1162 = vadd.f32 %v1130, 1.0
        %v1163 = vlog2.pop %v1131
        %v1164 = vmul.f32 %v1163, 0.6931472
        %v1165 = vlog2.pop %v1132
        %v1166 = vmul.f32 %v1165, 0.6931472
        %v1167 = vlog2.pop %v1133
        %v1168 = vmul.f32 %v1167, 0.6931472
        %v1169 = vlog2.pop %v1134
        %v1170 = vmul.f32 %v1169, 0.6931472
        %v1171 = vlog2.pop %v1135
        %v1172 = vmul.f32 %v1171, 0.6931472
        %v1173 = vlog2.pop %v1136
        %v1174 = vmul.f32 %v1173, 0.6931472
        %v1175 = vlog2.pop %v1137
        %v1176 = vmul.f32 %v1175, 0.6931472
        %v1177 = vlog2.pop %v1138
        %v1178 = vmul.f32 %v1177, 0.6931472
        %v1179 = vlog2.pop %v1139
        %v1180 = vmul.f32 %v1179, 0.6931472
        %v1181 = vlog2.pop %v1140
        %v1182 = vmul.f32 %v1181, 0.6931472
        %v1183 = vlog2.pop %v1141
        %v1184 = vmul.f32 %v1183, 0.6931472
        %v1185 = vlog2.pop %v1142
        %v1186 = vmul.f32 %v1185, 0.6931472
        %v1187 = vlog2.pop %v1143
        %v1188 = vmul.f32 %v1187, 0.6931472
        %v1189 = vlog2.pop %v1144
        %v1190 = vmul.f32 %v1189, 0.6931472
        %v1191 = vlog2.pop %v1145
        %v1192 = vmul.f32 %v1191, 0.6931472
        %v1193 = vlog2.pop %v1146
        %v1194 = vmul.f32 %v1193, 0.6931472
        %v1195 = vlog2.pop %v1147
        %v1196 = vmul.f32 %v1195, 0.6931472
        %v1197 = vlog2.pop %v1148
        %v1198 = vmul.f32 %v1197, 0.6931472
        %v1199 = vlog2.pop %v1149
        %v1200 = vmul.f32 %v1199, 0.6931472
        %v1201 = vlog2.pop %v1150
        %v1202 = vmul.f32 %v1201, 0.6931472
        %v1203 = vlog2.pop %v1151
        %v1204 = vmul.f32 %v1203, 0.6931472
        %v1205 = vlog2.pop %v1152
        %v1206 = vmul.f32 %v1205, 0.6931472
        %v1207 = vlog2.pop %v1153
        %v1208 = vmul.f32 %v1207, 0.6931472
        %v1209 = vlog2.pop %v1154
        %v1210 = vmul.f32 %v1209, 0.6931472
        %v1211 = vlog2.pop %v1155
        %v1212 = vmul.f32 %v1211, 0.6931472
        %v1213 = vlog2.pop %v1156
        %v1214 = vmul.f32 %v1213, 0.6931472
        %v1215 = vlog2.pop %v1157
        %v1216 = vmul.f32 %v1215, 0.6931472
        %v1217 = vlog2.pop %v1158
        %v1218 = vmul.f32 %v1217, 0.6931472
        %v1219 = vlog2.pop %v1159
        %v1220 = vmul.f32 %v1219, 0.6931472
        %v1221 = vlog2.pop %v1160
        %v1222 = vmul.f32 %v1221, 0.6931472
        %v1223 = vlog2.pop %v1161
        %v1224 = vmul.f32 %v1223, 0.6931472
        %v1225 = vlog2.pop %v1162
        %v1226 = vmul.f32 %v1225, 0.6931472
        %v1227 = vtanh.pop %v1164
        %v1228 = vtanh.pop %v1166
        %v1229 = vtanh.pop %v1168
        %v1230 = vtanh.pop %v1170
        %v1231 = vtanh.pop %v1172
        %v1232 = vtanh.pop %v1174
        %v1233 = vtanh.pop %v1176
        %v1234 = vtanh.pop %v1178
        %v1235 = vtanh.pop %v1180
        %v1236 = vtanh.pop %v1182
        %v1237 = vtanh.pop %v1184
        %v1238 = vtanh.pop %v1186
        %v1239 = vtanh.pop %v1188
        %v1240 = vtanh.pop %v1190
        %v1241 = vtanh.pop %v1192
        %v1242 = vtanh.pop %v1194
        %v1243 = vtanh.pop %v1196
        %v1244 = vtanh.pop %v1198
        %v1245 = vtanh.pop %v1200
        %v1246 = vtanh.pop %v1202
        %v1247 = vtanh.pop %v1204
        %v1248 = vtanh.pop %v1206
        %v1249 = vtanh.pop %v1208
        %v1250 = vtanh.pop %v1210
        %v1251 = vtanh.pop %v1212
        %v1252 = vtanh.pop %v1214
        %v1253 = vtanh.pop %v1216
        %v1254 = vtanh.pop %v1218
        %v1255 = vtanh.pop %v1220
        %v1256 = vtanh.pop %v1222
        %v1257 = vtanh.pop %v1224
        %v1258 = vtanh.pop %v1226
        %v1259 = vmul.f32 %v909, %v1227
        %v1260 = vmul.f32 %v912, %v1228
        %v1261 = vmul.f32 %v917, %v1229
        %v1262 = vmul.f32 %v920, %v1230
        %v1263 = vmul.f32 %v925, %v1231
        %v1264 = vmul.f32 %v928, %v1232
        %v1265 = vmul.f32 %v933, %v1233
        %v1266 = vmul.f32 %v936, %v1234
        %v1267 = vmul.f32 %v941, %v1235
        %v1268 = vmul.f32 %v944, %v1236
        %v1269 = vmul.f32 %v949, %v1237
        %v1270 = vmul.f32 %v952, %v1238
        %v1271 = vmul.f32 %v957, %v1239
        %v1272 = vmul.f32 %v960, %v1240
        %v1273 = vmul.f32 %v965, %v1241
        %v1274 = vmul.f32 %v968, %v1242
        %v1275 = vmul.f32 %v973, %v1243
        %v1276 = vmul.f32 %v976, %v1244
        %v1277 = vmul.f32 %v981, %v1245
        %v1278 = vmul.f32 %v984, %v1246
        %v1279 = vmul.f32 %v989, %v1247
        %v1280 = vmul.f32 %v992, %v1248
        %v1281 = vmul.f32 %v997, %v1249
        %v1282 = vmul.f32 %v1000, %v1250
        %v1283 = vmul.f32 %v1005, %v1251
        %v1284 = vmul.f32 %v1008, %v1252
        %v1285 = vmul.f32 %v1013, %v1253
        %v1286 = vmul.f32 %v1016, %v1254
        %v1287 = vmul.f32 %v1021, %v1255
        %v1288 = vmul.f32 %v1024, %v1256
        %v1289 = vmul.f32 %v1029, %v1257
        %v1290 = vmul.f32 %v1032, %v1258
        %s1291 = scalar_lea.vmem [#allocation2], 24
        %1292 = vst.msk [vmem:[%s1291 + $0x1] sm:$0xff] %vm656, %v1259
        %1293 = vst.msk [vmem:[%s1291 + $0x9] sm:$0xff] %vm656, %v1260
        %1294 = vst.msk [vmem:[%s1291 + $0x19] sm:$0xff] %vm656, %v1261
        %1295 = vst.msk [vmem:[%s1291 + $0x21] sm:$0xff] %vm656, %v1262
        %1296 = vst.msk [vmem:[%s1291 + $0x31] sm:$0xff] %vm656, %v1263
        %1297 = vst.msk [vmem:[%s1291 + $0x39] sm:$0xff] %vm656, %v1264
        %1298 = vst.msk [vmem:[%s1291 + $0x49] sm:$0xff] %vm656, %v1265
        %1299 = vst.msk [vmem:[%s1291 + $0x51] sm:$0xff] %vm656, %v1266
        %1300 = vst.msk [vmem:[%s1291 + $0x61] sm:$0xff] %vm656, %v1267
        %1301 = vst.msk [vmem:[%s1291 + $0x69] sm:$0xff] %vm656, %v1268
        %1302 = vst.msk [vmem:[%s1291 + $0x79] sm:$0xff] %vm656, %v1269
        %1303 = vst.msk [vmem:[%s1291 + $0x81] sm:$0xff] %vm656, %v1270
        %1304 = vst.msk [vmem:[%s1291 + $0x91] sm:$0xff] %vm656, %v1271
        %1305 = vst.msk [vmem:[%s1291 + $0x99] sm:$0xff] %vm656, %v1272
        %1306 = vst.msk [vmem:[%s1291 + $0xa9] sm:$0xff] %vm656, %v1273
        %1307 = vst.msk [vmem:[%s1291 + $0xb1] sm:$0xff] %vm656, %v1274
        %1308 = vst.msk [vmem:[%s1291 + $0xc1] sm:$0xff] %vm656, %v1275
        %1309 = vst.msk [vmem:[%s1291 + $0xc9] sm:$0xff] %vm656, %v1276
        %1310 = vst.msk [vmem:[%s1291 + $0xd9] sm:$0xff] %vm656, %v1277
        %1311 = vst.msk [vmem:[%s1291 + $0xe1] sm:$0xff] %vm656, %v1278
        %1312 = vst.msk [vmem:[%s1291 + $0xf1] sm:$0xff] %vm656, %v1279
        %1313 = vst.msk [vmem:[%s1291 + $0xf9] sm:$0xff] %vm656, %v1280
        %1314 = vst.msk [vmem:[%s1291 + $0x109] sm:$0xff] %vm656, %v1281
        %1315 = vst.msk [vmem:[%s1291 + $0x111] sm:$0xff] %vm656, %v1282
        %1316 = vst.msk [vmem:[%s1291 + $0x121] sm:$0xff] %vm656, %v1283
        %1317 = vst.msk [vmem:[%s1291 + $0x129] sm:$0xff] %vm656, %v1284
        %1318 = vst.msk [vmem:[%s1291 + $0x139] sm:$0xff] %vm656, %v1285
        %1319 = vst.msk [vmem:[%s1291 + $0x141] sm:$0xff] %vm656, %v1286
        %1320 = vst.msk [vmem:[%s1291 + $0x151] sm:$0xff] %vm656, %v1287
        %1321 = vst.msk [vmem:[%s1291 + $0x159] sm:$0xff] %vm656, %v1288
        %1322 = vst.msk [vmem:[%s1291 + $0x169] sm:$0xff] %vm656, %v1289
        %1323 = vst.msk [vmem:[%s1291 + $0x171] sm:$0xff] %vm656, %v1290
        %v1324 = vld [vmem:[#allocation2] ss:$2 sm:$0xff]
        %s1325 = scalar_lea.vmem [#allocation2], 24
        %v1326 = vld [vmem:[%s1325] ss:$2 sm:$0xff]
        %s1327 = scalar_lea.vmem [#allocation2], 48
        %v1328 = vld [vmem:[%s1327] ss:$2 sm:$0xff]
        %s1329 = scalar_lea.vmem [#allocation2], 72
        %v1330 = vld [vmem:[%s1329] ss:$2 sm:$0xff]
        %s1331 = scalar_lea.vmem [#allocation2], 96
        %v1332 = vld [vmem:[%s1331] ss:$2 sm:$0xff]
        %s1333 = scalar_lea.vmem [#allocation2], 120
        %v1334 = vld [vmem:[%s1333] ss:$2 sm:$0xff]
        %s1335 = scalar_lea.vmem [#allocation2], 144
        %v1336 = vld [vmem:[%s1335] ss:$2 sm:$0xff]
        %s1337 = scalar_lea.vmem [#allocation2], 168
        %v1338 = vld [vmem:[%s1337] ss:$2 sm:$0xff]
        %s1339 = scalar_lea.vmem [#allocation2], 192
        %v1340 = vld [vmem:[%s1339] ss:$2 sm:$0xff]
        %s1341 = scalar_lea.vmem [#allocation2], 216
        %v1342 = vld [vmem:[%s1341] ss:$2 sm:$0xff]
        %s1343 = scalar_lea.vmem [#allocation2], 240
        %v1344 = vld [vmem:[%s1343] ss:$2 sm:$0xff]
        %s1345 = scalar_lea.vmem [#allocation2], 264
        %v1346 = vld [vmem:[%s1345] ss:$2 sm:$0xff]
        %s1347 = scalar_lea.vmem [#allocation2], 288
        %v1348 = vld [vmem:[%s1347] ss:$2 sm:$0xff]
        %s1349 = scalar_lea.vmem [#allocation2], 312
        %v1350 = vld [vmem:[%s1349] ss:$2 sm:$0xff]
        %s1351 = scalar_lea.vmem [#allocation2], 336
        %v1352 = vld [vmem:[%s1351] ss:$2 sm:$0xff]
        %s1353 = scalar_lea.vmem [#allocation2], 360
        %v1354 = vld [vmem:[%s1353] ss:$2 sm:$0xff]
        %s1355 = scalar_lea.vmem [#allocation2], 384
        %v1356 = vld [vmem:[%s1355] ss:$2 sm:$0xff]
        %s1357 = scalar_lea.vmem [#allocation2], 1
        %v1358 = vld [vmem:[%s1357] ss:$2 sm:$0xff]
        %s1359 = scalar_lea.vmem [#allocation2], 25
        %v1360 = vld [vmem:[%s1359] ss:$2 sm:$0xff]
        %s1361 = scalar_lea.vmem [#allocation2], 49
        %v1362 = vld [vmem:[%s1361] ss:$2 sm:$0xff]
        %s1363 = scalar_lea.vmem [#allocation2], 73
        %v1364 = vld [vmem:[%s1363] ss:$2 sm:$0xff]
        %s1365 = scalar_lea.vmem [#allocation2], 97
        %v1366 = vld [vmem:[%s1365] ss:$2 sm:$0xff]
        %s1367 = scalar_lea.vmem [#allocation2], 121
        %v1368 = vld [vmem:[%s1367] ss:$2 sm:$0xff]
        %s1369 = scalar_lea.vmem [#allocation2], 145
        %v1370 = vld [vmem:[%s1369] ss:$2 sm:$0xff]
        %s1371 = scalar_lea.vmem [#allocation2], 169
        %v1372 = vld [vmem:[%s1371] ss:$2 sm:$0xff]
        %s1373 = scalar_lea.vmem [#allocation2], 193
        %v1374 = vld [vmem:[%s1373] ss:$2 sm:$0xff]
        %s1375 = scalar_lea.vmem [#allocation2], 217
        %v1376 = vld [vmem:[%s1375] ss:$2 sm:$0xff]
        %s1377 = scalar_lea.vmem [#allocation2], 241
        %v1378 = vld [vmem:[%s1377] ss:$2 sm:$0xff]
        %s1379 = scalar_lea.vmem [#allocation2], 265
        %v1380 = vld [vmem:[%s1379] ss:$2 sm:$0xff]
        %s1381 = scalar_lea.vmem [#allocation2], 289
        %v1382 = vld [vmem:[%s1381] ss:$2 sm:$0xff]
        %s1383 = scalar_lea.vmem [#allocation2], 313
        %v1384 = vld [vmem:[%s1383] ss:$2 sm:$0xff]
        %s1385 = scalar_lea.vmem [#allocation2], 337
        %v1386 = vld [vmem:[%s1385] ss:$2 sm:$0xff]
        %s1387 = scalar_lea.vmem [#allocation2], 361
        %v1388 = vld [vmem:[%s1387] ss:$2 sm:$0xff]
        %s1389 = scalar_lea.vmem [#allocation2], 385
        %v1390 = vld [vmem:[%s1389] ss:$2 sm:$0xff]
        %s1391 = scalar_lea.vmem [#allocation2], 2
        %v1392 = vld [vmem:[%s1391] ss:$2 sm:$0xff]
        %s1393 = scalar_lea.vmem [#allocation2], 26
        %v1394 = vld [vmem:[%s1393] ss:$2 sm:$0xff]
        %s1395 = scalar_lea.vmem [#allocation2], 50
        %v1396 = vld [vmem:[%s1395] ss:$2 sm:$0xff]
        %s1397 = scalar_lea.vmem [#allocation2], 74
        %v1398 = vld [vmem:[%s1397] ss:$2 sm:$0xff]
        %s1399 = scalar_lea.vmem [#allocation2], 98
        %v1400 = vld [vmem:[%s1399] ss:$2 sm:$0xff]
        %s1401 = scalar_lea.vmem [#allocation2], 122
        %v1402 = vld [vmem:[%s1401] ss:$2 sm:$0xff]
        %s1403 = scalar_lea.vmem [#allocation2], 146
        %v1404 = vld [vmem:[%s1403] ss:$2 sm:$0xff]
        %s1405 = scalar_lea.vmem [#allocation2], 170
        %v1406 = vld [vmem:[%s1405] ss:$2 sm:$0xff]
        %s1407 = scalar_lea.vmem [#allocation2], 194
        %v1408 = vld [vmem:[%s1407] ss:$2 sm:$0xff]
        %s1409 = scalar_lea.vmem [#allocation2], 218
        %v1410 = vld [vmem:[%s1409] ss:$2 sm:$0xff]
        %s1411 = scalar_lea.vmem [#allocation2], 242
        %v1412 = vld [vmem:[%s1411] ss:$2 sm:$0xff]
        %s1413 = scalar_lea.vmem [#allocation2], 266
        %v1414 = vld [vmem:[%s1413] ss:$2 sm:$0xff]
        %s1415 = scalar_lea.vmem [#allocation2], 290
        %v1416 = vld [vmem:[%s1415] ss:$2 sm:$0xff]
        %s1417 = scalar_lea.vmem [#allocation2], 314
        %v1418 = vld [vmem:[%s1417] ss:$2 sm:$0xff]
        %s1419 = scalar_lea.vmem [#allocation2], 338
        %v1420 = vld [vmem:[%s1419] ss:$2 sm:$0xff]
        %s1421 = scalar_lea.vmem [#allocation2], 362
        %v1422 = vld [vmem:[%s1421] ss:$2 sm:$0xff]
        %s1423 = scalar_lea.vmem [#allocation2], 386
        %v1424 = vld [vmem:[%s1423] ss:$2 sm:$0xff]
        %1433 = vrot.lane.b32.xlu0 %v1358, 32
        %v1434 = vpop.permute.xlu0 %1433
        %1435 = vrot.lane.b32.xlu0 %v1362, 32
        %v1436 = vpop.permute.xlu0 %1435
        %1437 = vrot.lane.b32.xlu0 %v1366, 32
        %v1438 = vpop.permute.xlu0 %1437
        %1439 = vrot.lane.b32.xlu0 %v1370, 32
        %v1440 = vpop.permute.xlu0 %1439
        %1441 = vrot.lane.b32.xlu0 %v1374, 32
        %v1442 = vpop.permute.xlu0 %1441
        %1443 = vrot.lane.b32.xlu0 %v1378, 32
        %v1444 = vpop.permute.xlu0 %1443
        %1445 = vrot.lane.b32.xlu0 %v1382, 32
        %v1446 = vpop.permute.xlu0 %1445
        %1447 = vrot.lane.b32.xlu0 %v1386, 32
        %v1448 = vpop.permute.xlu0 %1447
        %1465 = vrot.lane.b32.xlu0 %v1392, 64
        %v1466 = vpop.permute.xlu0 %1465
        %1467 = vrot.lane.b32.xlu0 %v1396, 64
        %v1468 = vpop.permute.xlu0 %1467
        %1469 = vrot.lane.b32.xlu0 %v1400, 64
        %v1470 = vpop.permute.xlu0 %1469
        %1471 = vrot.lane.b32.xlu0 %v1404, 64
        %v1472 = vpop.permute.xlu0 %1471
        %1473 = vrot.lane.b32.xlu0 %v1408, 64
        %v1474 = vpop.permute.xlu0 %1473
        %1475 = vrot.lane.b32.xlu0 %v1412, 64
        %v1476 = vpop.permute.xlu0 %1475
        %1477 = vrot.lane.b32.xlu0 %v1416, 64
        %v1478 = vpop.permute.xlu0 %1477
        %1479 = vrot.lane.b32.xlu0 %v1420, 64
        %v1480 = vpop.permute.xlu0 %1479
        %1497 = vrot.lane.b32.xlu0 %v1326, 96
        %v1498 = vpop.permute.xlu0 %1497
        %1499 = vrot.lane.b32.xlu0 %v1330, 96
        %v1500 = vpop.permute.xlu0 %1499
        %1501 = vrot.lane.b32.xlu0 %v1334, 96
        %v1502 = vpop.permute.xlu0 %1501
        %1503 = vrot.lane.b32.xlu0 %v1338, 96
        %v1504 = vpop.permute.xlu0 %1503
        %1505 = vrot.lane.b32.xlu0 %v1342, 96
        %v1506 = vpop.permute.xlu0 %1505
        %1507 = vrot.lane.b32.xlu0 %v1346, 96
        %v1508 = vpop.permute.xlu0 %1507
        %1509 = vrot.lane.b32.xlu0 %v1350, 96
        %v1510 = vpop.permute.xlu0 %1509
        %1511 = vrot.lane.b32.xlu0 %v1354, 96
        %v1512 = vpop.permute.xlu0 %1511
        %1529 = vrot.lane.b32.xlu0 %v1394, 32
        %v1530 = vpop.permute.xlu0 %1529
        %1531 = vrot.lane.b32.xlu0 %v1398, 32
        %v1532 = vpop.permute.xlu0 %1531
        %1533 = vrot.lane.b32.xlu0 %v1402, 32
        %v1534 = vpop.permute.xlu0 %1533
        %1535 = vrot.lane.b32.xlu0 %v1406, 32
        %v1536 = vpop.permute.xlu0 %1535
        %1537 = vrot.lane.b32.xlu0 %v1410, 32
        %v1538 = vpop.permute.xlu0 %1537
        %1539 = vrot.lane.b32.xlu0 %v1414, 32
        %v1540 = vpop.permute.xlu0 %1539
        %1541 = vrot.lane.b32.xlu0 %v1418, 32
        %v1542 = vpop.permute.xlu0 %1541
        %1543 = vrot.lane.b32.xlu0 %v1422, 32
        %v1544 = vpop.permute.xlu0 %1543
        %1561 = vrot.lane.b32.xlu0 %v1328, 64
        %v1562 = vpop.permute.xlu0 %1561
        %1563 = vrot.lane.b32.xlu0 %v1332, 64
        %v1564 = vpop.permute.xlu0 %1563
        %1565 = vrot.lane.b32.xlu0 %v1336, 64
        %v1566 = vpop.permute.xlu0 %1565
        %1567 = vrot.lane.b32.xlu0 %v1340, 64
        %v1568 = vpop.permute.xlu0 %1567
        %1569 = vrot.lane.b32.xlu0 %v1344, 64
        %v1570 = vpop.permute.xlu0 %1569
        %1571 = vrot.lane.b32.xlu0 %v1348, 64
        %v1572 = vpop.permute.xlu0 %1571
        %1573 = vrot.lane.b32.xlu0 %v1352, 64
        %v1574 = vpop.permute.xlu0 %1573
        %1575 = vrot.lane.b32.xlu0 %v1356, 64
        %v1576 = vpop.permute.xlu0 %1575
        %1586 = vrot.lane.b32.xlu0 %v1362, 96
        %v1587 = vpop.permute.xlu0 %1586
        %1588 = vrot.lane.b32.xlu0 %v1366, 96
        %v1589 = vpop.permute.xlu0 %1588
        %1590 = vrot.lane.b32.xlu0 %v1370, 96
        %v1591 = vpop.permute.xlu0 %1590
        %1592 = vrot.lane.b32.xlu0 %v1374, 96
        %v1593 = vpop.permute.xlu0 %1592
        %1594 = vrot.lane.b32.xlu0 %v1378, 96
        %v1595 = vpop.permute.xlu0 %1594
        %1596 = vrot.lane.b32.xlu0 %v1382, 96
        %v1597 = vpop.permute.xlu0 %1596
        %1598 = vrot.lane.b32.xlu0 %v1386, 96
        %v1599 = vpop.permute.xlu0 %1598
        %1600 = vrot.lane.b32.xlu0 %v1390, 96
        %v1601 = vpop.permute.xlu0 %1600
        %v1610 = vsel %vm656, %v1324, %v1434
        %v1611 = vsel %vm656, %v1328, %v1436
        %v1612 = vsel %vm656, %v1332, %v1438
        %v1613 = vsel %vm656, %v1336, %v1440
        %v1614 = vsel %vm656, %v1340, %v1442
        %v1615 = vsel %vm656, %v1344, %v1444
        %v1616 = vsel %vm656, %v1348, %v1446
        %v1617 = vsel %vm656, %v1352, %v1448
        %vm1618 = vcmask 523264
        %v1619 = vsel %vm1618, %v1610, %v1466
        %v1620 = vsel %vm1618, %v1611, %v1468
        %v1621 = vsel %vm1618, %v1612, %v1470
        %v1622 = vsel %vm1618, %v1613, %v1472
        %v1623 = vsel %vm1618, %v1614, %v1474
        %v1624 = vsel %vm1618, %v1615, %v1476
        %v1625 = vsel %vm1618, %v1616, %v1478
        %v1626 = vsel %vm1618, %v1617, %v1480
        %vm1627 = vcmask 785408
        %v1628 = vsel %vm1627, %v1619, %v1498
        %v1629 = vsel %vm1627, %v1620, %v1500
        %v1630 = vsel %vm1627, %v1621, %v1502
        %v1631 = vsel %vm1627, %v1622, %v1504
        %v1632 = vsel %vm1627, %v1623, %v1506
        %v1633 = vsel %vm1627, %v1624, %v1508
        %v1634 = vsel %vm1627, %v1625, %v1510
        %v1635 = vsel %vm1627, %v1626, %v1512
        %v1636 = vsel %vm656, %v1360, %v1530
        %v1637 = vsel %vm656, %v1364, %v1532
        %v1638 = vsel %vm656, %v1368, %v1534
        %v1639 = vsel %vm656, %v1372, %v1536
        %v1640 = vsel %vm656, %v1376, %v1538
        %v1641 = vsel %vm656, %v1380, %v1540
        %v1642 = vsel %vm656, %v1384, %v1542
        %v1643 = vsel %vm656, %v1388, %v1544
        %v1644 = vsel %vm1618, %v1636, %v1562
        %v1645 = vsel %vm1618, %v1637, %v1564
        %v1646 = vsel %vm1618, %v1638, %v1566
        %v1647 = vsel %vm1618, %v1639, %v1568
        %v1648 = vsel %vm1618, %v1640, %v1570
        %v1649 = vsel %vm1618, %v1641, %v1572
        %v1650 = vsel %vm1618, %v1642, %v1574
        %v1651 = vsel %vm1618, %v1643, %v1576
        %v1652 = vsel %vm1627, %v1644, %v1587
        %v1653 = vsel %vm1627, %v1645, %v1589
        %v1654 = vsel %vm1627, %v1646, %v1591
        %v1655 = vsel %vm1627, %v1647, %v1593
        %v1656 = vsel %vm1627, %v1648, %v1595
        %v1657 = vsel %vm1627, %v1649, %v1597
        %v1658 = vsel %vm1627, %v1650, %v1599
        %v1659 = vsel %vm1627, %v1651, %v1601
        %v1660 = vpack.c.bf16 %v1628, %v1628
        %v1661 = vpack.c.bf16 %v1652, %v1652
        %v1662 = vpack.c.bf16 %v1396, %v1396
        %v1663 = vpack.c.bf16 %v1629, %v1629
        %v1664 = vpack.c.bf16 %v1653, %v1653
        %v1665 = vpack.c.bf16 %v1400, %v1400
        %v1666 = vpack.c.bf16 %v1630, %v1630
        %v1667 = vpack.c.bf16 %v1654, %v1654
        %v1668 = vpack.c.bf16 %v1404, %v1404
        %v1669 = vpack.c.bf16 %v1631, %v1631
        %v1670 = vpack.c.bf16 %v1655, %v1655
        %v1671 = vpack.c.bf16 %v1408, %v1408
        %v1672 = vpack.c.bf16 %v1632, %v1632
        %v1673 = vpack.c.bf16 %v1656, %v1656
        %v1674 = vpack.c.bf16 %v1412, %v1412
        %v1675 = vpack.c.bf16 %v1633, %v1633
        %v1676 = vpack.c.bf16 %v1657, %v1657
        %v1677 = vpack.c.bf16 %v1416, %v1416
        %v1678 = vpack.c.bf16 %v1634, %v1634
        %v1679 = vpack.c.bf16 %v1658, %v1658
        %v1680 = vpack.c.bf16 %v1420, %v1420
        %v1681 = vpack.c.bf16 %v1635, %v1635
        %v1682 = vpack.c.bf16 %v1659, %v1659
        %v1683 = vpack.c.bf16 %v1424, %v1424
        %v1708 = vunpack.c.l.b16 %v1660
        %v1709 = vunpack.c.l.b16 %v1661
        %v1710 = vunpack.c.l.b16 %v1662
        %v1711 = vunpack.c.l.b16 %v1663
        %v1712 = vunpack.c.l.b16 %v1664
        %v1713 = vunpack.c.l.b16 %v1665
        %v1714 = vunpack.c.l.b16 %v1666
        %v1715 = vunpack.c.l.b16 %v1667
        %v1716 = vunpack.c.l.b16 %v1668
        %v1717 = vunpack.c.l.b16 %v1669
        %v1718 = vunpack.c.l.b16 %v1670
        %v1719 = vunpack.c.l.b16 %v1671
        %v1720 = vunpack.c.l.b16 %v1672
        %v1721 = vunpack.c.l.b16 %v1673
        %v1722 = vunpack.c.l.b16 %v1674
        %v1723 = vunpack.c.l.b16 %v1675
        %v1724 = vunpack.c.l.b16 %v1676
        %v1725 = vunpack.c.l.b16 %v1677
        %v1726 = vunpack.c.l.b16 %v1678
        %v1727 = vunpack.c.l.b16 %v1679
        %v1728 = vunpack.c.l.b16 %v1680
        %v1729 = vunpack.c.l.b16 %v1681
        %v1730 = vunpack.c.l.b16 %v1682
        %v1731 = vunpack.c.l.b16 %v1683
        %v1732 = vld [vmem:[%s3] sm:$0xf]
        %v1733 = vld [vmem:[%s3 + $0x4] sm:$0xf]
        %v1734 = vld [vmem:[%s3 + $0x8] sm:$0xf]
        %v1735 = vld [vmem:[%s3 + $0xc] sm:$0xf]
        %v1736 = vld [vmem:[%s3 + $0x10] sm:$0xf]
        %v1737 = vld [vmem:[%s3 + $0x14] sm:$0xf]
        %v1738 = vld [vmem:[%s3 + $0x18] sm:$0xf]
        %v1739 = vld [vmem:[%s3 + $0x1c] sm:$0xf]
        %v1740 = vld [vmem:[%s3 + $0x20] sm:$0xf]
        %v1741 = vld [vmem:[%s3 + $0x24] sm:$0xf]
        %v1742 = vld [vmem:[%s3 + $0x28] sm:$0xf]
        %v1743 = vld [vmem:[%s3 + $0x2c] sm:$0xf]
        %v1744 = vld [vmem:[%s3 + $0x30] sm:$0xf]
        %v1745 = vld [vmem:[%s3 + $0x34] sm:$0xf]
        %v1746 = vld [vmem:[%s3 + $0x38] sm:$0xf]
        %v1747 = vld [vmem:[%s3 + $0x3c] sm:$0xf]
        %v1748 = vld [vmem:[%s3 + $0x40] sm:$0xf]
        %v1749 = vld [vmem:[%s3 + $0x44] sm:$0xf]
        %v1750 = vld [vmem:[%s3 + $0x48] sm:$0xf]
        %v1751 = vld [vmem:[%s3 + $0x4c] sm:$0xf]
        %v1752 = vld [vmem:[%s3 + $0x50] sm:$0xf]
        %v1753 = vld [vmem:[%s3 + $0x54] sm:$0xf]
        %v1754 = vld [vmem:[%s3 + $0x58] sm:$0xf]
        %v1755 = vld [vmem:[%s3 + $0x5c] sm:$0xf]
        %v1756 = vld [vmem:[%s3 + $0x60] sm:$0xf]
        %v1757 = vld [vmem:[%s3 + $0x64] sm:$0xf]
        %v1758 = vld [vmem:[%s3 + $0x68] sm:$0xf]
        %v1759 = vld [vmem:[%s3 + $0x6c] sm:$0xf]
        %v1760 = vld [vmem:[%s3 + $0x70] sm:$0xf]
        %v1761 = vld [vmem:[%s3 + $0x74] sm:$0xf]
        %v1762 = vld [vmem:[%s3 + $0x78] sm:$0xf]
        %v1763 = vld [vmem:[%s3 + $0x7c] sm:$0xf]
        %v1764 = vld [vmem:[%s3 + $0x80] sm:$0xf]
        %v1765 = vld [vmem:[%s3 + $0x84] sm:$0xf]
        %v1766 = vld [vmem:[%s3 + $0x88] sm:$0xf]
        %v1767 = vld [vmem:[%s3 + $0x8c] sm:$0xf]
        %v1768 = vld [vmem:[%s4] sm:$0x1]
        %v1770 = vlaneseq
        %v1771 = vshrl.u32 %v1770, 7
        %v1772 = vsub.s32 0, %v1771
        %v1773 = vrot.slane %v1768, %v1772
        %v1775 = vpack.c.b16 %v1711, %v1708
        %v1776 = vpack.c.b16 %v1712, %v1709
        %v1777 = vpack.c.b16 %v1713, %v1710
        %v1778 = vpack.c.b16 %v1717, %v1714
        %v1779 = vpack.c.b16 %v1718, %v1715
        %v1780 = vpack.c.b16 %v1719, %v1716
        %v1781 = vpack.c.b16 %v1723, %v1720
        %v1782 = vpack.c.b16 %v1724, %v1721
        %v1783 = vpack.c.b16 %v1725, %v1722
        %v1784 = vpack.c.b16 %v1729, %v1726
        %v1785 = vpack.c.b16 %v1730, %v1727
        %v1786 = vpack.c.b16 %v1731, %v1728
        %v1831 = vunpack.c.l.b16 %v1732
        %v1832 = vunpack.c.l.b16 %v1733
        %v1833 = vunpack.c.l.b16 %v1734
        %v1834 = vunpack.c.l.b16 %v1735
        %v1835 = vunpack.c.l.b16 %v1736
        %v1836 = vunpack.c.l.b16 %v1737
        %v1837 = vunpack.c.l.b16 %v1738
        %v1838 = vunpack.c.l.b16 %v1739
        %v1839 = vunpack.c.l.b16 %v1740
        %v1840 = vunpack.c.l.b16 %v1741
        %v1841 = vunpack.c.l.b16 %v1742
        %v1842 = vunpack.c.l.b16 %v1743
        %v1843 = vunpack.c.l.b16 %v1744
        %v1844 = vunpack.c.l.b16 %v1745
        %v1845 = vunpack.c.l.b16 %v1746
        %v1846 = vunpack.c.l.b16 %v1747
        %v1847 = vunpack.c.l.b16 %v1748
        %v1848 = vunpack.c.l.b16 %v1749
        %v1849 = vunpack.c.l.b16 %v1750
        %v1850 = vunpack.c.l.b16 %v1751
        %v1851 = vunpack.c.l.b16 %v1752
        %v1852 = vunpack.c.l.b16 %v1753
        %v1853 = vunpack.c.l.b16 %v1754
        %v1854 = vunpack.c.l.b16 %v1755
        %v1855 = vunpack.c.l.b16 %v1756
        %v1856 = vunpack.c.l.b16 %v1757
        %v1857 = vunpack.c.l.b16 %v1758
        %v1858 = vunpack.c.l.b16 %v1759
        %v1859 = vunpack.c.l.b16 %v1760
        %v1860 = vunpack.c.l.b16 %v1761
        %v1861 = vunpack.c.l.b16 %v1762
        %v1862 = vunpack.c.l.b16 %v1763
        %v1863 = vunpack.c.l.b16 %v1764
        %v1864 = vunpack.c.l.b16 %v1765
        %v1865 = vunpack.c.l.b16 %v1766
        %v1866 = vunpack.c.l.b16 %v1767
        %v1867 = vpack.c.b16 %v1832, %v1831
        %v1868 = vpack.c.b16 %v1834, %v1833
        %v1869 = vpack.c.b16 %v1836, %v1835
        %v1870 = vpack.c.b16 %v1838, %v1837
        %v1871 = vpack.c.b16 %v1840, %v1839
        %v1872 = vpack.c.b16 %v1842, %v1841
        %v1873 = vpack.c.b16 %v1844, %v1843
        %v1874 = vpack.c.b16 %v1846, %v1845
        %v1875 = vpack.c.b16 %v1848, %v1847
        %v1876 = vpack.c.b16 %v1850, %v1849
        %v1877 = vpack.c.b16 %v1852, %v1851
        %v1878 = vpack.c.b16 %v1854, %v1853
        %v1879 = vpack.c.b16 %v1856, %v1855
        %v1880 = vpack.c.b16 %v1858, %v1857
        %v1881 = vpack.c.b16 %v1860, %v1859
        %v1882 = vpack.c.b16 %v1862, %v1861
        %v1883 = vpack.c.b16 %v1864, %v1863
        %v1884 = vpack.c.b16 %v1866, %v1865
        %v1904 = vsel %vm656, %v1777, 0
        %v1907 = vsel %vm656, %v1780, 0
        %v1910 = vsel %vm656, %v1783, 0
        %v1913 = vsel %vm656, %v1786, 0
        %1915 = vmatprep.subr.bf16.mxu0 0
        %1916 = vmatpush1.bf16.msra.mxu0 %v1874
        %1917 = vmatprep.subr.bf16.mxu0 0
        %1918 = vmatpush1.bf16.msra.mxu0 %v1873
        %1919 = vmatprep.subr.bf16.mxu0 0
        %1920 = vmatpush1.bf16.msra.mxu0 %v1872
        %1921 = vmatprep.subr.bf16.mxu0 0
        %1922 = vmatpush1.bf16.msra.mxu0 %v1871
        %1923 = vmatprep.subr.bf16.mxu0 0
        %1924 = vmatpush1.bf16.msra.mxu0 %v1870
        %1925 = vmatprep.subr.bf16.mxu0 0
        %1926 = vmatpush1.bf16.msra.mxu0 %v1869
        %1927 = vmatprep.subr.bf16.mxu0 0
        %1928 = vmatpush1.bf16.msra.mxu0 %v1868
        %1929 = vmatprep.subr.bf16.mxu0 0
        %1930 = vmatpush1.bf16.msra.mxu0 %v1867
        %1931 = vmatprep.subr.bf16.mxu0 0
        %1932 = vmatpush2.bf16.msra.mxu0 %v1882
        %1933 = vmatprep.subr.bf16.mxu0 0
        %1934 = vmatpush2.bf16.msra.mxu0 %v1881
        %1935 = vmatprep.subr.bf16.mxu0 0
        %1936 = vmatpush2.bf16.msra.mxu0 %v1880
        %1937 = vmatprep.subr.bf16.mxu0 0
        %1938 = vmatpush2.bf16.msra.mxu0 %v1879
        %1939 = vmatprep.subr.bf16.mxu0 0
        %1940 = vmatpush2.bf16.msra.mxu0 %v1878
        %1941 = vmatprep.subr.bf16.mxu0 0
        %1942 = vmatpush2.bf16.msra.mxu0 %v1877
        %1943 = vmatprep.subr.bf16.mxu0 0
        %1944 = vmatpush2.bf16.msra.mxu0 %v1876
        %1945 = vmatprep.subr.bf16.mxu0 0
        %1946 = vmatpush2.bf16.msra.mxu0 %v1875
        %1947 = vmatprep.mubr.bf16.mxu0 %v1776
        %1948 = vmatmul.mubr.bf16.gmra.mxu0 %v1775
        %v1949 = vpop.f32.mrf.mxu0
        %v1950 = vadd.f32 %v1773, %v1949
        %v1951 = vpop.f32.mrf.mxu0
        %v1952 = vpop.f32.mrf.mxu0
        %v1953 = vadd.f32 %v1773, %v1952
        %v1954 = vpop.f32.mrf.mxu0
        %1955 = vmatprep.mubr.bf16.mxu0 %v1779
        %1956 = vmatmul.mubr.bf16.gmra.mxu0 %v1778
        %v1957 = vpop.f32.mrf.mxu0
        %v1958 = vadd.f32 %v1773, %v1957
        %v1959 = vpop.f32.mrf.mxu0
        %v1960 = vpop.f32.mrf.mxu0
        %v1961 = vadd.f32 %v1773, %v1960
        %v1962 = vpop.f32.mrf.mxu0
        %1963 = vmatprep.mubr.bf16.mxu0 %v1782
        %1964 = vmatmul.mubr.bf16.gmra.mxu0 %v1781
        %v1965 = vpop.f32.mrf.mxu0
        %v1966 = vadd.f32 %v1773, %v1965
        %v1967 = vpop.f32.mrf.mxu0
        %v1968 = vpop.f32.mrf.mxu0
        %v1969 = vadd.f32 %v1773, %v1968
        %v1970 = vpop.f32.mrf.mxu0
        %1971 = vmatprep.mubr.bf16.mxu0 %v1785
        %1972 = vmatmul.mubr.bf16.gmra.mxu0 %v1784
        %v1973 = vpop.f32.mrf.mxu0
        %v1974 = vadd.f32 %v1773, %v1973
        %v1975 = vpop.f32.mrf.mxu0
        %v1976 = vpop.f32.mrf.mxu0
        %v1977 = vadd.f32 %v1773, %v1976
        %v1978 = vpop.f32.mrf.mxu0
        %1979 = vdwg.mxu0
        %1980 = vmatprep.subr.bf16.mxu0 0
        %1981 = vmatpush1.bf16.msra.mxu0 0
        %1982 = vmatprep.subr.bf16.mxu0 0
        %1983 = vmatpush1.bf16.msra.mxu0 0
        %1984 = vmatprep.subr.bf16.mxu0 0
        %1985 = vmatpush1.bf16.msra.mxu0 0
        %1986 = vmatprep.subr.bf16.mxu0 0
        %1987 = vmatpush1.bf16.msra.mxu0 0
        %1988 = vmatprep.subr.bf16.mxu0 0
        %1989 = vmatpush1.bf16.msra.mxu0 0
        %1990 = vmatprep.subr.bf16.mxu0 0
        %1991 = vmatpush1.bf16.msra.mxu0 0
        %1992 = vmatprep.subr.bf16.mxu0 0
        %1993 = vmatpush1.bf16.msra.mxu0 %v1884
        %1994 = vmatprep.subr.bf16.mxu0 0
        %1995 = vmatpush1.bf16.msra.mxu0 %v1883
        %1996 = vmatprep.subr.bf16.mxu0 0
        %1997 = vmatpush2.bf16.msra.mxu0 0
        %1998 = vmatprep.subr.bf16.mxu0 0
        %1999 = vmatpush2.bf16.msra.mxu0 0
        %2000 = vmatprep.subr.bf16.mxu0 0
        %2001 = vmatpush2.bf16.msra.mxu0 0
        %2002 = vmatprep.subr.bf16.mxu0 0
        %2003 = vmatpush2.bf16.msra.mxu0 0
        %2004 = vmatprep.subr.bf16.mxu0 0
        %2005 = vmatpush2.bf16.msra.mxu0 0
        %2006 = vmatprep.subr.bf16.mxu0 0
        %2007 = vmatpush2.bf16.msra.mxu0 0
        %2008 = vmatprep.subr.bf16.mxu0 0
        %2009 = vmatpush2.bf16.msra.mxu0 0
        %2010 = vmatprep.subr.bf16.mxu0 0
        %2011 = vmatpush2.bf16.msra.mxu0 0
        %2012 = vmatprep.mubr.bf16.mxu0 0
        %2013 = vmatmul.mubr.bf16.gmra.mxu0 %v1904
        %v2014 = vpop.f32.mrf.mxu0
        %v2015 = vadd.f32 %v1950, %v2014
        %v2016 = vpop.f32.mrf.mxu0
        %v2017 = vpop.f32.mrf.mxu0
        %v2018 = vadd.f32 %v1953, %v2017
        %v2019 = vpop.f32.mrf.mxu0
        %2020 = vmatprep.mubr.bf16.mxu0 0
        %2021 = vmatmul.mubr.bf16.gmra.mxu0 %v1907
        %v2022 = vpop.f32.mrf.mxu0
        %v2023 = vadd.f32 %v1958, %v2022
        %v2024 = vpop.f32.mrf.mxu0
        %v2025 = vpop.f32.mrf.mxu0
        %v2026 = vadd.f32 %v1961, %v2025
        %v2027 = vpop.f32.mrf.mxu0
        %2028 = vmatprep.mubr.bf16.mxu0 0
        %2029 = vmatmul.mubr.bf16.gmra.mxu0 %v1910
        %v2030 = vpop.f32.mrf.mxu0
        %v2031 = vadd.f32 %v1966, %v2030
        %v2032 = vpop.f32.mrf.mxu0
        %v2033 = vpop.f32.mrf.mxu0
        %v2034 = vadd.f32 %v1969, %v2033
        %v2035 = vpop.f32.mrf.mxu0
        %2036 = vmatprep.mubr.bf16.mxu0 0
        %2037 = vmatmul.mubr.bf16.gmra.mxu0 %v1913
        %v2038 = vpop.f32.mrf.mxu0
        %v2039 = vadd.f32 %v1974, %v2038
        %v2040 = vpop.f32.mrf.mxu0
        %v2041 = vpop.f32.mrf.mxu0
        %v2042 = vadd.f32 %v1977, %v2041
        %v2043 = vpop.f32.mrf.mxu0
        %2044 = vdwg.mxu0
        %v2045 = vmin.f32 %v2015, 20.0
        %v2046 = vmin.f32 %v2018, 20.0
        %v2047 = vmin.f32 %v2023, 20.0
        %v2048 = vmin.f32 %v2026, 20.0
        %v2049 = vmin.f32 %v2031, 20.0
        %v2050 = vmin.f32 %v2034, 20.0
        %v2051 = vmin.f32 %v2039, 20.0
        %v2052 = vmin.f32 %v2042, 20.0
        %v2053 = vmul.f32 %v2045, 1.442695
        %v2054 = vpow.pop %v2053
        %v2055 = vmul.f32 %v2046, 1.442695
        %v2056 = vpow.pop %v2055
        %v2057 = vmul.f32 %v2047, 1.442695
        %v2058 = vpow.pop %v2057
        %v2059 = vmul.f32 %v2048, 1.442695
        %v2060 = vpow.pop %v2059
        %v2061 = vmul.f32 %v2049, 1.442695
        %v2062 = vpow.pop %v2061
        %v2063 = vmul.f32 %v2050, 1.442695
        %v2064 = vpow.pop %v2063
        %v2065 = vmul.f32 %v2051, 1.442695
        %v2066 = vpow.pop %v2065
        %v2067 = vmul.f32 %v2052, 1.442695
        %v2068 = vpow.pop %v2067
        %v2069 = vadd.f32 %v2054, 1.0
        %v2070 = vadd.f32 %v2056, 1.0
        %v2071 = vadd.f32 %v2058, 1.0
        %v2072 = vadd.f32 %v2060, 1.0
        %v2073 = vadd.f32 %v2062, 1.0
        %v2074 = vadd.f32 %v2064, 1.0
        %v2075 = vadd.f32 %v2066, 1.0
        %v2076 = vadd.f32 %v2068, 1.0
        %v2077 = vlog2.pop %v2069
        %v2078 = vmul.f32 %v2077, 0.6931472
        %v2079 = vlog2.pop %v2070
        %v2080 = vmul.f32 %v2079, 0.6931472
        %v2081 = vlog2.pop %v2071
        %v2082 = vmul.f32 %v2081, 0.6931472
        %v2083 = vlog2.pop %v2072
        %v2084 = vmul.f32 %v2083, 0.6931472
        %v2085 = vlog2.pop %v2073
        %v2086 = vmul.f32 %v2085, 0.6931472
        %v2087 = vlog2.pop %v2074
        %v2088 = vmul.f32 %v2087, 0.6931472
        %v2089 = vlog2.pop %v2075
        %v2090 = vmul.f32 %v2089, 0.6931472
        %v2091 = vlog2.pop %v2076
        %v2092 = vmul.f32 %v2091, 0.6931472
        %v2093 = vtanh.pop %v2078
        %v2094 = vtanh.pop %v2080
        %v2095 = vtanh.pop %v2082
        %v2096 = vtanh.pop %v2084
        %v2097 = vtanh.pop %v2086
        %v2098 = vtanh.pop %v2088
        %v2099 = vtanh.pop %v2090
        %v2100 = vtanh.pop %v2092
        %v2101 = vmul.f32 %v2015, %v2093
        %v2102 = vmul.f32 %v2018, %v2094
        %v2103 = vmul.f32 %v2023, %v2095
        %v2104 = vmul.f32 %v2026, %v2096
        %v2105 = vmul.f32 %v2031, %v2097
        %v2106 = vmul.f32 %v2034, %v2098
        %v2107 = vmul.f32 %v2039, %v2099
        %v2108 = vmul.f32 %v2042, %v2100
        %v2109 = vpack.c.bf16 %v2101, %v2101
        %v2110 = vpack.c.bf16 %v2102, %v2102
        %v2111 = vpack.c.bf16 %v2103, %v2103
        %v2112 = vpack.c.bf16 %v2104, %v2104
        %v2113 = vpack.c.bf16 %v2105, %v2105
        %v2114 = vpack.c.bf16 %v2106, %v2106
        %v2115 = vpack.c.bf16 %v2107, %v2107
        %v2116 = vpack.c.bf16 %v2108, %v2108
        %v2125 = vunpack.c.l.b16 %v2109
        %v2126 = vunpack.c.l.b16 %v2110
        %v2127 = vunpack.c.l.b16 %v2111
        %v2128 = vunpack.c.l.b16 %v2112
        %v2129 = vunpack.c.l.b16 %v2113
        %v2130 = vunpack.c.l.b16 %v2114
        %v2131 = vunpack.c.l.b16 %v2115
        %v2132 = vunpack.c.l.b16 %v2116
        %v2133 = vpack.c.b16 %v2125, %v2125
        %v2134 = vpack.c.b16 %v2126, %v2126
        %v2135 = vpack.c.b16 %v2127, %v2127
        %v2136 = vpack.c.b16 %v2128, %v2128
        %v2137 = vpack.c.b16 %v2129, %v2129
        %v2138 = vpack.c.b16 %v2130, %v2130
        %v2139 = vpack.c.b16 %v2131, %v2131
        %v2140 = vpack.c.b16 %v2132, %v2132
        %v2142 = vshrl.u32 %v2133, 16
        %v2144 = vrot.slane %v2142, 7
        %v2145 = vshll.u32 %v2133, 16
        %v2147 = vor.u32 %v2144, %v2145
        %v2148 = vrot.slane %v2144, 4
        %v2150 = vshrl.u32 %v2134, 16
        %v2152 = vrot.slane %v2150, 7
        %v2153 = vshll.u32 %v2134, 16
        %v2155 = vor.u32 %v2152, %v2153
        %v2156 = vrot.slane %v2152, 4
        %v2158 = vshrl.u32 %v2135, 16
        %v2160 = vrot.slane %v2158, 7
        %v2161 = vshll.u32 %v2135, 16
        %v2163 = vor.u32 %v2160, %v2161
        %v2164 = vrot.slane %v2160, 4
        %v2166 = vshrl.u32 %v2136, 16
        %v2168 = vrot.slane %v2166, 7
        %v2169 = vshll.u32 %v2136, 16
        %v2171 = vor.u32 %v2168, %v2169
        %v2172 = vrot.slane %v2168, 4
        %v2174 = vshrl.u32 %v2137, 16
        %v2176 = vrot.slane %v2174, 7
        %v2177 = vshll.u32 %v2137, 16
        %v2179 = vor.u32 %v2176, %v2177
        %v2180 = vrot.slane %v2176, 4
        %v2182 = vshrl.u32 %v2138, 16
        %v2184 = vrot.slane %v2182, 7
        %v2185 = vshll.u32 %v2138, 16
        %v2187 = vor.u32 %v2184, %v2185
        %v2188 = vrot.slane %v2184, 4
        %v2190 = vshrl.u32 %v2139, 16
        %v2192 = vrot.slane %v2190, 7
        %v2193 = vshll.u32 %v2139, 16
        %v2195 = vor.u32 %v2192, %v2193
        %v2196 = vrot.slane %v2192, 4
        %v2198 = vshrl.u32 %v2140, 16
        %v2200 = vrot.slane %v2198, 7
        %v2201 = vshll.u32 %v2140, 16
        %v2203 = vor.u32 %v2200, %v2201
        %v2204 = vrot.slane %v2200, 4
        %s2221 = scalar_lea.vmem [#allocation3], 8
        %vm2222 = vcmask 519168
        %vm2223 = vsmask.f32 7938
        %vm2224 = vmand %vm2222, %vm2223
        %v2225 = vld [vmem:[%s2221] sm:$0xf]
        %v2226 = vsel %vm2224, %v2147, %v2225
        %2227 = vst [vmem:[%s2221] sm:$0xf] %v2226
        %vm2228 = vcmask 516096
        %vm2229 = vsmask.f32 256
        %vm2230 = vmand %vm2228, %vm2229
        %v2231 = vld [vmem:[%s2221 + $0x4] sm:$0x1]
        %v2232 = vsel %vm2230, %v2148, %v2231
        %2233 = vst [vmem:[%s2221 + $0x4] sm:$0x1] %v2232
        %v2234 = vld [vmem:[%s2221 + $0x8] sm:$0xf]
        %v2235 = vsel %vm2224, %v2155, %v2234
        %2236 = vst [vmem:[%s2221 + $0x8] sm:$0xf] %v2235
        %v2237 = vld [vmem:[%s2221 + $0xc] sm:$0x1]
        %v2238 = vsel %vm2230, %v2156, %v2237
        %2239 = vst [vmem:[%s2221 + $0xc] sm:$0x1] %v2238
        %v2240 = vld [vmem:[%s2221 + $0x10] sm:$0xf]
        %v2241 = vsel %vm2224, %v2163, %v2240
        %2242 = vst [vmem:[%s2221 + $0x10] sm:$0xf] %v2241
        %v2243 = vld [vmem:[%s2221 + $0x14] sm:$0x1]
        %v2244 = vsel %vm2230, %v2164, %v2243
        %2245 = vst [vmem:[%s2221 + $0x14] sm:$0x1] %v2244
        %v2246 = vld [vmem:[%s2221 + $0x18] sm:$0xf]
        %v2247 = vsel %vm2224, %v2171, %v2246
        %2248 = vst [vmem:[%s2221 + $0x18] sm:$0xf] %v2247
        %v2249 = vld [vmem:[%s2221 + $0x1c] sm:$0x1]
        %v2250 = vsel %vm2230, %v2172, %v2249
        %2251 = vst [vmem:[%s2221 + $0x1c] sm:$0x1] %v2250
        %v2252 = vld [vmem:[%s2221 + $0x20] sm:$0xf]
        %v2253 = vsel %vm2224, %v2179, %v2252
        %2254 = vst [vmem:[%s2221 + $0x20] sm:$0xf] %v2253
        %v2255 = vld [vmem:[%s2221 + $0x24] sm:$0x1]
        %v2256 = vsel %vm2230, %v2180, %v2255
        %2257 = vst [vmem:[%s2221 + $0x24] sm:$0x1] %v2256
        %v2258 = vld [vmem:[%s2221 + $0x28] sm:$0xf]
        %v2259 = vsel %vm2224, %v2187, %v2258
        %2260 = vst [vmem:[%s2221 + $0x28] sm:$0xf] %v2259
        %v2261 = vld [vmem:[%s2221 + $0x2c] sm:$0x1]
        %v2262 = vsel %vm2230, %v2188, %v2261
        %2263 = vst [vmem:[%s2221 + $0x2c] sm:$0x1] %v2262
        %v2264 = vld [vmem:[%s2221 + $0x30] sm:$0xf]
        %v2265 = vsel %vm2224, %v2195, %v2264
        %2266 = vst [vmem:[%s2221 + $0x30] sm:$0xf] %v2265
        %v2267 = vld [vmem:[%s2221 + $0x34] sm:$0x1]
        %v2268 = vsel %vm2230, %v2196, %v2267
        %2269 = vst [vmem:[%s2221 + $0x34] sm:$0x1] %v2268
        %v2270 = vld [vmem:[%s2221 + $0x38] sm:$0xf]
        %v2271 = vsel %vm2224, %v2203, %v2270
        %2272 = vst [vmem:[%s2221 + $0x38] sm:$0xf] %v2271
        %v2273 = vld [vmem:[%s2221 + $0x3c] sm:$0x1]
        %v2274 = vsel %vm2230, %v2204, %v2273
        %2275 = vst [vmem:[%s2221 + $0x3c] sm:$0x1] %v2274
        %v2276 = vld [vmem:[#allocation3] sm:$0xf]
        %v2277 = vld [vmem:[#allocation3 + $0x8] sm:$0xf]
        %v2278 = vld [vmem:[#allocation3 + $0x10] sm:$0xf]
        %v2279 = vld [vmem:[#allocation3 + $0x18] sm:$0xf]
        %v2280 = vld [vmem:[#allocation3 + $0x20] sm:$0xf]
        %v2281 = vld [vmem:[#allocation3 + $0x28] sm:$0xf]
        %v2282 = vld [vmem:[#allocation3 + $0x30] sm:$0xf]
        %v2283 = vld [vmem:[#allocation3 + $0x38] sm:$0xf]
        %v2284 = vld [vmem:[#allocation3 + $0x4] sm:$0x1]
        %v2285 = vld [vmem:[#allocation3 + $0xc] sm:$0x1]
        %v2286 = vld [vmem:[#allocation3 + $0x14] sm:$0x1]
        %v2287 = vld [vmem:[#allocation3 + $0x1c] sm:$0x1]
        %v2288 = vld [vmem:[#allocation3 + $0x24] sm:$0x1]
        %v2289 = vld [vmem:[#allocation3 + $0x2c] sm:$0x1]
        %v2290 = vld [vmem:[#allocation3 + $0x34] sm:$0x1]
        %v2291 = vld [vmem:[#allocation3 + $0x3c] sm:$0x1]
        %v2292 = vld [vmem:[#allocation3] sm:$0xe]
        %v2293 = vld [vmem:[#allocation3 + $0x8] sm:$0xe]
        %v2294 = vld [vmem:[#allocation3 + $0x10] sm:$0xe]
        %v2295 = vld [vmem:[#allocation3 + $0x18] sm:$0xe]
        %v2296 = vld [vmem:[#allocation3 + $0x20] sm:$0xe]
        %v2297 = vld [vmem:[#allocation3 + $0x28] sm:$0xe]
        %v2298 = vld [vmem:[#allocation3 + $0x30] sm:$0xe]
        %v2299 = vld [vmem:[#allocation3 + $0x38] sm:$0xe]
        %v2300 = vld [vmem:[%s2221] sm:$0xf]
        %v2301 = vld [vmem:[%s2221 + $0x8] sm:$0xf]
        %v2302 = vld [vmem:[%s2221 + $0x10] sm:$0xf]
        %v2303 = vld [vmem:[%s2221 + $0x18] sm:$0xf]
        %v2304 = vld [vmem:[%s2221 + $0x20] sm:$0xf]
        %v2305 = vld [vmem:[%s2221 + $0x28] sm:$0xf]
        %v2306 = vld [vmem:[%s2221 + $0x30] sm:$0xf]
        %v2307 = vld [vmem:[%s2221 + $0x38] sm:$0xf]
        %v2308 = vld [vmem:[%s2221 + $0x4] sm:$0x1]
        %v2309 = vld [vmem:[%s2221 + $0xc] sm:$0x1]
        %v2310 = vld [vmem:[%s2221 + $0x14] sm:$0x1]
        %v2311 = vld [vmem:[%s2221 + $0x1c] sm:$0x1]
        %v2312 = vld [vmem:[%s2221 + $0x24] sm:$0x1]
        %v2313 = vld [vmem:[%s2221 + $0x2c] sm:$0x1]
        %v2314 = vld [vmem:[%s2221 + $0x34] sm:$0x1]
        %v2315 = vld [vmem:[%s2221 + $0x3c] sm:$0x1]
        %v2316 = vld [vmem:[%s2221] sm:$0xe]
        %v2317 = vld [vmem:[%s2221 + $0x8] sm:$0xe]
        %v2318 = vld [vmem:[%s2221 + $0x10] sm:$0xe]
        %v2319 = vld [vmem:[%s2221 + $0x18] sm:$0xe]
        %v2320 = vld [vmem:[%s2221 + $0x20] sm:$0xe]
        %v2321 = vld [vmem:[%s2221 + $0x28] sm:$0xe]
        %v2322 = vld [vmem:[%s2221 + $0x30] sm:$0xe]
        %v2323 = vld [vmem:[%s2221 + $0x38] sm:$0xe]
        %s2324 = scalar_lea.vmem [#allocation3], 16
        %v2325 = vld [vmem:[%s2324] sm:$0xf]
        %v2326 = vld [vmem:[%s2324 + $0x8] sm:$0xf]
        %v2327 = vld [vmem:[%s2324 + $0x10] sm:$0xf]
        %v2328 = vld [vmem:[%s2324 + $0x18] sm:$0xf]
        %v2329 = vld [vmem:[%s2324 + $0x20] sm:$0xf]
        %v2330 = vld [vmem:[%s2324 + $0x28] sm:$0xf]
        %v2331 = vld [vmem:[%s2324 + $0x30] sm:$0xf]
        %v2332 = vld [vmem:[%s2324 + $0x38] sm:$0xf]
        %v2333 = vld [vmem:[%s2324 + $0x4] sm:$0x1]
        %v2334 = vld [vmem:[%s2324 + $0xc] sm:$0x1]
        %v2335 = vld [vmem:[%s2324 + $0x14] sm:$0x1]
        %v2336 = vld [vmem:[%s2324 + $0x1c] sm:$0x1]
        %v2337 = vld [vmem:[%s2324 + $0x24] sm:$0x1]
        %v2338 = vld [vmem:[%s2324 + $0x2c] sm:$0x1]
        %v2339 = vld [vmem:[%s2324 + $0x34] sm:$0x1]
        %v2340 = vld [vmem:[%s2324 + $0x3c] sm:$0x1]
        %v2341 = vld [vmem:[%s2324] sm:$0xe]
        %v2342 = vld [vmem:[%s2324 + $0x8] sm:$0xe]
        %v2343 = vld [vmem:[%s2324 + $0x10] sm:$0xe]
        %v2344 = vld [vmem:[%s2324 + $0x18] sm:$0xe]
        %v2345 = vld [vmem:[%s2324 + $0x20] sm:$0xe]
        %v2346 = vld [vmem:[%s2324 + $0x28] sm:$0xe]
        %v2347 = vld [vmem:[%s2324 + $0x30] sm:$0xe]
        %v2348 = vld [vmem:[%s2324 + $0x38] sm:$0xe]
        %v2365 = vunpack.c.l.b16 %v2276
        %v2366 = vunpack.c.l.b16 %v2284
        %v2367 = vunpack.c.l.b16 %v2277
        %v2368 = vunpack.c.l.b16 %v2285
        %v2369 = vunpack.c.l.b16 %v2278
        %v2370 = vunpack.c.l.b16 %v2286
        %v2371 = vunpack.c.l.b16 %v2279
        %v2372 = vunpack.c.l.b16 %v2287
        %v2373 = vunpack.c.l.b16 %v2280
        %v2374 = vunpack.c.l.b16 %v2288
        %v2375 = vunpack.c.l.b16 %v2281
        %v2376 = vunpack.c.l.b16 %v2289
        %v2377 = vunpack.c.l.b16 %v2282
        %v2378 = vunpack.c.l.b16 %v2290
        %v2379 = vunpack.c.l.b16 %v2283
        %v2380 = vunpack.c.l.b16 %v2291
        %v2381 = vpack.c.b16 %v2366, %v2365
        %v2382 = vpack.c.b16 %v2368, %v2367
        %v2383 = vpack.c.b16 %v2370, %v2369
        %v2384 = vpack.c.b16 %v2372, %v2371
        %v2385 = vpack.c.b16 %v2374, %v2373
        %v2386 = vpack.c.b16 %v2376, %v2375
        %v2387 = vpack.c.b16 %v2378, %v2377
        %v2388 = vpack.c.b16 %v2380, %v2379
        %v2390 = vshrl.u32 %v2381, 16
        %v2392 = vshll.u32 %v2381, 16
        %v2394 = vrot.slane %v2392, 1
        %v2395 = vor.u32 %v2390, %v2394
        %v2397 = vshrl.u32 %v2382, 16
        %v2399 = vshll.u32 %v2382, 16
        %v2401 = vrot.slane %v2399, 1
        %v2402 = vor.u32 %v2397, %v2401
        %v2404 = vshrl.u32 %v2383, 16
        %v2406 = vshll.u32 %v2383, 16
        %v2408 = vrot.slane %v2406, 1
        %v2409 = vor.u32 %v2404, %v2408
        %v2411 = vshrl.u32 %v2384, 16
        %v2413 = vshll.u32 %v2384, 16
        %v2415 = vrot.slane %v2413, 1
        %v2416 = vor.u32 %v2411, %v2415
        %v2418 = vshrl.u32 %v2385, 16
        %v2420 = vshll.u32 %v2385, 16
        %v2422 = vrot.slane %v2420, 1
        %v2423 = vor.u32 %v2418, %v2422
        %v2425 = vshrl.u32 %v2386, 16
        %v2427 = vshll.u32 %v2386, 16
        %v2429 = vrot.slane %v2427, 1
        %v2430 = vor.u32 %v2425, %v2429
        %v2432 = vshrl.u32 %v2387, 16
        %v2434 = vshll.u32 %v2387, 16
        %v2436 = vrot.slane %v2434, 1
        %v2437 = vor.u32 %v2432, %v2436
        %v2439 = vshrl.u32 %v2388, 16
        %v2441 = vshll.u32 %v2388, 16
        %v2443 = vrot.slane %v2441, 1
        %v2444 = vor.u32 %v2439, %v2443
        %2445 = vrot.lane.b32.xlu0 %v2395, 64
        %v2446 = vpop.permute.xlu0 %2445
        %2447 = vrot.lane.b32.xlu0 %v2402, 64
        %v2448 = vpop.permute.xlu0 %2447
        %2449 = vrot.lane.b32.xlu0 %v2409, 64
        %v2450 = vpop.permute.xlu0 %2449
        %2451 = vrot.lane.b32.xlu0 %v2416, 64
        %v2452 = vpop.permute.xlu0 %2451
        %2453 = vrot.lane.b32.xlu0 %v2423, 64
        %v2454 = vpop.permute.xlu0 %2453
        %2455 = vrot.lane.b32.xlu0 %v2430, 64
        %v2456 = vpop.permute.xlu0 %2455
        %2457 = vrot.lane.b32.xlu0 %v2437, 64
        %v2458 = vpop.permute.xlu0 %2457
        %2459 = vrot.lane.b32.xlu0 %v2444, 64
        %v2460 = vpop.permute.xlu0 %2459
        %v2469 = vunpack.c.l.b16 %v2292
        %v2470 = vunpack.c.l.b16 %v2293
        %v2471 = vunpack.c.l.b16 %v2294
        %v2472 = vunpack.c.l.b16 %v2295
        %v2473 = vunpack.c.l.b16 %v2296
        %v2474 = vunpack.c.l.b16 %v2297
        %v2475 = vunpack.c.l.b16 %v2298
        %v2476 = vunpack.c.l.b16 %v2299
        %v2477 = vpack.c.b16 %v2366, %v2469
        %v2478 = vpack.c.b16 %v2368, %v2470
        %v2479 = vpack.c.b16 %v2370, %v2471
        %v2480 = vpack.c.b16 %v2372, %v2472
        %v2481 = vpack.c.b16 %v2374, %v2473
        %v2482 = vpack.c.b16 %v2376, %v2474
        %v2483 = vpack.c.b16 %v2378, %v2475
        %v2484 = vpack.c.b16 %v2380, %v2476
        %v2485 = vrot.slane %v2477, 1
        %v2486 = vrot.slane %v2478, 1
        %v2487 = vrot.slane %v2479, 1
        %v2488 = vrot.slane %v2480, 1
        %v2489 = vrot.slane %v2481, 1
        %v2490 = vrot.slane %v2482, 1
        %v2491 = vrot.slane %v2483, 1
        %v2492 = vrot.slane %v2484, 1
        %v2501 = vunpack.c.l.b16 %v2300
        %v2502 = vunpack.c.l.b16 %v2301
        %v2503 = vunpack.c.l.b16 %v2302
        %v2504 = vunpack.c.l.b16 %v2303
        %v2505 = vunpack.c.l.b16 %v2304
        %v2506 = vunpack.c.l.b16 %v2305
        %v2507 = vunpack.c.l.b16 %v2306
        %v2508 = vunpack.c.l.b16 %v2307
        %v2509 = vpack.c.b16 %v2501, %v2501
        %v2510 = vpack.c.b16 %v2502, %v2502
        %v2511 = vpack.c.b16 %v2503, %v2503
        %v2512 = vpack.c.b16 %v2504, %v2504
        %v2513 = vpack.c.b16 %v2505, %v2505
        %v2514 = vpack.c.b16 %v2506, %v2506
        %v2515 = vpack.c.b16 %v2507, %v2507
        %v2516 = vpack.c.b16 %v2508, %v2508
        %2517 = vrot.lane.b32.xlu0 %v2509, 64
        %v2518 = vpop.permute.xlu0 %2517
        %2519 = vrot.lane.b32.xlu0 %v2510, 64
        %v2520 = vpop.permute.xlu0 %2519
        %2521 = vrot.lane.b32.xlu0 %v2511, 64
        %v2522 = vpop.permute.xlu0 %2521
        %2523 = vrot.lane.b32.xlu0 %v2512, 64
        %v2524 = vpop.permute.xlu0 %2523
        %2525 = vrot.lane.b32.xlu0 %v2513, 64
        %v2526 = vpop.permute.xlu0 %2525
        %2527 = vrot.lane.b32.xlu0 %v2514, 64
        %v2528 = vpop.permute.xlu0 %2527
        %2529 = vrot.lane.b32.xlu0 %v2515, 64
        %v2530 = vpop.permute.xlu0 %2529
        %2531 = vrot.lane.b32.xlu0 %v2516, 64
        %v2532 = vpop.permute.xlu0 %2531
        %v2541 = vunpack.c.l.b16 %v2308
        %v2542 = vunpack.c.l.b16 %v2309
        %v2543 = vunpack.c.l.b16 %v2310
        %v2544 = vunpack.c.l.b16 %v2311
        %v2545 = vunpack.c.l.b16 %v2312
        %v2546 = vunpack.c.l.b16 %v2313
        %v2547 = vunpack.c.l.b16 %v2314
        %v2548 = vunpack.c.l.b16 %v2315
        %v2549 = vpack.c.b16 %v2541, %v2501
        %v2550 = vpack.c.b16 %v2542, %v2502
        %v2551 = vpack.c.b16 %v2543, %v2503
        %v2552 = vpack.c.b16 %v2544, %v2504
        %v2553 = vpack.c.b16 %v2545, %v2505
        %v2554 = vpack.c.b16 %v2546, %v2506
        %v2555 = vpack.c.b16 %v2547, %v2507
        %v2556 = vpack.c.b16 %v2548, %v2508
        %v2558 = vshrl.u32 %v2549, 16
        %v2560 = vshll.u32 %v2549, 16
        %v2562 = vrot.slane %v2560, 1
        %v2563 = vor.u32 %v2558, %v2562
        %v2565 = vshrl.u32 %v2550, 16
        %v2567 = vshll.u32 %v2550, 16
        %v2569 = vrot.slane %v2567, 1
        %v2570 = vor.u32 %v2565, %v2569
        %v2572 = vshrl.u32 %v2551, 16
        %v2574 = vshll.u32 %v2551, 16
        %v2576 = vrot.slane %v2574, 1
        %v2577 = vor.u32 %v2572, %v2576
        %v2579 = vshrl.u32 %v2552, 16
        %v2581 = vshll.u32 %v2552, 16
        %v2583 = vrot.slane %v2581, 1
        %v2584 = vor.u32 %v2579, %v2583
        %v2586 = vshrl.u32 %v2553, 16
        %v2588 = vshll.u32 %v2553, 16
        %v2590 = vrot.slane %v2588, 1
        %v2591 = vor.u32 %v2586, %v2590
        %v2593 = vshrl.u32 %v2554, 16
        %v2595 = vshll.u32 %v2554, 16
        %v2597 = vrot.slane %v2595, 1
        %v2598 = vor.u32 %v2593, %v2597
        %v2600 = vshrl.u32 %v2555, 16
        %v2602 = vshll.u32 %v2555, 16
        %v2604 = vrot.slane %v2602, 1
        %v2605 = vor.u32 %v2600, %v2604
        %v2607 = vshrl.u32 %v2556, 16
        %v2609 = vshll.u32 %v2556, 16
        %v2611 = vrot.slane %v2609, 1
        %v2612 = vor.u32 %v2607, %v2611
        %v2621 = vunpack.c.l.b16 %v2316
        %v2622 = vunpack.c.l.b16 %v2317
        %v2623 = vunpack.c.l.b16 %v2318
        %v2624 = vunpack.c.l.b16 %v2319
        %v2625 = vunpack.c.l.b16 %v2320
        %v2626 = vunpack.c.l.b16 %v2321
        %v2627 = vunpack.c.l.b16 %v2322
        %v2628 = vunpack.c.l.b16 %v2323
        %v2629 = vpack.c.b16 %v2541, %v2621
        %v2630 = vpack.c.b16 %v2542, %v2622
        %v2631 = vpack.c.b16 %v2543, %v2623
        %v2632 = vpack.c.b16 %v2544, %v2624
        %v2633 = vpack.c.b16 %v2545, %v2625
        %v2634 = vpack.c.b16 %v2546, %v2626
        %v2635 = vpack.c.b16 %v2547, %v2627
        %v2636 = vpack.c.b16 %v2548, %v2628
        %v2637 = vrot.slane %v2629, 1
        %v2638 = vrot.slane %v2630, 1
        %v2639 = vrot.slane %v2631, 1
        %v2640 = vrot.slane %v2632, 1
        %v2641 = vrot.slane %v2633, 1
        %v2642 = vrot.slane %v2634, 1
        %v2643 = vrot.slane %v2635, 1
        %v2644 = vrot.slane %v2636, 1
        %2645 = vrot.lane.b32.xlu0 %v2637, 64
        %v2646 = vpop.permute.xlu0 %2645
        %2647 = vrot.lane.b32.xlu0 %v2638, 64
        %v2648 = vpop.permute.xlu0 %2647
        %2649 = vrot.lane.b32.xlu0 %v2639, 64
        %v2650 = vpop.permute.xlu0 %2649
        %2651 = vrot.lane.b32.xlu0 %v2640, 64
        %v2652 = vpop.permute.xlu0 %2651
        %2653 = vrot.lane.b32.xlu0 %v2641, 64
        %v2654 = vpop.permute.xlu0 %2653
        %2655 = vrot.lane.b32.xlu0 %v2642, 64
        %v2656 = vpop.permute.xlu0 %2655
        %2657 = vrot.lane.b32.xlu0 %v2643, 64
        %v2658 = vpop.permute.xlu0 %2657
        %2659 = vrot.lane.b32.xlu0 %v2644, 64
        %v2660 = vpop.permute.xlu0 %2659
        %v2677 = vunpack.c.l.b16 %v2325
        %v2678 = vunpack.c.l.b16 %v2333
        %v2679 = vunpack.c.l.b16 %v2326
        %v2680 = vunpack.c.l.b16 %v2334
        %v2681 = vunpack.c.l.b16 %v2327
        %v2682 = vunpack.c.l.b16 %v2335
        %v2683 = vunpack.c.l.b16 %v2328
        %v2684 = vunpack.c.l.b16 %v2336
        %v2685 = vunpack.c.l.b16 %v2329
        %v2686 = vunpack.c.l.b16 %v2337
        %v2687 = vunpack.c.l.b16 %v2330
        %v2688 = vunpack.c.l.b16 %v2338
        %v2689 = vunpack.c.l.b16 %v2331
        %v2690 = vunpack.c.l.b16 %v2339
        %v2691 = vunpack.c.l.b16 %v2332
        %v2692 = vunpack.c.l.b16 %v2340
        %v2693 = vpack.c.b16 %v2678, %v2677
        %v2694 = vpack.c.b16 %v2680, %v2679
        %v2695 = vpack.c.b16 %v2682, %v2681
        %v2696 = vpack.c.b16 %v2684, %v2683
        %v2697 = vpack.c.b16 %v2686, %v2685
        %v2698 = vpack.c.b16 %v2688, %v2687
        %v2699 = vpack.c.b16 %v2690, %v2689
        %v2700 = vpack.c.b16 %v2692, %v2691
        %v2702 = vshrl.u32 %v2693, 16
        %v2704 = vshll.u32 %v2693, 16
        %v2706 = vrot.slane %v2704, 1
        %v2707 = vor.u32 %v2702, %v2706
        %v2709 = vshrl.u32 %v2694, 16
        %v2711 = vshll.u32 %v2694, 16
        %v2713 = vrot.slane %v2711, 1
        %v2714 = vor.u32 %v2709, %v2713
        %v2716 = vshrl.u32 %v2695, 16
        %v2718 = vshll.u32 %v2695, 16
        %v2720 = vrot.slane %v2718, 1
        %v2721 = vor.u32 %v2716, %v2720
        %v2723 = vshrl.u32 %v2696, 16
        %v2725 = vshll.u32 %v2696, 16
        %v2727 = vrot.slane %v2725, 1
        %v2728 = vor.u32 %v2723, %v2727
        %v2730 = vshrl.u32 %v2697, 16
        %v2732 = vshll.u32 %v2697, 16
        %v2734 = vrot.slane %v2732, 1
        %v2735 = vor.u32 %v2730, %v2734
        %v2737 = vshrl.u32 %v2698, 16
        %v2739 = vshll.u32 %v2698, 16
        %v2741 = vrot.slane %v2739, 1
        %v2742 = vor.u32 %v2737, %v2741
        %v2744 = vshrl.u32 %v2699, 16
        %v2746 = vshll.u32 %v2699, 16
        %v2748 = vrot.slane %v2746, 1
        %v2749 = vor.u32 %v2744, %v2748
        %v2751 = vshrl.u32 %v2700, 16
        %v2753 = vshll.u32 %v2700, 16
        %v2755 = vrot.slane %v2753, 1
        %v2756 = vor.u32 %v2751, %v2755
        %2757 = vrot.lane.b32.xlu0 %v2707, 64
        %v2758 = vpop.permute.xlu0 %2757
        %2759 = vrot.lane.b32.xlu0 %v2714, 64
        %v2760 = vpop.permute.xlu0 %2759
        %2761 = vrot.lane.b32.xlu0 %v2721, 64
        %v2762 = vpop.permute.xlu0 %2761
        %2763 = vrot.lane.b32.xlu0 %v2728, 64
        %v2764 = vpop.permute.xlu0 %2763
        %2765 = vrot.lane.b32.xlu0 %v2735, 64
        %v2766 = vpop.permute.xlu0 %2765
        %2767 = vrot.lane.b32.xlu0 %v2742, 64
        %v2768 = vpop.permute.xlu0 %2767
        %2769 = vrot.lane.b32.xlu0 %v2749, 64
        %v2770 = vpop.permute.xlu0 %2769
        %2771 = vrot.lane.b32.xlu0 %v2756, 64
        %v2772 = vpop.permute.xlu0 %2771
        %v2781 = vunpack.c.l.b16 %v2341
        %v2782 = vunpack.c.l.b16 %v2342
        %v2783 = vunpack.c.l.b16 %v2343
        %v2784 = vunpack.c.l.b16 %v2344
        %v2785 = vunpack.c.l.b16 %v2345
        %v2786 = vunpack.c.l.b16 %v2346
        %v2787 = vunpack.c.l.b16 %v2347
        %v2788 = vunpack.c.l.b16 %v2348
        %v2789 = vpack.c.b16 %v2678, %v2781
        %v2790 = vpack.c.b16 %v2680, %v2782
        %v2791 = vpack.c.b16 %v2682, %v2783
        %v2792 = vpack.c.b16 %v2684, %v2784
        %v2793 = vpack.c.b16 %v2686, %v2785
        %v2794 = vpack.c.b16 %v2688, %v2786
        %v2795 = vpack.c.b16 %v2690, %v2787
        %v2796 = vpack.c.b16 %v2692, %v2788
        %v2797 = vrot.slane %v2789, 1
        %v2798 = vrot.slane %v2790, 1
        %v2799 = vrot.slane %v2791, 1
        %v2800 = vrot.slane %v2792, 1
        %v2801 = vrot.slane %v2793, 1
        %v2802 = vrot.slane %v2794, 1
        %v2803 = vrot.slane %v2795, 1
        %v2804 = vrot.slane %v2796, 1
        %v2807 = vsel %vm1618, %v2276, %v2446
        %v2810 = vsel %vm1618, %v2277, %v2448
        %v2813 = vsel %vm1618, %v2278, %v2450
        %v2816 = vsel %vm1618, %v2279, %v2452
        %v2819 = vsel %vm1618, %v2280, %v2454
        %v2822 = vsel %vm1618, %v2281, %v2456
        %v2825 = vsel %vm1618, %v2282, %v2458
        %v2828 = vsel %vm1618, %v2283, %v2460
        %v2831 = vsel %vm1618, %v2485, %v2518
        %v2834 = vsel %vm1618, %v2486, %v2520
        %v2837 = vsel %vm1618, %v2487, %v2522
        %v2840 = vsel %vm1618, %v2488, %v2524
        %v2843 = vsel %vm1618, %v2489, %v2526
        %v2846 = vsel %vm1618, %v2490, %v2528
        %v2849 = vsel %vm1618, %v2491, %v2530
        %v2852 = vsel %vm1618, %v2492, %v2532
        %v2855 = vsel %vm1618, %v2563, %v2646
        %v2858 = vsel %vm1618, %v2570, %v2648
        %v2861 = vsel %vm1618, %v2577, %v2650
        %v2864 = vsel %vm1618, %v2584, %v2652
        %v2867 = vsel %vm1618, %v2591, %v2654
        %v2870 = vsel %vm1618, %v2598, %v2656
        %v2873 = vsel %vm1618, %v2605, %v2658
        %v2876 = vsel %vm1618, %v2612, %v2660
        %v2879 = vsel %vm1618, %v2325, %v2758
        %v2882 = vsel %vm1618, %v2326, %v2760
        %v2885 = vsel %vm1618, %v2327, %v2762
        %v2888 = vsel %vm1618, %v2328, %v2764
        %v2891 = vsel %vm1618, %v2329, %v2766
        %v2894 = vsel %vm1618, %v2330, %v2768
        %v2897 = vsel %vm1618, %v2331, %v2770
        %v2900 = vsel %vm1618, %v2332, %v2772
        %v2933 = vunpack.c.l.b16 %v2807
        %v2934 = vunpack.c.l.b16 %v2831
        %v2935 = vunpack.c.l.b16 %v2855
        %v2936 = vunpack.c.l.b16 %v2879
        %v2937 = vunpack.c.l.b16 %v2797
        %v2938 = vunpack.c.l.b16 %v2810
        %v2939 = vunpack.c.l.b16 %v2834
        %v2940 = vunpack.c.l.b16 %v2858
        %v2941 = vunpack.c.l.b16 %v2882
        %v2942 = vunpack.c.l.b16 %v2798
        %v2943 = vunpack.c.l.b16 %v2813
        %v2944 = vunpack.c.l.b16 %v2837
        %v2945 = vunpack.c.l.b16 %v2861
        %v2946 = vunpack.c.l.b16 %v2885
        %v2947 = vunpack.c.l.b16 %v2799
        %v2948 = vunpack.c.l.b16 %v2816
        %v2949 = vunpack.c.l.b16 %v2840
        %v2950 = vunpack.c.l.b16 %v2864
        %v2951 = vunpack.c.l.b16 %v2888
        %v2952 = vunpack.c.l.b16 %v2800
        %v2953 = vunpack.c.l.b16 %v2819
        %v2954 = vunpack.c.l.b16 %v2843
        %v2955 = vunpack.c.l.b16 %v2867
        %v2956 = vunpack.c.l.b16 %v2891
        %v2957 = vunpack.c.l.b16 %v2801
        %v2958 = vunpack.c.l.b16 %v2822
        %v2959 = vunpack.c.l.b16 %v2846
        %v2960 = vunpack.c.l.b16 %v2870
        %v2961 = vunpack.c.l.b16 %v2894
        %v2962 = vunpack.c.l.b16 %v2802
        %v2963 = vunpack.c.l.b16 %v2825
        %v2964 = vunpack.c.l.b16 %v2849
        %v2965 = vunpack.c.l.b16 %v2873
        %v2966 = vunpack.c.l.b16 %v2897
        %v2967 = vunpack.c.l.b16 %v2803
        %v2968 = vunpack.c.l.b16 %v2828
        %v2969 = vunpack.c.l.b16 %v2852
        %v2970 = vunpack.c.l.b16 %v2876
        %v2971 = vunpack.c.l.b16 %v2900
        %v2972 = vunpack.c.l.b16 %v2804
        %v2973 = vld [vmem:[%s5] sm:$0xf]
        %v2974 = vld [vmem:[%s5 + $0x4] sm:$0xf]
        %v2975 = vld [vmem:[%s5 + $0x8] sm:$0xf]
        %v2976 = vld [vmem:[%s5 + $0xc] sm:$0xf]
        %v2977 = vld [vmem:[%s5 + $0x10] sm:$0xf]
        %v2978 = vld [vmem:[%s5 + $0x14] sm:$0xf]
        %v2979 = vld [vmem:[%s5 + $0x18] sm:$0xf]
        %v2980 = vld [vmem:[%s5 + $0x1c] sm:$0xf]
        %v2981 = vld [vmem:[%s5 + $0x20] sm:$0xf]
        %v2982 = vld [vmem:[%s5 + $0x24] sm:$0xf]
        %v2983 = vld [vmem:[%s5 + $0x28] sm:$0xf]
        %v2984 = vld [vmem:[%s5 + $0x2c] sm:$0xf]
        %v2985 = vld [vmem:[%s5 + $0x30] sm:$0xf]
        %v2986 = vld [vmem:[%s5 + $0x34] sm:$0xf]
        %v2987 = vld [vmem:[%s5 + $0x38] sm:$0xf]
        %v2988 = vld [vmem:[%s5 + $0x3c] sm:$0xf]
        %v2989 = vld [vmem:[%s5 + $0x40] sm:$0xf]
        %v2990 = vld [vmem:[%s5 + $0x44] sm:$0xf]
        %v2991 = vld [vmem:[%s5 + $0x48] sm:$0xf]
        %v2992 = vld [vmem:[%s5 + $0x4c] sm:$0xf]
        %v2993 = vld [vmem:[%s5 + $0x50] sm:$0xf]
        %v2994 = vld [vmem:[%s5 + $0x54] sm:$0xf]
        %v2995 = vld [vmem:[%s5 + $0x58] sm:$0xf]
        %v2996 = vld [vmem:[%s5 + $0x5c] sm:$0xf]
        %v2997 = vld [vmem:[%s5 + $0x60] sm:$0xf]
        %v2998 = vld [vmem:[%s5 + $0x64] sm:$0xf]
        %v2999 = vld [vmem:[%s5 + $0x68] sm:$0xf]
        %v3000 = vld [vmem:[%s5 + $0x6c] sm:$0xf]
        %v3001 = vld [vmem:[%s5 + $0x70] sm:$0xf]
        %v3002 = vld [vmem:[%s5 + $0x74] sm:$0xf]
        %v3003 = vld [vmem:[%s5 + $0x78] sm:$0xf]
        %v3004 = vld [vmem:[%s5 + $0x7c] sm:$0xf]
        %v3005 = vld [vmem:[%s5 + $0x80] sm:$0xf]
        %v3006 = vld [vmem:[%s5 + $0x84] sm:$0xf]
        %v3007 = vld [vmem:[%s5 + $0x88] sm:$0xf]
        %v3008 = vld [vmem:[%s5 + $0x8c] sm:$0xf]
        %v3009 = vld [vmem:[%s5 + $0x90] sm:$0xf]
        %v3010 = vld [vmem:[%s5 + $0x94] sm:$0xf]
        %v3011 = vld [vmem:[%s5 + $0x98] sm:$0xf]
        %v3012 = vld [vmem:[%s5 + $0x9c] sm:$0xf]
        %v3013 = vld [vmem:[%s5 + $0xa0] sm:$0xf]
        %v3014 = vld [vmem:[%s5 + $0xa4] sm:$0xf]
        %v3015 = vld [vmem:[%s5 + $0xa8] sm:$0xf]
        %v3016 = vld [vmem:[%s5 + $0xac] sm:$0xf]
        %v3017 = vld [vmem:[%s5 + $0xb0] sm:$0xf]
        %v3018 = vld [vmem:[%s5 + $0xb4] sm:$0xf]
        %v3019 = vld [vmem:[%s5 + $0xb8] sm:$0xf]
        %v3020 = vld [vmem:[%s5 + $0xbc] sm:$0xf]
        %v3021 = vld [vmem:[%s5 + $0xc0] sm:$0xf]
        %v3022 = vld [vmem:[%s5 + $0xc4] sm:$0xf]
        %v3023 = vld [vmem:[%s5 + $0xc8] sm:$0xf]
        %v3024 = vld [vmem:[%s5 + $0xcc] sm:$0xf]
        %v3025 = vld [vmem:[%s5 + $0xd0] sm:$0xf]
        %v3026 = vld [vmem:[%s5 + $0xd4] sm:$0xf]
        %v3027 = vld [vmem:[%s5 + $0xd8] sm:$0xf]
        %v3028 = vld [vmem:[%s5 + $0xdc] sm:$0xf]
        %v3029 = vld [vmem:[%s5 + $0xe0] sm:$0xf]
        %v3030 = vld [vmem:[%s5 + $0xe4] sm:$0xf]
        %v3031 = vld [vmem:[%s5 + $0xe8] sm:$0xf]
        %v3032 = vld [vmem:[%s5 + $0xec] sm:$0xf]
        %v3033 = vld [vmem:[%s5 + $0xf0] sm:$0xf]
        %v3034 = vld [vmem:[%s5 + $0xf4] sm:$0xf]
        %v3035 = vld [vmem:[%s5 + $0xf8] sm:$0xf]
        %v3036 = vld [vmem:[%s5 + $0xfc] sm:$0xf]
        %v3037 = vld [vmem:[%s5 + $0x100] sm:$0xf]
        %v3038 = vld [vmem:[%s5 + $0x104] sm:$0xf]
        %v3039 = vld [vmem:[%s5 + $0x108] sm:$0xf]
        %v3040 = vld [vmem:[%s5 + $0x10c] sm:$0xf]
        %v3041 = vld [vmem:[%s5 + $0x110] sm:$0xf]
        %v3042 = vld [vmem:[%s5 + $0x114] sm:$0xf]
        %v3043 = vld [vmem:[%s5 + $0x118] sm:$0xf]
        %v3044 = vld [vmem:[%s5 + $0x11c] sm:$0xf]
        %v3045 = vld [vmem:[%s6] sm:$0x1]
        %v3047 = vlaneseq
        %v3048 = vshrl.u32 %v3047, 7
        %v3049 = vsub.s32 0, %v3048
        %v3050 = vrot.slane %v3045, %v3049
        %v3052 = vpack.c.b16 %v2938, %v2933
        %v3053 = vpack.c.b16 %v2939, %v2934
        %v3054 = vpack.c.b16 %v2940, %v2935
        %v3055 = vpack.c.b16 %v2941, %v2936
        %v3056 = vpack.c.b16 %v2942, %v2937
        %v3057 = vpack.c.b16 %v2948, %v2943
        %v3058 = vpack.c.b16 %v2949, %v2944
        %v3059 = vpack.c.b16 %v2950, %v2945
        %v3060 = vpack.c.b16 %v2951, %v2946
        %v3061 = vpack.c.b16 %v2952, %v2947
        %v3062 = vpack.c.b16 %v2958, %v2953
        %v3063 = vpack.c.b16 %v2959, %v2954
        %v3064 = vpack.c.b16 %v2960, %v2955
        %v3065 = vpack.c.b16 %v2961, %v2956
        %v3066 = vpack.c.b16 %v2962, %v2957
        %v3067 = vpack.c.b16 %v2968, %v2963
        %v3068 = vpack.c.b16 %v2969, %v2964
        %v3069 = vpack.c.b16 %v2970, %v2965
        %v3070 = vpack.c.b16 %v2971, %v2966
        %v3071 = vpack.c.b16 %v2972, %v2967
        %v3160 = vunpack.c.l.b16 %v2973
        %v3161 = vunpack.c.l.b16 %v2974
        %v3162 = vunpack.c.l.b16 %v2975
        %v3163 = vunpack.c.l.b16 %v2976
        %v3164 = vunpack.c.l.b16 %v2977
        %v3165 = vunpack.c.l.b16 %v2978
        %v3166 = vunpack.c.l.b16 %v2979
        %v3167 = vunpack.c.l.b16 %v2980
        %v3168 = vunpack.c.l.b16 %v2981
        %v3169 = vunpack.c.l.b16 %v2982
        %v3170 = vunpack.c.l.b16 %v2983
        %v3171 = vunpack.c.l.b16 %v2984
        %v3172 = vunpack.c.l.b16 %v2985
        %v3173 = vunpack.c.l.b16 %v2986
        %v3174 = vunpack.c.l.b16 %v2987
        %v3175 = vunpack.c.l.b16 %v2988
        %v3176 = vunpack.c.l.b16 %v2989
        %v3177 = vunpack.c.l.b16 %v2990
        %v3178 = vunpack.c.l.b16 %v2991
        %v3179 = vunpack.c.l.b16 %v2992
        %v3180 = vunpack.c.l.b16 %v2993
        %v3181 = vunpack.c.l.b16 %v2994
        %v3182 = vunpack.c.l.b16 %v2995
        %v3183 = vunpack.c.l.b16 %v2996
        %v3184 = vunpack.c.l.b16 %v2997
        %v3185 = vunpack.c.l.b16 %v2998
        %v3186 = vunpack.c.l.b16 %v2999
        %v3187 = vunpack.c.l.b16 %v3000
        %v3188 = vunpack.c.l.b16 %v3001
        %v3189 = vunpack.c.l.b16 %v3002
        %v3190 = vunpack.c.l.b16 %v3003
        %v3191 = vunpack.c.l.b16 %v3004
        %v3192 = vunpack.c.l.b16 %v3005
        %v3193 = vunpack.c.l.b16 %v3006
        %v3194 = vunpack.c.l.b16 %v3007
        %v3195 = vunpack.c.l.b16 %v3008
        %v3196 = vunpack.c.l.b16 %v3009
        %v3197 = vunpack.c.l.b16 %v3010
        %v3198 = vunpack.c.l.b16 %v3011
        %v3199 = vunpack.c.l.b16 %v3012
        %v3200 = vunpack.c.l.b16 %v3013
        %v3201 = vunpack.c.l.b16 %v3014
        %v3202 = vunpack.c.l.b16 %v3015
        %v3203 = vunpack.c.l.b16 %v3016
        %v3204 = vunpack.c.l.b16 %v3017
        %v3205 = vunpack.c.l.b16 %v3018
        %v3206 = vunpack.c.l.b16 %v3019
        %v3207 = vunpack.c.l.b16 %v3020
        %v3208 = vunpack.c.l.b16 %v3021
        %v3209 = vunpack.c.l.b16 %v3022
        %v3210 = vunpack.c.l.b16 %v3023
        %v3211 = vunpack.c.l.b16 %v3024
        %v3212 = vunpack.c.l.b16 %v3025
        %v3213 = vunpack.c.l.b16 %v3026
        %v3214 = vunpack.c.l.b16 %v3027
        %v3215 = vunpack.c.l.b16 %v3028
        %v3216 = vunpack.c.l.b16 %v3029
        %v3217 = vunpack.c.l.b16 %v3030
        %v3218 = vunpack.c.l.b16 %v3031
        %v3219 = vunpack.c.l.b16 %v3032
        %v3220 = vunpack.c.l.b16 %v3033
        %v3221 = vunpack.c.l.b16 %v3034
        %v3222 = vunpack.c.l.b16 %v3035
        %v3223 = vunpack.c.l.b16 %v3036
        %v3224 = vunpack.c.l.b16 %v3037
        %v3225 = vunpack.c.l.b16 %v3038
        %v3226 = vunpack.c.l.b16 %v3039
        %v3227 = vunpack.c.l.b16 %v3040
        %v3228 = vunpack.c.l.b16 %v3041
        %v3229 = vunpack.c.l.b16 %v3042
        %v3230 = vunpack.c.l.b16 %v3043
        %v3231 = vunpack.c.l.b16 %v3044
        %v3232 = vpack.c.b16 %v3161, %v3160
        %v3233 = vpack.c.b16 %v3163, %v3162
        %v3234 = vpack.c.b16 %v3165, %v3164
        %v3235 = vpack.c.b16 %v3167, %v3166
        %v3236 = vpack.c.b16 %v3169, %v3168
        %v3237 = vpack.c.b16 %v3171, %v3170
        %v3238 = vpack.c.b16 %v3173, %v3172
        %v3239 = vpack.c.b16 %v3175, %v3174
        %v3240 = vpack.c.b16 %v3177, %v3176
        %v3241 = vpack.c.b16 %v3179, %v3178
        %v3242 = vpack.c.b16 %v3181, %v3180
        %v3243 = vpack.c.b16 %v3183, %v3182
        %v3244 = vpack.c.b16 %v3185, %v3184
        %v3245 = vpack.c.b16 %v3187, %v3186
        %v3246 = vpack.c.b16 %v3189, %v3188
        %v3247 = vpack.c.b16 %v3191, %v3190
        %v3248 = vpack.c.b16 %v3193, %v3192
        %v3249 = vpack.c.b16 %v3195, %v3194
        %v3250 = vpack.c.b16 %v3197, %v3196
        %v3251 = vpack.c.b16 %v3199, %v3198
        %v3252 = vpack.c.b16 %v3201, %v3200
        %v3253 = vpack.c.b16 %v3203, %v3202
        %v3254 = vpack.c.b16 %v3205, %v3204
        %v3255 = vpack.c.b16 %v3207, %v3206
        %v3256 = vpack.c.b16 %v3209, %v3208
        %v3257 = vpack.c.b16 %v3211, %v3210
        %v3258 = vpack.c.b16 %v3213, %v3212
        %v3259 = vpack.c.b16 %v3215, %v3214
        %v3260 = vpack.c.b16 %v3217, %v3216
        %v3261 = vpack.c.b16 %v3219, %v3218
        %v3262 = vpack.c.b16 %v3221, %v3220
        %v3263 = vpack.c.b16 %v3223, %v3222
        %v3264 = vpack.c.b16 %v3225, %v3224
        %v3265 = vpack.c.b16 %v3227, %v3226
        %v3266 = vpack.c.b16 %v3229, %v3228
        %v3267 = vpack.c.b16 %v3231, %v3230
        %v3305 = vsel %vm1618, %v3056, 0
        %v3308 = vsel %vm1618, %v3061, 0
        %v3311 = vsel %vm1618, %v3066, 0
        %v3314 = vsel %vm1618, %v3071, 0
        %3316 = vmatprep.subr.bf16.mxu0 0
        %3317 = vmatpush1.bf16.msra.mxu0 %v3239
        %3318 = vmatprep.subr.bf16.mxu0 0
        %3319 = vmatpush1.bf16.msra.mxu0 %v3238
        %3320 = vmatprep.subr.bf16.mxu0 0
        %3321 = vmatpush1.bf16.msra.mxu0 %v3237
        %3322 = vmatprep.subr.bf16.mxu0 0
        %3323 = vmatpush1.bf16.msra.mxu0 %v3236
        %3324 = vmatprep.subr.bf16.mxu0 0
        %3325 = vmatpush1.bf16.msra.mxu0 %v3235
        %3326 = vmatprep.subr.bf16.mxu0 0
        %3327 = vmatpush1.bf16.msra.mxu0 %v3234
        %3328 = vmatprep.subr.bf16.mxu0 0
        %3329 = vmatpush1.bf16.msra.mxu0 %v3233
        %3330 = vmatprep.subr.bf16.mxu0 0
        %3331 = vmatpush1.bf16.msra.mxu0 %v3232
        %3332 = vmatprep.subr.bf16.mxu0 0
        %3333 = vmatpush2.bf16.msra.mxu0 %v3247
        %3334 = vmatprep.subr.bf16.mxu0 0
        %3335 = vmatpush2.bf16.msra.mxu0 %v3246
        %3336 = vmatprep.subr.bf16.mxu0 0
        %3337 = vmatpush2.bf16.msra.mxu0 %v3245
        %3338 = vmatprep.subr.bf16.mxu0 0
        %3339 = vmatpush2.bf16.msra.mxu0 %v3244
        %3340 = vmatprep.subr.bf16.mxu0 0
        %3341 = vmatpush2.bf16.msra.mxu0 %v3243
        %3342 = vmatprep.subr.bf16.mxu0 0
        %3343 = vmatpush2.bf16.msra.mxu0 %v3242
        %3344 = vmatprep.subr.bf16.mxu0 0
        %3345 = vmatpush2.bf16.msra.mxu0 %v3241
        %3346 = vmatprep.subr.bf16.mxu0 0
        %3347 = vmatpush2.bf16.msra.mxu0 %v3240
        %3348 = vmatprep.mubr.bf16.mxu0 %v3053
        %3349 = vmatmul.mubr.bf16.gmra.mxu0 %v3052
        %v3350 = vpop.f32.mrf.mxu0
        %v3351 = vadd.f32 %v3050, %v3350
        %v3352 = vpop.f32.mrf.mxu0
        %v3353 = vpop.f32.mrf.mxu0
        %v3354 = vadd.f32 %v3050, %v3353
        %v3355 = vpop.f32.mrf.mxu0
        %3356 = vmatprep.mubr.bf16.mxu0 %v3058
        %3357 = vmatmul.mubr.bf16.gmra.mxu0 %v3057
        %v3358 = vpop.f32.mrf.mxu0
        %v3359 = vadd.f32 %v3050, %v3358
        %v3360 = vpop.f32.mrf.mxu0
        %v3361 = vpop.f32.mrf.mxu0
        %v3362 = vadd.f32 %v3050, %v3361
        %v3363 = vpop.f32.mrf.mxu0
        %3364 = vmatprep.mubr.bf16.mxu0 %v3063
        %3365 = vmatmul.mubr.bf16.gmra.mxu0 %v3062
        %v3366 = vpop.f32.mrf.mxu0
        %v3367 = vadd.f32 %v3050, %v3366
        %v3368 = vpop.f32.mrf.mxu0
        %v3369 = vpop.f32.mrf.mxu0
        %v3370 = vadd.f32 %v3050, %v3369
        %v3371 = vpop.f32.mrf.mxu0
        %3372 = vmatprep.mubr.bf16.mxu0 %v3068
        %3373 = vmatmul.mubr.bf16.gmra.mxu0 %v3067
        %v3374 = vpop.f32.mrf.mxu0
        %v3375 = vadd.f32 %v3050, %v3374
        %v3376 = vpop.f32.mrf.mxu0
        %v3377 = vpop.f32.mrf.mxu0
        %v3378 = vadd.f32 %v3050, %v3377
        %v3379 = vpop.f32.mrf.mxu0
        %3380 = vdwg.mxu0
        %3381 = vmatprep.subr.bf16.mxu0 0
        %3382 = vmatpush1.bf16.msra.mxu0 %v3255
        %3383 = vmatprep.subr.bf16.mxu0 0
        %3384 = vmatpush1.bf16.msra.mxu0 %v3254
        %3385 = vmatprep.subr.bf16.mxu0 0
        %3386 = vmatpush1.bf16.msra.mxu0 %v3253
        %3387 = vmatprep.subr.bf16.mxu0 0
        %3388 = vmatpush1.bf16.msra.mxu0 %v3252
        %3389 = vmatprep.subr.bf16.mxu0 0
        %3390 = vmatpush1.bf16.msra.mxu0 %v3251
        %3391 = vmatprep.subr.bf16.mxu0 0
        %3392 = vmatpush1.bf16.msra.mxu0 %v3250
        %3393 = vmatprep.subr.bf16.mxu0 0
        %3394 = vmatpush1.bf16.msra.mxu0 %v3249
        %3395 = vmatprep.subr.bf16.mxu0 0
        %3396 = vmatpush1.bf16.msra.mxu0 %v3248
        %3397 = vmatprep.subr.bf16.mxu0 0
        %3398 = vmatpush2.bf16.msra.mxu0 %v3263
        %3399 = vmatprep.subr.bf16.mxu0 0
        %3400 = vmatpush2.bf16.msra.mxu0 %v3262
        %3401 = vmatprep.subr.bf16.mxu0 0
        %3402 = vmatpush2.bf16.msra.mxu0 %v3261
        %3403 = vmatprep.subr.bf16.mxu0 0
        %3404 = vmatpush2.bf16.msra.mxu0 %v3260
        %3405 = vmatprep.subr.bf16.mxu0 0
        %3406 = vmatpush2.bf16.msra.mxu0 %v3259
        %3407 = vmatprep.subr.bf16.mxu0 0
        %3408 = vmatpush2.bf16.msra.mxu0 %v3258
        %3409 = vmatprep.subr.bf16.mxu0 0
        %3410 = vmatpush2.bf16.msra.mxu0 %v3257
        %3411 = vmatprep.subr.bf16.mxu0 0
        %3412 = vmatpush2.bf16.msra.mxu0 %v3256
        %3413 = vmatprep.mubr.bf16.mxu0 %v3055
        %3414 = vmatmul.mubr.bf16.gmra.mxu0 %v3054
        %v3415 = vpop.f32.mrf.mxu0
        %v3416 = vadd.f32 %v3351, %v3415
        %v3417 = vpop.f32.mrf.mxu0
        %v3418 = vpop.f32.mrf.mxu0
        %v3419 = vadd.f32 %v3354, %v3418
        %v3420 = vpop.f32.mrf.mxu0
        %3421 = vmatprep.mubr.bf16.mxu0 %v3060
        %3422 = vmatmul.mubr.bf16.gmra.mxu0 %v3059
        %v3423 = vpop.f32.mrf.mxu0
        %v3424 = vadd.f32 %v3359, %v3423
        %v3425 = vpop.f32.mrf.mxu0
        %v3426 = vpop.f32.mrf.mxu0
        %v3427 = vadd.f32 %v3362, %v3426
        %v3428 = vpop.f32.mrf.mxu0
        %3429 = vmatprep.mubr.bf16.mxu0 %v3065
        %3430 = vmatmul.mubr.bf16.gmra.mxu0 %v3064
        %v3431 = vpop.f32.mrf.mxu0
        %v3432 = vadd.f32 %v3367, %v3431
        %v3433 = vpop.f32.mrf.mxu0
        %v3434 = vpop.f32.mrf.mxu0
        %v3435 = vadd.f32 %v3370, %v3434
        %v3436 = vpop.f32.mrf.mxu0
        %3437 = vmatprep.mubr.bf16.mxu0 %v3070
        %3438 = vmatmul.mubr.bf16.gmra.mxu0 %v3069
        %v3439 = vpop.f32.mrf.mxu0
        %v3440 = vadd.f32 %v3375, %v3439
        %v3441 = vpop.f32.mrf.mxu0
        %v3442 = vpop.f32.mrf.mxu0
        %v3443 = vadd.f32 %v3378, %v3442
        %v3444 = vpop.f32.mrf.mxu0
        %3445 = vdwg.mxu0
        %3446 = vmatprep.subr.bf16.mxu0 0
        %3447 = vmatpush1.bf16.msra.mxu0 0
        %3448 = vmatprep.subr.bf16.mxu0 0
        %3449 = vmatpush1.bf16.msra.mxu0 0
        %3450 = vmatprep.subr.bf16.mxu0 0
        %3451 = vmatpush1.bf16.msra.mxu0 0
        %3452 = vmatprep.subr.bf16.mxu0 0
        %3453 = vmatpush1.bf16.msra.mxu0 0
        %3454 = vmatprep.subr.bf16.mxu0 0
        %3455 = vmatpush1.bf16.msra.mxu0 %v3267
        %3456 = vmatprep.subr.bf16.mxu0 0
        %3457 = vmatpush1.bf16.msra.mxu0 %v3266
        %3458 = vmatprep.subr.bf16.mxu0 0
        %3459 = vmatpush1.bf16.msra.mxu0 %v3265
        %3460 = vmatprep.subr.bf16.mxu0 0
        %3461 = vmatpush1.bf16.msra.mxu0 %v3264
        %3462 = vmatprep.subr.bf16.mxu0 0
        %3463 = vmatpush2.bf16.msra.mxu0 0
        %3464 = vmatprep.subr.bf16.mxu0 0
        %3465 = vmatpush2.bf16.msra.mxu0 0
        %3466 = vmatprep.subr.bf16.mxu0 0
        %3467 = vmatpush2.bf16.msra.mxu0 0
        %3468 = vmatprep.subr.bf16.mxu0 0
        %3469 = vmatpush2.bf16.msra.mxu0 0
        %3470 = vmatprep.subr.bf16.mxu0 0
        %3471 = vmatpush2.bf16.msra.mxu0 0
        %3472 = vmatprep.subr.bf16.mxu0 0
        %3473 = vmatpush2.bf16.msra.mxu0 0
        %3474 = vmatprep.subr.bf16.mxu0 0
        %3475 = vmatpush2.bf16.msra.mxu0 0
        %3476 = vmatprep.subr.bf16.mxu0 0
        %3477 = vmatpush2.bf16.msra.mxu0 0
        %3478 = vmatprep.mubr.bf16.mxu0 0
        %3479 = vmatmul.mubr.bf16.gmra.mxu0 %v3305
        %v3480 = vpop.f32.mrf.mxu0
        %v3481 = vadd.f32 %v3416, %v3480
        %v3482 = vpop.f32.mrf.mxu0
        %v3483 = vpop.f32.mrf.mxu0
        %v3484 = vadd.f32 %v3419, %v3483
        %v3485 = vpop.f32.mrf.mxu0
        %3486 = vmatprep.mubr.bf16.mxu0 0
        %3487 = vmatmul.mubr.bf16.gmra.mxu0 %v3308
        %v3488 = vpop.f32.mrf.mxu0
        %v3489 = vadd.f32 %v3424, %v3488
        %v3490 = vpop.f32.mrf.mxu0
        %v3491 = vpop.f32.mrf.mxu0
        %v3492 = vadd.f32 %v3427, %v3491
        %v3493 = vpop.f32.mrf.mxu0
        %3494 = vmatprep.mubr.bf16.mxu0 0
        %3495 = vmatmul.mubr.bf16.gmra.mxu0 %v3311
        %v3496 = vpop.f32.mrf.mxu0
        %v3497 = vadd.f32 %v3432, %v3496
        %v3498 = vpop.f32.mrf.mxu0
        %v3499 = vpop.f32.mrf.mxu0
        %v3500 = vadd.f32 %v3435, %v3499
        %v3501 = vpop.f32.mrf.mxu0
        %3502 = vmatprep.mubr.bf16.mxu0 0
        %3503 = vmatmul.mubr.bf16.gmra.mxu0 %v3314
        %v3504 = vpop.f32.mrf.mxu0
        %v3505 = vadd.f32 %v3440, %v3504
        %v3506 = vpop.f32.mrf.mxu0
        %v3507 = vpop.f32.mrf.mxu0
        %v3508 = vadd.f32 %v3443, %v3507
        %v3509 = vpop.f32.mrf.mxu0
        %3510 = vdwg.mxu0
        %v3511 = vmin.f32 %v3481, 20.0
        %v3512 = vmin.f32 %v3484, 20.0
        %v3513 = vmin.f32 %v3489, 20.0
        %v3514 = vmin.f32 %v3492, 20.0
        %v3515 = vmin.f32 %v3497, 20.0
        %v3516 = vmin.f32 %v3500, 20.0
        %v3517 = vmin.f32 %v3505, 20.0
        %v3518 = vmin.f32 %v3508, 20.0
        %v3519 = vmul.f32 %v3511, 1.442695
        %v3520 = vpow.pop %v3519
        %v3521 = vmul.f32 %v3512, 1.442695
        %v3522 = vpow.pop %v3521
        %v3523 = vmul.f32 %v3513, 1.442695
        %v3524 = vpow.pop %v3523
        %v3525 = vmul.f32 %v3514, 1.442695
        %v3526 = vpow.pop %v3525
        %v3527 = vmul.f32 %v3515, 1.442695
        %v3528 = vpow.pop %v3527
        %v3529 = vmul.f32 %v3516, 1.442695
        %v3530 = vpow.pop %v3529
        %v3531 = vmul.f32 %v3517, 1.442695
        %v3532 = vpow.pop %v3531
        %v3533 = vmul.f32 %v3518, 1.442695
        %v3534 = vpow.pop %v3533
        %v3535 = vadd.f32 %v3520, 1.0
        %v3536 = vadd.f32 %v3522, 1.0
        %v3537 = vadd.f32 %v3524, 1.0
        %v3538 = vadd.f32 %v3526, 1.0
        %v3539 = vadd.f32 %v3528, 1.0
        %v3540 = vadd.f32 %v3530, 1.0
        %v3541 = vadd.f32 %v3532, 1.0
        %v3542 = vadd.f32 %v3534, 1.0
        %v3543 = vlog2.pop %v3535
        %v3544 = vmul.f32 %v3543, 0.6931472
        %v3545 = vlog2.pop %v3536
        %v3546 = vmul.f32 %v3545, 0.6931472
        %v3547 = vlog2.pop %v3537
        %v3548 = vmul.f32 %v3547, 0.6931472
        %v3549 = vlog2.pop %v3538
        %v3550 = vmul.f32 %v3549, 0.6931472
        %v3551 = vlog2.pop %v3539
        %v3552 = vmul.f32 %v3551, 0.6931472
        %v3553 = vlog2.pop %v3540
        %v3554 = vmul.f32 %v3553, 0.6931472
        %v3555 = vlog2.pop %v3541
        %v3556 = vmul.f32 %v3555, 0.6931472
        %v3557 = vlog2.pop %v3542
        %v3558 = vmul.f32 %v3557, 0.6931472
        %v3559 = vtanh.pop %v3544
        %v3560 = vtanh.pop %v3546
        %v3561 = vtanh.pop %v3548
        %v3562 = vtanh.pop %v3550
        %v3563 = vtanh.pop %v3552
        %v3564 = vtanh.pop %v3554
        %v3565 = vtanh.pop %v3556
        %v3566 = vtanh.pop %v3558
        %v3567 = vmul.f32 %v3481, %v3559
        %v3568 = vmul.f32 %v3484, %v3560
        %v3569 = vmul.f32 %v3489, %v3561
        %v3570 = vmul.f32 %v3492, %v3562
        %v3571 = vmul.f32 %v3497, %v3563
        %v3572 = vmul.f32 %v3500, %v3564
        %v3573 = vmul.f32 %v3505, %v3565
        %v3574 = vmul.f32 %v3508, %v3566
        %v3575 = vpack.c.bf16 %v3567, %v3567
        %v3576 = vpack.c.bf16 %v3568, %v3568
        %v3577 = vpack.c.bf16 %v3569, %v3569
        %v3578 = vpack.c.bf16 %v3570, %v3570
        %v3579 = vpack.c.bf16 %v3571, %v3571
        %v3580 = vpack.c.bf16 %v3572, %v3572
        %v3581 = vpack.c.bf16 %v3573, %v3573
        %v3582 = vpack.c.bf16 %v3574, %v3574
        %v3591 = vunpack.c.l.b16 %v3575
        %v3592 = vunpack.c.l.b16 %v3576
        %v3593 = vunpack.c.l.b16 %v3577
        %v3594 = vunpack.c.l.b16 %v3578
        %v3595 = vunpack.c.l.b16 %v3579
        %v3596 = vunpack.c.l.b16 %v3580
        %v3597 = vunpack.c.l.b16 %v3581
        %v3598 = vunpack.c.l.b16 %v3582
        %v3599 = vpack.c.b16 %v3591, %v3591
        %v3600 = vpack.c.b16 %v3592, %v3592
        %v3601 = vpack.c.b16 %v3593, %v3593
        %v3602 = vpack.c.b16 %v3594, %v3594
        %v3603 = vpack.c.b16 %v3595, %v3595
        %v3604 = vpack.c.b16 %v3596, %v3596
        %v3605 = vpack.c.b16 %v3597, %v3597
        %v3606 = vpack.c.b16 %v3598, %v3598
        %v3608 = vshrl.u32 %v3599, 16
        %v3610 = vrot.slane %v3608, 7
        %v3611 = vshll.u32 %v3599, 16
        %v3613 = vor.u32 %v3610, %v3611
        %v3614 = vrot.slane %v3610, 4
        %v3616 = vshrl.u32 %v3600, 16
        %v3618 = vrot.slane %v3616, 7
        %v3619 = vshll.u32 %v3600, 16
        %v3621 = vor.u32 %v3618, %v3619
        %v3622 = vrot.slane %v3618, 4
        %v3624 = vshrl.u32 %v3601, 16
        %v3626 = vrot.slane %v3624, 7
        %v3627 = vshll.u32 %v3601, 16
        %v3629 = vor.u32 %v3626, %v3627
        %v3630 = vrot.slane %v3626, 4
        %v3632 = vshrl.u32 %v3602, 16
        %v3634 = vrot.slane %v3632, 7
        %v3635 = vshll.u32 %v3602, 16
        %v3637 = vor.u32 %v3634, %v3635
        %v3638 = vrot.slane %v3634, 4
        %v3640 = vshrl.u32 %v3603, 16
        %v3642 = vrot.slane %v3640, 7
        %v3643 = vshll.u32 %v3603, 16
        %v3645 = vor.u32 %v3642, %v3643
        %v3646 = vrot.slane %v3642, 4
        %v3648 = vshrl.u32 %v3604, 16
        %v3650 = vrot.slane %v3648, 7
        %v3651 = vshll.u32 %v3604, 16
        %v3653 = vor.u32 %v3650, %v3651
        %v3654 = vrot.slane %v3650, 4
        %v3656 = vshrl.u32 %v3605, 16
        %v3658 = vrot.slane %v3656, 7
        %v3659 = vshll.u32 %v3605, 16
        %v3661 = vor.u32 %v3658, %v3659
        %v3662 = vrot.slane %v3658, 4
        %v3664 = vshrl.u32 %v3606, 16
        %v3666 = vrot.slane %v3664, 7
        %v3667 = vshll.u32 %v3606, 16
        %v3669 = vor.u32 %v3666, %v3667
        %v3670 = vrot.slane %v3666, 4
        %v3687 = vsel %vm2224, %v3613, %v2300
        %3688 = vst [vmem:[%s2221] sm:$0xf] %v3687
        %v3689 = vld [vmem:[%s2221 + $0x4] sm:$0x1]
        %v3690 = vsel %vm2230, %v3614, %v3689
        %3691 = vst [vmem:[%s2221 + $0x4] sm:$0x1] %v3690
        %v3692 = vld [vmem:[%s2221 + $0x8] sm:$0xf]
        %v3693 = vsel %vm2224, %v3621, %v3692
        %3694 = vst [vmem:[%s2221 + $0x8] sm:$0xf] %v3693
        %v3695 = vld [vmem:[%s2221 + $0xc] sm:$0x1]
        %v3696 = vsel %vm2230, %v3622, %v3695
        %3697 = vst [vmem:[%s2221 + $0xc] sm:$0x1] %v3696
        %v3698 = vld [vmem:[%s2221 + $0x10] sm:$0xf]
        %v3699 = vsel %vm2224, %v3629, %v3698
        %3700 = vst [vmem:[%s2221 + $0x10] sm:$0xf] %v3699
        %v3701 = vld [vmem:[%s2221 + $0x14] sm:$0x1]
        %v3702 = vsel %vm2230, %v3630, %v3701
        %3703 = vst [vmem:[%s2221 + $0x14] sm:$0x1] %v3702
        %v3704 = vld [vmem:[%s2221 + $0x18] sm:$0xf]
        %v3705 = vsel %vm2224, %v3637, %v3704
        %3706 = vst [vmem:[%s2221 + $0x18] sm:$0xf] %v3705
        %v3707 = vld [vmem:[%s2221 + $0x1c] sm:$0x1]
        %v3708 = vsel %vm2230, %v3638, %v3707
        %3709 = vst [vmem:[%s2221 + $0x1c] sm:$0x1] %v3708
        %v3710 = vld [vmem:[%s2221 + $0x20] sm:$0xf]
        %v3711 = vsel %vm2224, %v3645, %v3710
        %3712 = vst [vmem:[%s2221 + $0x20] sm:$0xf] %v3711
        %v3713 = vld [vmem:[%s2221 + $0x24] sm:$0x1]
        %v3714 = vsel %vm2230, %v3646, %v3713
        %3715 = vst [vmem:[%s2221 + $0x24] sm:$0x1] %v3714
        %v3716 = vld [vmem:[%s2221 + $0x28] sm:$0xf]
        %v3717 = vsel %vm2224, %v3653, %v3716
        %3718 = vst [vmem:[%s2221 + $0x28] sm:$0xf] %v3717
        %v3719 = vld [vmem:[%s2221 + $0x2c] sm:$0x1]
        %v3720 = vsel %vm2230, %v3654, %v3719
        %3721 = vst [vmem:[%s2221 + $0x2c] sm:$0x1] %v3720
        %v3722 = vld [vmem:[%s2221 + $0x30] sm:$0xf]
        %v3723 = vsel %vm2224, %v3661, %v3722
        %3724 = vst [vmem:[%s2221 + $0x30] sm:$0xf] %v3723
        %v3725 = vld [vmem:[%s2221 + $0x34] sm:$0x1]
        %v3726 = vsel %vm2230, %v3662, %v3725
        %3727 = vst [vmem:[%s2221 + $0x34] sm:$0x1] %v3726
        %v3728 = vld [vmem:[%s2221 + $0x38] sm:$0xf]
        %v3729 = vsel %vm2224, %v3669, %v3728
        %3730 = vst [vmem:[%s2221 + $0x38] sm:$0xf] %v3729
        %v3731 = vld [vmem:[%s2221 + $0x3c] sm:$0x1]
        %v3732 = vsel %vm2230, %v3670, %v3731
        %3733 = vst [vmem:[%s2221 + $0x3c] sm:$0x1] %v3732
        %v3734 = vld [vmem:[#allocation3] sm:$0xf]
        %v3735 = vld [vmem:[#allocation3 + $0x8] sm:$0xf]
        %v3736 = vld [vmem:[#allocation3 + $0x10] sm:$0xf]
        %v3737 = vld [vmem:[#allocation3 + $0x18] sm:$0xf]
        %v3738 = vld [vmem:[#allocation3 + $0x20] sm:$0xf]
        %v3739 = vld [vmem:[#allocation3 + $0x28] sm:$0xf]
        %v3740 = vld [vmem:[#allocation3 + $0x30] sm:$0xf]
        %v3741 = vld [vmem:[#allocation3 + $0x38] sm:$0xf]
        %v3742 = vld [vmem:[#allocation3 + $0x4] sm:$0x1]
        %v3743 = vld [vmem:[#allocation3 + $0xc] sm:$0x1]
        %v3744 = vld [vmem:[#allocation3 + $0x14] sm:$0x1]
        %v3745 = vld [vmem:[#allocation3 + $0x1c] sm:$0x1]
        %v3746 = vld [vmem:[#allocation3 + $0x24] sm:$0x1]
        %v3747 = vld [vmem:[#allocation3 + $0x2c] sm:$0x1]
        %v3748 = vld [vmem:[#allocation3 + $0x34] sm:$0x1]
        %v3749 = vld [vmem:[#allocation3 + $0x3c] sm:$0x1]
        %v3750 = vld [vmem:[#allocation3] sm:$0xe]
        %v3751 = vld [vmem:[#allocation3 + $0x8] sm:$0xe]
        %v3752 = vld [vmem:[#allocation3 + $0x10] sm:$0xe]
        %v3753 = vld [vmem:[#allocation3 + $0x18] sm:$0xe]
        %v3754 = vld [vmem:[#allocation3 + $0x20] sm:$0xe]
        %v3755 = vld [vmem:[#allocation3 + $0x28] sm:$0xe]
        %v3756 = vld [vmem:[#allocation3 + $0x30] sm:$0xe]
        %v3757 = vld [vmem:[#allocation3 + $0x38] sm:$0xe]
        %v3758 = vld [vmem:[%s2221] sm:$0xf]
        %v3759 = vld [vmem:[%s2221 + $0x8] sm:$0xf]
        %v3760 = vld [vmem:[%s2221 + $0x10] sm:$0xf]
        %v3761 = vld [vmem:[%s2221 + $0x18] sm:$0xf]
        %v3762 = vld [vmem:[%s2221 + $0x20] sm:$0xf]
        %v3763 = vld [vmem:[%s2221 + $0x28] sm:$0xf]
        %v3764 = vld [vmem:[%s2221 + $0x30] sm:$0xf]
        %v3765 = vld [vmem:[%s2221 + $0x38] sm:$0xf]
        %v3766 = vld [vmem:[%s2221 + $0x4] sm:$0x1]
        %v3767 = vld [vmem:[%s2221 + $0xc] sm:$0x1]
        %v3768 = vld [vmem:[%s2221 + $0x14] sm:$0x1]
        %v3769 = vld [vmem:[%s2221 + $0x1c] sm:$0x1]
        %v3770 = vld [vmem:[%s2221 + $0x24] sm:$0x1]
        %v3771 = vld [vmem:[%s2221 + $0x2c] sm:$0x1]
        %v3772 = vld [vmem:[%s2221 + $0x34] sm:$0x1]
        %v3773 = vld [vmem:[%s2221 + $0x3c] sm:$0x1]
        %v3774 = vld [vmem:[%s2221] sm:$0xe]
        %v3775 = vld [vmem:[%s2221 + $0x8] sm:$0xe]
        %v3776 = vld [vmem:[%s2221 + $0x10] sm:$0xe]
        %v3777 = vld [vmem:[%s2221 + $0x18] sm:$0xe]
        %v3778 = vld [vmem:[%s2221 + $0x20] sm:$0xe]
        %v3779 = vld [vmem:[%s2221 + $0x28] sm:$0xe]
        %v3780 = vld [vmem:[%s2221 + $0x30] sm:$0xe]
        %v3781 = vld [vmem:[%s2221 + $0x38] sm:$0xe]
        %v3782 = vld [vmem:[%s2324] sm:$0xf]
        %v3783 = vld [vmem:[%s2324 + $0x8] sm:$0xf]
        %v3784 = vld [vmem:[%s2324 + $0x10] sm:$0xf]
        %v3785 = vld [vmem:[%s2324 + $0x18] sm:$0xf]
        %v3786 = vld [vmem:[%s2324 + $0x20] sm:$0xf]
        %v3787 = vld [vmem:[%s2324 + $0x28] sm:$0xf]
        %v3788 = vld [vmem:[%s2324 + $0x30] sm:$0xf]
        %v3789 = vld [vmem:[%s2324 + $0x38] sm:$0xf]
        %v3790 = vld [vmem:[%s2324 + $0x4] sm:$0x1]
        %v3791 = vld [vmem:[%s2324 + $0xc] sm:$0x1]
        %v3792 = vld [vmem:[%s2324 + $0x14] sm:$0x1]
        %v3793 = vld [vmem:[%s2324 + $0x1c] sm:$0x1]
        %v3794 = vld [vmem:[%s2324 + $0x24] sm:$0x1]
        %v3795 = vld [vmem:[%s2324 + $0x2c] sm:$0x1]
        %v3796 = vld [vmem:[%s2324 + $0x34] sm:$0x1]
        %v3797 = vld [vmem:[%s2324 + $0x3c] sm:$0x1]
        %v3798 = vld [vmem:[%s2324] sm:$0xe]
        %v3799 = vld [vmem:[%s2324 + $0x8] sm:$0xe]
        %v3800 = vld [vmem:[%s2324 + $0x10] sm:$0xe]
        %v3801 = vld [vmem:[%s2324 + $0x18] sm:$0xe]
        %v3802 = vld [vmem:[%s2324 + $0x20] sm:$0xe]
        %v3803 = vld [vmem:[%s2324 + $0x28] sm:$0xe]
        %v3804 = vld [vmem:[%s2324 + $0x30] sm:$0xe]
        %v3805 = vld [vmem:[%s2324 + $0x38] sm:$0xe]
        %v3822 = vunpack.c.l.b16 %v3734
        %v3823 = vunpack.c.l.b16 %v3742
        %v3824 = vunpack.c.l.b16 %v3735
        %v3825 = vunpack.c.l.b16 %v3743
        %v3826 = vunpack.c.l.b16 %v3736
        %v3827 = vunpack.c.l.b16 %v3744
        %v3828 = vunpack.c.l.b16 %v3737
        %v3829 = vunpack.c.l.b16 %v3745
        %v3830 = vunpack.c.l.b16 %v3738
        %v3831 = vunpack.c.l.b16 %v3746
        %v3832 = vunpack.c.l.b16 %v3739
        %v3833 = vunpack.c.l.b16 %v3747
        %v3834 = vunpack.c.l.b16 %v3740
        %v3835 = vunpack.c.l.b16 %v3748
        %v3836 = vunpack.c.l.b16 %v3741
        %v3837 = vunpack.c.l.b16 %v3749
        %v3838 = vpack.c.b16 %v3823, %v3822
        %v3839 = vpack.c.b16 %v3825, %v3824
        %v3840 = vpack.c.b16 %v3827, %v3826
        %v3841 = vpack.c.b16 %v3829, %v3828
        %v3842 = vpack.c.b16 %v3831, %v3830
        %v3843 = vpack.c.b16 %v3833, %v3832
        %v3844 = vpack.c.b16 %v3835, %v3834
        %v3845 = vpack.c.b16 %v3837, %v3836
        %v3847 = vshrl.u32 %v3838, 16
        %v3849 = vshll.u32 %v3838, 16
        %v3851 = vrot.slane %v3849, 1
        %v3852 = vor.u32 %v3847, %v3851
        %v3854 = vshrl.u32 %v3839, 16
        %v3856 = vshll.u32 %v3839, 16
        %v3858 = vrot.slane %v3856, 1
        %v3859 = vor.u32 %v3854, %v3858
        %v3861 = vshrl.u32 %v3840, 16
        %v3863 = vshll.u32 %v3840, 16
        %v3865 = vrot.slane %v3863, 1
        %v3866 = vor.u32 %v3861, %v3865
        %v3868 = vshrl.u32 %v3841, 16
        %v3870 = vshll.u32 %v3841, 16
        %v3872 = vrot.slane %v3870, 1
        %v3873 = vor.u32 %v3868, %v3872
        %v3875 = vshrl.u32 %v3842, 16
        %v3877 = vshll.u32 %v3842, 16
        %v3879 = vrot.slane %v3877, 1
        %v3880 = vor.u32 %v3875, %v3879
        %v3882 = vshrl.u32 %v3843, 16
        %v3884 = vshll.u32 %v3843, 16
        %v3886 = vrot.slane %v3884, 1
        %v3887 = vor.u32 %v3882, %v3886
        %v3889 = vshrl.u32 %v3844, 16
        %v3891 = vshll.u32 %v3844, 16
        %v3893 = vrot.slane %v3891, 1
        %v3894 = vor.u32 %v3889, %v3893
        %v3896 = vshrl.u32 %v3845, 16
        %v3898 = vshll.u32 %v3845, 16
        %v3900 = vrot.slane %v3898, 1
        %v3901 = vor.u32 %v3896, %v3900
        %3902 = vrot.lane.b32.xlu0 %v3852, 64
        %v3903 = vpop.permute.xlu0 %3902
        %3904 = vrot.lane.b32.xlu0 %v3859, 64
        %v3905 = vpop.permute.xlu0 %3904
        %3906 = vrot.lane.b32.xlu0 %v3866, 64
        %v3907 = vpop.permute.xlu0 %3906
        %3908 = vrot.lane.b32.xlu0 %v3873, 64
        %v3909 = vpop.permute.xlu0 %3908
        %3910 = vrot.lane.b32.xlu0 %v3880, 64
        %v3911 = vpop.permute.xlu0 %3910
        %3912 = vrot.lane.b32.xlu0 %v3887, 64
        %v3913 = vpop.permute.xlu0 %3912
        %3914 = vrot.lane.b32.xlu0 %v3894, 64
        %v3915 = vpop.permute.xlu0 %3914
        %3916 = vrot.lane.b32.xlu0 %v3901, 64
        %v3917 = vpop.permute.xlu0 %3916
        %v3926 = vunpack.c.l.b16 %v3750
        %v3927 = vunpack.c.l.b16 %v3751
        %v3928 = vunpack.c.l.b16 %v3752
        %v3929 = vunpack.c.l.b16 %v3753
        %v3930 = vunpack.c.l.b16 %v3754
        %v3931 = vunpack.c.l.b16 %v3755
        %v3932 = vunpack.c.l.b16 %v3756
        %v3933 = vunpack.c.l.b16 %v3757
        %v3934 = vpack.c.b16 %v3823, %v3926
        %v3935 = vpack.c.b16 %v3825, %v3927
        %v3936 = vpack.c.b16 %v3827, %v3928
        %v3937 = vpack.c.b16 %v3829, %v3929
        %v3938 = vpack.c.b16 %v3831, %v3930
        %v3939 = vpack.c.b16 %v3833, %v3931
        %v3940 = vpack.c.b16 %v3835, %v3932
        %v3941 = vpack.c.b16 %v3837, %v3933
        %v3942 = vrot.slane %v3934, 1
        %v3943 = vrot.slane %v3935, 1
        %v3944 = vrot.slane %v3936, 1
        %v3945 = vrot.slane %v3937, 1
        %v3946 = vrot.slane %v3938, 1
        %v3947 = vrot.slane %v3939, 1
        %v3948 = vrot.slane %v3940, 1
        %v3949 = vrot.slane %v3941, 1
        %v3958 = vunpack.c.l.b16 %v3758
        %v3959 = vunpack.c.l.b16 %v3759
        %v3960 = vunpack.c.l.b16 %v3760
        %v3961 = vunpack.c.l.b16 %v3761
        %v3962 = vunpack.c.l.b16 %v3762
        %v3963 = vunpack.c.l.b16 %v3763
        %v3964 = vunpack.c.l.b16 %v3764
        %v3965 = vunpack.c.l.b16 %v3765
        %v3966 = vpack.c.b16 %v3958, %v3958
        %v3967 = vpack.c.b16 %v3959, %v3959
        %v3968 = vpack.c.b16 %v3960, %v3960
        %v3969 = vpack.c.b16 %v3961, %v3961
        %v3970 = vpack.c.b16 %v3962, %v3962
        %v3971 = vpack.c.b16 %v3963, %v3963
        %v3972 = vpack.c.b16 %v3964, %v3964
        %v3973 = vpack.c.b16 %v3965, %v3965
        %3974 = vrot.lane.b32.xlu0 %v3966, 64
        %v3975 = vpop.permute.xlu0 %3974
        %3976 = vrot.lane.b32.xlu0 %v3967, 64
        %v3977 = vpop.permute.xlu0 %3976
        %3978 = vrot.lane.b32.xlu0 %v3968, 64
        %v3979 = vpop.permute.xlu0 %3978
        %3980 = vrot.lane.b32.xlu0 %v3969, 64
        %v3981 = vpop.permute.xlu0 %3980
        %3982 = vrot.lane.b32.xlu0 %v3970, 64
        %v3983 = vpop.permute.xlu0 %3982
        %3984 = vrot.lane.b32.xlu0 %v3971, 64
        %v3985 = vpop.permute.xlu0 %3984
        %3986 = vrot.lane.b32.xlu0 %v3972, 64
        %v3987 = vpop.permute.xlu0 %3986
        %3988 = vrot.lane.b32.xlu0 %v3973, 64
        %v3989 = vpop.permute.xlu0 %3988
        %v3998 = vunpack.c.l.b16 %v3766
        %v3999 = vunpack.c.l.b16 %v3767
        %v4000 = vunpack.c.l.b16 %v3768
        %v4001 = vunpack.c.l.b16 %v3769
        %v4002 = vunpack.c.l.b16 %v3770
        %v4003 = vunpack.c.l.b16 %v3771
        %v4004 = vunpack.c.l.b16 %v3772
        %v4005 = vunpack.c.l.b16 %v3773
        %v4006 = vpack.c.b16 %v3998, %v3958
        %v4007 = vpack.c.b16 %v3999, %v3959
        %v4008 = vpack.c.b16 %v4000, %v3960
        %v4009 = vpack.c.b16 %v4001, %v3961
        %v4010 = vpack.c.b16 %v4002, %v3962
        %v4011 = vpack.c.b16 %v4003, %v3963
        %v4012 = vpack.c.b16 %v4004, %v3964
        %v4013 = vpack.c.b16 %v4005, %v3965
        %v4015 = vshrl.u32 %v4006, 16
        %v4017 = vshll.u32 %v4006, 16
        %v4019 = vrot.slane %v4017, 1
        %v4020 = vor.u32 %v4015, %v4019
        %v4022 = vshrl.u32 %v4007, 16
        %v4024 = vshll.u32 %v4007, 16
        %v4026 = vrot.slane %v4024, 1
        %v4027 = vor.u32 %v4022, %v4026
        %v4029 = vshrl.u32 %v4008, 16
        %v4031 = vshll.u32 %v4008, 16
        %v4033 = vrot.slane %v4031, 1
        %v4034 = vor.u32 %v4029, %v4033
        %v4036 = vshrl.u32 %v4009, 16
        %v4038 = vshll.u32 %v4009, 16
        %v4040 = vrot.slane %v4038, 1
        %v4041 = vor.u32 %v4036, %v4040
        %v4043 = vshrl.u32 %v4010, 16
        %v4045 = vshll.u32 %v4010, 16
        %v4047 = vrot.slane %v4045, 1
        %v4048 = vor.u32 %v4043, %v4047
        %v4050 = vshrl.u32 %v4011, 16
        %v4052 = vshll.u32 %v4011, 16
        %v4054 = vrot.slane %v4052, 1
        %v4055 = vor.u32 %v4050, %v4054
        %v4057 = vshrl.u32 %v4012, 16
        %v4059 = vshll.u32 %v4012, 16
        %v4061 = vrot.slane %v4059, 1
        %v4062 = vor.u32 %v4057, %v4061
        %v4064 = vshrl.u32 %v4013, 16
        %v4066 = vshll.u32 %v4013, 16
        %v4068 = vrot.slane %v4066, 1
        %v4069 = vor.u32 %v4064, %v4068
        %v4078 = vunpack.c.l.b16 %v3774
        %v4079 = vunpack.c.l.b16 %v3775
        %v4080 = vunpack.c.l.b16 %v3776
        %v4081 = vunpack.c.l.b16 %v3777
        %v4082 = vunpack.c.l.b16 %v3778
        %v4083 = vunpack.c.l.b16 %v3779
        %v4084 = vunpack.c.l.b16 %v3780
        %v4085 = vunpack.c.l.b16 %v3781
        %v4086 = vpack.c.b16 %v3998, %v4078
        %v4087 = vpack.c.b16 %v3999, %v4079
        %v4088 = vpack.c.b16 %v4000, %v4080
        %v4089 = vpack.c.b16 %v4001, %v4081
        %v4090 = vpack.c.b16 %v4002, %v4082
        %v4091 = vpack.c.b16 %v4003, %v4083
        %v4092 = vpack.c.b16 %v4004, %v4084
        %v4093 = vpack.c.b16 %v4005, %v4085
        %v4094 = vrot.slane %v4086, 1
        %v4095 = vrot.slane %v4087, 1
        %v4096 = vrot.slane %v4088, 1
        %v4097 = vrot.slane %v4089, 1
        %v4098 = vrot.slane %v4090, 1
        %v4099 = vrot.slane %v4091, 1
        %v4100 = vrot.slane %v4092, 1
        %v4101 = vrot.slane %v4093, 1
        %4102 = vrot.lane.b32.xlu0 %v4094, 64
        %v4103 = vpop.permute.xlu0 %4102
        %4104 = vrot.lane.b32.xlu0 %v4095, 64
        %v4105 = vpop.permute.xlu0 %4104
        %4106 = vrot.lane.b32.xlu0 %v4096, 64
        %v4107 = vpop.permute.xlu0 %4106
        %4108 = vrot.lane.b32.xlu0 %v4097, 64
        %v4109 = vpop.permute.xlu0 %4108
        %4110 = vrot.lane.b32.xlu0 %v4098, 64
        %v4111 = vpop.permute.xlu0 %4110
        %4112 = vrot.lane.b32.xlu0 %v4099, 64
        %v4113 = vpop.permute.xlu0 %4112
        %4114 = vrot.lane.b32.xlu0 %v4100, 64
        %v4115 = vpop.permute.xlu0 %4114
        %4116 = vrot.lane.b32.xlu0 %v4101, 64
        %v4117 = vpop.permute.xlu0 %4116
        %v4134 = vunpack.c.l.b16 %v3782
        %v4135 = vunpack.c.l.b16 %v3790
        %v4136 = vunpack.c.l.b16 %v3783
        %v4137 = vunpack.c.l.b16 %v3791
        %v4138 = vunpack.c.l.b16 %v3784
        %v4139 = vunpack.c.l.b16 %v3792
        %v4140 = vunpack.c.l.b16 %v3785
        %v4141 = vunpack.c.l.b16 %v3793
        %v4142 = vunpack.c.l.b16 %v3786
        %v4143 = vunpack.c.l.b16 %v3794
        %v4144 = vunpack.c.l.b16 %v3787
        %v4145 = vunpack.c.l.b16 %v3795
        %v4146 = vunpack.c.l.b16 %v3788
        %v4147 = vunpack.c.l.b16 %v3796
        %v4148 = vunpack.c.l.b16 %v3789
        %v4149 = vunpack.c.l.b16 %v3797
        %v4150 = vpack.c.b16 %v4135, %v4134
        %v4151 = vpack.c.b16 %v4137, %v4136
        %v4152 = vpack.c.b16 %v4139, %v4138
        %v4153 = vpack.c.b16 %v4141, %v4140
        %v4154 = vpack.c.b16 %v4143, %v4142
        %v4155 = vpack.c.b16 %v4145, %v4144
        %v4156 = vpack.c.b16 %v4147, %v4146
        %v4157 = vpack.c.b16 %v4149, %v4148
        %v4159 = vshrl.u32 %v4150, 16
        %v4161 = vshll.u32 %v4150, 16
        %v4163 = vrot.slane %v4161, 1
        %v4164 = vor.u32 %v4159, %v4163
        %v4166 = vshrl.u32 %v4151, 16
        %v4168 = vshll.u32 %v4151, 16
        %v4170 = vrot.slane %v4168, 1
        %v4171 = vor.u32 %v4166, %v4170
        %v4173 = vshrl.u32 %v4152, 16
        %v4175 = vshll.u32 %v4152, 16
        %v4177 = vrot.slane %v4175, 1
        %v4178 = vor.u32 %v4173, %v4177
        %v4180 = vshrl.u32 %v4153, 16
        %v4182 = vshll.u32 %v4153, 16
        %v4184 = vrot.slane %v4182, 1
        %v4185 = vor.u32 %v4180, %v4184
        %v4187 = vshrl.u32 %v4154, 16
        %v4189 = vshll.u32 %v4154, 16
        %v4191 = vrot.slane %v4189, 1
        %v4192 = vor.u32 %v4187, %v4191
        %v4194 = vshrl.u32 %v4155, 16
        %v4196 = vshll.u32 %v4155, 16
        %v4198 = vrot.slane %v4196, 1
        %v4199 = vor.u32 %v4194, %v4198
        %v4201 = vshrl.u32 %v4156, 16
        %v4203 = vshll.u32 %v4156, 16
        %v4205 = vrot.slane %v4203, 1
        %v4206 = vor.u32 %v4201, %v4205
        %v4208 = vshrl.u32 %v4157, 16
        %v4210 = vshll.u32 %v4157, 16
        %v4212 = vrot.slane %v4210, 1
        %v4213 = vor.u32 %v4208, %v4212
        %4214 = vrot.lane.b32.xlu0 %v4164, 64
        %v4215 = vpop.permute.xlu0 %4214
        %4216 = vrot.lane.b32.xlu0 %v4171, 64
        %v4217 = vpop.permute.xlu0 %4216
        %4218 = vrot.lane.b32.xlu0 %v4178, 64
        %v4219 = vpop.permute.xlu0 %4218
        %4220 = vrot.lane.b32.xlu0 %v4185, 64
        %v4221 = vpop.permute.xlu0 %4220
        %4222 = vrot.lane.b32.xlu0 %v4192, 64
        %v4223 = vpop.permute.xlu0 %4222
        %4224 = vrot.lane.b32.xlu0 %v4199, 64
        %v4225 = vpop.permute.xlu0 %4224
        %4226 = vrot.lane.b32.xlu0 %v4206, 64
        %v4227 = vpop.permute.xlu0 %4226
        %4228 = vrot.lane.b32.xlu0 %v4213, 64
        %v4229 = vpop.permute.xlu0 %4228
        %v4238 = vunpack.c.l.b16 %v3798
        %v4239 = vunpack.c.l.b16 %v3799
        %v4240 = vunpack.c.l.b16 %v3800
        %v4241 = vunpack.c.l.b16 %v3801
        %v4242 = vunpack.c.l.b16 %v3802
        %v4243 = vunpack.c.l.b16 %v3803
        %v4244 = vunpack.c.l.b16 %v3804
        %v4245 = vunpack.c.l.b16 %v3805
        %v4246 = vpack.c.b16 %v4135, %v4238
        %v4247 = vpack.c.b16 %v4137, %v4239
        %v4248 = vpack.c.b16 %v4139, %v4240
        %v4249 = vpack.c.b16 %v4141, %v4241
        %v4250 = vpack.c.b16 %v4143, %v4242
        %v4251 = vpack.c.b16 %v4145, %v4243
        %v4252 = vpack.c.b16 %v4147, %v4244
        %v4253 = vpack.c.b16 %v4149, %v4245
        %v4254 = vrot.slane %v4246, 1
        %v4255 = vrot.slane %v4247, 1
        %v4256 = vrot.slane %v4248, 1
        %v4257 = vrot.slane %v4249, 1
        %v4258 = vrot.slane %v4250, 1
        %v4259 = vrot.slane %v4251, 1
        %v4260 = vrot.slane %v4252, 1
        %v4261 = vrot.slane %v4253, 1
        %v4264 = vsel %vm1618, %v3734, %v3903
        %v4267 = vsel %vm1618, %v3735, %v3905
        %v4270 = vsel %vm1618, %v3736, %v3907
        %v4273 = vsel %vm1618, %v3737, %v3909
        %v4276 = vsel %vm1618, %v3738, %v3911
        %v4279 = vsel %vm1618, %v3739, %v3913
        %v4282 = vsel %vm1618, %v3740, %v3915
        %v4285 = vsel %vm1618, %v3741, %v3917
        %v4288 = vsel %vm1618, %v3942, %v3975
        %v4291 = vsel %vm1618, %v3943, %v3977
        %v4294 = vsel %vm1618, %v3944, %v3979
        %v4297 = vsel %vm1618, %v3945, %v3981
        %v4300 = vsel %vm1618, %v3946, %v3983
        %v4303 = vsel %vm1618, %v3947, %v3985
        %v4306 = vsel %vm1618, %v3948, %v3987
        %v4309 = vsel %vm1618, %v3949, %v3989
        %v4312 = vsel %vm1618, %v4020, %v4103
        %v4315 = vsel %vm1618, %v4027, %v4105
        %v4318 = vsel %vm1618, %v4034, %v4107
        %v4321 = vsel %vm1618, %v4041, %v4109
        %v4324 = vsel %vm1618, %v4048, %v4111
        %v4327 = vsel %vm1618, %v4055, %v4113
        %v4330 = vsel %vm1618, %v4062, %v4115
        %v4333 = vsel %vm1618, %v4069, %v4117
        %v4336 = vsel %vm1618, %v3782, %v4215
        %v4339 = vsel %vm1618, %v3783, %v4217
        %v4342 = vsel %vm1618, %v3784, %v4219
        %v4345 = vsel %vm1618, %v3785, %v4221
        %v4348 = vsel %vm1618, %v3786, %v4223
        %v4351 = vsel %vm1618, %v3787, %v4225
        %v4354 = vsel %vm1618, %v3788, %v4227
        %v4357 = vsel %vm1618, %v3789, %v4229
        %v4390 = vunpack.c.l.b16 %v4264
        %v4391 = vunpack.c.l.b16 %v4288
        %v4392 = vunpack.c.l.b16 %v4312
        %v4393 = vunpack.c.l.b16 %v4336
        %v4394 = vunpack.c.l.b16 %v4254
        %v4395 = vunpack.c.l.b16 %v4267
        %v4396 = vunpack.c.l.b16 %v4291
        %v4397 = vunpack.c.l.b16 %v4315
        %v4398 = vunpack.c.l.b16 %v4339
        %v4399 = vunpack.c.l.b16 %v4255
        %v4400 = vunpack.c.l.b16 %v4270
        %v4401 = vunpack.c.l.b16 %v4294
        %v4402 = vunpack.c.l.b16 %v4318
        %v4403 = vunpack.c.l.b16 %v4342
        %v4404 = vunpack.c.l.b16 %v4256
        %v4405 = vunpack.c.l.b16 %v4273
        %v4406 = vunpack.c.l.b16 %v4297
        %v4407 = vunpack.c.l.b16 %v4321
        %v4408 = vunpack.c.l.b16 %v4345
        %v4409 = vunpack.c.l.b16 %v4257
        %v4410 = vunpack.c.l.b16 %v4276
        %v4411 = vunpack.c.l.b16 %v4300
        %v4412 = vunpack.c.l.b16 %v4324
        %v4413 = vunpack.c.l.b16 %v4348
        %v4414 = vunpack.c.l.b16 %v4258
        %v4415 = vunpack.c.l.b16 %v4279
        %v4416 = vunpack.c.l.b16 %v4303
        %v4417 = vunpack.c.l.b16 %v4327
        %v4418 = vunpack.c.l.b16 %v4351
        %v4419 = vunpack.c.l.b16 %v4259
        %v4420 = vunpack.c.l.b16 %v4282
        %v4421 = vunpack.c.l.b16 %v4306
        %v4422 = vunpack.c.l.b16 %v4330
        %v4423 = vunpack.c.l.b16 %v4354
        %v4424 = vunpack.c.l.b16 %v4260
        %v4425 = vunpack.c.l.b16 %v4285
        %v4426 = vunpack.c.l.b16 %v4309
        %v4427 = vunpack.c.l.b16 %v4333
        %v4428 = vunpack.c.l.b16 %v4357
        %v4429 = vunpack.c.l.b16 %v4261
        %v4430 = vld [vmem:[%s7] sm:$0xf]
        %v4431 = vld [vmem:[%s7 + $0x4] sm:$0xf]
        %v4432 = vld [vmem:[%s7 + $0x8] sm:$0xf]
        %v4433 = vld [vmem:[%s7 + $0xc] sm:$0xf]
        %v4434 = vld [vmem:[%s7 + $0x10] sm:$0xf]
        %v4435 = vld [vmem:[%s7 + $0x14] sm:$0xf]
        %v4436 = vld [vmem:[%s7 + $0x18] sm:$0xf]
        %v4437 = vld [vmem:[%s7 + $0x1c] sm:$0xf]
        %v4438 = vld [vmem:[%s7 + $0x20] sm:$0xf]
        %v4439 = vld [vmem:[%s7 + $0x24] sm:$0xf]
        %v4440 = vld [vmem:[%s7 + $0x28] sm:$0xf]
        %v4441 = vld [vmem:[%s7 + $0x2c] sm:$0xf]
        %v4442 = vld [vmem:[%s7 + $0x30] sm:$0xf]
        %v4443 = vld [vmem:[%s7 + $0x34] sm:$0xf]
        %v4444 = vld [vmem:[%s7 + $0x38] sm:$0xf]
        %v4445 = vld [vmem:[%s7 + $0x3c] sm:$0xf]
        %v4446 = vld [vmem:[%s7 + $0x40] sm:$0xf]
        %v4447 = vld [vmem:[%s7 + $0x44] sm:$0xf]
        %v4448 = vld [vmem:[%s7 + $0x48] sm:$0xf]
        %v4449 = vld [vmem:[%s7 + $0x4c] sm:$0xf]
        %v4450 = vld [vmem:[%s7 + $0x50] sm:$0xf]
        %v4451 = vld [vmem:[%s7 + $0x54] sm:$0xf]
        %v4452 = vld [vmem:[%s7 + $0x58] sm:$0xf]
        %v4453 = vld [vmem:[%s7 + $0x5c] sm:$0xf]
        %v4454 = vld [vmem:[%s7 + $0x60] sm:$0xf]
        %v4455 = vld [vmem:[%s7 + $0x64] sm:$0xf]
        %v4456 = vld [vmem:[%s7 + $0x68] sm:$0xf]
        %v4457 = vld [vmem:[%s7 + $0x6c] sm:$0xf]
        %v4458 = vld [vmem:[%s7 + $0x70] sm:$0xf]
        %v4459 = vld [vmem:[%s7 + $0x74] sm:$0xf]
        %v4460 = vld [vmem:[%s7 + $0x78] sm:$0xf]
        %v4461 = vld [vmem:[%s7 + $0x7c] sm:$0xf]
        %v4462 = vld [vmem:[%s7 + $0x80] sm:$0xf]
        %v4463 = vld [vmem:[%s7 + $0x84] sm:$0xf]
        %v4464 = vld [vmem:[%s7 + $0x88] sm:$0xf]
        %v4465 = vld [vmem:[%s7 + $0x8c] sm:$0xf]
        %v4466 = vld [vmem:[%s7 + $0x90] sm:$0xf]
        %v4467 = vld [vmem:[%s7 + $0x94] sm:$0xf]
        %v4468 = vld [vmem:[%s7 + $0x98] sm:$0xf]
        %v4469 = vld [vmem:[%s7 + $0x9c] sm:$0xf]
        %v4470 = vld [vmem:[%s7 + $0xa0] sm:$0xf]
        %v4471 = vld [vmem:[%s7 + $0xa4] sm:$0xf]
        %v4472 = vld [vmem:[%s7 + $0xa8] sm:$0xf]
        %v4473 = vld [vmem:[%s7 + $0xac] sm:$0xf]
        %v4474 = vld [vmem:[%s7 + $0xb0] sm:$0xf]
        %v4475 = vld [vmem:[%s7 + $0xb4] sm:$0xf]
        %v4476 = vld [vmem:[%s7 + $0xb8] sm:$0xf]
        %v4477 = vld [vmem:[%s7 + $0xbc] sm:$0xf]
        %v4478 = vld [vmem:[%s7 + $0xc0] sm:$0xf]
        %v4479 = vld [vmem:[%s7 + $0xc4] sm:$0xf]
        %v4480 = vld [vmem:[%s7 + $0xc8] sm:$0xf]
        %v4481 = vld [vmem:[%s7 + $0xcc] sm:$0xf]
        %v4482 = vld [vmem:[%s7 + $0xd0] sm:$0xf]
        %v4483 = vld [vmem:[%s7 + $0xd4] sm:$0xf]
        %v4484 = vld [vmem:[%s7 + $0xd8] sm:$0xf]
        %v4485 = vld [vmem:[%s7 + $0xdc] sm:$0xf]
        %v4486 = vld [vmem:[%s7 + $0xe0] sm:$0xf]
        %v4487 = vld [vmem:[%s7 + $0xe4] sm:$0xf]
        %v4488 = vld [vmem:[%s7 + $0xe8] sm:$0xf]
        %v4489 = vld [vmem:[%s7 + $0xec] sm:$0xf]
        %v4490 = vld [vmem:[%s7 + $0xf0] sm:$0xf]
        %v4491 = vld [vmem:[%s7 + $0xf4] sm:$0xf]
        %v4492 = vld [vmem:[%s7 + $0xf8] sm:$0xf]
        %v4493 = vld [vmem:[%s7 + $0xfc] sm:$0xf]
        %v4494 = vld [vmem:[%s7 + $0x100] sm:$0xf]
        %v4495 = vld [vmem:[%s7 + $0x104] sm:$0xf]
        %v4496 = vld [vmem:[%s7 + $0x108] sm:$0xf]
        %v4497 = vld [vmem:[%s7 + $0x10c] sm:$0xf]
        %v4498 = vld [vmem:[%s7 + $0x110] sm:$0xf]
        %v4499 = vld [vmem:[%s7 + $0x114] sm:$0xf]
        %v4500 = vld [vmem:[%s7 + $0x118] sm:$0xf]
        %v4501 = vld [vmem:[%s7 + $0x11c] sm:$0xf]
        %v4502 = vld [vmem:[%s8] sm:$0x1]
        %v4504 = vlaneseq
        %v4505 = vshrl.u32 %v4504, 7
        %v4506 = vsub.s32 0, %v4505
        %v4507 = vrot.slane %v4502, %v4506
        %v4509 = vpack.c.b16 %v4395, %v4390
        %v4510 = vpack.c.b16 %v4396, %v4391
        %v4511 = vpack.c.b16 %v4397, %v4392
        %v4512 = vpack.c.b16 %v4398, %v4393
        %v4513 = vpack.c.b16 %v4399, %v4394
        %v4514 = vpack.c.b16 %v4405, %v4400
        %v4515 = vpack.c.b16 %v4406, %v4401
        %v4516 = vpack.c.b16 %v4407, %v4402
        %v4517 = vpack.c.b16 %v4408, %v4403
        %v4518 = vpack.c.b16 %v4409, %v4404
        %v4519 = vpack.c.b16 %v4415, %v4410
        %v4520 = vpack.c.b16 %v4416, %v4411
        %v4521 = vpack.c.b16 %v4417, %v4412
        %v4522 = vpack.c.b16 %v4418, %v4413
        %v4523 = vpack.c.b16 %v4419, %v4414
        %v4524 = vpack.c.b16 %v4425, %v4420
        %v4525 = vpack.c.b16 %v4426, %v4421
        %v4526 = vpack.c.b16 %v4427, %v4422
        %v4527 = vpack.c.b16 %v4428, %v4423
        %v4528 = vpack.c.b16 %v4429, %v4424
        %v4617 = vunpack.c.l.b16 %v4430
        %v4618 = vunpack.c.l.b16 %v4431
        %v4619 = vunpack.c.l.b16 %v4432
        %v4620 = vunpack.c.l.b16 %v4433
        %v4621 = vunpack.c.l.b16 %v4434
        %v4622 = vunpack.c.l.b16 %v4435
        %v4623 = vunpack.c.l.b16 %v4436
        %v4624 = vunpack.c.l.b16 %v4437
        %v4625 = vunpack.c.l.b16 %v4438
        %v4626 = vunpack.c.l.b16 %v4439
        %v4627 = vunpack.c.l.b16 %v4440
        %v4628 = vunpack.c.l.b16 %v4441
        %v4629 = vunpack.c.l.b16 %v4442
        %v4630 = vunpack.c.l.b16 %v4443
        %v4631 = vunpack.c.l.b16 %v4444
        %v4632 = vunpack.c.l.b16 %v4445
        %v4633 = vunpack.c.l.b16 %v4446
        %v4634 = vunpack.c.l.b16 %v4447
        %v4635 = vunpack.c.l.b16 %v4448
        %v4636 = vunpack.c.l.b16 %v4449
        %v4637 = vunpack.c.l.b16 %v4450
        %v4638 = vunpack.c.l.b16 %v4451
        %v4639 = vunpack.c.l.b16 %v4452
        %v4640 = vunpack.c.l.b16 %v4453
        %v4641 = vunpack.c.l.b16 %v4454
        %v4642 = vunpack.c.l.b16 %v4455
        %v4643 = vunpack.c.l.b16 %v4456
        %v4644 = vunpack.c.l.b16 %v4457
        %v4645 = vunpack.c.l.b16 %v4458
        %v4646 = vunpack.c.l.b16 %v4459
        %v4647 = vunpack.c.l.b16 %v4460
        %v4648 = vunpack.c.l.b16 %v4461
        %v4649 = vunpack.c.l.b16 %v4462
        %v4650 = vunpack.c.l.b16 %v4463
        %v4651 = vunpack.c.l.b16 %v4464
        %v4652 = vunpack.c.l.b16 %v4465
        %v4653 = vunpack.c.l.b16 %v4466
        %v4654 = vunpack.c.l.b16 %v4467
        %v4655 = vunpack.c.l.b16 %v4468
        %v4656 = vunpack.c.l.b16 %v4469
        %v4657 = vunpack.c.l.b16 %v4470
        %v4658 = vunpack.c.l.b16 %v4471
        %v4659 = vunpack.c.l.b16 %v4472
        %v4660 = vunpack.c.l.b16 %v4473
        %v4661 = vunpack.c.l.b16 %v4474
        %v4662 = vunpack.c.l.b16 %v4475
        %v4663 = vunpack.c.l.b16 %v4476
        %v4664 = vunpack.c.l.b16 %v4477
        %v4665 = vunpack.c.l.b16 %v4478
        %v4666 = vunpack.c.l.b16 %v4479
        %v4667 = vunpack.c.l.b16 %v4480
        %v4668 = vunpack.c.l.b16 %v4481
        %v4669 = vunpack.c.l.b16 %v4482
        %v4670 = vunpack.c.l.b16 %v4483
        %v4671 = vunpack.c.l.b16 %v4484
        %v4672 = vunpack.c.l.b16 %v4485
        %v4673 = vunpack.c.l.b16 %v4486
        %v4674 = vunpack.c.l.b16 %v4487
        %v4675 = vunpack.c.l.b16 %v4488
        %v4676 = vunpack.c.l.b16 %v4489
        %v4677 = vunpack.c.l.b16 %v4490
        %v4678 = vunpack.c.l.b16 %v4491
        %v4679 = vunpack.c.l.b16 %v4492
        %v4680 = vunpack.c.l.b16 %v4493
        %v4681 = vunpack.c.l.b16 %v4494
        %v4682 = vunpack.c.l.b16 %v4495
        %v4683 = vunpack.c.l.b16 %v4496
        %v4684 = vunpack.c.l.b16 %v4497
        %v4685 = vunpack.c.l.b16 %v4498
        %v4686 = vunpack.c.l.b16 %v4499
        %v4687 = vunpack.c.l.b16 %v4500
        %v4688 = vunpack.c.l.b16 %v4501
        %v4689 = vpack.c.b16 %v4618, %v4617
        %v4690 = vpack.c.b16 %v4620, %v4619
        %v4691 = vpack.c.b16 %v4622, %v4621
        %v4692 = vpack.c.b16 %v4624, %v4623
        %v4693 = vpack.c.b16 %v4626, %v4625
        %v4694 = vpack.c.b16 %v4628, %v4627
        %v4695 = vpack.c.b16 %v4630, %v4629
        %v4696 = vpack.c.b16 %v4632, %v4631
        %v4697 = vpack.c.b16 %v4634, %v4633
        %v4698 = vpack.c.b16 %v4636, %v4635
        %v4699 = vpack.c.b16 %v4638, %v4637
        %v4700 = vpack.c.b16 %v4640, %v4639
        %v4701 = vpack.c.b16 %v4642, %v4641
        %v4702 = vpack.c.b16 %v4644, %v4643
        %v4703 = vpack.c.b16 %v4646, %v4645
        %v4704 = vpack.c.b16 %v4648, %v4647
        %v4705 = vpack.c.b16 %v4650, %v4649
        %v4706 = vpack.c.b16 %v4652, %v4651
        %v4707 = vpack.c.b16 %v4654, %v4653
        %v4708 = vpack.c.b16 %v4656, %v4655
        %v4709 = vpack.c.b16 %v4658, %v4657
        %v4710 = vpack.c.b16 %v4660, %v4659
        %v4711 = vpack.c.b16 %v4662, %v4661
        %v4712 = vpack.c.b16 %v4664, %v4663
        %v4713 = vpack.c.b16 %v4666, %v4665
        %v4714 = vpack.c.b16 %v4668, %v4667
        %v4715 = vpack.c.b16 %v4670, %v4669
        %v4716 = vpack.c.b16 %v4672, %v4671
        %v4717 = vpack.c.b16 %v4674, %v4673
        %v4718 = vpack.c.b16 %v4676, %v4675
        %v4719 = vpack.c.b16 %v4678, %v4677
        %v4720 = vpack.c.b16 %v4680, %v4679
        %v4721 = vpack.c.b16 %v4682, %v4681
        %v4722 = vpack.c.b16 %v4684, %v4683
        %v4723 = vpack.c.b16 %v4686, %v4685
        %v4724 = vpack.c.b16 %v4688, %v4687
        %v4762 = vsel %vm1618, %v4513, 0
        %v4765 = vsel %vm1618, %v4518, 0
        %v4768 = vsel %vm1618, %v4523, 0
        %v4771 = vsel %vm1618, %v4528, 0
        %4773 = vmatprep.subr.bf16.mxu0 0
        %4774 = vmatpush1.bf16.msra.mxu0 %v4696
        %4775 = vmatprep.subr.bf16.mxu0 0
        %4776 = vmatpush1.bf16.msra.mxu0 %v4695
        %4777 = vmatprep.subr.bf16.mxu0 0
        %4778 = vmatpush1.bf16.msra.mxu0 %v4694
        %4779 = vmatprep.subr.bf16.mxu0 0
        %4780 = vmatpush1.bf16.msra.mxu0 %v4693
        %4781 = vmatprep.subr.bf16.mxu0 0
        %4782 = vmatpush1.bf16.msra.mxu0 %v4692
        %4783 = vmatprep.subr.bf16.mxu0 0
        %4784 = vmatpush1.bf16.msra.mxu0 %v4691
        %4785 = vmatprep.subr.bf16.mxu0 0
        %4786 = vmatpush1.bf16.msra.mxu0 %v4690
        %4787 = vmatprep.subr.bf16.mxu0 0
        %4788 = vmatpush1.bf16.msra.mxu0 %v4689
        %4789 = vmatprep.subr.bf16.mxu0 0
        %4790 = vmatpush2.bf16.msra.mxu0 %v4704
        %4791 = vmatprep.subr.bf16.mxu0 0
        %4792 = vmatpush2.bf16.msra.mxu0 %v4703
        %4793 = vmatprep.subr.bf16.mxu0 0
        %4794 = vmatpush2.bf16.msra.mxu0 %v4702
        %4795 = vmatprep.subr.bf16.mxu0 0
        %4796 = vmatpush2.bf16.msra.mxu0 %v4701
        %4797 = vmatprep.subr.bf16.mxu0 0
        %4798 = vmatpush2.bf16.msra.mxu0 %v4700
        %4799 = vmatprep.subr.bf16.mxu0 0
        %4800 = vmatpush2.bf16.msra.mxu0 %v4699
        %4801 = vmatprep.subr.bf16.mxu0 0
        %4802 = vmatpush2.bf16.msra.mxu0 %v4698
        %4803 = vmatprep.subr.bf16.mxu0 0
        %4804 = vmatpush2.bf16.msra.mxu0 %v4697
        %4805 = vmatprep.mubr.bf16.mxu0 %v4510
        %4806 = vmatmul.mubr.bf16.gmra.mxu0 %v4509
        %v4807 = vpop.f32.mrf.mxu0
        %v4808 = vadd.f32 %v4507, %v4807
        %v4809 = vpop.f32.mrf.mxu0
        %v4810 = vpop.f32.mrf.mxu0
        %v4811 = vadd.f32 %v4507, %v4810
        %v4812 = vpop.f32.mrf.mxu0
        %4813 = vmatprep.mubr.bf16.mxu0 %v4515
        %4814 = vmatmul.mubr.bf16.gmra.mxu0 %v4514
        %v4815 = vpop.f32.mrf.mxu0
        %v4816 = vadd.f32 %v4507, %v4815
        %v4817 = vpop.f32.mrf.mxu0
        %v4818 = vpop.f32.mrf.mxu0
        %v4819 = vadd.f32 %v4507, %v4818
        %v4820 = vpop.f32.mrf.mxu0
        %4821 = vmatprep.mubr.bf16.mxu0 %v4520
        %4822 = vmatmul.mubr.bf16.gmra.mxu0 %v4519
        %v4823 = vpop.f32.mrf.mxu0
        %v4824 = vadd.f32 %v4507, %v4823
        %v4825 = vpop.f32.mrf.mxu0
        %v4826 = vpop.f32.mrf.mxu0
        %v4827 = vadd.f32 %v4507, %v4826
        %v4828 = vpop.f32.mrf.mxu0
        %4829 = vmatprep.mubr.bf16.mxu0 %v4525
        %4830 = vmatmul.mubr.bf16.gmra.mxu0 %v4524
        %v4831 = vpop.f32.mrf.mxu0
        %v4832 = vadd.f32 %v4507, %v4831
        %v4833 = vpop.f32.mrf.mxu0
        %v4834 = vpop.f32.mrf.mxu0
        %v4835 = vadd.f32 %v4507, %v4834
        %v4836 = vpop.f32.mrf.mxu0
        %4837 = vdwg.mxu0
        %4838 = vmatprep.subr.bf16.mxu0 0
        %4839 = vmatpush1.bf16.msra.mxu0 %v4712
        %4840 = vmatprep.subr.bf16.mxu0 0
        %4841 = vmatpush1.bf16.msra.mxu0 %v4711
        %4842 = vmatprep.subr.bf16.mxu0 0
        %4843 = vmatpush1.bf16.msra.mxu0 %v4710
        %4844 = vmatprep.subr.bf16.mxu0 0
        %4845 = vmatpush1.bf16.msra.mxu0 %v4709
        %4846 = vmatprep.subr.bf16.mxu0 0
        %4847 = vmatpush1.bf16.msra.mxu0 %v4708
        %4848 = vmatprep.subr.bf16.mxu0 0
        %4849 = vmatpush1.bf16.msra.mxu0 %v4707
        %4850 = vmatprep.subr.bf16.mxu0 0
        %4851 = vmatpush1.bf16.msra.mxu0 %v4706
        %4852 = vmatprep.subr.bf16.mxu0 0
        %4853 = vmatpush1.bf16.msra.mxu0 %v4705
        %4854 = vmatprep.subr.bf16.mxu0 0
        %4855 = vmatpush2.bf16.msra.mxu0 %v4720
        %4856 = vmatprep.subr.bf16.mxu0 0
        %4857 = vmatpush2.bf16.msra.mxu0 %v4719
        %4858 = vmatprep.subr.bf16.mxu0 0
        %4859 = vmatpush2.bf16.msra.mxu0 %v4718
        %4860 = vmatprep.subr.bf16.mxu0 0
        %4861 = vmatpush2.bf16.msra.mxu0 %v4717
        %4862 = vmatprep.subr.bf16.mxu0 0
        %4863 = vmatpush2.bf16.msra.mxu0 %v4716
        %4864 = vmatprep.subr.bf16.mxu0 0
        %4865 = vmatpush2.bf16.msra.mxu0 %v4715
        %4866 = vmatprep.subr.bf16.mxu0 0
        %4867 = vmatpush2.bf16.msra.mxu0 %v4714
        %4868 = vmatprep.subr.bf16.mxu0 0
        %4869 = vmatpush2.bf16.msra.mxu0 %v4713
        %4870 = vmatprep.mubr.bf16.mxu0 %v4512
        %4871 = vmatmul.mubr.bf16.gmra.mxu0 %v4511
        %v4872 = vpop.f32.mrf.mxu0
        %v4873 = vadd.f32 %v4808, %v4872
        %v4874 = vpop.f32.mrf.mxu0
        %v4875 = vpop.f32.mrf.mxu0
        %v4876 = vadd.f32 %v4811, %v4875
        %v4877 = vpop.f32.mrf.mxu0
        %4878 = vmatprep.mubr.bf16.mxu0 %v4517
        %4879 = vmatmul.mubr.bf16.gmra.mxu0 %v4516
        %v4880 = vpop.f32.mrf.mxu0
        %v4881 = vadd.f32 %v4816, %v4880
        %v4882 = vpop.f32.mrf.mxu0
        %v4883 = vpop.f32.mrf.mxu0
        %v4884 = vadd.f32 %v4819, %v4883
        %v4885 = vpop.f32.mrf.mxu0
        %4886 = vmatprep.mubr.bf16.mxu0 %v4522
        %4887 = vmatmul.mubr.bf16.gmra.mxu0 %v4521
        %v4888 = vpop.f32.mrf.mxu0
        %v4889 = vadd.f32 %v4824, %v4888
        %v4890 = vpop.f32.mrf.mxu0
        %v4891 = vpop.f32.mrf.mxu0
        %v4892 = vadd.f32 %v4827, %v4891
        %v4893 = vpop.f32.mrf.mxu0
        %4894 = vmatprep.mubr.bf16.mxu0 %v4527
        %4895 = vmatmul.mubr.bf16.gmra.mxu0 %v4526
        %v4896 = vpop.f32.mrf.mxu0
        %v4897 = vadd.f32 %v4832, %v4896
        %v4898 = vpop.f32.mrf.mxu0
        %v4899 = vpop.f32.mrf.mxu0
        %v4900 = vadd.f32 %v4835, %v4899
        %v4901 = vpop.f32.mrf.mxu0
        %4902 = vdwg.mxu0
        %4903 = vmatprep.subr.bf16.mxu0 0
        %4904 = vmatpush1.bf16.msra.mxu0 0
        %4905 = vmatprep.subr.bf16.mxu0 0
        %4906 = vmatpush1.bf16.msra.mxu0 0
        %4907 = vmatprep.subr.bf16.mxu0 0
        %4908 = vmatpush1.bf16.msra.mxu0 0
        %4909 = vmatprep.subr.bf16.mxu0 0
        %4910 = vmatpush1.bf16.msra.mxu0 0
        %4911 = vmatprep.subr.bf16.mxu0 0
        %4912 = vmatpush1.bf16.msra.mxu0 %v4724
        %4913 = vmatprep.subr.bf16.mxu0 0
        %4914 = vmatpush1.bf16.msra.mxu0 %v4723
        %4915 = vmatprep.subr.bf16.mxu0 0
        %4916 = vmatpush1.bf16.msra.mxu0 %v4722
        %4917 = vmatprep.subr.bf16.mxu0 0
        %4918 = vmatpush1.bf16.msra.mxu0 %v4721
        %4919 = vmatprep.subr.bf16.mxu0 0
        %4920 = vmatpush2.bf16.msra.mxu0 0
        %4921 = vmatprep.subr.bf16.mxu0 0
        %4922 = vmatpush2.bf16.msra.mxu0 0
        %4923 = vmatprep.subr.bf16.mxu0 0
        %4924 = vmatpush2.bf16.msra.mxu0 0
        %4925 = vmatprep.subr.bf16.mxu0 0
        %4926 = vmatpush2.bf16.msra.mxu0 0
        %4927 = vmatprep.subr.bf16.mxu0 0
        %4928 = vmatpush2.bf16.msra.mxu0 0
        %4929 = vmatprep.subr.bf16.mxu0 0
        %4930 = vmatpush2.bf16.msra.mxu0 0
        %4931 = vmatprep.subr.bf16.mxu0 0
        %4932 = vmatpush2.bf16.msra.mxu0 0
        %4933 = vmatprep.subr.bf16.mxu0 0
        %4934 = vmatpush2.bf16.msra.mxu0 0
        %4935 = vmatprep.mubr.bf16.mxu0 0
        %4936 = vmatmul.mubr.bf16.gmra.mxu0 %v4762
        %v4937 = vpop.f32.mrf.mxu0
        %v4938 = vadd.f32 %v4873, %v4937
        %v4939 = vpop.f32.mrf.mxu0
        %v4940 = vpop.f32.mrf.mxu0
        %v4941 = vadd.f32 %v4876, %v4940
        %v4942 = vpop.f32.mrf.mxu0
        %4943 = vmatprep.mubr.bf16.mxu0 0
        %4944 = vmatmul.mubr.bf16.gmra.mxu0 %v4765
        %v4945 = vpop.f32.mrf.mxu0
        %v4946 = vadd.f32 %v4881, %v4945
        %v4947 = vpop.f32.mrf.mxu0
        %v4948 = vpop.f32.mrf.mxu0
        %v4949 = vadd.f32 %v4884, %v4948
        %v4950 = vpop.f32.mrf.mxu0
        %4951 = vmatprep.mubr.bf16.mxu0 0
        %4952 = vmatmul.mubr.bf16.gmra.mxu0 %v4768
        %v4953 = vpop.f32.mrf.mxu0
        %v4954 = vadd.f32 %v4889, %v4953
        %v4955 = vpop.f32.mrf.mxu0
        %v4956 = vpop.f32.mrf.mxu0
        %v4957 = vadd.f32 %v4892, %v4956
        %v4958 = vpop.f32.mrf.mxu0
        %4959 = vmatprep.mubr.bf16.mxu0 0
        %4960 = vmatmul.mubr.bf16.gmra.mxu0 %v4771
        %v4961 = vpop.f32.mrf.mxu0
        %v4962 = vadd.f32 %v4897, %v4961
        %v4963 = vpop.f32.mrf.mxu0
        %v4964 = vpop.f32.mrf.mxu0
        %v4965 = vadd.f32 %v4900, %v4964
        %v4966 = vpop.f32.mrf.mxu0
        %4967 = vdwg.mxu0
        %v4968 = vmin.f32 %v4938, 20.0
        %v4969 = vmin.f32 %v4941, 20.0
        %v4970 = vmin.f32 %v4946, 20.0
        %v4971 = vmin.f32 %v4949, 20.0
        %v4972 = vmin.f32 %v4954, 20.0
        %v4973 = vmin.f32 %v4957, 20.0
        %v4974 = vmin.f32 %v4962, 20.0
        %v4975 = vmin.f32 %v4965, 20.0
        %v4976 = vmul.f32 %v4968, 1.442695
        %v4977 = vpow.pop %v4976
        %v4978 = vmul.f32 %v4969, 1.442695
        %v4979 = vpow.pop %v4978
        %v4980 = vmul.f32 %v4970, 1.442695
        %v4981 = vpow.pop %v4980
        %v4982 = vmul.f32 %v4971, 1.442695
        %v4983 = vpow.pop %v4982
        %v4984 = vmul.f32 %v4972, 1.442695
        %v4985 = vpow.pop %v4984
        %v4986 = vmul.f32 %v4973, 1.442695
        %v4987 = vpow.pop %v4986
        %v4988 = vmul.f32 %v4974, 1.442695
        %v4989 = vpow.pop %v4988
        %v4990 = vmul.f32 %v4975, 1.442695
        %v4991 = vpow.pop %v4990
        %v4992 = vadd.f32 %v4977, 1.0
        %v4993 = vadd.f32 %v4979, 1.0
        %v4994 = vadd.f32 %v4981, 1.0
        %v4995 = vadd.f32 %v4983, 1.0
        %v4996 = vadd.f32 %v4985, 1.0
        %v4997 = vadd.f32 %v4987, 1.0
        %v4998 = vadd.f32 %v4989, 1.0
        %v4999 = vadd.f32 %v4991, 1.0
        %v5000 = vlog2.pop %v4992
        %v5001 = vmul.f32 %v5000, 0.6931472
        %v5002 = vlog2.pop %v4993
        %v5003 = vmul.f32 %v5002, 0.6931472
        %v5004 = vlog2.pop %v4994
        %v5005 = vmul.f32 %v5004, 0.6931472
        %v5006 = vlog2.pop %v4995
        %v5007 = vmul.f32 %v5006, 0.6931472
        %v5008 = vlog2.pop %v4996
        %v5009 = vmul.f32 %v5008, 0.6931472
        %v5010 = vlog2.pop %v4997
        %v5011 = vmul.f32 %v5010, 0.6931472
        %v5012 = vlog2.pop %v4998
        %v5013 = vmul.f32 %v5012, 0.6931472
        %v5014 = vlog2.pop %v4999
        %v5015 = vmul.f32 %v5014, 0.6931472
        %v5016 = vtanh.pop %v5001
        %v5017 = vtanh.pop %v5003
        %v5018 = vtanh.pop %v5005
        %v5019 = vtanh.pop %v5007
        %v5020 = vtanh.pop %v5009
        %v5021 = vtanh.pop %v5011
        %v5022 = vtanh.pop %v5013
        %v5023 = vtanh.pop %v5015
        %v5024 = vmul.f32 %v4938, %v5016
        %v5025 = vmul.f32 %v4941, %v5017
        %v5026 = vmul.f32 %v4946, %v5018
        %v5027 = vmul.f32 %v4949, %v5019
        %v5028 = vmul.f32 %v4954, %v5020
        %v5029 = vmul.f32 %v4957, %v5021
        %v5030 = vmul.f32 %v4962, %v5022
        %v5031 = vmul.f32 %v4965, %v5023
        %v5032 = vpack.c.bf16 %v5024, %v5024
        %v5033 = vpack.c.bf16 %v5025, %v5025
        %v5034 = vpack.c.bf16 %v5026, %v5026
        %v5035 = vpack.c.bf16 %v5027, %v5027
        %v5036 = vpack.c.bf16 %v5028, %v5028
        %v5037 = vpack.c.bf16 %v5029, %v5029
        %v5038 = vpack.c.bf16 %v5030, %v5030
        %v5039 = vpack.c.bf16 %v5031, %v5031
        %v5048 = vunpack.c.l.b16 %v5032
        %v5049 = vunpack.c.l.b16 %v5033
        %v5050 = vunpack.c.l.b16 %v5034
        %v5051 = vunpack.c.l.b16 %v5035
        %v5052 = vunpack.c.l.b16 %v5036
        %v5053 = vunpack.c.l.b16 %v5037
        %v5054 = vunpack.c.l.b16 %v5038
        %v5055 = vunpack.c.l.b16 %v5039
        %v5056 = vpack.c.b16 %v5048, %v5048
        %v5057 = vpack.c.b16 %v5049, %v5049
        %v5058 = vpack.c.b16 %v5050, %v5050
        %v5059 = vpack.c.b16 %v5051, %v5051
        %v5060 = vpack.c.b16 %v5052, %v5052
        %v5061 = vpack.c.b16 %v5053, %v5053
        %v5062 = vpack.c.b16 %v5054, %v5054
        %v5063 = vpack.c.b16 %v5055, %v5055
        %v5065 = vshrl.u32 %v5056, 16
        %v5067 = vrot.slane %v5065, 7
        %v5068 = vshll.u32 %v5056, 16
        %v5070 = vor.u32 %v5067, %v5068
        %v5071 = vrot.slane %v5067, 4
        %v5073 = vshrl.u32 %v5057, 16
        %v5075 = vrot.slane %v5073, 7
        %v5076 = vshll.u32 %v5057, 16
        %v5078 = vor.u32 %v5075, %v5076
        %v5079 = vrot.slane %v5075, 4
        %v5081 = vshrl.u32 %v5058, 16
        %v5083 = vrot.slane %v5081, 7
        %v5084 = vshll.u32 %v5058, 16
        %v5086 = vor.u32 %v5083, %v5084
        %v5087 = vrot.slane %v5083, 4
        %v5089 = vshrl.u32 %v5059, 16
        %v5091 = vrot.slane %v5089, 7
        %v5092 = vshll.u32 %v5059, 16
        %v5094 = vor.u32 %v5091, %v5092
        %v5095 = vrot.slane %v5091, 4
        %v5097 = vshrl.u32 %v5060, 16
        %v5099 = vrot.slane %v5097, 7
        %v5100 = vshll.u32 %v5060, 16
        %v5102 = vor.u32 %v5099, %v5100
        %v5103 = vrot.slane %v5099, 4
        %v5105 = vshrl.u32 %v5061, 16
        %v5107 = vrot.slane %v5105, 7
        %v5108 = vshll.u32 %v5061, 16
        %v5110 = vor.u32 %v5107, %v5108
        %v5111 = vrot.slane %v5107, 4
        %v5113 = vshrl.u32 %v5062, 16
        %v5115 = vrot.slane %v5113, 7
        %v5116 = vshll.u32 %v5062, 16
        %v5118 = vor.u32 %v5115, %v5116
        %v5119 = vrot.slane %v5115, 4
        %v5121 = vshrl.u32 %v5063, 16
        %v5123 = vrot.slane %v5121, 7
        %v5124 = vshll.u32 %v5063, 16
        %v5126 = vor.u32 %v5123, %v5124
        %v5127 = vrot.slane %v5123, 4
        %vm5144 = vcmask 257024
        %vm5145 = vmand %vm5144, %vm2223
        %v5146 = vsel %vm5145, %v5070, %v3758
        %5147 = vst [vmem:[%s2221] sm:$0xf] %v5146
        %vm5148 = vcmask 253952
        %vm5149 = vmand %vm5148, %vm2229
        %v5150 = vld [vmem:[%s2221 + $0x4] sm:$0x1]
        %v5151 = vsel %vm5149, %v5071, %v5150
        %5152 = vst [vmem:[%s2221 + $0x4] sm:$0x1] %v5151
        %v5153 = vld [vmem:[%s2221 + $0x8] sm:$0xf]
        %v5154 = vsel %vm5145, %v5078, %v5153
        %5155 = vst [vmem:[%s2221 + $0x8] sm:$0xf] %v5154
        %v5156 = vld [vmem:[%s2221 + $0xc] sm:$0x1]
        %v5157 = vsel %vm5149, %v5079, %v5156
        %5158 = vst [vmem:[%s2221 + $0xc] sm:$0x1] %v5157
        %v5159 = vld [vmem:[%s2221 + $0x10] sm:$0xf]
        %v5160 = vsel %vm5145, %v5086, %v5159
        %5161 = vst [vmem:[%s2221 + $0x10] sm:$0xf] %v5160
        %v5162 = vld [vmem:[%s2221 + $0x14] sm:$0x1]
        %v5163 = vsel %vm5149, %v5087, %v5162
        %5164 = vst [vmem:[%s2221 + $0x14] sm:$0x1] %v5163
        %v5165 = vld [vmem:[%s2221 + $0x18] sm:$0xf]
        %v5166 = vsel %vm5145, %v5094, %v5165
        %5167 = vst [vmem:[%s2221 + $0x18] sm:$0xf] %v5166
        %v5168 = vld [vmem:[%s2221 + $0x1c] sm:$0x1]
        %v5169 = vsel %vm5149, %v5095, %v5168
        %5170 = vst [vmem:[%s2221 + $0x1c] sm:$0x1] %v5169
        %v5171 = vld [vmem:[%s2221 + $0x20] sm:$0xf]
        %v5172 = vsel %vm5145, %v5102, %v5171
        %5173 = vst [vmem:[%s2221 + $0x20] sm:$0xf] %v5172
        %v5174 = vld [vmem:[%s2221 + $0x24] sm:$0x1]
        %v5175 = vsel %vm5149, %v5103, %v5174
        %5176 = vst [vmem:[%s2221 + $0x24] sm:$0x1] %v5175
        %v5177 = vld [vmem:[%s2221 + $0x28] sm:$0xf]
        %v5178 = vsel %vm5145, %v5110, %v5177
        %5179 = vst [vmem:[%s2221 + $0x28] sm:$0xf] %v5178
        %v5180 = vld [vmem:[%s2221 + $0x2c] sm:$0x1]
        %v5181 = vsel %vm5149, %v5111, %v5180
        %5182 = vst [vmem:[%s2221 + $0x2c] sm:$0x1] %v5181
        %v5183 = vld [vmem:[%s2221 + $0x30] sm:$0xf]
        %v5184 = vsel %vm5145, %v5118, %v5183
        %5185 = vst [vmem:[%s2221 + $0x30] sm:$0xf] %v5184
        %v5186 = vld [vmem:[%s2221 + $0x34] sm:$0x1]
        %v5187 = vsel %vm5149, %v5119, %v5186
        %5188 = vst [vmem:[%s2221 + $0x34] sm:$0x1] %v5187
        %v5189 = vld [vmem:[%s2221 + $0x38] sm:$0xf]
        %v5190 = vsel %vm5145, %v5126, %v5189
        %5191 = vst [vmem:[%s2221 + $0x38] sm:$0xf] %v5190
        %v5192 = vld [vmem:[%s2221 + $0x3c] sm:$0x1]
        %v5193 = vsel %vm5149, %v5127, %v5192
        %5194 = vst [vmem:[%s2221 + $0x3c] sm:$0x1] %v5193
        %v5195 = vld [vmem:[#allocation3] sm:$0xf]
        %v5196 = vld [vmem:[#allocation3 + $0x8] sm:$0xf]
        %v5197 = vld [vmem:[#allocation3 + $0x10] sm:$0xf]
        %v5198 = vld [vmem:[#allocation3 + $0x18] sm:$0xf]
        %v5199 = vld [vmem:[#allocation3 + $0x20] sm:$0xf]
        %v5200 = vld [vmem:[#allocation3 + $0x28] sm:$0xf]
        %v5201 = vld [vmem:[#allocation3 + $0x30] sm:$0xf]
        %v5202 = vld [vmem:[#allocation3 + $0x38] sm:$0xf]
        %v5203 = vld [vmem:[#allocation3 + $0x4] sm:$0x1]
        %v5204 = vld [vmem:[#allocation3 + $0xc] sm:$0x1]
        %v5205 = vld [vmem:[#allocation3 + $0x14] sm:$0x1]
        %v5206 = vld [vmem:[#allocation3 + $0x1c] sm:$0x1]
        %v5207 = vld [vmem:[#allocation3 + $0x24] sm:$0x1]
        %v5208 = vld [vmem:[#allocation3 + $0x2c] sm:$0x1]
        %v5209 = vld [vmem:[#allocation3 + $0x34] sm:$0x1]
        %v5210 = vld [vmem:[#allocation3 + $0x3c] sm:$0x1]
        %v5211 = vld [vmem:[#allocation3] sm:$0xe]
        %v5212 = vld [vmem:[#allocation3 + $0x8] sm:$0xe]
        %v5213 = vld [vmem:[#allocation3 + $0x10] sm:$0xe]
        %v5214 = vld [vmem:[#allocation3 + $0x18] sm:$0xe]
        %v5215 = vld [vmem:[#allocation3 + $0x20] sm:$0xe]
        %v5216 = vld [vmem:[#allocation3 + $0x28] sm:$0xe]
        %v5217 = vld [vmem:[#allocation3 + $0x30] sm:$0xe]
        %v5218 = vld [vmem:[#allocation3 + $0x38] sm:$0xe]
        %v5219 = vld [vmem:[%s2221] sm:$0xf]
        %v5220 = vld [vmem:[%s2221 + $0x8] sm:$0xf]
        %v5221 = vld [vmem:[%s2221 + $0x10] sm:$0xf]
        %v5222 = vld [vmem:[%s2221 + $0x18] sm:$0xf]
        %v5223 = vld [vmem:[%s2221 + $0x20] sm:$0xf]
        %v5224 = vld [vmem:[%s2221 + $0x28] sm:$0xf]
        %v5225 = vld [vmem:[%s2221 + $0x30] sm:$0xf]
        %v5226 = vld [vmem:[%s2221 + $0x38] sm:$0xf]
        %v5227 = vld [vmem:[%s2221 + $0x4] sm:$0x1]
        %v5228 = vld [vmem:[%s2221 + $0xc] sm:$0x1]
        %v5229 = vld [vmem:[%s2221 + $0x14] sm:$0x1]
        %v5230 = vld [vmem:[%s2221 + $0x1c] sm:$0x1]
        %v5231 = vld [vmem:[%s2221 + $0x24] sm:$0x1]
        %v5232 = vld [vmem:[%s2221 + $0x2c] sm:$0x1]
        %v5233 = vld [vmem:[%s2221 + $0x34] sm:$0x1]
        %v5234 = vld [vmem:[%s2221 + $0x3c] sm:$0x1]
        %v5235 = vld [vmem:[%s2221] sm:$0xe]
        %v5236 = vld [vmem:[%s2221 + $0x8] sm:$0xe]
        %v5237 = vld [vmem:[%s2221 + $0x10] sm:$0xe]
        %v5238 = vld [vmem:[%s2221 + $0x18] sm:$0xe]
        %v5239 = vld [vmem:[%s2221 + $0x20] sm:$0xe]
        %v5240 = vld [vmem:[%s2221 + $0x28] sm:$0xe]
        %v5241 = vld [vmem:[%s2221 + $0x30] sm:$0xe]
        %v5242 = vld [vmem:[%s2221 + $0x38] sm:$0xe]
        %v5243 = vld [vmem:[%s2324] sm:$0xf]
        %v5244 = vld [vmem:[%s2324 + $0x8] sm:$0xf]
        %v5245 = vld [vmem:[%s2324 + $0x10] sm:$0xf]
        %v5246 = vld [vmem:[%s2324 + $0x18] sm:$0xf]
        %v5247 = vld [vmem:[%s2324 + $0x20] sm:$0xf]
        %v5248 = vld [vmem:[%s2324 + $0x28] sm:$0xf]
        %v5249 = vld [vmem:[%s2324 + $0x30] sm:$0xf]
        %v5250 = vld [vmem:[%s2324 + $0x38] sm:$0xf]
        %v5251 = vld [vmem:[%s2324 + $0x4] sm:$0x1]
        %v5252 = vld [vmem:[%s2324 + $0xc] sm:$0x1]
        %v5253 = vld [vmem:[%s2324 + $0x14] sm:$0x1]
        %v5254 = vld [vmem:[%s2324 + $0x1c] sm:$0x1]
        %v5255 = vld [vmem:[%s2324 + $0x24] sm:$0x1]
        %v5256 = vld [vmem:[%s2324 + $0x2c] sm:$0x1]
        %v5257 = vld [vmem:[%s2324 + $0x34] sm:$0x1]
        %v5258 = vld [vmem:[%s2324 + $0x3c] sm:$0x1]
        %v5259 = vld [vmem:[%s2324] sm:$0xe]
        %v5260 = vld [vmem:[%s2324 + $0x8] sm:$0xe]
        %v5261 = vld [vmem:[%s2324 + $0x10] sm:$0xe]
        %v5262 = vld [vmem:[%s2324 + $0x18] sm:$0xe]
        %v5263 = vld [vmem:[%s2324 + $0x20] sm:$0xe]
        %v5264 = vld [vmem:[%s2324 + $0x28] sm:$0xe]
        %v5265 = vld [vmem:[%s2324 + $0x30] sm:$0xe]
        %v5266 = vld [vmem:[%s2324 + $0x38] sm:$0xe]
        %v5283 = vunpack.c.l.b16 %v5195
        %v5284 = vunpack.c.l.b16 %v5203
        %v5285 = vunpack.c.l.b16 %v5196
        %v5286 = vunpack.c.l.b16 %v5204
        %v5287 = vunpack.c.l.b16 %v5197
        %v5288 = vunpack.c.l.b16 %v5205
        %v5289 = vunpack.c.l.b16 %v5198
        %v5290 = vunpack.c.l.b16 %v5206
        %v5291 = vunpack.c.l.b16 %v5199
        %v5292 = vunpack.c.l.b16 %v5207
        %v5293 = vunpack.c.l.b16 %v5200
        %v5294 = vunpack.c.l.b16 %v5208
        %v5295 = vunpack.c.l.b16 %v5201
        %v5296 = vunpack.c.l.b16 %v5209
        %v5297 = vunpack.c.l.b16 %v5202
        %v5298 = vunpack.c.l.b16 %v5210
        %v5299 = vpack.c.b16 %v5284, %v5283
        %v5300 = vpack.c.b16 %v5286, %v5285
        %v5301 = vpack.c.b16 %v5288, %v5287
        %v5302 = vpack.c.b16 %v5290, %v5289
        %v5303 = vpack.c.b16 %v5292, %v5291
        %v5304 = vpack.c.b16 %v5294, %v5293
        %v5305 = vpack.c.b16 %v5296, %v5295
        %v5306 = vpack.c.b16 %v5298, %v5297
        %v5308 = vshrl.u32 %v5299, 16
        %v5310 = vshll.u32 %v5299, 16
        %v5312 = vrot.slane %v5310, 1
        %v5313 = vor.u32 %v5308, %v5312
        %v5315 = vshrl.u32 %v5300, 16
        %v5317 = vshll.u32 %v5300, 16
        %v5319 = vrot.slane %v5317, 1
        %v5320 = vor.u32 %v5315, %v5319
        %v5322 = vshrl.u32 %v5301, 16
        %v5324 = vshll.u32 %v5301, 16
        %v5326 = vrot.slane %v5324, 1
        %v5327 = vor.u32 %v5322, %v5326
        %v5329 = vshrl.u32 %v5302, 16
        %v5331 = vshll.u32 %v5302, 16
        %v5333 = vrot.slane %v5331, 1
        %v5334 = vor.u32 %v5329, %v5333
        %v5336 = vshrl.u32 %v5303, 16
        %v5338 = vshll.u32 %v5303, 16
        %v5340 = vrot.slane %v5338, 1
        %v5341 = vor.u32 %v5336, %v5340
        %v5343 = vshrl.u32 %v5304, 16
        %v5345 = vshll.u32 %v5304, 16
        %v5347 = vrot.slane %v5345, 1
        %v5348 = vor.u32 %v5343, %v5347
        %v5350 = vshrl.u32 %v5305, 16
        %v5352 = vshll.u32 %v5305, 16
        %v5354 = vrot.slane %v5352, 1
        %v5355 = vor.u32 %v5350, %v5354
        %v5357 = vshrl.u32 %v5306, 16
        %v5359 = vshll.u32 %v5306, 16
        %v5361 = vrot.slane %v5359, 1
        %v5362 = vor.u32 %v5357, %v5361
        %5363 = vrot.lane.b32.xlu0 %v5313, 32
        %v5364 = vpop.permute.xlu0 %5363
        %5365 = vrot.lane.b32.xlu0 %v5320, 32
        %v5366 = vpop.permute.xlu0 %5365
        %5367 = vrot.lane.b32.xlu0 %v5327, 32
        %v5368 = vpop.permute.xlu0 %5367
        %5369 = vrot.lane.b32.xlu0 %v5334, 32
        %v5370 = vpop.permute.xlu0 %5369
        %5371 = vrot.lane.b32.xlu0 %v5341, 32
        %v5372 = vpop.permute.xlu0 %5371
        %5373 = vrot.lane.b32.xlu0 %v5348, 32
        %v5374 = vpop.permute.xlu0 %5373
        %5375 = vrot.lane.b32.xlu0 %v5355, 32
        %v5376 = vpop.permute.xlu0 %5375
        %5377 = vrot.lane.b32.xlu0 %v5362, 32
        %v5378 = vpop.permute.xlu0 %5377
        %v5387 = vunpack.c.l.b16 %v5211
        %v5388 = vunpack.c.l.b16 %v5212
        %v5389 = vunpack.c.l.b16 %v5213
        %v5390 = vunpack.c.l.b16 %v5214
        %v5391 = vunpack.c.l.b16 %v5215
        %v5392 = vunpack.c.l.b16 %v5216
        %v5393 = vunpack.c.l.b16 %v5217
        %v5394 = vunpack.c.l.b16 %v5218
        %v5395 = vpack.c.b16 %v5284, %v5387
        %v5396 = vpack.c.b16 %v5286, %v5388
        %v5397 = vpack.c.b16 %v5288, %v5389
        %v5398 = vpack.c.b16 %v5290, %v5390
        %v5399 = vpack.c.b16 %v5292, %v5391
        %v5400 = vpack.c.b16 %v5294, %v5392
        %v5401 = vpack.c.b16 %v5296, %v5393
        %v5402 = vpack.c.b16 %v5298, %v5394
        %v5403 = vrot.slane %v5395, 1
        %v5404 = vrot.slane %v5396, 1
        %v5405 = vrot.slane %v5397, 1
        %v5406 = vrot.slane %v5398, 1
        %v5407 = vrot.slane %v5399, 1
        %v5408 = vrot.slane %v5400, 1
        %v5409 = vrot.slane %v5401, 1
        %v5410 = vrot.slane %v5402, 1
        %5411 = vrot.lane.b32.xlu0 %v5403, 64
        %v5412 = vpop.permute.xlu0 %5411
        %5413 = vrot.lane.b32.xlu0 %v5404, 64
        %v5414 = vpop.permute.xlu0 %5413
        %5415 = vrot.lane.b32.xlu0 %v5405, 64
        %v5416 = vpop.permute.xlu0 %5415
        %5417 = vrot.lane.b32.xlu0 %v5406, 64
        %v5418 = vpop.permute.xlu0 %5417
        %5419 = vrot.lane.b32.xlu0 %v5407, 64
        %v5420 = vpop.permute.xlu0 %5419
        %5421 = vrot.lane.b32.xlu0 %v5408, 64
        %v5422 = vpop.permute.xlu0 %5421
        %5423 = vrot.lane.b32.xlu0 %v5409, 64
        %v5424 = vpop.permute.xlu0 %5423
        %5425 = vrot.lane.b32.xlu0 %v5410, 64
        %v5426 = vpop.permute.xlu0 %5425
        %v5435 = vunpack.c.l.b16 %v5219
        %v5436 = vunpack.c.l.b16 %v5220
        %v5437 = vunpack.c.l.b16 %v5221
        %v5438 = vunpack.c.l.b16 %v5222
        %v5439 = vunpack.c.l.b16 %v5223
        %v5440 = vunpack.c.l.b16 %v5224
        %v5441 = vunpack.c.l.b16 %v5225
        %v5442 = vunpack.c.l.b16 %v5226
        %v5443 = vpack.c.b16 %v5435, %v5435
        %v5444 = vpack.c.b16 %v5436, %v5436
        %v5445 = vpack.c.b16 %v5437, %v5437
        %v5446 = vpack.c.b16 %v5438, %v5438
        %v5447 = vpack.c.b16 %v5439, %v5439
        %v5448 = vpack.c.b16 %v5440, %v5440
        %v5449 = vpack.c.b16 %v5441, %v5441
        %v5450 = vpack.c.b16 %v5442, %v5442
        %5451 = vrot.lane.b32.xlu0 %v5443, 96
        %v5452 = vpop.permute.xlu0 %5451
        %5453 = vrot.lane.b32.xlu0 %v5444, 96
        %v5454 = vpop.permute.xlu0 %5453
        %5455 = vrot.lane.b32.xlu0 %v5445, 96
        %v5456 = vpop.permute.xlu0 %5455
        %5457 = vrot.lane.b32.xlu0 %v5446, 96
        %v5458 = vpop.permute.xlu0 %5457
        %5459 = vrot.lane.b32.xlu0 %v5447, 96
        %v5460 = vpop.permute.xlu0 %5459
        %5461 = vrot.lane.b32.xlu0 %v5448, 96
        %v5462 = vpop.permute.xlu0 %5461
        %5463 = vrot.lane.b32.xlu0 %v5449, 96
        %v5464 = vpop.permute.xlu0 %5463
        %5465 = vrot.lane.b32.xlu0 %v5450, 96
        %v5466 = vpop.permute.xlu0 %5465
        %v5475 = vunpack.c.l.b16 %v5227
        %v5476 = vunpack.c.l.b16 %v5228
        %v5477 = vunpack.c.l.b16 %v5229
        %v5478 = vunpack.c.l.b16 %v5230
        %v5479 = vunpack.c.l.b16 %v5231
        %v5480 = vunpack.c.l.b16 %v5232
        %v5481 = vunpack.c.l.b16 %v5233
        %v5482 = vunpack.c.l.b16 %v5234
        %v5483 = vpack.c.b16 %v5475, %v5435
        %v5484 = vpack.c.b16 %v5476, %v5436
        %v5485 = vpack.c.b16 %v5477, %v5437
        %v5486 = vpack.c.b16 %v5478, %v5438
        %v5487 = vpack.c.b16 %v5479, %v5439
        %v5488 = vpack.c.b16 %v5480, %v5440
        %v5489 = vpack.c.b16 %v5481, %v5441
        %v5490 = vpack.c.b16 %v5482, %v5442
        %v5492 = vshrl.u32 %v5483, 16
        %v5494 = vshll.u32 %v5483, 16
        %v5496 = vrot.slane %v5494, 1
        %v5497 = vor.u32 %v5492, %v5496
        %v5499 = vshrl.u32 %v5484, 16
        %v5501 = vshll.u32 %v5484, 16
        %v5503 = vrot.slane %v5501, 1
        %v5504 = vor.u32 %v5499, %v5503
        %v5506 = vshrl.u32 %v5485, 16
        %v5508 = vshll.u32 %v5485, 16
        %v5510 = vrot.slane %v5508, 1
        %v5511 = vor.u32 %v5506, %v5510
        %v5513 = vshrl.u32 %v5486, 16
        %v5515 = vshll.u32 %v5486, 16
        %v5517 = vrot.slane %v5515, 1
        %v5518 = vor.u32 %v5513, %v5517
        %v5520 = vshrl.u32 %v5487, 16
        %v5522 = vshll.u32 %v5487, 16
        %v5524 = vrot.slane %v5522, 1
        %v5525 = vor.u32 %v5520, %v5524
        %v5527 = vshrl.u32 %v5488, 16
        %v5529 = vshll.u32 %v5488, 16
        %v5531 = vrot.slane %v5529, 1
        %v5532 = vor.u32 %v5527, %v5531
        %v5534 = vshrl.u32 %v5489, 16
        %v5536 = vshll.u32 %v5489, 16
        %v5538 = vrot.slane %v5536, 1
        %v5539 = vor.u32 %v5534, %v5538
        %v5541 = vshrl.u32 %v5490, 16
        %v5543 = vshll.u32 %v5490, 16
        %v5545 = vrot.slane %v5543, 1
        %v5546 = vor.u32 %v5541, %v5545
        %v5555 = vunpack.c.l.b16 %v5235
        %v5556 = vunpack.c.l.b16 %v5236
        %v5557 = vunpack.c.l.b16 %v5237
        %v5558 = vunpack.c.l.b16 %v5238
        %v5559 = vunpack.c.l.b16 %v5239
        %v5560 = vunpack.c.l.b16 %v5240
        %v5561 = vunpack.c.l.b16 %v5241
        %v5562 = vunpack.c.l.b16 %v5242
        %v5563 = vpack.c.b16 %v5475, %v5555
        %v5564 = vpack.c.b16 %v5476, %v5556
        %v5565 = vpack.c.b16 %v5477, %v5557
        %v5566 = vpack.c.b16 %v5478, %v5558
        %v5567 = vpack.c.b16 %v5479, %v5559
        %v5568 = vpack.c.b16 %v5480, %v5560
        %v5569 = vpack.c.b16 %v5481, %v5561
        %v5570 = vpack.c.b16 %v5482, %v5562
        %v5571 = vrot.slane %v5563, 1
        %v5572 = vrot.slane %v5564, 1
        %v5573 = vrot.slane %v5565, 1
        %v5574 = vrot.slane %v5566, 1
        %v5575 = vrot.slane %v5567, 1
        %v5576 = vrot.slane %v5568, 1
        %v5577 = vrot.slane %v5569, 1
        %v5578 = vrot.slane %v5570, 1
        %5579 = vrot.lane.b32.xlu0 %v5571, 32
        %v5580 = vpop.permute.xlu0 %5579
        %5581 = vrot.lane.b32.xlu0 %v5572, 32
        %v5582 = vpop.permute.xlu0 %5581
        %5583 = vrot.lane.b32.xlu0 %v5573, 32
        %v5584 = vpop.permute.xlu0 %5583
        %5585 = vrot.lane.b32.xlu0 %v5574, 32
        %v5586 = vpop.permute.xlu0 %5585
        %5587 = vrot.lane.b32.xlu0 %v5575, 32
        %v5588 = vpop.permute.xlu0 %5587
        %5589 = vrot.lane.b32.xlu0 %v5576, 32
        %v5590 = vpop.permute.xlu0 %5589
        %5591 = vrot.lane.b32.xlu0 %v5577, 32
        %v5592 = vpop.permute.xlu0 %5591
        %5593 = vrot.lane.b32.xlu0 %v5578, 32
        %v5594 = vpop.permute.xlu0 %5593
        %v5603 = vunpack.c.l.b16 %v5243
        %v5604 = vunpack.c.l.b16 %v5244
        %v5605 = vunpack.c.l.b16 %v5245
        %v5606 = vunpack.c.l.b16 %v5246
        %v5607 = vunpack.c.l.b16 %v5247
        %v5608 = vunpack.c.l.b16 %v5248
        %v5609 = vunpack.c.l.b16 %v5249
        %v5610 = vunpack.c.l.b16 %v5250
        %v5611 = vpack.c.b16 %v5603, %v5603
        %v5612 = vpack.c.b16 %v5604, %v5604
        %v5613 = vpack.c.b16 %v5605, %v5605
        %v5614 = vpack.c.b16 %v5606, %v5606
        %v5615 = vpack.c.b16 %v5607, %v5607
        %v5616 = vpack.c.b16 %v5608, %v5608
        %v5617 = vpack.c.b16 %v5609, %v5609
        %v5618 = vpack.c.b16 %v5610, %v5610
        %5619 = vrot.lane.b32.xlu0 %v5611, 64
        %v5620 = vpop.permute.xlu0 %5619
        %5621 = vrot.lane.b32.xlu0 %v5612, 64
        %v5622 = vpop.permute.xlu0 %5621
        %5623 = vrot.lane.b32.xlu0 %v5613, 64
        %v5624 = vpop.permute.xlu0 %5623
        %5625 = vrot.lane.b32.xlu0 %v5614, 64
        %v5626 = vpop.permute.xlu0 %5625
        %5627 = vrot.lane.b32.xlu0 %v5615, 64
        %v5628 = vpop.permute.xlu0 %5627
        %5629 = vrot.lane.b32.xlu0 %v5616, 64
        %v5630 = vpop.permute.xlu0 %5629
        %5631 = vrot.lane.b32.xlu0 %v5617, 64
        %v5632 = vpop.permute.xlu0 %5631
        %5633 = vrot.lane.b32.xlu0 %v5618, 64
        %v5634 = vpop.permute.xlu0 %5633
        %v5643 = vunpack.c.l.b16 %v5251
        %v5644 = vunpack.c.l.b16 %v5252
        %v5645 = vunpack.c.l.b16 %v5253
        %v5646 = vunpack.c.l.b16 %v5254
        %v5647 = vunpack.c.l.b16 %v5255
        %v5648 = vunpack.c.l.b16 %v5256
        %v5649 = vunpack.c.l.b16 %v5257
        %v5650 = vunpack.c.l.b16 %v5258
        %v5651 = vpack.c.b16 %v5643, %v5603
        %v5652 = vpack.c.b16 %v5644, %v5604
        %v5653 = vpack.c.b16 %v5645, %v5605
        %v5654 = vpack.c.b16 %v5646, %v5606
        %v5655 = vpack.c.b16 %v5647, %v5607
        %v5656 = vpack.c.b16 %v5648, %v5608
        %v5657 = vpack.c.b16 %v5649, %v5609
        %v5658 = vpack.c.b16 %v5650, %v5610
        %v5660 = vshrl.u32 %v5651, 16
        %v5662 = vshll.u32 %v5651, 16
        %v5664 = vrot.slane %v5662, 1
        %v5665 = vor.u32 %v5660, %v5664
        %v5667 = vshrl.u32 %v5652, 16
        %v5669 = vshll.u32 %v5652, 16
        %v5671 = vrot.slane %v5669, 1
        %v5672 = vor.u32 %v5667, %v5671
        %v5674 = vshrl.u32 %v5653, 16
        %v5676 = vshll.u32 %v5653, 16
        %v5678 = vrot.slane %v5676, 1
        %v5679 = vor.u32 %v5674, %v5678
        %v5681 = vshrl.u32 %v5654, 16
        %v5683 = vshll.u32 %v5654, 16
        %v5685 = vrot.slane %v5683, 1
        %v5686 = vor.u32 %v5681, %v5685
        %v5688 = vshrl.u32 %v5655, 16
        %v5690 = vshll.u32 %v5655, 16
        %v5692 = vrot.slane %v5690, 1
        %v5693 = vor.u32 %v5688, %v5692
        %v5695 = vshrl.u32 %v5656, 16
        %v5697 = vshll.u32 %v5656, 16
        %v5699 = vrot.slane %v5697, 1
        %v5700 = vor.u32 %v5695, %v5699
        %v5702 = vshrl.u32 %v5657, 16
        %v5704 = vshll.u32 %v5657, 16
        %v5706 = vrot.slane %v5704, 1
        %v5707 = vor.u32 %v5702, %v5706
        %v5709 = vshrl.u32 %v5658, 16
        %v5711 = vshll.u32 %v5658, 16
        %v5713 = vrot.slane %v5711, 1
        %v5714 = vor.u32 %v5709, %v5713
        %5715 = vrot.lane.b32.xlu0 %v5665, 96
        %v5716 = vpop.permute.xlu0 %5715
        %5717 = vrot.lane.b32.xlu0 %v5672, 96
        %v5718 = vpop.permute.xlu0 %5717
        %5719 = vrot.lane.b32.xlu0 %v5679, 96
        %v5720 = vpop.permute.xlu0 %5719
        %5721 = vrot.lane.b32.xlu0 %v5686, 96
        %v5722 = vpop.permute.xlu0 %5721
        %5723 = vrot.lane.b32.xlu0 %v5693, 96
        %v5724 = vpop.permute.xlu0 %5723
        %5725 = vrot.lane.b32.xlu0 %v5700, 96
        %v5726 = vpop.permute.xlu0 %5725
        %5727 = vrot.lane.b32.xlu0 %v5707, 96
        %v5728 = vpop.permute.xlu0 %5727
        %5729 = vrot.lane.b32.xlu0 %v5714, 96
        %v5730 = vpop.permute.xlu0 %5729
        %v5739 = vunpack.c.l.b16 %v5259
        %v5740 = vunpack.c.l.b16 %v5260
        %v5741 = vunpack.c.l.b16 %v5261
        %v5742 = vunpack.c.l.b16 %v5262
        %v5743 = vunpack.c.l.b16 %v5263
        %v5744 = vunpack.c.l.b16 %v5264
        %v5745 = vunpack.c.l.b16 %v5265
        %v5746 = vunpack.c.l.b16 %v5266
        %v5747 = vpack.c.b16 %v5643, %v5739
        %v5748 = vpack.c.b16 %v5644, %v5740
        %v5749 = vpack.c.b16 %v5645, %v5741
        %v5750 = vpack.c.b16 %v5646, %v5742
        %v5751 = vpack.c.b16 %v5647, %v5743
        %v5752 = vpack.c.b16 %v5648, %v5744
        %v5753 = vpack.c.b16 %v5649, %v5745
        %v5754 = vpack.c.b16 %v5650, %v5746
        %v5755 = vrot.slane %v5747, 1
        %v5756 = vrot.slane %v5748, 1
        %v5757 = vrot.slane %v5749, 1
        %v5758 = vrot.slane %v5750, 1
        %v5759 = vrot.slane %v5751, 1
        %v5760 = vrot.slane %v5752, 1
        %v5761 = vrot.slane %v5753, 1
        %v5762 = vrot.slane %v5754, 1
        %v5765 = vsel %vm656, %v5195, %v5364
        %v5768 = vsel %vm656, %v5196, %v5366
        %v5771 = vsel %vm656, %v5197, %v5368
        %v5774 = vsel %vm656, %v5198, %v5370
        %v5777 = vsel %vm656, %v5199, %v5372
        %v5780 = vsel %vm656, %v5200, %v5374
        %v5783 = vsel %vm656, %v5201, %v5376
        %v5786 = vsel %vm656, %v5202, %v5378
        %v5788 = vsel %vm1618, %v5765, %v5412
        %v5790 = vsel %vm1618, %v5768, %v5414
        %v5792 = vsel %vm1618, %v5771, %v5416
        %v5794 = vsel %vm1618, %v5774, %v5418
        %v5796 = vsel %vm1618, %v5777, %v5420
        %v5798 = vsel %vm1618, %v5780, %v5422
        %v5800 = vsel %vm1618, %v5783, %v5424
        %v5802 = vsel %vm1618, %v5786, %v5426
        %v5804 = vsel %vm1627, %v5788, %v5452
        %v5806 = vsel %vm1627, %v5790, %v5454
        %v5808 = vsel %vm1627, %v5792, %v5456
        %v5810 = vsel %vm1627, %v5794, %v5458
        %v5812 = vsel %vm1627, %v5796, %v5460
        %v5814 = vsel %vm1627, %v5798, %v5462
        %v5816 = vsel %vm1627, %v5800, %v5464
        %v5818 = vsel %vm1627, %v5802, %v5466
        %v5821 = vsel %vm656, %v5497, %v5580
        %v5824 = vsel %vm656, %v5504, %v5582
        %v5827 = vsel %vm656, %v5511, %v5584
        %v5830 = vsel %vm656, %v5518, %v5586
        %v5833 = vsel %vm656, %v5525, %v5588
        %v5836 = vsel %vm656, %v5532, %v5590
        %v5839 = vsel %vm656, %v5539, %v5592
        %v5842 = vsel %vm656, %v5546, %v5594
        %v5844 = vsel %vm1618, %v5821, %v5620
        %v5846 = vsel %vm1618, %v5824, %v5622
        %v5848 = vsel %vm1618, %v5827, %v5624
        %v5850 = vsel %vm1618, %v5830, %v5626
        %v5852 = vsel %vm1618, %v5833, %v5628
        %v5854 = vsel %vm1618, %v5836, %v5630
        %v5856 = vsel %vm1618, %v5839, %v5632
        %v5858 = vsel %vm1618, %v5842, %v5634
        %v5860 = vsel %vm1627, %v5844, %v5716
        %v5862 = vsel %vm1627, %v5846, %v5718
        %v5864 = vsel %vm1627, %v5848, %v5720
        %v5866 = vsel %vm1627, %v5850, %v5722
        %v5868 = vsel %vm1627, %v5852, %v5724
        %v5870 = vsel %vm1627, %v5854, %v5726
        %v5872 = vsel %vm1627, %v5856, %v5728
        %v5874 = vsel %vm1627, %v5858, %v5730
        %v5891 = vunpack.c.l.b16 %v5804
        %v5892 = vunpack.c.l.b16 %v5860
        %v5893 = vunpack.c.l.b16 %v5755
        %v5894 = vunpack.c.l.b16 %v5806
        %v5895 = vunpack.c.l.b16 %v5862
        %v5896 = vunpack.c.l.b16 %v5756
        %v5897 = vunpack.c.l.b16 %v5808
        %v5898 = vunpack.c.l.b16 %v5864
        %v5899 = vunpack.c.l.b16 %v5757
        %v5900 = vunpack.c.l.b16 %v5810
        %v5901 = vunpack.c.l.b16 %v5866
        %v5902 = vunpack.c.l.b16 %v5758
        %v5903 = vunpack.c.l.b16 %v5812
        %v5904 = vunpack.c.l.b16 %v5868
        %v5905 = vunpack.c.l.b16 %v5759
        %v5906 = vunpack.c.l.b16 %v5814
        %v5907 = vunpack.c.l.b16 %v5870
        %v5908 = vunpack.c.l.b16 %v5760
        %v5909 = vunpack.c.l.b16 %v5816
        %v5910 = vunpack.c.l.b16 %v5872
        %v5911 = vunpack.c.l.b16 %v5761
        %v5912 = vunpack.c.l.b16 %v5818
        %v5913 = vunpack.c.l.b16 %v5874
        %v5914 = vunpack.c.l.b16 %v5762
        %v5915 = vld [vmem:[%s9] sm:$0xf]
        %v5916 = vld [vmem:[%s9 + $0x4] sm:$0xf]
        %v5917 = vld [vmem:[%s9 + $0x8] sm:$0xf]
        %v5918 = vld [vmem:[%s9 + $0xc] sm:$0xf]
        %v5919 = vld [vmem:[%s9 + $0x10] sm:$0xf]
        %v5920 = vld [vmem:[%s9 + $0x14] sm:$0xf]
        %v5921 = vld [vmem:[%s9 + $0x18] sm:$0xf]
        %v5922 = vld [vmem:[%s9 + $0x1c] sm:$0xf]
        %v5923 = vld [vmem:[%s9 + $0x20] sm:$0xf]
        %v5924 = vld [vmem:[%s9 + $0x24] sm:$0xf]
        %v5925 = vld [vmem:[%s9 + $0x28] sm:$0xf]
        %v5926 = vld [vmem:[%s9 + $0x2c] sm:$0xf]
        %v5927 = vld [vmem:[%s9 + $0x30] sm:$0xf]
        %v5928 = vld [vmem:[%s9 + $0x34] sm:$0xf]
        %v5929 = vld [vmem:[%s9 + $0x38] sm:$0xf]
        %v5930 = vld [vmem:[%s9 + $0x3c] sm:$0xf]
        %v5931 = vld [vmem:[%s9 + $0x40] sm:$0xf]
        %v5932 = vld [vmem:[%s9 + $0x44] sm:$0xf]
        %v5933 = vld [vmem:[%s9 + $0x48] sm:$0xf]
        %v5934 = vld [vmem:[%s9 + $0x4c] sm:$0xf]
        %v5935 = vld [vmem:[%s9 + $0x50] sm:$0xf]
        %v5936 = vld [vmem:[%s9 + $0x54] sm:$0xf]
        %v5937 = vld [vmem:[%s9 + $0x58] sm:$0xf]
        %v5938 = vld [vmem:[%s9 + $0x5c] sm:$0xf]
        %v5939 = vld [vmem:[%s9 + $0x60] sm:$0xf]
        %v5940 = vld [vmem:[%s9 + $0x64] sm:$0xf]
        %v5941 = vld [vmem:[%s9 + $0x68] sm:$0xf]
        %v5942 = vld [vmem:[%s9 + $0x6c] sm:$0xf]
        %v5943 = vld [vmem:[%s9 + $0x70] sm:$0xf]
        %v5944 = vld [vmem:[%s9 + $0x74] sm:$0xf]
        %v5945 = vld [vmem:[%s9 + $0x78] sm:$0xf]
        %v5946 = vld [vmem:[%s9 + $0x7c] sm:$0xf]
        %v5947 = vld [vmem:[%s9 + $0x80] sm:$0xf]
        %v5948 = vld [vmem:[%s9 + $0x84] sm:$0xf]
        %v5949 = vld [vmem:[%s9 + $0x88] sm:$0xf]
        %v5950 = vld [vmem:[%s9 + $0x8c] sm:$0xf]
        %v5951 = vld [vmem:[%s10] sm:$0x1]
        %v5953 = vlaneseq
        %v5954 = vshrl.u32 %v5953, 7
        %v5955 = vsub.s32 0, %v5954
        %v5956 = vrot.slane %v5951, %v5955
        %v5958 = vpack.c.b16 %v5894, %v5891
        %v5959 = vpack.c.b16 %v5895, %v5892
        %v5960 = vpack.c.b16 %v5896, %v5893
        %v5961 = vpack.c.b16 %v5900, %v5897
        %v5962 = vpack.c.b16 %v5901, %v5898
        %v5963 = vpack.c.b16 %v5902, %v5899
        %v5964 = vpack.c.b16 %v5906, %v5903
        %v5965 = vpack.c.b16 %v5907, %v5904
        %v5966 = vpack.c.b16 %v5908, %v5905
        %v5967 = vpack.c.b16 %v5912, %v5909
        %v5968 = vpack.c.b16 %v5913, %v5910
        %v5969 = vpack.c.b16 %v5914, %v5911
        %v6014 = vunpack.c.l.b16 %v5915
        %v6015 = vunpack.c.l.b16 %v5916
        %v6016 = vunpack.c.l.b16 %v5917
        %v6017 = vunpack.c.l.b16 %v5918
        %v6018 = vunpack.c.l.b16 %v5919
        %v6019 = vunpack.c.l.b16 %v5920
        %v6020 = vunpack.c.l.b16 %v5921
        %v6021 = vunpack.c.l.b16 %v5922
        %v6022 = vunpack.c.l.b16 %v5923
        %v6023 = vunpack.c.l.b16 %v5924
        %v6024 = vunpack.c.l.b16 %v5925
        %v6025 = vunpack.c.l.b16 %v5926
        %v6026 = vunpack.c.l.b16 %v5927
        %v6027 = vunpack.c.l.b16 %v5928
        %v6028 = vunpack.c.l.b16 %v5929
        %v6029 = vunpack.c.l.b16 %v5930
        %v6030 = vunpack.c.l.b16 %v5931
        %v6031 = vunpack.c.l.b16 %v5932
        %v6032 = vunpack.c.l.b16 %v5933
        %v6033 = vunpack.c.l.b16 %v5934
        %v6034 = vunpack.c.l.b16 %v5935
        %v6035 = vunpack.c.l.b16 %v5936
        %v6036 = vunpack.c.l.b16 %v5937
        %v6037 = vunpack.c.l.b16 %v5938
        %v6038 = vunpack.c.l.b16 %v5939
        %v6039 = vunpack.c.l.b16 %v5940
        %v6040 = vunpack.c.l.b16 %v5941
        %v6041 = vunpack.c.l.b16 %v5942
        %v6042 = vunpack.c.l.b16 %v5943
        %v6043 = vunpack.c.l.b16 %v5944
        %v6044 = vunpack.c.l.b16 %v5945
        %v6045 = vunpack.c.l.b16 %v5946
        %v6046 = vunpack.c.l.b16 %v5947
        %v6047 = vunpack.c.l.b16 %v5948
        %v6048 = vunpack.c.l.b16 %v5949
        %v6049 = vunpack.c.l.b16 %v5950
        %v6050 = vpack.c.b16 %v6015, %v6014
        %v6051 = vpack.c.b16 %v6017, %v6016
        %v6052 = vpack.c.b16 %v6019, %v6018
        %v6053 = vpack.c.b16 %v6021, %v6020
        %v6054 = vpack.c.b16 %v6023, %v6022
        %v6055 = vpack.c.b16 %v6025, %v6024
        %v6056 = vpack.c.b16 %v6027, %v6026
        %v6057 = vpack.c.b16 %v6029, %v6028
        %v6058 = vpack.c.b16 %v6031, %v6030
        %v6059 = vpack.c.b16 %v6033, %v6032
        %v6060 = vpack.c.b16 %v6035, %v6034
        %v6061 = vpack.c.b16 %v6037, %v6036
        %v6062 = vpack.c.b16 %v6039, %v6038
        %v6063 = vpack.c.b16 %v6041, %v6040
        %v6064 = vpack.c.b16 %v6043, %v6042
        %v6065 = vpack.c.b16 %v6045, %v6044
        %v6066 = vpack.c.b16 %v6047, %v6046
        %v6067 = vpack.c.b16 %v6049, %v6048
        %v6087 = vsel %vm656, %v5960, 0
        %v6090 = vsel %vm656, %v5963, 0
        %v6093 = vsel %vm656, %v5966, 0
        %v6096 = vsel %vm656, %v5969, 0
        %6098 = vmatprep.subr.bf16.mxu0 0
        %6099 = vmatpush1.bf16.msra.mxu0 %v6057
        %6100 = vmatprep.subr.bf16.mxu0 0
        %6101 = vmatpush1.bf16.msra.mxu0 %v6056
        %6102 = vmatprep.subr.bf16.mxu0 0
        %6103 = vmatpush1.bf16.msra.mxu0 %v6055
        %6104 = vmatprep.subr.bf16.mxu0 0
        %6105 = vmatpush1.bf16.msra.mxu0 %v6054
        %6106 = vmatprep.subr.bf16.mxu0 0
        %6107 = vmatpush1.bf16.msra.mxu0 %v6053
        %6108 = vmatprep.subr.bf16.mxu0 0
        %6109 = vmatpush1.bf16.msra.mxu0 %v6052
        %6110 = vmatprep.subr.bf16.mxu0 0
        %6111 = vmatpush1.bf16.msra.mxu0 %v6051
        %6112 = vmatprep.subr.bf16.mxu0 0
        %6113 = vmatpush1.bf16.msra.mxu0 %v6050
        %6114 = vmatprep.subr.bf16.mxu0 0
        %6115 = vmatpush2.bf16.msra.mxu0 %v6065
        %6116 = vmatprep.subr.bf16.mxu0 0
        %6117 = vmatpush2.bf16.msra.mxu0 %v6064
        %6118 = vmatprep.subr.bf16.mxu0 0
        %6119 = vmatpush2.bf16.msra.mxu0 %v6063
        %6120 = vmatprep.subr.bf16.mxu0 0
        %6121 = vmatpush2.bf16.msra.mxu0 %v6062
        %6122 = vmatprep.subr.bf16.mxu0 0
        %6123 = vmatpush2.bf16.msra.mxu0 %v6061
        %6124 = vmatprep.subr.bf16.mxu0 0
        %6125 = vmatpush2.bf16.msra.mxu0 %v6060
        %6126 = vmatprep.subr.bf16.mxu0 0
        %6127 = vmatpush2.bf16.msra.mxu0 %v6059
        %6128 = vmatprep.subr.bf16.mxu0 0
        %6129 = vmatpush2.bf16.msra.mxu0 %v6058
        %6130 = vmatprep.mubr.bf16.mxu0 %v5959
        %6131 = vmatmul.mubr.bf16.gmra.mxu0 %v5958
        %v6132 = vpop.f32.mrf.mxu0
        %v6133 = vadd.f32 %v5956, %v6132
        %v6134 = vpop.f32.mrf.mxu0
        %v6135 = vpop.f32.mrf.mxu0
        %v6136 = vadd.f32 %v5956, %v6135
        %v6137 = vpop.f32.mrf.mxu0
        %6138 = vmatprep.mubr.bf16.mxu0 %v5962
        %6139 = vmatmul.mubr.bf16.gmra.mxu0 %v5961
        %v6140 = vpop.f32.mrf.mxu0
        %v6141 = vadd.f32 %v5956, %v6140
        %v6142 = vpop.f32.mrf.mxu0
        %v6143 = vpop.f32.mrf.mxu0
        %v6144 = vadd.f32 %v5956, %v6143
        %v6145 = vpop.f32.mrf.mxu0
        %6146 = vmatprep.mubr.bf16.mxu0 %v5965
        %6147 = vmatmul.mubr.bf16.gmra.mxu0 %v5964
        %v6148 = vpop.f32.mrf.mxu0
        %v6149 = vadd.f32 %v5956, %v6148
        %v6150 = vpop.f32.mrf.mxu0
        %v6151 = vpop.f32.mrf.mxu0
        %v6152 = vadd.f32 %v5956, %v6151
        %v6153 = vpop.f32.mrf.mxu0
        %6154 = vmatprep.mubr.bf16.mxu0 %v5968
        %6155 = vmatmul.mubr.bf16.gmra.mxu0 %v5967
        %v6156 = vpop.f32.mrf.mxu0
        %v6157 = vadd.f32 %v5956, %v6156
        %v6158 = vpop.f32.mrf.mxu0
        %v6159 = vpop.f32.mrf.mxu0
        %v6160 = vadd.f32 %v5956, %v6159
        %v6161 = vpop.f32.mrf.mxu0
        %6162 = vdwg.mxu0
        %6163 = vmatprep.subr.bf16.mxu0 0
        %6164 = vmatpush1.bf16.msra.mxu0 0
        %6165 = vmatprep.subr.bf16.mxu0 0
        %6166 = vmatpush1.bf16.msra.mxu0 0
        %6167 = vmatprep.subr.bf16.mxu0 0
        %6168 = vmatpush1.bf16.msra.mxu0 0
        %6169 = vmatprep.subr.bf16.mxu0 0
        %6170 = vmatpush1.bf16.msra.mxu0 0
        %6171 = vmatprep.subr.bf16.mxu0 0
        %6172 = vmatpush1.bf16.msra.mxu0 0
        %6173 = vmatprep.subr.bf16.mxu0 0
        %6174 = vmatpush1.bf16.msra.mxu0 0
        %6175 = vmatprep.subr.bf16.mxu0 0
        %6176 = vmatpush1.bf16.msra.mxu0 %v6067
        %6177 = vmatprep.subr.bf16.mxu0 0
        %6178 = vmatpush1.bf16.msra.mxu0 %v6066
        %6179 = vmatprep.subr.bf16.mxu0 0
        %6180 = vmatpush2.bf16.msra.mxu0 0
        %6181 = vmatprep.subr.bf16.mxu0 0
        %6182 = vmatpush2.bf16.msra.mxu0 0
        %6183 = vmatprep.subr.bf16.mxu0 0
        %6184 = vmatpush2.bf16.msra.mxu0 0
        %6185 = vmatprep.subr.bf16.mxu0 0
        %6186 = vmatpush2.bf16.msra.mxu0 0
        %6187 = vmatprep.subr.bf16.mxu0 0
        %6188 = vmatpush2.bf16.msra.mxu0 0
        %6189 = vmatprep.subr.bf16.mxu0 0
        %6190 = vmatpush2.bf16.msra.mxu0 0
        %6191 = vmatprep.subr.bf16.mxu0 0
        %6192 = vmatpush2.bf16.msra.mxu0 0
        %6193 = vmatprep.subr.bf16.mxu0 0
        %6194 = vmatpush2.bf16.msra.mxu0 0
        %6195 = vmatprep.mubr.bf16.mxu0 0
        %6196 = vmatmul.mubr.bf16.gmra.mxu0 %v6087
        %v6197 = vpop.f32.mrf.mxu0
        %v6198 = vadd.f32 %v6133, %v6197
        %v6199 = vpop.f32.mrf.mxu0
        %v6200 = vpop.f32.mrf.mxu0
        %v6201 = vadd.f32 %v6136, %v6200
        %v6202 = vpop.f32.mrf.mxu0
        %6203 = vmatprep.mubr.bf16.mxu0 0
        %6204 = vmatmul.mubr.bf16.gmra.mxu0 %v6090
        %v6205 = vpop.f32.mrf.mxu0
        %v6206 = vadd.f32 %v6141, %v6205
        %v6207 = vpop.f32.mrf.mxu0
        %v6208 = vpop.f32.mrf.mxu0
        %v6209 = vadd.f32 %v6144, %v6208
        %v6210 = vpop.f32.mrf.mxu0
        %6211 = vmatprep.mubr.bf16.mxu0 0
        %6212 = vmatmul.mubr.bf16.gmra.mxu0 %v6093
        %v6213 = vpop.f32.mrf.mxu0
        %v6214 = vadd.f32 %v6149, %v6213
        %v6215 = vpop.f32.mrf.mxu0
        %v6216 = vpop.f32.mrf.mxu0
        %v6217 = vadd.f32 %v6152, %v6216
        %v6218 = vpop.f32.mrf.mxu0
        %6219 = vmatprep.mubr.bf16.mxu0 0
        %6220 = vmatmul.mubr.bf16.gmra.mxu0 %v6096
        %v6221 = vpop.f32.mrf.mxu0
        %v6222 = vadd.f32 %v6157, %v6221
        %v6223 = vpop.f32.mrf.mxu0
        %v6224 = vpop.f32.mrf.mxu0
        %v6225 = vadd.f32 %v6160, %v6224
        %v6226 = vpop.f32.mrf.mxu0
        %6227 = vdwg.mxu0
        %v6228 = vmin.f32 %v6198, 20.0
        %v6229 = vmin.f32 %v6201, 20.0
        %v6230 = vmin.f32 %v6206, 20.0
        %v6231 = vmin.f32 %v6209, 20.0
        %v6232 = vmin.f32 %v6214, 20.0
        %v6233 = vmin.f32 %v6217, 20.0
        %v6234 = vmin.f32 %v6222, 20.0
        %v6235 = vmin.f32 %v6225, 20.0
        %v6236 = vmul.f32 %v6228, 1.442695
        %v6237 = vpow.pop %v6236
        %v6238 = vmul.f32 %v6229, 1.442695
        %v6239 = vpow.pop %v6238
        %v6240 = vmul.f32 %v6230, 1.442695
        %v6241 = vpow.pop %v6240
        %v6242 = vmul.f32 %v6231, 1.442695
        %v6243 = vpow.pop %v6242
        %v6244 = vmul.f32 %v6232, 1.442695
        %v6245 = vpow.pop %v6244
        %v6246 = vmul.f32 %v6233, 1.442695
        %v6247 = vpow.pop %v6246
        %v6248 = vmul.f32 %v6234, 1.442695
        %v6249 = vpow.pop %v6248
        %v6250 = vmul.f32 %v6235, 1.442695
        %v6251 = vpow.pop %v6250
        %v6252 = vadd.f32 %v6237, 1.0
        %v6253 = vadd.f32 %v6239, 1.0
        %v6254 = vadd.f32 %v6241, 1.0
        %v6255 = vadd.f32 %v6243, 1.0
        %v6256 = vadd.f32 %v6245, 1.0
        %v6257 = vadd.f32 %v6247, 1.0
        %v6258 = vadd.f32 %v6249, 1.0
        %v6259 = vadd.f32 %v6251, 1.0
        %v6260 = vlog2.pop %v6252
        %v6261 = vmul.f32 %v6260, 0.6931472
        %v6262 = vlog2.pop %v6253
        %v6263 = vmul.f32 %v6262, 0.6931472
        %v6264 = vlog2.pop %v6254
        %v6265 = vmul.f32 %v6264, 0.6931472
        %v6266 = vlog2.pop %v6255
        %v6267 = vmul.f32 %v6266, 0.6931472
        %v6268 = vlog2.pop %v6256
        %v6269 = vmul.f32 %v6268, 0.6931472
        %v6270 = vlog2.pop %v6257
        %v6271 = vmul.f32 %v6270, 0.6931472
        %v6272 = vlog2.pop %v6258
        %v6273 = vmul.f32 %v6272, 0.6931472
        %v6274 = vlog2.pop %v6259
        %v6275 = vmul.f32 %v6274, 0.6931472
        %v6276 = vtanh.pop %v6261
        %v6277 = vtanh.pop %v6263
        %v6278 = vtanh.pop %v6265
        %v6279 = vtanh.pop %v6267
        %v6280 = vtanh.pop %v6269
        %v6281 = vtanh.pop %v6271
        %v6282 = vtanh.pop %v6273
        %v6283 = vtanh.pop %v6275
        %v6284 = vmul.f32 %v6198, %v6276
        %v6285 = vmul.f32 %v6201, %v6277
        %v6286 = vmul.f32 %v6206, %v6278
        %v6287 = vmul.f32 %v6209, %v6279
        %v6288 = vmul.f32 %v6214, %v6280
        %v6289 = vmul.f32 %v6217, %v6281
        %v6290 = vmul.f32 %v6222, %v6282
        %v6291 = vmul.f32 %v6225, %v6283
        %6300 = vrot.lane.b32.xlu0 %v5024, 32
        %v6301 = vpop.permute.xlu0 %6300
        %6302 = vrot.lane.b32.xlu0 %v5025, 32
        %v6303 = vpop.permute.xlu0 %6302
        %6304 = vrot.lane.b32.xlu0 %v5026, 32
        %v6305 = vpop.permute.xlu0 %6304
        %6306 = vrot.lane.b32.xlu0 %v5027, 32
        %v6307 = vpop.permute.xlu0 %6306
        %6308 = vrot.lane.b32.xlu0 %v5028, 32
        %v6309 = vpop.permute.xlu0 %6308
        %6310 = vrot.lane.b32.xlu0 %v5029, 32
        %v6311 = vpop.permute.xlu0 %6310
        %6312 = vrot.lane.b32.xlu0 %v5030, 32
        %v6313 = vpop.permute.xlu0 %6312
        %6314 = vrot.lane.b32.xlu0 %v5031, 32
        %v6315 = vpop.permute.xlu0 %6314
        %v6324 = vsel %vm656, %v6284, %v6301
        %v6325 = vsel %vm656, %v6285, %v6303
        %v6326 = vsel %vm656, %v6286, %v6305
        %v6327 = vsel %vm656, %v6287, %v6307
        %v6328 = vsel %vm656, %v6288, %v6309
        %v6329 = vsel %vm656, %v6289, %v6311
        %v6330 = vsel %vm656, %v6290, %v6313
        %v6331 = vsel %vm656, %v6291, %v6315
        %v6332 = vpack.c.bf16 %v6325, %v6324
        %v6333 = vpack.c.bf16 %v6327, %v6326
        %v6334 = vpack.c.bf16 %v6329, %v6328
        %v6335 = vpack.c.bf16 %v6331, %v6330
        %v6336 = vld [vmem:[%s11] sm:$0xf]
        %v6337 = vld [vmem:[%s11 + $0x4] sm:$0xf]
        %v6338 = vld [vmem:[%s11 + $0x8] sm:$0xf]
        %v6339 = vld [vmem:[%s11 + $0xc] sm:$0xf]
        %v6340 = vld [vmem:[%s11 + $0x10] sm:$0xf]
        %v6341 = vld [vmem:[%s11 + $0x14] sm:$0xf]
        %v6342 = vld [vmem:[%s11 + $0x18] sm:$0xf]
        %v6343 = vld [vmem:[%s11 + $0x1c] sm:$0xf]
        %v6344 = vld [vmem:[%s12] sm:$0x1]
        %v6346 = vlaneseq
        %v6347 = vshrl.u32 %v6346, 7
        %v6348 = vsub.s32 0, %v6347
        %v6349 = vrot.slane %v6344, %v6348
        %v6359 = vunpack.c.l.b16 %v6336
        %v6360 = vunpack.c.l.b16 %v6337
        %v6361 = vunpack.c.l.b16 %v6338
        %v6362 = vunpack.c.l.b16 %v6339
        %v6363 = vunpack.c.l.b16 %v6340
        %v6364 = vunpack.c.l.b16 %v6341
        %v6365 = vunpack.c.l.b16 %v6342
        %v6366 = vunpack.c.l.b16 %v6343
        %v6367 = vpack.c.b16 %v6360, %v6359
        %v6368 = vpack.c.b16 %v6362, %v6361
        %v6369 = vpack.c.b16 %v6364, %v6363
        %v6370 = vpack.c.b16 %v6366, %v6365
        %v6376 = vsel %vm1618, %v6332, 0
        %v6379 = vsel %vm1618, %v6333, 0
        %v6382 = vsel %vm1618, %v6334, 0
        %v6385 = vsel %vm1618, %v6335, 0
        %6387 = vmatprep.subr.bf16.mxu0 0
        %6388 = vmatpush1.bf16.msra.mxu0 0
        %6389 = vmatprep.subr.bf16.mxu0 0
        %6390 = vmatpush1.bf16.msra.mxu0 0
        %6391 = vmatprep.subr.bf16.mxu0 0
        %6392 = vmatpush1.bf16.msra.mxu0 0
        %6393 = vmatprep.subr.bf16.mxu0 0
        %6394 = vmatpush1.bf16.msra.mxu0 0
        %6395 = vmatprep.subr.bf16.mxu0 0
        %6396 = vmatpush1.bf16.msra.mxu0 %v6370
        %6397 = vmatprep.subr.bf16.mxu0 0
        %6398 = vmatpush1.bf16.msra.mxu0 %v6369
        %6399 = vmatprep.subr.bf16.mxu0 0
        %6400 = vmatpush1.bf16.msra.mxu0 %v6368
        %6401 = vmatprep.subr.bf16.mxu0 0
        %6402 = vmatpush1.bf16.msra.mxu0 %v6367
        %6403 = vmatprep.subr.bf16.mxu0 0
        %6404 = vmatpush2.bf16.msra.mxu0 0
        %6405 = vmatprep.subr.bf16.mxu0 0
        %6406 = vmatpush2.bf16.msra.mxu0 0
        %6407 = vmatprep.subr.bf16.mxu0 0
        %6408 = vmatpush2.bf16.msra.mxu0 0
        %6409 = vmatprep.subr.bf16.mxu0 0
        %6410 = vmatpush2.bf16.msra.mxu0 0
        %6411 = vmatprep.subr.bf16.mxu0 0
        %6412 = vmatpush2.bf16.msra.mxu0 0
        %6413 = vmatprep.subr.bf16.mxu0 0
        %6414 = vmatpush2.bf16.msra.mxu0 0
        %6415 = vmatprep.subr.bf16.mxu0 0
        %6416 = vmatpush2.bf16.msra.mxu0 0
        %6417 = vmatprep.subr.bf16.mxu0 0
        %6418 = vmatpush2.bf16.msra.mxu0 0
        %6419 = vmatprep.mubr.bf16.mxu0 0
        %6420 = vmatmul.mubr.bf16.gmra.mxu0 %v6376
        %v6421 = vpop.f32.mrf.mxu0
        %v6422 = vadd.f32 %v6349, %v6421
        %v6423 = vpop.f32.mrf.mxu0
        %v6424 = vpop.f32.mrf.mxu0
        %v6425 = vadd.f32 %v6349, %v6424
        %v6426 = vpop.f32.mrf.mxu0
        %6427 = vmatprep.mubr.bf16.mxu0 0
        %6428 = vmatmul.mubr.bf16.gmra.mxu0 %v6379
        %v6429 = vpop.f32.mrf.mxu0
        %v6430 = vadd.f32 %v6349, %v6429
        %v6431 = vpop.f32.mrf.mxu0
        %v6432 = vpop.f32.mrf.mxu0
        %v6433 = vadd.f32 %v6349, %v6432
        %v6434 = vpop.f32.mrf.mxu0
        %6435 = vmatprep.mubr.bf16.mxu0 0
        %6436 = vmatmul.mubr.bf16.gmra.mxu0 %v6382
        %v6437 = vpop.f32.mrf.mxu0
        %v6438 = vadd.f32 %v6349, %v6437
        %v6439 = vpop.f32.mrf.mxu0
        %v6440 = vpop.f32.mrf.mxu0
        %v6441 = vadd.f32 %v6349, %v6440
        %v6442 = vpop.f32.mrf.mxu0
        %6443 = vmatprep.mubr.bf16.mxu0 0
        %6444 = vmatmul.mubr.bf16.gmra.mxu0 %v6385
        %v6445 = vpop.f32.mrf.mxu0
        %v6446 = vadd.f32 %v6349, %v6445
        %v6447 = vpop.f32.mrf.mxu0
        %v6448 = vpop.f32.mrf.mxu0
        %v6449 = vadd.f32 %v6349, %v6448
        %v6450 = vpop.f32.mrf.mxu0
        %6451 = vdwg.mxu0
        %v6452 = vmin.f32 %v6422, 20.0
        %v6453 = vmin.f32 %v6425, 20.0
        %v6454 = vmin.f32 %v6430, 20.0
        %v6455 = vmin.f32 %v6433, 20.0
        %v6456 = vmin.f32 %v6438, 20.0
        %v6457 = vmin.f32 %v6441, 20.0
        %v6458 = vmin.f32 %v6446, 20.0
        %v6459 = vmin.f32 %v6449, 20.0
        %v6460 = vmul.f32 %v6452, 1.442695
        %v6461 = vpow.pop %v6460
        %v6462 = vmul.f32 %v6453, 1.442695
        %v6463 = vpow.pop %v6462
        %v6464 = vmul.f32 %v6454, 1.442695
        %v6465 = vpow.pop %v6464
        %v6466 = vmul.f32 %v6455, 1.442695
        %v6467 = vpow.pop %v6466
        %v6468 = vmul.f32 %v6456, 1.442695
        %v6469 = vpow.pop %v6468
        %v6470 = vmul.f32 %v6457, 1.442695
        %v6471 = vpow.pop %v6470
        %v6472 = vmul.f32 %v6458, 1.442695
        %v6473 = vpow.pop %v6472
        %v6474 = vmul.f32 %v6459, 1.442695
        %v6475 = vpow.pop %v6474
        %v6476 = vadd.f32 %v6461, 1.0
        %v6477 = vadd.f32 %v6463, 1.0
        %v6478 = vadd.f32 %v6465, 1.0
        %v6479 = vadd.f32 %v6467, 1.0
        %v6480 = vadd.f32 %v6469, 1.0
        %v6481 = vadd.f32 %v6471, 1.0
        %v6482 = vadd.f32 %v6473, 1.0
        %v6483 = vadd.f32 %v6475, 1.0
        %v6484 = vlog2.pop %v6476
        %v6485 = vmul.f32 %v6484, 0.6931472
        %v6486 = vlog2.pop %v6477
        %v6487 = vmul.f32 %v6486, 0.6931472
        %v6488 = vlog2.pop %v6478
        %v6489 = vmul.f32 %v6488, 0.6931472
        %v6490 = vlog2.pop %v6479
        %v6491 = vmul.f32 %v6490, 0.6931472
        %v6492 = vlog2.pop %v6480
        %v6493 = vmul.f32 %v6492, 0.6931472
        %v6494 = vlog2.pop %v6481
        %v6495 = vmul.f32 %v6494, 0.6931472
        %v6496 = vlog2.pop %v6482
        %v6497 = vmul.f32 %v6496, 0.6931472
        %v6498 = vlog2.pop %v6483
        %v6499 = vmul.f32 %v6498, 0.6931472
        %v6500 = vtanh.pop %v6485
        %v6501 = vtanh.pop %v6487
        %v6502 = vtanh.pop %v6489
        %v6503 = vtanh.pop %v6491
        %v6504 = vtanh.pop %v6493
        %v6505 = vtanh.pop %v6495
        %v6506 = vtanh.pop %v6497
        %v6507 = vtanh.pop %v6499
        %v6508 = vmul.f32 %v6422, %v6500
        %v6509 = vmul.f32 %v6425, %v6501
        %v6510 = vmul.f32 %v6430, %v6502
        %v6511 = vmul.f32 %v6433, %v6503
        %v6512 = vmul.f32 %v6438, %v6504
        %v6513 = vmul.f32 %v6441, %v6505
        %v6514 = vmul.f32 %v6446, %v6506
        %v6515 = vmul.f32 %v6449, %v6507
        %v6516 = vmax.f32 %v6508, %v6509
        %v6517 = vmax.f32 %v6510, %v6511
        %v6518 = vmax.f32 %v6512, %v6513
        %v6519 = vmax.f32 %v6514, %v6515
        %6520 = vst.msk [vmem:[#allocation5] sm:$0xff] %vm1618, %v6516
        %6521 = vst.msk [vmem:[#allocation5 + $0x8] sm:$0xff] %vm1618, %v6517
        %6522 = vst.msk [vmem:[#allocation5 + $0x10] sm:$0xff] %vm1618, %v6518
        %6523 = vst.msk [vmem:[#allocation5 + $0x18] sm:$0xff] %vm1618, %v6519
        %v6524 = vld [vmem:[#allocation5] ss:$2 sm:$0xf]
        %s6525 = scalar_lea.vmem [#allocation5], 8
        %v6526 = vld [vmem:[%s6525] ss:$2 sm:$0xf]
        %s6527 = scalar_lea.vmem [#allocation5], 16
        %v6528 = vld [vmem:[%s6527] ss:$2 sm:$0xf]
        %s6529 = scalar_lea.vmem [#allocation5], 24
        %v6530 = vld [vmem:[%s6529] ss:$2 sm:$0xf]
        %s6531 = scalar_lea.vmem [#allocation5], 1
        %v6532 = vld [vmem:[%s6531] ss:$2 sm:$0xf]
        %s6533 = scalar_lea.vmem [#allocation5], 9
        %v6534 = vld [vmem:[%s6533] ss:$2 sm:$0xf]
        %s6535 = scalar_lea.vmem [#allocation5], 17
        %v6536 = vld [vmem:[%s6535] ss:$2 sm:$0xf]
        %s6537 = scalar_lea.vmem [#allocation5], 25
        %v6538 = vld [vmem:[%s6537] ss:$2 sm:$0xf]
        %v6539 = vmax.f32 %v6524, %v6532
        %v6540 = vmax.f32 %v6526, %v6534
        %v6541 = vmax.f32 %v6528, %v6536
        %v6542 = vmax.f32 %v6530, %v6538
        %v6543 = vmax.f32 %v3567, %v3568
        %v6544 = vmax.f32 %v3569, %v3570
        %v6545 = vmax.f32 %v3571, %v3572
        %v6546 = vmax.f32 %v3573, %v3574
        %6547 = vst.msk [vmem:[#allocation5] sm:$0xff] %vm1618, %v6543
        %6548 = vst.msk [vmem:[#allocation5 + $0x8] sm:$0xff] %vm1618, %v6544
        %6549 = vst.msk [vmem:[#allocation5 + $0x10] sm:$0xff] %vm1618, %v6545
        %6550 = vst.msk [vmem:[#allocation5 + $0x18] sm:$0xff] %vm1618, %v6546
        %v6551 = vld [vmem:[#allocation5] ss:$2 sm:$0xf]
        %v6552 = vld [vmem:[%s6525] ss:$2 sm:$0xf]
        %v6553 = vld [vmem:[%s6527] ss:$2 sm:$0xf]
        %v6554 = vld [vmem:[%s6529] ss:$2 sm:$0xf]
        %v6555 = vld [vmem:[%s6531] ss:$2 sm:$0xf]
        %v6556 = vld [vmem:[%s6533] ss:$2 sm:$0xf]
        %v6557 = vld [vmem:[%s6535] ss:$2 sm:$0xf]
        %v6558 = vld [vmem:[%s6537] ss:$2 sm:$0xf]
        %v6559 = vmax.f32 %v6551, %v6555
        %v6560 = vmax.f32 %v6552, %v6556
        %v6561 = vmax.f32 %v6553, %v6557
        %v6562 = vmax.f32 %v6554, %v6558
        %6567 = vrot.lane.b32.xlu0 %v6559, 64
        %v6568 = vpop.permute.xlu0 %6567
        %6569 = vrot.lane.b32.xlu0 %v6560, 64
        %v6570 = vpop.permute.xlu0 %6569
        %6571 = vrot.lane.b32.xlu0 %v6561, 64
        %v6572 = vpop.permute.xlu0 %6571
        %6573 = vrot.lane.b32.xlu0 %v6562, 64
        %v6574 = vpop.permute.xlu0 %6573
        %v6579 = vsel %vm1618, %v6539, %v6568
        %v6580 = vsel %vm1618, %v6540, %v6570
        %v6581 = vsel %vm1618, %v6541, %v6572
        %v6582 = vsel %vm1618, %v6542, %v6574
        %v6583 = vpack.c.bf16 %v6579, %v6579
        %v6584 = vpack.c.bf16 %v6580, %v6580
        %v6585 = vpack.c.bf16 %v6581, %v6581
        %v6586 = vpack.c.bf16 %v6582, %v6582
        %v6591 = vunpack.c.l.b16 %v6583
        %v6592 = vunpack.c.l.b16 %v6584
        %v6593 = vunpack.c.l.b16 %v6585
        %v6594 = vunpack.c.l.b16 %v6586
        %v6595 = vpack.c.b16 %v6591, %v6591
        %v6596 = vpack.c.b16 %v6592, %v6592
        %v6597 = vpack.c.b16 %v6593, %v6593
        %v6598 = vpack.c.b16 %v6594, %v6594
        %v6600 = vshrl.u32 %v6595, 16
        %v6602 = vrot.slane %v6600, 7
        %v6603 = vshll.u32 %v6595, 16
        %v6605 = vor.u32 %v6602, %v6603
        %v6607 = vshrl.u32 %v6596, 16
        %v6609 = vrot.slane %v6607, 7
        %v6610 = vshll.u32 %v6596, 16
        %v6612 = vor.u32 %v6609, %v6610
        %v6614 = vshrl.u32 %v6597, 16
        %v6616 = vrot.slane %v6614, 7
        %v6617 = vshll.u32 %v6597, 16
        %v6619 = vor.u32 %v6616, %v6617
        %v6621 = vshrl.u32 %v6598, 16
        %v6623 = vrot.slane %v6621, 7
        %v6624 = vshll.u32 %v6598, 16
        %v6626 = vor.u32 %v6623, %v6624
        %s6631 = scalar_lea.vmem [#allocation4], 8
        %vm6632 = vcmask 1042432
        %vm6633 = vsmask.f32 2306
        %vm6634 = vmand %vm6632, %vm6633
        %v6635 = vld [vmem:[%s6631] sm:$0x7]
        %v6636 = vsel %vm6634, %v6605, %v6635
        %6637 = vst [vmem:[%s6631] sm:$0x7] %v6636
        %v6638 = vld [vmem:[%s6631 + $0x8] sm:$0x7]
        %v6639 = vsel %vm6634, %v6612, %v6638
        %6640 = vst [vmem:[%s6631 + $0x8] sm:$0x7] %v6639
        %v6641 = vld [vmem:[%s6631 + $0x10] sm:$0x7]
        %v6642 = vsel %vm6634, %v6619, %v6641
        %6643 = vst [vmem:[%s6631 + $0x10] sm:$0x7] %v6642
        %v6644 = vld [vmem:[%s6631 + $0x18] sm:$0x7]
        %v6645 = vsel %vm6634, %v6626, %v6644
        %6646 = vst [vmem:[%s6631 + $0x18] sm:$0x7] %v6645
        %v6647 = vld [vmem:[#allocation4] sm:$0xf]
        %v6648 = vld [vmem:[#allocation4 + $0x8] sm:$0xf]
        %v6649 = vld [vmem:[#allocation4 + $0x10] sm:$0xf]
        %v6650 = vld [vmem:[#allocation4 + $0x18] sm:$0xf]
        %v6651 = vld [vmem:[#allocation4 + $0x4] sm:$0x1]
        %v6652 = vld [vmem:[#allocation4 + $0xc] sm:$0x1]
        %v6653 = vld [vmem:[#allocation4 + $0x14] sm:$0x1]
        %v6654 = vld [vmem:[#allocation4 + $0x1c] sm:$0x1]
        %v6655 = vld [vmem:[#allocation4] sm:$0xe]
        %v6656 = vld [vmem:[#allocation4 + $0x8] sm:$0xe]
        %v6657 = vld [vmem:[#allocation4 + $0x10] sm:$0xe]
        %v6658 = vld [vmem:[#allocation4 + $0x18] sm:$0xe]
        %v6659 = vld [vmem:[%s6631] sm:$0xf]
        %v6660 = vld [vmem:[%s6631 + $0x8] sm:$0xf]
        %v6661 = vld [vmem:[%s6631 + $0x10] sm:$0xf]
        %v6662 = vld [vmem:[%s6631 + $0x18] sm:$0xf]
        %v6663 = vld [vmem:[%s6631 + $0x4] sm:$0x1]
        %v6664 = vld [vmem:[%s6631 + $0xc] sm:$0x1]
        %v6665 = vld [vmem:[%s6631 + $0x14] sm:$0x1]
        %v6666 = vld [vmem:[%s6631 + $0x1c] sm:$0x1]
        %v6667 = vld [vmem:[%s6631] sm:$0xe]
        %v6668 = vld [vmem:[%s6631 + $0x8] sm:$0xe]
        %v6669 = vld [vmem:[%s6631 + $0x10] sm:$0xe]
        %v6670 = vld [vmem:[%s6631 + $0x18] sm:$0xe]
        %s6671 = scalar_lea.vmem [#allocation4], 16
        %v6672 = vld [vmem:[%s6671] sm:$0xf]
        %v6673 = vld [vmem:[%s6671 + $0x8] sm:$0xf]
        %v6674 = vld [vmem:[%s6671 + $0x10] sm:$0xf]
        %v6675 = vld [vmem:[%s6671 + $0x18] sm:$0xf]
        %v6676 = vld [vmem:[%s6671 + $0x4] sm:$0x1]
        %v6677 = vld [vmem:[%s6671 + $0xc] sm:$0x1]
        %v6678 = vld [vmem:[%s6671 + $0x14] sm:$0x1]
        %v6679 = vld [vmem:[%s6671 + $0x1c] sm:$0x1]
        %v6680 = vld [vmem:[%s6671] sm:$0xe]
        %v6681 = vld [vmem:[%s6671 + $0x8] sm:$0xe]
        %v6682 = vld [vmem:[%s6671 + $0x10] sm:$0xe]
        %v6683 = vld [vmem:[%s6671 + $0x18] sm:$0xe]
        %v6692 = vunpack.c.l.b16 %v6647
        %v6693 = vunpack.c.l.b16 %v6651
        %v6694 = vunpack.c.l.b16 %v6648
        %v6695 = vunpack.c.l.b16 %v6652
        %v6696 = vunpack.c.l.b16 %v6649
        %v6697 = vunpack.c.l.b16 %v6653
        %v6698 = vunpack.c.l.b16 %v6650
        %v6699 = vunpack.c.l.b16 %v6654
        %v6700 = vpack.c.b16 %v6693, %v6692
        %v6701 = vpack.c.b16 %v6695, %v6694
        %v6702 = vpack.c.b16 %v6697, %v6696
        %v6703 = vpack.c.b16 %v6699, %v6698
        %v6705 = vshrl.u32 %v6700, 16
        %v6707 = vshll.u32 %v6700, 16
        %v6709 = vrot.slane %v6707, 1
        %v6710 = vor.u32 %v6705, %v6709
        %v6712 = vshrl.u32 %v6701, 16
        %v6714 = vshll.u32 %v6701, 16
        %v6716 = vrot.slane %v6714, 1
        %v6717 = vor.u32 %v6712, %v6716
        %v6719 = vshrl.u32 %v6702, 16
        %v6721 = vshll.u32 %v6702, 16
        %v6723 = vrot.slane %v6721, 1
        %v6724 = vor.u32 %v6719, %v6723
        %v6726 = vshrl.u32 %v6703, 16
        %v6728 = vshll.u32 %v6703, 16
        %v6730 = vrot.slane %v6728, 1
        %v6731 = vor.u32 %v6726, %v6730
        %v6736 = vunpack.c.l.b16 %v6655
        %v6737 = vunpack.c.l.b16 %v6656
        %v6738 = vunpack.c.l.b16 %v6657
        %v6739 = vunpack.c.l.b16 %v6658
        %v6740 = vpack.c.b16 %v6693, %v6736
        %v6741 = vpack.c.b16 %v6695, %v6737
        %v6742 = vpack.c.b16 %v6697, %v6738
        %v6743 = vpack.c.b16 %v6699, %v6739
        %v6744 = vrot.slane %v6740, 1
        %v6745 = vrot.slane %v6741, 1
        %v6746 = vrot.slane %v6742, 1
        %v6747 = vrot.slane %v6743, 1
        %v6756 = vunpack.c.l.b16 %v6659
        %v6757 = vunpack.c.l.b16 %v6663
        %v6758 = vunpack.c.l.b16 %v6660
        %v6759 = vunpack.c.l.b16 %v6664
        %v6760 = vunpack.c.l.b16 %v6661
        %v6761 = vunpack.c.l.b16 %v6665
        %v6762 = vunpack.c.l.b16 %v6662
        %v6763 = vunpack.c.l.b16 %v6666
        %v6764 = vpack.c.b16 %v6757, %v6756
        %v6765 = vpack.c.b16 %v6759, %v6758
        %v6766 = vpack.c.b16 %v6761, %v6760
        %v6767 = vpack.c.b16 %v6763, %v6762
        %v6769 = vshrl.u32 %v6764, 16
        %v6771 = vshll.u32 %v6764, 16
        %v6773 = vrot.slane %v6771, 1
        %v6774 = vor.u32 %v6769, %v6773
        %v6776 = vshrl.u32 %v6765, 16
        %v6778 = vshll.u32 %v6765, 16
        %v6780 = vrot.slane %v6778, 1
        %v6781 = vor.u32 %v6776, %v6780
        %v6783 = vshrl.u32 %v6766, 16
        %v6785 = vshll.u32 %v6766, 16
        %v6787 = vrot.slane %v6785, 1
        %v6788 = vor.u32 %v6783, %v6787
        %v6790 = vshrl.u32 %v6767, 16
        %v6792 = vshll.u32 %v6767, 16
        %v6794 = vrot.slane %v6792, 1
        %v6795 = vor.u32 %v6790, %v6794
        %v6800 = vunpack.c.l.b16 %v6667
        %v6801 = vunpack.c.l.b16 %v6668
        %v6802 = vunpack.c.l.b16 %v6669
        %v6803 = vunpack.c.l.b16 %v6670
        %v6804 = vpack.c.b16 %v6757, %v6800
        %v6805 = vpack.c.b16 %v6759, %v6801
        %v6806 = vpack.c.b16 %v6761, %v6802
        %v6807 = vpack.c.b16 %v6763, %v6803
        %v6808 = vrot.slane %v6804, 1
        %v6809 = vrot.slane %v6805, 1
        %v6810 = vrot.slane %v6806, 1
        %v6811 = vrot.slane %v6807, 1
        %v6820 = vunpack.c.l.b16 %v6672
        %v6821 = vunpack.c.l.b16 %v6676
        %v6822 = vunpack.c.l.b16 %v6673
        %v6823 = vunpack.c.l.b16 %v6677
        %v6824 = vunpack.c.l.b16 %v6674
        %v6825 = vunpack.c.l.b16 %v6678
        %v6826 = vunpack.c.l.b16 %v6675
        %v6827 = vunpack.c.l.b16 %v6679
        %v6828 = vpack.c.b16 %v6821, %v6820
        %v6829 = vpack.c.b16 %v6823, %v6822
        %v6830 = vpack.c.b16 %v6825, %v6824
        %v6831 = vpack.c.b16 %v6827, %v6826
        %v6833 = vshrl.u32 %v6828, 16
        %v6835 = vshll.u32 %v6828, 16
        %v6837 = vrot.slane %v6835, 1
        %v6838 = vor.u32 %v6833, %v6837
        %v6840 = vshrl.u32 %v6829, 16
        %v6842 = vshll.u32 %v6829, 16
        %v6844 = vrot.slane %v6842, 1
        %v6845 = vor.u32 %v6840, %v6844
        %v6847 = vshrl.u32 %v6830, 16
        %v6849 = vshll.u32 %v6830, 16
        %v6851 = vrot.slane %v6849, 1
        %v6852 = vor.u32 %v6847, %v6851
        %v6854 = vshrl.u32 %v6831, 16
        %v6856 = vshll.u32 %v6831, 16
        %v6858 = vrot.slane %v6856, 1
        %v6859 = vor.u32 %v6854, %v6858
        %v6864 = vunpack.c.l.b16 %v6680
        %v6865 = vunpack.c.l.b16 %v6681
        %v6866 = vunpack.c.l.b16 %v6682
        %v6867 = vunpack.c.l.b16 %v6683
        %v6868 = vpack.c.b16 %v6821, %v6864
        %v6869 = vpack.c.b16 %v6823, %v6865
        %v6870 = vpack.c.b16 %v6825, %v6866
        %v6871 = vpack.c.b16 %v6827, %v6867
        %v6872 = vrot.slane %v6868, 1
        %v6873 = vrot.slane %v6869, 1
        %v6874 = vrot.slane %v6870, 1
        %v6875 = vrot.slane %v6871, 1
        %v6876 = vunpack.c.l.b16 %v6710
        %v6877 = vunpack.c.l.b16 %v6744
        %v6878 = vunpack.c.l.b16 %v6774
        %v6879 = vunpack.c.l.b16 %v6808
        %v6880 = vunpack.c.l.b16 %v6838
        %v6881 = vunpack.c.l.b16 %v6872
        %v6882 = vunpack.c.l.b16 %v6717
        %v6883 = vunpack.c.l.b16 %v6745
        %v6884 = vunpack.c.l.b16 %v6781
        %v6885 = vunpack.c.l.b16 %v6809
        %v6886 = vunpack.c.l.b16 %v6845
        %v6887 = vunpack.c.l.b16 %v6873
        %v6888 = vunpack.c.l.b16 %v6724
        %v6889 = vunpack.c.l.b16 %v6746
        %v6890 = vunpack.c.l.b16 %v6788
        %v6891 = vunpack.c.l.b16 %v6810
        %v6892 = vunpack.c.l.b16 %v6852
        %v6893 = vunpack.c.l.b16 %v6874
        %v6894 = vunpack.c.l.b16 %v6731
        %v6895 = vunpack.c.l.b16 %v6747
        %v6896 = vunpack.c.l.b16 %v6795
        %v6897 = vunpack.c.l.b16 %v6811
        %v6898 = vunpack.c.l.b16 %v6859
        %v6899 = vunpack.c.l.b16 %v6875
        %v6900 = vld [vmem:[%s13] sm:$0xf]
        %v6901 = vld [vmem:[%s13 + $0x4] sm:$0xf]
        %v6902 = vld [vmem:[%s13 + $0x8] sm:$0xf]
        %v6903 = vld [vmem:[%s13 + $0xc] sm:$0xf]
        %v6904 = vld [vmem:[%s13 + $0x10] sm:$0xf]
        %v6905 = vld [vmem:[%s13 + $0x14] sm:$0xf]
        %v6906 = vld [vmem:[%s13 + $0x18] sm:$0xf]
        %v6907 = vld [vmem:[%s13 + $0x1c] sm:$0xf]
        %v6908 = vld [vmem:[%s13 + $0x20] sm:$0xf]
        %v6909 = vld [vmem:[%s13 + $0x24] sm:$0xf]
        %v6910 = vld [vmem:[%s13 + $0x28] sm:$0xf]
        %v6911 = vld [vmem:[%s13 + $0x2c] sm:$0xf]
        %v6912 = vld [vmem:[%s13 + $0x30] sm:$0xf]
        %v6913 = vld [vmem:[%s13 + $0x34] sm:$0xf]
        %v6914 = vld [vmem:[%s13 + $0x38] sm:$0xf]
        %v6915 = vld [vmem:[%s13 + $0x3c] sm:$0xf]
        %v6916 = vld [vmem:[%s13 + $0x40] sm:$0xf]
        %v6917 = vld [vmem:[%s13 + $0x44] sm:$0xf]
        %v6918 = vld [vmem:[%s13 + $0x48] sm:$0xf]
        %v6919 = vld [vmem:[%s13 + $0x4c] sm:$0xf]
        %v6920 = vld [vmem:[%s13 + $0x50] sm:$0xf]
        %v6921 = vld [vmem:[%s13 + $0x54] sm:$0xf]
        %v6922 = vld [vmem:[%s13 + $0x58] sm:$0xf]
        %v6923 = vld [vmem:[%s13 + $0x5c] sm:$0xf]
        %v6924 = vld [vmem:[%s13 + $0x60] sm:$0xf]
        %v6925 = vld [vmem:[%s13 + $0x64] sm:$0xf]
        %v6926 = vld [vmem:[%s13 + $0x68] sm:$0xf]
        %v6927 = vld [vmem:[%s13 + $0x6c] sm:$0xf]
        %v6928 = vld [vmem:[%s13 + $0x70] sm:$0xf]
        %v6929 = vld [vmem:[%s13 + $0x74] sm:$0xf]
        %v6930 = vld [vmem:[%s13 + $0x78] sm:$0xf]
        %v6931 = vld [vmem:[%s13 + $0x7c] sm:$0xf]
        %v6932 = vld [vmem:[%s13 + $0x80] sm:$0xf]
        %v6933 = vld [vmem:[%s13 + $0x84] sm:$0xf]
        %v6934 = vld [vmem:[%s13 + $0x88] sm:$0xf]
        %v6935 = vld [vmem:[%s13 + $0x8c] sm:$0xf]
        %v6936 = vld [vmem:[%s13 + $0x90] sm:$0xf]
        %v6937 = vld [vmem:[%s13 + $0x94] sm:$0xf]
        %v6938 = vld [vmem:[%s13 + $0x98] sm:$0xf]
        %v6939 = vld [vmem:[%s13 + $0x9c] sm:$0xf]
        %v6940 = vld [vmem:[%s13 + $0xa0] sm:$0xf]
        %v6941 = vld [vmem:[%s13 + $0xa4] sm:$0xf]
        %v6942 = vld [vmem:[%s13 + $0xa8] sm:$0xf]
        %v6943 = vld [vmem:[%s13 + $0xac] sm:$0xf]
        %v6944 = vld [vmem:[%s13 + $0xb0] sm:$0xf]
        %v6945 = vld [vmem:[%s13 + $0xb4] sm:$0xf]
        %v6946 = vld [vmem:[%s13 + $0xb8] sm:$0xf]
        %v6947 = vld [vmem:[%s13 + $0xbc] sm:$0xf]
        %v6948 = vld [vmem:[%s13 + $0xc0] sm:$0xf]
        %v6949 = vld [vmem:[%s13 + $0xc4] sm:$0xf]
        %v6950 = vld [vmem:[%s13 + $0xc8] sm:$0xf]
        %v6951 = vld [vmem:[%s13 + $0xcc] sm:$0xf]
        %v6952 = vld [vmem:[%s13 + $0xd0] sm:$0xf]
        %v6953 = vld [vmem:[%s13 + $0xd4] sm:$0xf]
        %v6954 = vld [vmem:[%s13 + $0xd8] sm:$0xf]
        %v6955 = vld [vmem:[%s13 + $0xdc] sm:$0xf]
        %v6956 = vld [vmem:[%s13 + $0xe0] sm:$0xf]
        %v6957 = vld [vmem:[%s13 + $0xe4] sm:$0xf]
        %v6958 = vld [vmem:[%s13 + $0xe8] sm:$0xf]
        %v6959 = vld [vmem:[%s13 + $0xec] sm:$0xf]
        %v6960 = vld [vmem:[%s13 + $0xf0] sm:$0xf]
        %v6961 = vld [vmem:[%s13 + $0xf4] sm:$0xf]
        %v6962 = vld [vmem:[%s13 + $0xf8] sm:$0xf]
        %v6963 = vld [vmem:[%s13 + $0xfc] sm:$0xf]
        %v6964 = vld [vmem:[%s13 + $0x100] sm:$0xf]
        %v6965 = vld [vmem:[%s13 + $0x104] sm:$0xf]
        %v6966 = vld [vmem:[%s13 + $0x108] sm:$0xf]
        %v6967 = vld [vmem:[%s13 + $0x10c] sm:$0xf]
        %v6968 = vld [vmem:[%s13 + $0x110] sm:$0xf]
        %v6969 = vld [vmem:[%s13 + $0x114] sm:$0xf]
        %v6970 = vld [vmem:[%s13 + $0x118] sm:$0xf]
        %v6971 = vld [vmem:[%s13 + $0x11c] sm:$0xf]
        %v6972 = vld [vmem:[%s13 + $0x120] sm:$0xf]
        %v6973 = vld [vmem:[%s13 + $0x124] sm:$0xf]
        %v6974 = vld [vmem:[%s13 + $0x128] sm:$0xf]
        %v6975 = vld [vmem:[%s13 + $0x12c] sm:$0xf]
        %v6976 = vld [vmem:[%s13 + $0x130] sm:$0xf]
        %v6977 = vld [vmem:[%s13 + $0x134] sm:$0xf]
        %v6978 = vld [vmem:[%s13 + $0x138] sm:$0xf]
        %v6979 = vld [vmem:[%s13 + $0x13c] sm:$0xf]
        %v6980 = vld [vmem:[%s13 + $0x140] sm:$0xf]
        %v6981 = vld [vmem:[%s13 + $0x144] sm:$0xf]
        %v6982 = vld [vmem:[%s13 + $0x148] sm:$0xf]
        %v6983 = vld [vmem:[%s13 + $0x14c] sm:$0xf]
        %v6984 = vld [vmem:[%s13 + $0x150] sm:$0xf]
        %v6985 = vld [vmem:[%s13 + $0x154] sm:$0xf]
        %v6986 = vld [vmem:[%s13 + $0x158] sm:$0xf]
        %v6987 = vld [vmem:[%s13 + $0x15c] sm:$0xf]
        %v6988 = vld [vmem:[%s13 + $0x160] sm:$0xf]
        %v6989 = vld [vmem:[%s13 + $0x164] sm:$0xf]
        %v6990 = vld [vmem:[%s13 + $0x168] sm:$0xf]
        %v6991 = vld [vmem:[%s13 + $0x16c] sm:$0xf]
        %v6992 = vld [vmem:[%s13 + $0x170] sm:$0xf]
        %v6993 = vld [vmem:[%s13 + $0x174] sm:$0xf]
        %v6994 = vld [vmem:[%s13 + $0x178] sm:$0xf]
        %v6995 = vld [vmem:[%s13 + $0x17c] sm:$0xf]
        %v6996 = vld [vmem:[%s13 + $0x180] sm:$0xf]
        %v6997 = vld [vmem:[%s13 + $0x184] sm:$0xf]
        %v6998 = vld [vmem:[%s13 + $0x188] sm:$0xf]
        %v6999 = vld [vmem:[%s13 + $0x18c] sm:$0xf]
        %v7000 = vld [vmem:[%s13 + $0x190] sm:$0xf]
        %v7001 = vld [vmem:[%s13 + $0x194] sm:$0xf]
        %v7002 = vld [vmem:[%s13 + $0x198] sm:$0xf]
        %v7003 = vld [vmem:[%s13 + $0x19c] sm:$0xf]
        %v7004 = vld [vmem:[%s13 + $0x1a0] sm:$0xf]
        %v7005 = vld [vmem:[%s13 + $0x1a4] sm:$0xf]
        %v7006 = vld [vmem:[%s13 + $0x1a8] sm:$0xf]
        %v7007 = vld [vmem:[%s13 + $0x1ac] sm:$0xf]
        %v7008 = vld [vmem:[%s13 + $0x1b0] sm:$0xf]
        %v7009 = vld [vmem:[%s13 + $0x1b4] sm:$0xf]
        %v7010 = vld [vmem:[%s13 + $0x1b8] sm:$0xf]
        %v7011 = vld [vmem:[%s13 + $0x1bc] sm:$0xf]
        %v7012 = vld [vmem:[%s13 + $0x1c0] sm:$0xf]
        %v7013 = vld [vmem:[%s13 + $0x1c4] sm:$0xf]
        %v7014 = vld [vmem:[%s13 + $0x1c8] sm:$0xf]
        %v7015 = vld [vmem:[%s13 + $0x1cc] sm:$0xf]
        %v7016 = vld [vmem:[%s13 + $0x1d0] sm:$0xf]
        %v7017 = vld [vmem:[%s13 + $0x1d4] sm:$0xf]
        %v7018 = vld [vmem:[%s13 + $0x1d8] sm:$0xf]
        %v7019 = vld [vmem:[%s13 + $0x1dc] sm:$0xf]
        %v7020 = vld [vmem:[%s13 + $0x1e0] sm:$0xf]
        %v7021 = vld [vmem:[%s13 + $0x1e4] sm:$0xf]
        %v7022 = vld [vmem:[%s13 + $0x1e8] sm:$0xf]
        %v7023 = vld [vmem:[%s13 + $0x1ec] sm:$0xf]
        %v7024 = vld [vmem:[%s13 + $0x1f0] sm:$0xf]
        %v7025 = vld [vmem:[%s13 + $0x1f4] sm:$0xf]
        %v7026 = vld [vmem:[%s13 + $0x1f8] sm:$0xf]
        %v7027 = vld [vmem:[%s13 + $0x1fc] sm:$0xf]
        %v7028 = vld [vmem:[%s13 + $0x200] sm:$0xf]
        %v7029 = vld [vmem:[%s13 + $0x204] sm:$0xf]
        %v7030 = vld [vmem:[%s13 + $0x208] sm:$0xf]
        %v7031 = vld [vmem:[%s13 + $0x20c] sm:$0xf]
        %v7032 = vld [vmem:[%s13 + $0x210] sm:$0xf]
        %v7033 = vld [vmem:[%s13 + $0x214] sm:$0xf]
        %v7034 = vld [vmem:[%s13 + $0x218] sm:$0xf]
        %v7035 = vld [vmem:[%s13 + $0x21c] sm:$0xf]
        %v7036 = vld [vmem:[%s13 + $0x220] sm:$0xf]
        %v7037 = vld [vmem:[%s13 + $0x224] sm:$0xf]
        %v7038 = vld [vmem:[%s13 + $0x228] sm:$0xf]
        %v7039 = vld [vmem:[%s13 + $0x22c] sm:$0xf]
        %v7040 = vld [vmem:[%s13 + $0x230] sm:$0xf]
        %v7041 = vld [vmem:[%s13 + $0x234] sm:$0xf]
        %v7042 = vld [vmem:[%s13 + $0x238] sm:$0xf]
        %v7043 = vld [vmem:[%s13 + $0x23c] sm:$0xf]
        %v7044 = vld [vmem:[%s14] sm:$0x1]
        %v7046 = vlaneseq
        %v7047 = vshrl.u32 %v7046, 7
        %v7048 = vsub.s32 0, %v7047
        %v7049 = vrot.slane %v7044, %v7048
        %v7051 = vpack.c.b16 %v6694, %v6692
        %v7052 = vpack.c.b16 %v6882, %v6876
        %v7053 = vpack.c.b16 %v6883, %v6877
        %v7054 = vpack.c.b16 %v6758, %v6756
        %v7055 = vpack.c.b16 %v6884, %v6878
        %v7056 = vpack.c.b16 %v6885, %v6879
        %v7057 = vpack.c.b16 %v6822, %v6820
        %v7058 = vpack.c.b16 %v6886, %v6880
        %v7059 = vpack.c.b16 %v6887, %v6881
        %v7060 = vpack.c.b16 %v6698, %v6696
        %v7061 = vpack.c.b16 %v6894, %v6888
        %v7062 = vpack.c.b16 %v6895, %v6889
        %v7063 = vpack.c.b16 %v6762, %v6760
        %v7064 = vpack.c.b16 %v6896, %v6890
        %v7065 = vpack.c.b16 %v6897, %v6891
        %v7066 = vpack.c.b16 %v6826, %v6824
        %v7067 = vpack.c.b16 %v6898, %v6892
        %v7068 = vpack.c.b16 %v6899, %v6893
        %v7231 = vunpack.c.l.b16 %v6900
        %v7232 = vunpack.c.l.b16 %v6901
        %v7233 = vunpack.c.l.b16 %v6902
        %v7234 = vunpack.c.l.b16 %v6903
        %v7235 = vunpack.c.l.b16 %v6904
        %v7236 = vunpack.c.l.b16 %v6905
        %v7237 = vunpack.c.l.b16 %v6906
        %v7238 = vunpack.c.l.b16 %v6907
        %v7239 = vunpack.c.l.b16 %v6908
        %v7240 = vunpack.c.l.b16 %v6909
        %v7241 = vunpack.c.l.b16 %v6910
        %v7242 = vunpack.c.l.b16 %v6911
        %v7243 = vunpack.c.l.b16 %v6912
        %v7244 = vunpack.c.l.b16 %v6913
        %v7245 = vunpack.c.l.b16 %v6914
        %v7246 = vunpack.c.l.b16 %v6915
        %v7247 = vunpack.c.l.b16 %v6916
        %v7248 = vunpack.c.l.b16 %v6917
        %v7249 = vunpack.c.l.b16 %v6918
        %v7250 = vunpack.c.l.b16 %v6919
        %v7251 = vunpack.c.l.b16 %v6920
        %v7252 = vunpack.c.l.b16 %v6921
        %v7253 = vunpack.c.l.b16 %v6922
        %v7254 = vunpack.c.l.b16 %v6923
        %v7255 = vunpack.c.l.b16 %v6924
        %v7256 = vunpack.c.l.b16 %v6925
        %v7257 = vunpack.c.l.b16 %v6926
        %v7258 = vunpack.c.l.b16 %v6927
        %v7259 = vunpack.c.l.b16 %v6928
        %v7260 = vunpack.c.l.b16 %v6929
        %v7261 = vunpack.c.l.b16 %v6930
        %v7262 = vunpack.c.l.b16 %v6931
        %v7263 = vunpack.c.l.b16 %v6932
        %v7264 = vunpack.c.l.b16 %v6933
        %v7265 = vunpack.c.l.b16 %v6934
        %v7266 = vunpack.c.l.b16 %v6935
        %v7267 = vunpack.c.l.b16 %v6936
        %v7268 = vunpack.c.l.b16 %v6937
        %v7269 = vunpack.c.l.b16 %v6938
        %v7270 = vunpack.c.l.b16 %v6939
        %v7271 = vunpack.c.l.b16 %v6940
        %v7272 = vunpack.c.l.b16 %v6941
        %v7273 = vunpack.c.l.b16 %v6942
        %v7274 = vunpack.c.l.b16 %v6943
        %v7275 = vunpack.c.l.b16 %v6944
        %v7276 = vunpack.c.l.b16 %v6945
        %v7277 = vunpack.c.l.b16 %v6946
        %v7278 = vunpack.c.l.b16 %v6947
        %v7279 = vunpack.c.l.b16 %v6948
        %v7280 = vunpack.c.l.b16 %v6949
        %v7281 = vunpack.c.l.b16 %v6950
        %v7282 = vunpack.c.l.b16 %v6951
        %v7283 = vunpack.c.l.b16 %v6952
        %v7284 = vunpack.c.l.b16 %v6953
        %v7285 = vunpack.c.l.b16 %v6954
        %v7286 = vunpack.c.l.b16 %v6955
        %v7287 = vunpack.c.l.b16 %v6956
        %v7288 = vunpack.c.l.b16 %v6957
        %v7289 = vunpack.c.l.b16 %v6958
        %v7290 = vunpack.c.l.b16 %v6959
        %v7291 = vunpack.c.l.b16 %v6960
        %v7292 = vunpack.c.l.b16 %v6961
        %v7293 = vunpack.c.l.b16 %v6962
        %v7294 = vunpack.c.l.b16 %v6963
        %v7295 = vunpack.c.l.b16 %v6964
        %v7296 = vunpack.c.l.b16 %v6965
        %v7297 = vunpack.c.l.b16 %v6966
        %v7298 = vunpack.c.l.b16 %v6967
        %v7299 = vunpack.c.l.b16 %v6968
        %v7300 = vunpack.c.l.b16 %v6969
        %v7301 = vunpack.c.l.b16 %v6970
        %v7302 = vunpack.c.l.b16 %v6971
        %v7303 = vunpack.c.l.b16 %v6972
        %v7304 = vunpack.c.l.b16 %v6973
        %v7305 = vunpack.c.l.b16 %v6974
        %v7306 = vunpack.c.l.b16 %v6975
        %v7307 = vunpack.c.l.b16 %v6976
        %v7308 = vunpack.c.l.b16 %v6977
        %v7309 = vunpack.c.l.b16 %v6978
        %v7310 = vunpack.c.l.b16 %v6979
        %v7311 = vunpack.c.l.b16 %v6980
        %v7312 = vunpack.c.l.b16 %v6981
        %v7313 = vunpack.c.l.b16 %v6982
        %v7314 = vunpack.c.l.b16 %v6983
        %v7315 = vunpack.c.l.b16 %v6984
        %v7316 = vunpack.c.l.b16 %v6985
        %v7317 = vunpack.c.l.b16 %v6986
        %v7318 = vunpack.c.l.b16 %v6987
        %v7319 = vunpack.c.l.b16 %v6988
        %v7320 = vunpack.c.l.b16 %v6989
        %v7321 = vunpack.c.l.b16 %v6990
        %v7322 = vunpack.c.l.b16 %v6991
        %v7323 = vunpack.c.l.b16 %v6992
        %v7324 = vunpack.c.l.b16 %v6993
        %v7325 = vunpack.c.l.b16 %v6994
        %v7326 = vunpack.c.l.b16 %v6995
        %v7327 = vunpack.c.l.b16 %v6996
        %v7328 = vunpack.c.l.b16 %v6997
        %v7329 = vunpack.c.l.b16 %v6998
        %v7330 = vunpack.c.l.b16 %v6999
        %v7331 = vunpack.c.l.b16 %v7000
        %v7332 = vunpack.c.l.b16 %v7001
        %v7333 = vunpack.c.l.b16 %v7002
        %v7334 = vunpack.c.l.b16 %v7003
        %v7335 = vunpack.c.l.b16 %v7004
        %v7336 = vunpack.c.l.b16 %v7005
        %v7337 = vunpack.c.l.b16 %v7006
        %v7338 = vunpack.c.l.b16 %v7007
        %v7339 = vunpack.c.l.b16 %v7008
        %v7340 = vunpack.c.l.b16 %v7009
        %v7341 = vunpack.c.l.b16 %v7010
        %v7342 = vunpack.c.l.b16 %v7011
        %v7343 = vunpack.c.l.b16 %v7012
        %v7344 = vunpack.c.l.b16 %v7013
        %v7345 = vunpack.c.l.b16 %v7014
        %v7346 = vunpack.c.l.b16 %v7015
        %v7347 = vunpack.c.l.b16 %v7016
        %v7348 = vunpack.c.l.b16 %v7017
        %v7349 = vunpack.c.l.b16 %v7018
        %v7350 = vunpack.c.l.b16 %v7019
        %v7351 = vunpack.c.l.b16 %v7020
        %v7352 = vunpack.c.l.b16 %v7021
        %v7353 = vunpack.c.l.b16 %v7022
        %v7354 = vunpack.c.l.b16 %v7023
        %v7355 = vunpack.c.l.b16 %v7024
        %v7356 = vunpack.c.l.b16 %v7025
        %v7357 = vunpack.c.l.b16 %v7026
        %v7358 = vunpack.c.l.b16 %v7027
        %v7359 = vunpack.c.l.b16 %v7028
        %v7360 = vunpack.c.l.b16 %v7029
        %v7361 = vunpack.c.l.b16 %v7030
        %v7362 = vunpack.c.l.b16 %v7031
        %v7363 = vunpack.c.l.b16 %v7032
        %v7364 = vunpack.c.l.b16 %v7033
        %v7365 = vunpack.c.l.b16 %v7034
        %v7366 = vunpack.c.l.b16 %v7035
        %v7367 = vunpack.c.l.b16 %v7036
        %v7368 = vunpack.c.l.b16 %v7037
        %v7369 = vunpack.c.l.b16 %v7038
        %v7370 = vunpack.c.l.b16 %v7039
        %v7371 = vunpack.c.l.b16 %v7040
        %v7372 = vunpack.c.l.b16 %v7041
        %v7373 = vunpack.c.l.b16 %v7042
        %v7374 = vunpack.c.l.b16 %v7043
        %v7375 = vpack.c.b16 %v7232, %v7231
        %v7376 = vpack.c.b16 %v7234, %v7233
        %v7377 = vpack.c.b16 %v7236, %v7235
        %v7378 = vpack.c.b16 %v7238, %v7237
        %v7379 = vpack.c.b16 %v7240, %v7239
        %v7380 = vpack.c.b16 %v7242, %v7241
        %v7381 = vpack.c.b16 %v7244, %v7243
        %v7382 = vpack.c.b16 %v7246, %v7245
        %v7383 = vpack.c.b16 %v7248, %v7247
        %v7384 = vpack.c.b16 %v7250, %v7249
        %v7385 = vpack.c.b16 %v7252, %v7251
        %v7386 = vpack.c.b16 %v7254, %v7253
        %v7387 = vpack.c.b16 %v7256, %v7255
        %v7388 = vpack.c.b16 %v7258, %v7257
        %v7389 = vpack.c.b16 %v7260, %v7259
        %v7390 = vpack.c.b16 %v7262, %v7261
        %v7391 = vpack.c.b16 %v7264, %v7263
        %v7392 = vpack.c.b16 %v7266, %v7265
        %v7393 = vpack.c.b16 %v7268, %v7267
        %v7394 = vpack.c.b16 %v7270, %v7269
        %v7395 = vpack.c.b16 %v7272, %v7271
        %v7396 = vpack.c.b16 %v7274, %v7273
        %v7397 = vpack.c.b16 %v7276, %v7275
        %v7398 = vpack.c.b16 %v7278, %v7277
        %v7399 = vpack.c.b16 %v7280, %v7279
        %v7400 = vpack.c.b16 %v7282, %v7281
        %v7401 = vpack.c.b16 %v7284, %v7283
        %v7402 = vpack.c.b16 %v7286, %v7285
        %v7403 = vpack.c.b16 %v7288, %v7287
        %v7404 = vpack.c.b16 %v7290, %v7289
        %v7405 = vpack.c.b16 %v7292, %v7291
        %v7406 = vpack.c.b16 %v7294, %v7293
        %v7407 = vpack.c.b16 %v7296, %v7295
        %v7408 = vpack.c.b16 %v7298, %v7297
        %v7409 = vpack.c.b16 %v7300, %v7299
        %v7410 = vpack.c.b16 %v7302, %v7301
        %v7411 = vpack.c.b16 %v7304, %v7303
        %v7412 = vpack.c.b16 %v7306, %v7305
        %v7413 = vpack.c.b16 %v7308, %v7307
        %v7414 = vpack.c.b16 %v7310, %v7309
        %v7415 = vpack.c.b16 %v7312, %v7311
        %v7416 = vpack.c.b16 %v7314, %v7313
        %v7417 = vpack.c.b16 %v7316, %v7315
        %v7418 = vpack.c.b16 %v7318, %v7317
        %v7419 = vpack.c.b16 %v7320, %v7319
        %v7420 = vpack.c.b16 %v7322, %v7321
        %v7421 = vpack.c.b16 %v7324, %v7323
        %v7422 = vpack.c.b16 %v7326, %v7325
        %v7423 = vpack.c.b16 %v7328, %v7327
        %v7424 = vpack.c.b16 %v7330, %v7329
        %v7425 = vpack.c.b16 %v7332, %v7331
        %v7426 = vpack.c.b16 %v7334, %v7333
        %v7427 = vpack.c.b16 %v7336, %v7335
        %v7428 = vpack.c.b16 %v7338, %v7337
        %v7429 = vpack.c.b16 %v7340, %v7339
        %v7430 = vpack.c.b16 %v7342, %v7341
        %v7431 = vpack.c.b16 %v7344, %v7343
        %v7432 = vpack.c.b16 %v7346, %v7345
        %v7433 = vpack.c.b16 %v7348, %v7347
        %v7434 = vpack.c.b16 %v7350, %v7349
        %v7435 = vpack.c.b16 %v7352, %v7351
        %v7436 = vpack.c.b16 %v7354, %v7353
        %v7437 = vpack.c.b16 %v7356, %v7355
        %v7438 = vpack.c.b16 %v7358, %v7357
        %v7439 = vpack.c.b16 %v7360, %v7359
        %v7440 = vpack.c.b16 %v7362, %v7361
        %v7441 = vpack.c.b16 %v7364, %v7363
        %v7442 = vpack.c.b16 %v7366, %v7365
        %v7443 = vpack.c.b16 %v7368, %v7367
        %v7444 = vpack.c.b16 %v7370, %v7369
        %v7445 = vpack.c.b16 %v7372, %v7371
        %v7446 = vpack.c.b16 %v7374, %v7373
        %7519 = vmatprep.subr.bf16.mxu0 0
        %7520 = vmatpush1.bf16.msra.mxu0 %v7382
        %7521 = vmatprep.subr.bf16.mxu0 0
        %7522 = vmatpush1.bf16.msra.mxu0 %v7381
        %7523 = vmatprep.subr.bf16.mxu0 0
        %7524 = vmatpush1.bf16.msra.mxu0 %v7380
        %7525 = vmatprep.subr.bf16.mxu0 0
        %7526 = vmatpush1.bf16.msra.mxu0 %v7379
        %7527 = vmatprep.subr.bf16.mxu0 0
        %7528 = vmatpush1.bf16.msra.mxu0 %v7378
        %7529 = vmatprep.subr.bf16.mxu0 0
        %7530 = vmatpush1.bf16.msra.mxu0 %v7377
        %7531 = vmatprep.subr.bf16.mxu0 0
        %7532 = vmatpush1.bf16.msra.mxu0 %v7376
        %7533 = vmatprep.subr.bf16.mxu0 0
        %7534 = vmatpush1.bf16.msra.mxu0 %v7375
        %7535 = vmatprep.subr.bf16.mxu0 0
        %7536 = vmatpush2.bf16.msra.mxu0 %v7390
        %7537 = vmatprep.subr.bf16.mxu0 0
        %7538 = vmatpush2.bf16.msra.mxu0 %v7389
        %7539 = vmatprep.subr.bf16.mxu0 0
        %7540 = vmatpush2.bf16.msra.mxu0 %v7388
        %7541 = vmatprep.subr.bf16.mxu0 0
        %7542 = vmatpush2.bf16.msra.mxu0 %v7387
        %7543 = vmatprep.subr.bf16.mxu0 0
        %7544 = vmatpush2.bf16.msra.mxu0 %v7386
        %7545 = vmatprep.subr.bf16.mxu0 0
        %7546 = vmatpush2.bf16.msra.mxu0 %v7385
        %7547 = vmatprep.subr.bf16.mxu0 0
        %7548 = vmatpush2.bf16.msra.mxu0 %v7384
        %7549 = vmatprep.subr.bf16.mxu0 0
        %7550 = vmatpush2.bf16.msra.mxu0 %v7383
        %7551 = vmatprep.mubr.bf16.mxu0 %v7052
        %7552 = vmatmul.mubr.bf16.gmra.mxu0 %v7051
        %v7553 = vpop.f32.mrf.mxu0
        %v7554 = vadd.f32 %v7049, %v7553
        %v7555 = vpop.f32.mrf.mxu0
        %v7556 = vpop.f32.mrf.mxu0
        %v7557 = vadd.f32 %v7049, %v7556
        %v7558 = vpop.f32.mrf.mxu0
        %7559 = vmatprep.mubr.bf16.mxu0 %v7061
        %7560 = vmatmul.mubr.bf16.gmra.mxu0 %v7060
        %v7561 = vpop.f32.mrf.mxu0
        %v7562 = vadd.f32 %v7049, %v7561
        %v7563 = vpop.f32.mrf.mxu0
        %v7564 = vpop.f32.mrf.mxu0
        %v7565 = vadd.f32 %v7049, %v7564
        %v7566 = vpop.f32.mrf.mxu0
        %7567 = vdwg.mxu0
        %7568 = vmatprep.subr.bf16.mxu0 0
        %7569 = vmatpush1.bf16.msra.mxu0 %v7398
        %7570 = vmatprep.subr.bf16.mxu0 0
        %7571 = vmatpush1.bf16.msra.mxu0 %v7397
        %7572 = vmatprep.subr.bf16.mxu0 0
        %7573 = vmatpush1.bf16.msra.mxu0 %v7396
        %7574 = vmatprep.subr.bf16.mxu0 0
        %7575 = vmatpush1.bf16.msra.mxu0 %v7395
        %7576 = vmatprep.subr.bf16.mxu0 0
        %7577 = vmatpush1.bf16.msra.mxu0 %v7394
        %7578 = vmatprep.subr.bf16.mxu0 0
        %7579 = vmatpush1.bf16.msra.mxu0 %v7393
        %7580 = vmatprep.subr.bf16.mxu0 0
        %7581 = vmatpush1.bf16.msra.mxu0 %v7392
        %7582 = vmatprep.subr.bf16.mxu0 0
        %7583 = vmatpush1.bf16.msra.mxu0 %v7391
        %7584 = vmatprep.subr.bf16.mxu0 0
        %7585 = vmatpush2.bf16.msra.mxu0 %v7406
        %7586 = vmatprep.subr.bf16.mxu0 0
        %7587 = vmatpush2.bf16.msra.mxu0 %v7405
        %7588 = vmatprep.subr.bf16.mxu0 0
        %7589 = vmatpush2.bf16.msra.mxu0 %v7404
        %7590 = vmatprep.subr.bf16.mxu0 0
        %7591 = vmatpush2.bf16.msra.mxu0 %v7403
        %7592 = vmatprep.subr.bf16.mxu0 0
        %7593 = vmatpush2.bf16.msra.mxu0 %v7402
        %7594 = vmatprep.subr.bf16.mxu0 0
        %7595 = vmatpush2.bf16.msra.mxu0 %v7401
        %7596 = vmatprep.subr.bf16.mxu0 0
        %7597 = vmatpush2.bf16.msra.mxu0 %v7400
        %7598 = vmatprep.subr.bf16.mxu0 0
        %7599 = vmatpush2.bf16.msra.mxu0 %v7399
        %7600 = vmatprep.mubr.bf16.mxu0 %v7054
        %7601 = vmatmul.mubr.bf16.gmra.mxu0 %v7053
        %v7602 = vpop.f32.mrf.mxu0
        %v7603 = vadd.f32 %v7554, %v7602
        %v7604 = vpop.f32.mrf.mxu0
        %v7605 = vpop.f32.mrf.mxu0
        %v7606 = vadd.f32 %v7557, %v7605
        %v7607 = vpop.f32.mrf.mxu0
        %7608 = vmatprep.mubr.bf16.mxu0 %v7063
        %7609 = vmatmul.mubr.bf16.gmra.mxu0 %v7062
        %v7610 = vpop.f32.mrf.mxu0
        %v7611 = vadd.f32 %v7562, %v7610
        %v7612 = vpop.f32.mrf.mxu0
        %v7613 = vpop.f32.mrf.mxu0
        %v7614 = vadd.f32 %v7565, %v7613
        %v7615 = vpop.f32.mrf.mxu0
        %7616 = vdwg.mxu0
        %7617 = vmatprep.subr.bf16.mxu0 0
        %7618 = vmatpush1.bf16.msra.mxu0 %v7414
        %7619 = vmatprep.subr.bf16.mxu0 0
        %7620 = vmatpush1.bf16.msra.mxu0 %v7413
        %7621 = vmatprep.subr.bf16.mxu0 0
        %7622 = vmatpush1.bf16.msra.mxu0 %v7412
        %7623 = vmatprep.subr.bf16.mxu0 0
        %7624 = vmatpush1.bf16.msra.mxu0 %v7411
        %7625 = vmatprep.subr.bf16.mxu0 0
        %7626 = vmatpush1.bf16.msra.mxu0 %v7410
        %7627 = vmatprep.subr.bf16.mxu0 0
        %7628 = vmatpush1.bf16.msra.mxu0 %v7409
        %7629 = vmatprep.subr.bf16.mxu0 0
        %7630 = vmatpush1.bf16.msra.mxu0 %v7408
        %7631 = vmatprep.subr.bf16.mxu0 0
        %7632 = vmatpush1.bf16.msra.mxu0 %v7407
        %7633 = vmatprep.subr.bf16.mxu0 0
        %7634 = vmatpush2.bf16.msra.mxu0 %v7422
        %7635 = vmatprep.subr.bf16.mxu0 0
        %7636 = vmatpush2.bf16.msra.mxu0 %v7421
        %7637 = vmatprep.subr.bf16.mxu0 0
        %7638 = vmatpush2.bf16.msra.mxu0 %v7420
        %7639 = vmatprep.subr.bf16.mxu0 0
        %7640 = vmatpush2.bf16.msra.mxu0 %v7419
        %7641 = vmatprep.subr.bf16.mxu0 0
        %7642 = vmatpush2.bf16.msra.mxu0 %v7418
        %7643 = vmatprep.subr.bf16.mxu0 0
        %7644 = vmatpush2.bf16.msra.mxu0 %v7417
        %7645 = vmatprep.subr.bf16.mxu0 0
        %7646 = vmatpush2.bf16.msra.mxu0 %v7416
        %7647 = vmatprep.subr.bf16.mxu0 0
        %7648 = vmatpush2.bf16.msra.mxu0 %v7415
        %7649 = vmatprep.mubr.bf16.mxu0 %v7056
        %7650 = vmatmul.mubr.bf16.gmra.mxu0 %v7055
        %v7651 = vpop.f32.mrf.mxu0
        %v7652 = vadd.f32 %v7603, %v7651
        %v7653 = vpop.f32.mrf.mxu0
        %v7654 = vpop.f32.mrf.mxu0
        %v7655 = vadd.f32 %v7606, %v7654
        %v7656 = vpop.f32.mrf.mxu0
        %7657 = vmatprep.mubr.bf16.mxu0 %v7065
        %7658 = vmatmul.mubr.bf16.gmra.mxu0 %v7064
        %v7659 = vpop.f32.mrf.mxu0
        %v7660 = vadd.f32 %v7611, %v7659
        %v7661 = vpop.f32.mrf.mxu0
        %v7662 = vpop.f32.mrf.mxu0
        %v7663 = vadd.f32 %v7614, %v7662
        %v7664 = vpop.f32.mrf.mxu0
        %7665 = vdwg.mxu0
        %7666 = vmatprep.subr.bf16.mxu0 0
        %7667 = vmatpush1.bf16.msra.mxu0 %v7430
        %7668 = vmatprep.subr.bf16.mxu0 0
        %7669 = vmatpush1.bf16.msra.mxu0 %v7429
        %7670 = vmatprep.subr.bf16.mxu0 0
        %7671 = vmatpush1.bf16.msra.mxu0 %v7428
        %7672 = vmatprep.subr.bf16.mxu0 0
        %7673 = vmatpush1.bf16.msra.mxu0 %v7427
        %7674 = vmatprep.subr.bf16.mxu0 0
        %7675 = vmatpush1.bf16.msra.mxu0 %v7426
        %7676 = vmatprep.subr.bf16.mxu0 0
        %7677 = vmatpush1.bf16.msra.mxu0 %v7425
        %7678 = vmatprep.subr.bf16.mxu0 0
        %7679 = vmatpush1.bf16.msra.mxu0 %v7424
        %7680 = vmatprep.subr.bf16.mxu0 0
        %7681 = vmatpush1.bf16.msra.mxu0 %v7423
        %7682 = vmatprep.subr.bf16.mxu0 0
        %7683 = vmatpush2.bf16.msra.mxu0 %v7438
        %7684 = vmatprep.subr.bf16.mxu0 0
        %7685 = vmatpush2.bf16.msra.mxu0 %v7437
        %7686 = vmatprep.subr.bf16.mxu0 0
        %7687 = vmatpush2.bf16.msra.mxu0 %v7436
        %7688 = vmatprep.subr.bf16.mxu0 0
        %7689 = vmatpush2.bf16.msra.mxu0 %v7435
        %7690 = vmatprep.subr.bf16.mxu0 0
        %7691 = vmatpush2.bf16.msra.mxu0 %v7434
        %7692 = vmatprep.subr.bf16.mxu0 0
        %7693 = vmatpush2.bf16.msra.mxu0 %v7433
        %7694 = vmatprep.subr.bf16.mxu0 0
        %7695 = vmatpush2.bf16.msra.mxu0 %v7432
        %7696 = vmatprep.subr.bf16.mxu0 0
        %7697 = vmatpush2.bf16.msra.mxu0 %v7431
        %7698 = vmatprep.mubr.bf16.mxu0 %v7058
        %7699 = vmatmul.mubr.bf16.gmra.mxu0 %v7057
        %v7700 = vpop.f32.mrf.mxu0
        %v7701 = vadd.f32 %v7652, %v7700
        %v7702 = vpop.f32.mrf.mxu0
        %v7703 = vpop.f32.mrf.mxu0
        %v7704 = vadd.f32 %v7655, %v7703
        %v7705 = vpop.f32.mrf.mxu0
        %7706 = vmatprep.mubr.bf16.mxu0 %v7067
        %7707 = vmatmul.mubr.bf16.gmra.mxu0 %v7066
        %v7708 = vpop.f32.mrf.mxu0
        %v7709 = vadd.f32 %v7660, %v7708
        %v7710 = vpop.f32.mrf.mxu0
        %v7711 = vpop.f32.mrf.mxu0
        %v7712 = vadd.f32 %v7663, %v7711
        %v7713 = vpop.f32.mrf.mxu0
        %7714 = vdwg.mxu0
        %7715 = vmatprep.subr.bf16.mxu0 0
        %7716 = vmatpush1.bf16.msra.mxu0 %v7446
        %7717 = vmatprep.subr.bf16.mxu0 0
        %7718 = vmatpush1.bf16.msra.mxu0 %v7445
        %7719 = vmatprep.subr.bf16.mxu0 0
        %7720 = vmatpush1.bf16.msra.mxu0 %v7444
        %7721 = vmatprep.subr.bf16.mxu0 0
        %7722 = vmatpush1.bf16.msra.mxu0 %v7443
        %7723 = vmatprep.subr.bf16.mxu0 0
        %7724 = vmatpush1.bf16.msra.mxu0 %v7442
        %7725 = vmatprep.subr.bf16.mxu0 0
        %7726 = vmatpush1.bf16.msra.mxu0 %v7441
        %7727 = vmatprep.subr.bf16.mxu0 0
        %7728 = vmatpush1.bf16.msra.mxu0 %v7440
        %7729 = vmatprep.subr.bf16.mxu0 0
        %7730 = vmatpush1.bf16.msra.mxu0 %v7439
        %7731 = vmatprep.subr.bf16.mxu0 0
        %7732 = vmatpush2.bf16.msra.mxu0 0
        %7733 = vmatprep.subr.bf16.mxu0 0
        %7734 = vmatpush2.bf16.msra.mxu0 0
        %7735 = vmatprep.subr.bf16.mxu0 0
        %7736 = vmatpush2.bf16.msra.mxu0 0
        %7737 = vmatprep.subr.bf16.mxu0 0
        %7738 = vmatpush2.bf16.msra.mxu0 0
        %7739 = vmatprep.subr.bf16.mxu0 0
        %7740 = vmatpush2.bf16.msra.mxu0 0
        %7741 = vmatprep.subr.bf16.mxu0 0
        %7742 = vmatpush2.bf16.msra.mxu0 0
        %7743 = vmatprep.subr.bf16.mxu0 0
        %7744 = vmatpush2.bf16.msra.mxu0 0
        %7745 = vmatprep.subr.bf16.mxu0 0
        %7746 = vmatpush2.bf16.msra.mxu0 0
        %7747 = vmatprep.mubr.bf16.mxu0 0
        %7748 = vmatmul.mubr.bf16.gmra.mxu0 %v7059
        %v7749 = vpop.f32.mrf.mxu0
        %v7750 = vadd.f32 %v7701, %v7749
        %v7751 = vpop.f32.mrf.mxu0
        %v7752 = vpop.f32.mrf.mxu0
        %v7753 = vadd.f32 %v7704, %v7752
        %v7754 = vpop.f32.mrf.mxu0
        %7755 = vmatprep.mubr.bf16.mxu0 0
        %7756 = vmatmul.mubr.bf16.gmra.mxu0 %v7068
        %v7757 = vpop.f32.mrf.mxu0
        %v7758 = vadd.f32 %v7709, %v7757
        %v7759 = vpop.f32.mrf.mxu0
        %v7760 = vpop.f32.mrf.mxu0
        %v7761 = vadd.f32 %v7712, %v7760
        %v7762 = vpop.f32.mrf.mxu0
        %7763 = vdwg.mxu0
        %v7764 = vmin.f32 %v7750, 20.0
        %v7765 = vmin.f32 %v7753, 20.0
        %v7766 = vmin.f32 %v7758, 20.0
        %v7767 = vmin.f32 %v7761, 20.0
        %v7768 = vmul.f32 %v7764, 1.442695
        %v7769 = vpow.pop %v7768
        %v7770 = vmul.f32 %v7765, 1.442695
        %v7771 = vpow.pop %v7770
        %v7772 = vmul.f32 %v7766, 1.442695
        %v7773 = vpow.pop %v7772
        %v7774 = vmul.f32 %v7767, 1.442695
        %v7775 = vpow.pop %v7774
        %v7776 = vadd.f32 %v7769, 1.0
        %v7777 = vadd.f32 %v7771, 1.0
        %v7778 = vadd.f32 %v7773, 1.0
        %v7779 = vadd.f32 %v7775, 1.0
        %v7780 = vlog2.pop %v7776
        %v7781 = vmul.f32 %v7780, 0.6931472
        %v7782 = vlog2.pop %v7777
        %v7783 = vmul.f32 %v7782, 0.6931472
        %v7784 = vlog2.pop %v7778
        %v7785 = vmul.f32 %v7784, 0.6931472
        %v7786 = vlog2.pop %v7779
        %v7787 = vmul.f32 %v7786, 0.6931472
        %v7788 = vtanh.pop %v7781
        %v7789 = vtanh.pop %v7783
        %v7790 = vtanh.pop %v7785
        %v7791 = vtanh.pop %v7787
        %v7792 = vmul.f32 %v7750, %v7788
        %v7793 = vmul.f32 %v7753, %v7789
        %v7794 = vmul.f32 %v7758, %v7790
        %v7795 = vmul.f32 %v7761, %v7791
        %v7796 = vpack.c.bf16 %v7792, %v7792
        %v7797 = vpack.c.bf16 %v7793, %v7793
        %v7798 = vpack.c.bf16 %v7794, %v7794
        %v7799 = vpack.c.bf16 %v7795, %v7795
        %v7804 = vunpack.c.l.b16 %v7796
        %v7805 = vunpack.c.l.b16 %v7797
        %v7806 = vunpack.c.l.b16 %v7798
        %v7807 = vunpack.c.l.b16 %v7799
        %v7808 = vpack.c.b16 %v7804, %v7804
        %v7809 = vpack.c.b16 %v7805, %v7805
        %v7810 = vpack.c.b16 %v7806, %v7806
        %v7811 = vpack.c.b16 %v7807, %v7807
        %v7813 = vshrl.u32 %v7808, 16
        %v7815 = vrot.slane %v7813, 7
        %v7816 = vshll.u32 %v7808, 16
        %v7818 = vor.u32 %v7815, %v7816
        %v7820 = vshrl.u32 %v7809, 16
        %v7822 = vrot.slane %v7820, 7
        %v7823 = vshll.u32 %v7809, 16
        %v7825 = vor.u32 %v7822, %v7823
        %v7827 = vshrl.u32 %v7810, 16
        %v7829 = vrot.slane %v7827, 7
        %v7830 = vshll.u32 %v7810, 16
        %v7832 = vor.u32 %v7829, %v7830
        %v7834 = vshrl.u32 %v7811, 16
        %v7836 = vrot.slane %v7834, 7
        %v7837 = vshll.u32 %v7811, 16
        %v7839 = vor.u32 %v7836, %v7837
        %v7844 = vld [vmem:[%s6631] sm:$0x7]
        %v7845 = vsel %vm6634, %v7818, %v7844
        %7846 = vst [vmem:[%s6631] sm:$0x7] %v7845
        %v7847 = vld [vmem:[%s6631 + $0x8] sm:$0x7]
        %v7848 = vsel %vm6634, %v7825, %v7847
        %7849 = vst [vmem:[%s6631 + $0x8] sm:$0x7] %v7848
        %v7850 = vld [vmem:[%s6631 + $0x10] sm:$0x7]
        %v7851 = vsel %vm6634, %v7832, %v7850
        %7852 = vst [vmem:[%s6631 + $0x10] sm:$0x7] %v7851
        %v7853 = vld [vmem:[%s6631 + $0x18] sm:$0x7]
        %v7854 = vsel %vm6634, %v7839, %v7853
        %7855 = vst [vmem:[%s6631 + $0x18] sm:$0x7] %v7854
        %v7856 = vld [vmem:[#allocation4] sm:$0xf]
        %v7857 = vld [vmem:[#allocation4 + $0x8] sm:$0xf]
        %v7858 = vld [vmem:[#allocation4 + $0x10] sm:$0xf]
        %v7859 = vld [vmem:[#allocation4 + $0x18] sm:$0xf]
        %v7860 = vld [vmem:[#allocation4 + $0x4] sm:$0x1]
        %v7861 = vld [vmem:[#allocation4 + $0xc] sm:$0x1]
        %v7862 = vld [vmem:[#allocation4 + $0x14] sm:$0x1]
        %v7863 = vld [vmem:[#allocation4 + $0x1c] sm:$0x1]
        %v7864 = vld [vmem:[#allocation4] sm:$0xe]
        %v7865 = vld [vmem:[#allocation4 + $0x8] sm:$0xe]
        %v7866 = vld [vmem:[#allocation4 + $0x10] sm:$0xe]
        %v7867 = vld [vmem:[#allocation4 + $0x18] sm:$0xe]
        %v7868 = vld [vmem:[%s6631] sm:$0xf]
        %v7869 = vld [vmem:[%s6631 + $0x8] sm:$0xf]
        %v7870 = vld [vmem:[%s6631 + $0x10] sm:$0xf]
        %v7871 = vld [vmem:[%s6631 + $0x18] sm:$0xf]
        %v7872 = vld [vmem:[%s6631 + $0x4] sm:$0x1]
        %v7873 = vld [vmem:[%s6631 + $0xc] sm:$0x1]
        %v7874 = vld [vmem:[%s6631 + $0x14] sm:$0x1]
        %v7875 = vld [vmem:[%s6631 + $0x1c] sm:$0x1]
        %v7876 = vld [vmem:[%s6631] sm:$0xe]
        %v7877 = vld [vmem:[%s6631 + $0x8] sm:$0xe]
        %v7878 = vld [vmem:[%s6631 + $0x10] sm:$0xe]
        %v7879 = vld [vmem:[%s6631 + $0x18] sm:$0xe]
        %v7880 = vld [vmem:[%s6671] sm:$0xf]
        %v7881 = vld [vmem:[%s6671 + $0x8] sm:$0xf]
        %v7882 = vld [vmem:[%s6671 + $0x10] sm:$0xf]
        %v7883 = vld [vmem:[%s6671 + $0x18] sm:$0xf]
        %v7884 = vld [vmem:[%s6671 + $0x4] sm:$0x1]
        %v7885 = vld [vmem:[%s6671 + $0xc] sm:$0x1]
        %v7886 = vld [vmem:[%s6671 + $0x14] sm:$0x1]
        %v7887 = vld [vmem:[%s6671 + $0x1c] sm:$0x1]
        %v7888 = vld [vmem:[%s6671] sm:$0xe]
        %v7889 = vld [vmem:[%s6671 + $0x8] sm:$0xe]
        %v7890 = vld [vmem:[%s6671 + $0x10] sm:$0xe]
        %v7891 = vld [vmem:[%s6671 + $0x18] sm:$0xe]
        %v7900 = vunpack.c.l.b16 %v7856
        %v7901 = vunpack.c.l.b16 %v7860
        %v7902 = vunpack.c.l.b16 %v7857
        %v7903 = vunpack.c.l.b16 %v7861
        %v7904 = vunpack.c.l.b16 %v7858
        %v7905 = vunpack.c.l.b16 %v7862
        %v7906 = vunpack.c.l.b16 %v7859
        %v7907 = vunpack.c.l.b16 %v7863
        %v7908 = vpack.c.b16 %v7901, %v7900
        %v7909 = vpack.c.b16 %v7903, %v7902
        %v7910 = vpack.c.b16 %v7905, %v7904
        %v7911 = vpack.c.b16 %v7907, %v7906
        %v7913 = vshrl.u32 %v7908, 16
        %v7915 = vshll.u32 %v7908, 16
        %v7917 = vrot.slane %v7915, 1
        %v7918 = vor.u32 %v7913, %v7917
        %v7920 = vshrl.u32 %v7909, 16
        %v7922 = vshll.u32 %v7909, 16
        %v7924 = vrot.slane %v7922, 1
        %v7925 = vor.u32 %v7920, %v7924
        %v7927 = vshrl.u32 %v7910, 16
        %v7929 = vshll.u32 %v7910, 16
        %v7931 = vrot.slane %v7929, 1
        %v7932 = vor.u32 %v7927, %v7931
        %v7934 = vshrl.u32 %v7911, 16
        %v7936 = vshll.u32 %v7911, 16
        %v7938 = vrot.slane %v7936, 1
        %v7939 = vor.u32 %v7934, %v7938
        %v7944 = vunpack.c.l.b16 %v7864
        %v7945 = vunpack.c.l.b16 %v7865
        %v7946 = vunpack.c.l.b16 %v7866
        %v7947 = vunpack.c.l.b16 %v7867
        %v7948 = vpack.c.b16 %v7901, %v7944
        %v7949 = vpack.c.b16 %v7903, %v7945
        %v7950 = vpack.c.b16 %v7905, %v7946
        %v7951 = vpack.c.b16 %v7907, %v7947
        %v7952 = vrot.slane %v7948, 1
        %v7953 = vrot.slane %v7949, 1
        %v7954 = vrot.slane %v7950, 1
        %v7955 = vrot.slane %v7951, 1
        %v7964 = vunpack.c.l.b16 %v7868
        %v7965 = vunpack.c.l.b16 %v7872
        %v7966 = vunpack.c.l.b16 %v7869
        %v7967 = vunpack.c.l.b16 %v7873
        %v7968 = vunpack.c.l.b16 %v7870
        %v7969 = vunpack.c.l.b16 %v7874
        %v7970 = vunpack.c.l.b16 %v7871
        %v7971 = vunpack.c.l.b16 %v7875
        %v7972 = vpack.c.b16 %v7965, %v7964
        %v7973 = vpack.c.b16 %v7967, %v7966
        %v7974 = vpack.c.b16 %v7969, %v7968
        %v7975 = vpack.c.b16 %v7971, %v7970
        %v7977 = vshrl.u32 %v7972, 16
        %v7979 = vshll.u32 %v7972, 16
        %v7981 = vrot.slane %v7979, 1
        %v7982 = vor.u32 %v7977, %v7981
        %v7984 = vshrl.u32 %v7973, 16
        %v7986 = vshll.u32 %v7973, 16
        %v7988 = vrot.slane %v7986, 1
        %v7989 = vor.u32 %v7984, %v7988
        %v7991 = vshrl.u32 %v7974, 16
        %v7993 = vshll.u32 %v7974, 16
        %v7995 = vrot.slane %v7993, 1
        %v7996 = vor.u32 %v7991, %v7995
        %v7998 = vshrl.u32 %v7975, 16
        %v8000 = vshll.u32 %v7975, 16
        %v8002 = vrot.slane %v8000, 1
        %v8003 = vor.u32 %v7998, %v8002
        %v8008 = vunpack.c.l.b16 %v7876
        %v8009 = vunpack.c.l.b16 %v7877
        %v8010 = vunpack.c.l.b16 %v7878
        %v8011 = vunpack.c.l.b16 %v7879
        %v8012 = vpack.c.b16 %v7965, %v8008
        %v8013 = vpack.c.b16 %v7967, %v8009
        %v8014 = vpack.c.b16 %v7969, %v8010
        %v8015 = vpack.c.b16 %v7971, %v8011
        %v8016 = vrot.slane %v8012, 1
        %v8017 = vrot.slane %v8013, 1
        %v8018 = vrot.slane %v8014, 1
        %v8019 = vrot.slane %v8015, 1
        %v8028 = vunpack.c.l.b16 %v7880
        %v8029 = vunpack.c.l.b16 %v7884
        %v8030 = vunpack.c.l.b16 %v7881
        %v8031 = vunpack.c.l.b16 %v7885
        %v8032 = vunpack.c.l.b16 %v7882
        %v8033 = vunpack.c.l.b16 %v7886
        %v8034 = vunpack.c.l.b16 %v7883
        %v8035 = vunpack.c.l.b16 %v7887
        %v8036 = vpack.c.b16 %v8029, %v8028
        %v8037 = vpack.c.b16 %v8031, %v8030
        %v8038 = vpack.c.b16 %v8033, %v8032
        %v8039 = vpack.c.b16 %v8035, %v8034
        %v8041 = vshrl.u32 %v8036, 16
        %v8043 = vshll.u32 %v8036, 16
        %v8045 = vrot.slane %v8043, 1
        %v8046 = vor.u32 %v8041, %v8045
        %v8048 = vshrl.u32 %v8037, 16
        %v8050 = vshll.u32 %v8037, 16
        %v8052 = vrot.slane %v8050, 1
        %v8053 = vor.u32 %v8048, %v8052
        %v8055 = vshrl.u32 %v8038, 16
        %v8057 = vshll.u32 %v8038, 16
        %v8059 = vrot.slane %v8057, 1
        %v8060 = vor.u32 %v8055, %v8059
        %v8062 = vshrl.u32 %v8039, 16
        %v8064 = vshll.u32 %v8039, 16
        %v8066 = vrot.slane %v8064, 1
        %v8067 = vor.u32 %v8062, %v8066
        %v8072 = vunpack.c.l.b16 %v7888
        %v8073 = vunpack.c.l.b16 %v7889
        %v8074 = vunpack.c.l.b16 %v7890
        %v8075 = vunpack.c.l.b16 %v7891
        %v8076 = vpack.c.b16 %v8029, %v8072
        %v8077 = vpack.c.b16 %v8031, %v8073
        %v8078 = vpack.c.b16 %v8033, %v8074
        %v8079 = vpack.c.b16 %v8035, %v8075
        %v8080 = vrot.slane %v8076, 1
        %v8081 = vrot.slane %v8077, 1
        %v8082 = vrot.slane %v8078, 1
        %v8083 = vrot.slane %v8079, 1
        %v8084 = vunpack.c.l.b16 %v7918
        %v8085 = vunpack.c.l.b16 %v7952
        %v8086 = vunpack.c.l.b16 %v7982
        %v8087 = vunpack.c.l.b16 %v8016
        %v8088 = vunpack.c.l.b16 %v8046
        %v8089 = vunpack.c.l.b16 %v8080
        %v8090 = vunpack.c.l.b16 %v7925
        %v8091 = vunpack.c.l.b16 %v7953
        %v8092 = vunpack.c.l.b16 %v7989
        %v8093 = vunpack.c.l.b16 %v8017
        %v8094 = vunpack.c.l.b16 %v8053
        %v8095 = vunpack.c.l.b16 %v8081
        %v8096 = vunpack.c.l.b16 %v7932
        %v8097 = vunpack.c.l.b16 %v7954
        %v8098 = vunpack.c.l.b16 %v7996
        %v8099 = vunpack.c.l.b16 %v8018
        %v8100 = vunpack.c.l.b16 %v8060
        %v8101 = vunpack.c.l.b16 %v8082
        %v8102 = vunpack.c.l.b16 %v7939
        %v8103 = vunpack.c.l.b16 %v7955
        %v8104 = vunpack.c.l.b16 %v8003
        %v8105 = vunpack.c.l.b16 %v8019
        %v8106 = vunpack.c.l.b16 %v8067
        %v8107 = vunpack.c.l.b16 %v8083
        %v8108 = vld [vmem:[%s15] sm:$0xf]
        %v8109 = vld [vmem:[%s15 + $0x4] sm:$0xf]
        %v8110 = vld [vmem:[%s15 + $0x8] sm:$0xf]
        %v8111 = vld [vmem:[%s15 + $0xc] sm:$0xf]
        %v8112 = vld [vmem:[%s15 + $0x10] sm:$0xf]
        %v8113 = vld [vmem:[%s15 + $0x14] sm:$0xf]
        %v8114 = vld [vmem:[%s15 + $0x18] sm:$0xf]
        %v8115 = vld [vmem:[%s15 + $0x1c] sm:$0xf]
        %v8116 = vld [vmem:[%s15 + $0x20] sm:$0xf]
        %v8117 = vld [vmem:[%s15 + $0x24] sm:$0xf]
        %v8118 = vld [vmem:[%s15 + $0x28] sm:$0xf]
        %v8119 = vld [vmem:[%s15 + $0x2c] sm:$0xf]
        %v8120 = vld [vmem:[%s15 + $0x30] sm:$0xf]
        %v8121 = vld [vmem:[%s15 + $0x34] sm:$0xf]
        %v8122 = vld [vmem:[%s15 + $0x38] sm:$0xf]
        %v8123 = vld [vmem:[%s15 + $0x3c] sm:$0xf]
        %v8124 = vld [vmem:[%s15 + $0x40] sm:$0xf]
        %v8125 = vld [vmem:[%s15 + $0x44] sm:$0xf]
        %v8126 = vld [vmem:[%s15 + $0x48] sm:$0xf]
        %v8127 = vld [vmem:[%s15 + $0x4c] sm:$0xf]
        %v8128 = vld [vmem:[%s15 + $0x50] sm:$0xf]
        %v8129 = vld [vmem:[%s15 + $0x54] sm:$0xf]
        %v8130 = vld [vmem:[%s15 + $0x58] sm:$0xf]
        %v8131 = vld [vmem:[%s15 + $0x5c] sm:$0xf]
        %v8132 = vld [vmem:[%s15 + $0x60] sm:$0xf]
        %v8133 = vld [vmem:[%s15 + $0x64] sm:$0xf]
        %v8134 = vld [vmem:[%s15 + $0x68] sm:$0xf]
        %v8135 = vld [vmem:[%s15 + $0x6c] sm:$0xf]
        %v8136 = vld [vmem:[%s15 + $0x70] sm:$0xf]
        %v8137 = vld [vmem:[%s15 + $0x74] sm:$0xf]
        %v8138 = vld [vmem:[%s15 + $0x78] sm:$0xf]
        %v8139 = vld [vmem:[%s15 + $0x7c] sm:$0xf]
        %v8140 = vld [vmem:[%s15 + $0x80] sm:$0xf]
        %v8141 = vld [vmem:[%s15 + $0x84] sm:$0xf]
        %v8142 = vld [vmem:[%s15 + $0x88] sm:$0xf]
        %v8143 = vld [vmem:[%s15 + $0x8c] sm:$0xf]
        %v8144 = vld [vmem:[%s15 + $0x90] sm:$0xf]
        %v8145 = vld [vmem:[%s15 + $0x94] sm:$0xf]
        %v8146 = vld [vmem:[%s15 + $0x98] sm:$0xf]
        %v8147 = vld [vmem:[%s15 + $0x9c] sm:$0xf]
        %v8148 = vld [vmem:[%s15 + $0xa0] sm:$0xf]
        %v8149 = vld [vmem:[%s15 + $0xa4] sm:$0xf]
        %v8150 = vld [vmem:[%s15 + $0xa8] sm:$0xf]
        %v8151 = vld [vmem:[%s15 + $0xac] sm:$0xf]
        %v8152 = vld [vmem:[%s15 + $0xb0] sm:$0xf]
        %v8153 = vld [vmem:[%s15 + $0xb4] sm:$0xf]
        %v8154 = vld [vmem:[%s15 + $0xb8] sm:$0xf]
        %v8155 = vld [vmem:[%s15 + $0xbc] sm:$0xf]
        %v8156 = vld [vmem:[%s15 + $0xc0] sm:$0xf]
        %v8157 = vld [vmem:[%s15 + $0xc4] sm:$0xf]
        %v8158 = vld [vmem:[%s15 + $0xc8] sm:$0xf]
        %v8159 = vld [vmem:[%s15 + $0xcc] sm:$0xf]
        %v8160 = vld [vmem:[%s15 + $0xd0] sm:$0xf]
        %v8161 = vld [vmem:[%s15 + $0xd4] sm:$0xf]
        %v8162 = vld [vmem:[%s15 + $0xd8] sm:$0xf]
        %v8163 = vld [vmem:[%s15 + $0xdc] sm:$0xf]
        %v8164 = vld [vmem:[%s15 + $0xe0] sm:$0xf]
        %v8165 = vld [vmem:[%s15 + $0xe4] sm:$0xf]
        %v8166 = vld [vmem:[%s15 + $0xe8] sm:$0xf]
        %v8167 = vld [vmem:[%s15 + $0xec] sm:$0xf]
        %v8168 = vld [vmem:[%s15 + $0xf0] sm:$0xf]
        %v8169 = vld [vmem:[%s15 + $0xf4] sm:$0xf]
        %v8170 = vld [vmem:[%s15 + $0xf8] sm:$0xf]
        %v8171 = vld [vmem:[%s15 + $0xfc] sm:$0xf]
        %v8172 = vld [vmem:[%s15 + $0x100] sm:$0xf]
        %v8173 = vld [vmem:[%s15 + $0x104] sm:$0xf]
        %v8174 = vld [vmem:[%s15 + $0x108] sm:$0xf]
        %v8175 = vld [vmem:[%s15 + $0x10c] sm:$0xf]
        %v8176 = vld [vmem:[%s15 + $0x110] sm:$0xf]
        %v8177 = vld [vmem:[%s15 + $0x114] sm:$0xf]
        %v8178 = vld [vmem:[%s15 + $0x118] sm:$0xf]
        %v8179 = vld [vmem:[%s15 + $0x11c] sm:$0xf]
        %v8180 = vld [vmem:[%s15 + $0x120] sm:$0xf]
        %v8181 = vld [vmem:[%s15 + $0x124] sm:$0xf]
        %v8182 = vld [vmem:[%s15 + $0x128] sm:$0xf]
        %v8183 = vld [vmem:[%s15 + $0x12c] sm:$0xf]
        %v8184 = vld [vmem:[%s15 + $0x130] sm:$0xf]
        %v8185 = vld [vmem:[%s15 + $0x134] sm:$0xf]
        %v8186 = vld [vmem:[%s15 + $0x138] sm:$0xf]
        %v8187 = vld [vmem:[%s15 + $0x13c] sm:$0xf]
        %v8188 = vld [vmem:[%s15 + $0x140] sm:$0xf]
        %v8189 = vld [vmem:[%s15 + $0x144] sm:$0xf]
        %v8190 = vld [vmem:[%s15 + $0x148] sm:$0xf]
        %v8191 = vld [vmem:[%s15 + $0x14c] sm:$0xf]
        %v8192 = vld [vmem:[%s15 + $0x150] sm:$0xf]
        %v8193 = vld [vmem:[%s15 + $0x154] sm:$0xf]
        %v8194 = vld [vmem:[%s15 + $0x158] sm:$0xf]
        %v8195 = vld [vmem:[%s15 + $0x15c] sm:$0xf]
        %v8196 = vld [vmem:[%s15 + $0x160] sm:$0xf]
        %v8197 = vld [vmem:[%s15 + $0x164] sm:$0xf]
        %v8198 = vld [vmem:[%s15 + $0x168] sm:$0xf]
        %v8199 = vld [vmem:[%s15 + $0x16c] sm:$0xf]
        %v8200 = vld [vmem:[%s15 + $0x170] sm:$0xf]
        %v8201 = vld [vmem:[%s15 + $0x174] sm:$0xf]
        %v8202 = vld [vmem:[%s15 + $0x178] sm:$0xf]
        %v8203 = vld [vmem:[%s15 + $0x17c] sm:$0xf]
        %v8204 = vld [vmem:[%s15 + $0x180] sm:$0xf]
        %v8205 = vld [vmem:[%s15 + $0x184] sm:$0xf]
        %v8206 = vld [vmem:[%s15 + $0x188] sm:$0xf]
        %v8207 = vld [vmem:[%s15 + $0x18c] sm:$0xf]
        %v8208 = vld [vmem:[%s15 + $0x190] sm:$0xf]
        %v8209 = vld [vmem:[%s15 + $0x194] sm:$0xf]
        %v8210 = vld [vmem:[%s15 + $0x198] sm:$0xf]
        %v8211 = vld [vmem:[%s15 + $0x19c] sm:$0xf]
        %v8212 = vld [vmem:[%s15 + $0x1a0] sm:$0xf]
        %v8213 = vld [vmem:[%s15 + $0x1a4] sm:$0xf]
        %v8214 = vld [vmem:[%s15 + $0x1a8] sm:$0xf]
        %v8215 = vld [vmem:[%s15 + $0x1ac] sm:$0xf]
        %v8216 = vld [vmem:[%s15 + $0x1b0] sm:$0xf]
        %v8217 = vld [vmem:[%s15 + $0x1b4] sm:$0xf]
        %v8218 = vld [vmem:[%s15 + $0x1b8] sm:$0xf]
        %v8219 = vld [vmem:[%s15 + $0x1bc] sm:$0xf]
        %v8220 = vld [vmem:[%s15 + $0x1c0] sm:$0xf]
        %v8221 = vld [vmem:[%s15 + $0x1c4] sm:$0xf]
        %v8222 = vld [vmem:[%s15 + $0x1c8] sm:$0xf]
        %v8223 = vld [vmem:[%s15 + $0x1cc] sm:$0xf]
        %v8224 = vld [vmem:[%s15 + $0x1d0] sm:$0xf]
        %v8225 = vld [vmem:[%s15 + $0x1d4] sm:$0xf]
        %v8226 = vld [vmem:[%s15 + $0x1d8] sm:$0xf]
        %v8227 = vld [vmem:[%s15 + $0x1dc] sm:$0xf]
        %v8228 = vld [vmem:[%s15 + $0x1e0] sm:$0xf]
        %v8229 = vld [vmem:[%s15 + $0x1e4] sm:$0xf]
        %v8230 = vld [vmem:[%s15 + $0x1e8] sm:$0xf]
        %v8231 = vld [vmem:[%s15 + $0x1ec] sm:$0xf]
        %v8232 = vld [vmem:[%s15 + $0x1f0] sm:$0xf]
        %v8233 = vld [vmem:[%s15 + $0x1f4] sm:$0xf]
        %v8234 = vld [vmem:[%s15 + $0x1f8] sm:$0xf]
        %v8235 = vld [vmem:[%s15 + $0x1fc] sm:$0xf]
        %v8236 = vld [vmem:[%s15 + $0x200] sm:$0xf]
        %v8237 = vld [vmem:[%s15 + $0x204] sm:$0xf]
        %v8238 = vld [vmem:[%s15 + $0x208] sm:$0xf]
        %v8239 = vld [vmem:[%s15 + $0x20c] sm:$0xf]
        %v8240 = vld [vmem:[%s15 + $0x210] sm:$0xf]
        %v8241 = vld [vmem:[%s15 + $0x214] sm:$0xf]
        %v8242 = vld [vmem:[%s15 + $0x218] sm:$0xf]
        %v8243 = vld [vmem:[%s15 + $0x21c] sm:$0xf]
        %v8244 = vld [vmem:[%s15 + $0x220] sm:$0xf]
        %v8245 = vld [vmem:[%s15 + $0x224] sm:$0xf]
        %v8246 = vld [vmem:[%s15 + $0x228] sm:$0xf]
        %v8247 = vld [vmem:[%s15 + $0x22c] sm:$0xf]
        %v8248 = vld [vmem:[%s15 + $0x230] sm:$0xf]
        %v8249 = vld [vmem:[%s15 + $0x234] sm:$0xf]
        %v8250 = vld [vmem:[%s15 + $0x238] sm:$0xf]
        %v8251 = vld [vmem:[%s15 + $0x23c] sm:$0xf]
        %v8252 = vld [vmem:[%s16] sm:$0x1]
        %v8254 = vlaneseq
        %v8255 = vshrl.u32 %v8254, 7
        %v8256 = vsub.s32 0, %v8255
        %v8257 = vrot.slane %v8252, %v8256
        %v8259 = vpack.c.b16 %v7902, %v7900
        %v8260 = vpack.c.b16 %v8090, %v8084
        %v8261 = vpack.c.b16 %v8091, %v8085
        %v8262 = vpack.c.b16 %v7966, %v7964
        %v8263 = vpack.c.b16 %v8092, %v8086
        %v8264 = vpack.c.b16 %v8093, %v8087
        %v8265 = vpack.c.b16 %v8030, %v8028
        %v8266 = vpack.c.b16 %v8094, %v8088
        %v8267 = vpack.c.b16 %v8095, %v8089
        %v8268 = vpack.c.b16 %v7906, %v7904
        %v8269 = vpack.c.b16 %v8102, %v8096
        %v8270 = vpack.c.b16 %v8103, %v8097
        %v8271 = vpack.c.b16 %v7970, %v7968
        %v8272 = vpack.c.b16 %v8104, %v8098
        %v8273 = vpack.c.b16 %v8105, %v8099
        %v8274 = vpack.c.b16 %v8034, %v8032
        %v8275 = vpack.c.b16 %v8106, %v8100
        %v8276 = vpack.c.b16 %v8107, %v8101
        %v8439 = vunpack.c.l.b16 %v8108
        %v8440 = vunpack.c.l.b16 %v8109
        %v8441 = vunpack.c.l.b16 %v8110
        %v8442 = vunpack.c.l.b16 %v8111
        %v8443 = vunpack.c.l.b16 %v8112
        %v8444 = vunpack.c.l.b16 %v8113
        %v8445 = vunpack.c.l.b16 %v8114
        %v8446 = vunpack.c.l.b16 %v8115
        %v8447 = vunpack.c.l.b16 %v8116
        %v8448 = vunpack.c.l.b16 %v8117
        %v8449 = vunpack.c.l.b16 %v8118
        %v8450 = vunpack.c.l.b16 %v8119
        %v8451 = vunpack.c.l.b16 %v8120
        %v8452 = vunpack.c.l.b16 %v8121
        %v8453 = vunpack.c.l.b16 %v8122
        %v8454 = vunpack.c.l.b16 %v8123
        %v8455 = vunpack.c.l.b16 %v8124
        %v8456 = vunpack.c.l.b16 %v8125
        %v8457 = vunpack.c.l.b16 %v8126
        %v8458 = vunpack.c.l.b16 %v8127
        %v8459 = vunpack.c.l.b16 %v8128
        %v8460 = vunpack.c.l.b16 %v8129
        %v8461 = vunpack.c.l.b16 %v8130
        %v8462 = vunpack.c.l.b16 %v8131
        %v8463 = vunpack.c.l.b16 %v8132
        %v8464 = vunpack.c.l.b16 %v8133
        %v8465 = vunpack.c.l.b16 %v8134
        %v8466 = vunpack.c.l.b16 %v8135
        %v8467 = vunpack.c.l.b16 %v8136
        %v8468 = vunpack.c.l.b16 %v8137
        %v8469 = vunpack.c.l.b16 %v8138
        %v8470 = vunpack.c.l.b16 %v8139
        %v8471 = vunpack.c.l.b16 %v8140
        %v8472 = vunpack.c.l.b16 %v8141
        %v8473 = vunpack.c.l.b16 %v8142
        %v8474 = vunpack.c.l.b16 %v8143
        %v8475 = vunpack.c.l.b16 %v8144
        %v8476 = vunpack.c.l.b16 %v8145
        %v8477 = vunpack.c.l.b16 %v8146
        %v8478 = vunpack.c.l.b16 %v8147
        %v8479 = vunpack.c.l.b16 %v8148
        %v8480 = vunpack.c.l.b16 %v8149
        %v8481 = vunpack.c.l.b16 %v8150
        %v8482 = vunpack.c.l.b16 %v8151
        %v8483 = vunpack.c.l.b16 %v8152
        %v8484 = vunpack.c.l.b16 %v8153
        %v8485 = vunpack.c.l.b16 %v8154
        %v8486 = vunpack.c.l.b16 %v8155
        %v8487 = vunpack.c.l.b16 %v8156
        %v8488 = vunpack.c.l.b16 %v8157
        %v8489 = vunpack.c.l.b16 %v8158
        %v8490 = vunpack.c.l.b16 %v8159
        %v8491 = vunpack.c.l.b16 %v8160
        %v8492 = vunpack.c.l.b16 %v8161
        %v8493 = vunpack.c.l.b16 %v8162
        %v8494 = vunpack.c.l.b16 %v8163
        %v8495 = vunpack.c.l.b16 %v8164
        %v8496 = vunpack.c.l.b16 %v8165
        %v8497 = vunpack.c.l.b16 %v8166
        %v8498 = vunpack.c.l.b16 %v8167
        %v8499 = vunpack.c.l.b16 %v8168
        %v8500 = vunpack.c.l.b16 %v8169
        %v8501 = vunpack.c.l.b16 %v8170
        %v8502 = vunpack.c.l.b16 %v8171
        %v8503 = vunpack.c.l.b16 %v8172
        %v8504 = vunpack.c.l.b16 %v8173
        %v8505 = vunpack.c.l.b16 %v8174
        %v8506 = vunpack.c.l.b16 %v8175
        %v8507 = vunpack.c.l.b16 %v8176
        %v8508 = vunpack.c.l.b16 %v8177
        %v8509 = vunpack.c.l.b16 %v8178
        %v8510 = vunpack.c.l.b16 %v8179
        %v8511 = vunpack.c.l.b16 %v8180
        %v8512 = vunpack.c.l.b16 %v8181
        %v8513 = vunpack.c.l.b16 %v8182
        %v8514 = vunpack.c.l.b16 %v8183
        %v8515 = vunpack.c.l.b16 %v8184
        %v8516 = vunpack.c.l.b16 %v8185
        %v8517 = vunpack.c.l.b16 %v8186
        %v8518 = vunpack.c.l.b16 %v8187
        %v8519 = vunpack.c.l.b16 %v8188
        %v8520 = vunpack.c.l.b16 %v8189
        %v8521 = vunpack.c.l.b16 %v8190
        %v8522 = vunpack.c.l.b16 %v8191
        %v8523 = vunpack.c.l.b16 %v8192
        %v8524 = vunpack.c.l.b16 %v8193
        %v8525 = vunpack.c.l.b16 %v8194
        %v8526 = vunpack.c.l.b16 %v8195
        %v8527 = vunpack.c.l.b16 %v8196
        %v8528 = vunpack.c.l.b16 %v8197
        %v8529 = vunpack.c.l.b16 %v8198
        %v8530 = vunpack.c.l.b16 %v8199
        %v8531 = vunpack.c.l.b16 %v8200
        %v8532 = vunpack.c.l.b16 %v8201
        %v8533 = vunpack.c.l.b16 %v8202
        %v8534 = vunpack.c.l.b16 %v8203
        %v8535 = vunpack.c.l.b16 %v8204
        %v8536 = vunpack.c.l.b16 %v8205
        %v8537 = vunpack.c.l.b16 %v8206
        %v8538 = vunpack.c.l.b16 %v8207
        %v8539 = vunpack.c.l.b16 %v8208
        %v8540 = vunpack.c.l.b16 %v8209
        %v8541 = vunpack.c.l.b16 %v8210
        %v8542 = vunpack.c.l.b16 %v8211
        %v8543 = vunpack.c.l.b16 %v8212
        %v8544 = vunpack.c.l.b16 %v8213
        %v8545 = vunpack.c.l.b16 %v8214
        %v8546 = vunpack.c.l.b16 %v8215
        %v8547 = vunpack.c.l.b16 %v8216
        %v8548 = vunpack.c.l.b16 %v8217
        %v8549 = vunpack.c.l.b16 %v8218
        %v8550 = vunpack.c.l.b16 %v8219
        %v8551 = vunpack.c.l.b16 %v8220
        %v8552 = vunpack.c.l.b16 %v8221
        %v8553 = vunpack.c.l.b16 %v8222
        %v8554 = vunpack.c.l.b16 %v8223
        %v8555 = vunpack.c.l.b16 %v8224
        %v8556 = vunpack.c.l.b16 %v8225
        %v8557 = vunpack.c.l.b16 %v8226
        %v8558 = vunpack.c.l.b16 %v8227
        %v8559 = vunpack.c.l.b16 %v8228
        %v8560 = vunpack.c.l.b16 %v8229
        %v8561 = vunpack.c.l.b16 %v8230
        %v8562 = vunpack.c.l.b16 %v8231
        %v8563 = vunpack.c.l.b16 %v8232
        %v8564 = vunpack.c.l.b16 %v8233
        %v8565 = vunpack.c.l.b16 %v8234
        %v8566 = vunpack.c.l.b16 %v8235
        %v8567 = vunpack.c.l.b16 %v8236
        %v8568 = vunpack.c.l.b16 %v8237
        %v8569 = vunpack.c.l.b16 %v8238
        %v8570 = vunpack.c.l.b16 %v8239
        %v8571 = vunpack.c.l.b16 %v8240
        %v8572 = vunpack.c.l.b16 %v8241
        %v8573 = vunpack.c.l.b16 %v8242
        %v8574 = vunpack.c.l.b16 %v8243
        %v8575 = vunpack.c.l.b16 %v8244
        %v8576 = vunpack.c.l.b16 %v8245
        %v8577 = vunpack.c.l.b16 %v8246
        %v8578 = vunpack.c.l.b16 %v8247
        %v8579 = vunpack.c.l.b16 %v8248
        %v8580 = vunpack.c.l.b16 %v8249
        %v8581 = vunpack.c.l.b16 %v8250
        %v8582 = vunpack.c.l.b16 %v8251
        %v8583 = vpack.c.b16 %v8440, %v8439
        %v8584 = vpack.c.b16 %v8442, %v8441
        %v8585 = vpack.c.b16 %v8444, %v8443
        %v8586 = vpack.c.b16 %v8446, %v8445
        %v8587 = vpack.c.b16 %v8448, %v8447
        %v8588 = vpack.c.b16 %v8450, %v8449
        %v8589 = vpack.c.b16 %v8452, %v8451
        %v8590 = vpack.c.b16 %v8454, %v8453
        %v8591 = vpack.c.b16 %v8456, %v8455
        %v8592 = vpack.c.b16 %v8458, %v8457
        %v8593 = vpack.c.b16 %v8460, %v8459
        %v8594 = vpack.c.b16 %v8462, %v8461
        %v8595 = vpack.c.b16 %v8464, %v8463
        %v8596 = vpack.c.b16 %v8466, %v8465
        %v8597 = vpack.c.b16 %v8468, %v8467
        %v8598 = vpack.c.b16 %v8470, %v8469
        %v8599 = vpack.c.b16 %v8472, %v8471
        %v8600 = vpack.c.b16 %v8474, %v8473
        %v8601 = vpack.c.b16 %v8476, %v8475
        %v8602 = vpack.c.b16 %v8478, %v8477
        %v8603 = vpack.c.b16 %v8480, %v8479
        %v8604 = vpack.c.b16 %v8482, %v8481
        %v8605 = vpack.c.b16 %v8484, %v8483
        %v8606 = vpack.c.b16 %v8486, %v8485
        %v8607 = vpack.c.b16 %v8488, %v8487
        %v8608 = vpack.c.b16 %v8490, %v8489
        %v8609 = vpack.c.b16 %v8492, %v8491
        %v8610 = vpack.c.b16 %v8494, %v8493
        %v8611 = vpack.c.b16 %v8496, %v8495
        %v8612 = vpack.c.b16 %v8498, %v8497
        %v8613 = vpack.c.b16 %v8500, %v8499
        %v8614 = vpack.c.b16 %v8502, %v8501
        %v8615 = vpack.c.b16 %v8504, %v8503
        %v8616 = vpack.c.b16 %v8506, %v8505
        %v8617 = vpack.c.b16 %v8508, %v8507
        %v8618 = vpack.c.b16 %v8510, %v8509
        %v8619 = vpack.c.b16 %v8512, %v8511
        %v8620 = vpack.c.b16 %v8514, %v8513
        %v8621 = vpack.c.b16 %v8516, %v8515
        %v8622 = vpack.c.b16 %v8518, %v8517
        %v8623 = vpack.c.b16 %v8520, %v8519
        %v8624 = vpack.c.b16 %v8522, %v8521
        %v8625 = vpack.c.b16 %v8524, %v8523
        %v8626 = vpack.c.b16 %v8526, %v8525
        %v8627 = vpack.c.b16 %v8528, %v8527
        %v8628 = vpack.c.b16 %v8530, %v8529
        %v8629 = vpack.c.b16 %v8532, %v8531
        %v8630 = vpack.c.b16 %v8534, %v8533
        %v8631 = vpack.c.b16 %v8536, %v8535
        %v8632 = vpack.c.b16 %v8538, %v8537
        %v8633 = vpack.c.b16 %v8540, %v8539
        %v8634 = vpack.c.b16 %v8542, %v8541
        %v8635 = vpack.c.b16 %v8544, %v8543
        %v8636 = vpack.c.b16 %v8546, %v8545
        %v8637 = vpack.c.b16 %v8548, %v8547
        %v8638 = vpack.c.b16 %v8550, %v8549
        %v8639 = vpack.c.b16 %v8552, %v8551
        %v8640 = vpack.c.b16 %v8554, %v8553
        %v8641 = vpack.c.b16 %v8556, %v8555
        %v8642 = vpack.c.b16 %v8558, %v8557
        %v8643 = vpack.c.b16 %v8560, %v8559
        %v8644 = vpack.c.b16 %v8562, %v8561
        %v8645 = vpack.c.b16 %v8564, %v8563
        %v8646 = vpack.c.b16 %v8566, %v8565
        %v8647 = vpack.c.b16 %v8568, %v8567
        %v8648 = vpack.c.b16 %v8570, %v8569
        %v8649 = vpack.c.b16 %v8572, %v8571
        %v8650 = vpack.c.b16 %v8574, %v8573
        %v8651 = vpack.c.b16 %v8576, %v8575
        %v8652 = vpack.c.b16 %v8578, %v8577
        %v8653 = vpack.c.b16 %v8580, %v8579
        %v8654 = vpack.c.b16 %v8582, %v8581
        %8727 = vmatprep.subr.bf16.mxu0 0
        %8728 = vmatpush1.bf16.msra.mxu0 %v8590
        %8729 = vmatprep.subr.bf16.mxu0 0
        %8730 = vmatpush1.bf16.msra.mxu0 %v8589
        %8731 = vmatprep.subr.bf16.mxu0 0
        %8732 = vmatpush1.bf16.msra.mxu0 %v8588
        %8733 = vmatprep.subr.bf16.mxu0 0
        %8734 = vmatpush1.bf16.msra.mxu0 %v8587
        %8735 = vmatprep.subr.bf16.mxu0 0
        %8736 = vmatpush1.bf16.msra.mxu0 %v8586
        %8737 = vmatprep.subr.bf16.mxu0 0
        %8738 = vmatpush1.bf16.msra.mxu0 %v8585
        %8739 = vmatprep.subr.bf16.mxu0 0
        %8740 = vmatpush1.bf16.msra.mxu0 %v8584
        %8741 = vmatprep.subr.bf16.mxu0 0
        %8742 = vmatpush1.bf16.msra.mxu0 %v8583
        %8743 = vmatprep.subr.bf16.mxu0 0
        %8744 = vmatpush2.bf16.msra.mxu0 %v8598
        %8745 = vmatprep.subr.bf16.mxu0 0
        %8746 = vmatpush2.bf16.msra.mxu0 %v8597
        %8747 = vmatprep.subr.bf16.mxu0 0
        %8748 = vmatpush2.bf16.msra.mxu0 %v8596
        %8749 = vmatprep.subr.bf16.mxu0 0
        %8750 = vmatpush2.bf16.msra.mxu0 %v8595
        %8751 = vmatprep.subr.bf16.mxu0 0
        %8752 = vmatpush2.bf16.msra.mxu0 %v8594
        %8753 = vmatprep.subr.bf16.mxu0 0
        %8754 = vmatpush2.bf16.msra.mxu0 %v8593
        %8755 = vmatprep.subr.bf16.mxu0 0
        %8756 = vmatpush2.bf16.msra.mxu0 %v8592
        %8757 = vmatprep.subr.bf16.mxu0 0
        %8758 = vmatpush2.bf16.msra.mxu0 %v8591
        %8759 = vmatprep.mubr.bf16.mxu0 %v8260
        %8760 = vmatmul.mubr.bf16.gmra.mxu0 %v8259
        %v8761 = vpop.f32.mrf.mxu0
        %v8762 = vadd.f32 %v8257, %v8761
        %v8763 = vpop.f32.mrf.mxu0
        %v8764 = vpop.f32.mrf.mxu0
        %v8765 = vadd.f32 %v8257, %v8764
        %v8766 = vpop.f32.mrf.mxu0
        %8767 = vmatprep.mubr.bf16.mxu0 %v8269
        %8768 = vmatmul.mubr.bf16.gmra.mxu0 %v8268
        %v8769 = vpop.f32.mrf.mxu0
        %v8770 = vadd.f32 %v8257, %v8769
        %v8771 = vpop.f32.mrf.mxu0
        %v8772 = vpop.f32.mrf.mxu0
        %v8773 = vadd.f32 %v8257, %v8772
        %v8774 = vpop.f32.mrf.mxu0
        %8775 = vdwg.mxu0
        %8776 = vmatprep.subr.bf16.mxu0 0
        %8777 = vmatpush1.bf16.msra.mxu0 %v8606
        %8778 = vmatprep.subr.bf16.mxu0 0
        %8779 = vmatpush1.bf16.msra.mxu0 %v8605
        %8780 = vmatprep.subr.bf16.mxu0 0
        %8781 = vmatpush1.bf16.msra.mxu0 %v8604
        %8782 = vmatprep.subr.bf16.mxu0 0
        %8783 = vmatpush1.bf16.msra.mxu0 %v8603
        %8784 = vmatprep.subr.bf16.mxu0 0
        %8785 = vmatpush1.bf16.msra.mxu0 %v8602
        %8786 = vmatprep.subr.bf16.mxu0 0
        %8787 = vmatpush1.bf16.msra.mxu0 %v8601
        %8788 = vmatprep.subr.bf16.mxu0 0
        %8789 = vmatpush1.bf16.msra.mxu0 %v8600
        %8790 = vmatprep.subr.bf16.mxu0 0
        %8791 = vmatpush1.bf16.msra.mxu0 %v8599
        %8792 = vmatprep.subr.bf16.mxu0 0
        %8793 = vmatpush2.bf16.msra.mxu0 %v8614
        %8794 = vmatprep.subr.bf16.mxu0 0
        %8795 = vmatpush2.bf16.msra.mxu0 %v8613
        %8796 = vmatprep.subr.bf16.mxu0 0
        %8797 = vmatpush2.bf16.msra.mxu0 %v8612
        %8798 = vmatprep.subr.bf16.mxu0 0
        %8799 = vmatpush2.bf16.msra.mxu0 %v8611
        %8800 = vmatprep.subr.bf16.mxu0 0
        %8801 = vmatpush2.bf16.msra.mxu0 %v8610
        %8802 = vmatprep.subr.bf16.mxu0 0
        %8803 = vmatpush2.bf16.msra.mxu0 %v8609
        %8804 = vmatprep.subr.bf16.mxu0 0
        %8805 = vmatpush2.bf16.msra.mxu0 %v8608
        %8806 = vmatprep.subr.bf16.mxu0 0
        %8807 = vmatpush2.bf16.msra.mxu0 %v8607
        %8808 = vmatprep.mubr.bf16.mxu0 %v8262
        %8809 = vmatmul.mubr.bf16.gmra.mxu0 %v8261
        %v8810 = vpop.f32.mrf.mxu0
        %v8811 = vadd.f32 %v8762, %v8810
        %v8812 = vpop.f32.mrf.mxu0
        %v8813 = vpop.f32.mrf.mxu0
        %v8814 = vadd.f32 %v8765, %v8813
        %v8815 = vpop.f32.mrf.mxu0
        %8816 = vmatprep.mubr.bf16.mxu0 %v8271
        %8817 = vmatmul.mubr.bf16.gmra.mxu0 %v8270
        %v8818 = vpop.f32.mrf.mxu0
        %v8819 = vadd.f32 %v8770, %v8818
        %v8820 = vpop.f32.mrf.mxu0
        %v8821 = vpop.f32.mrf.mxu0
        %v8822 = vadd.f32 %v8773, %v8821
        %v8823 = vpop.f32.mrf.mxu0
        %8824 = vdwg.mxu0
        %8825 = vmatprep.subr.bf16.mxu0 0
        %8826 = vmatpush1.bf16.msra.mxu0 %v8622
        %8827 = vmatprep.subr.bf16.mxu0 0
        %8828 = vmatpush1.bf16.msra.mxu0 %v8621
        %8829 = vmatprep.subr.bf16.mxu0 0
        %8830 = vmatpush1.bf16.msra.mxu0 %v8620
        %8831 = vmatprep.subr.bf16.mxu0 0
        %8832 = vmatpush1.bf16.msra.mxu0 %v8619
        %8833 = vmatprep.subr.bf16.mxu0 0
        %8834 = vmatpush1.bf16.msra.mxu0 %v8618
        %8835 = vmatprep.subr.bf16.mxu0 0
        %8836 = vmatpush1.bf16.msra.mxu0 %v8617
        %8837 = vmatprep.subr.bf16.mxu0 0
        %8838 = vmatpush1.bf16.msra.mxu0 %v8616
        %8839 = vmatprep.subr.bf16.mxu0 0
        %8840 = vmatpush1.bf16.msra.mxu0 %v8615
        %8841 = vmatprep.subr.bf16.mxu0 0
        %8842 = vmatpush2.bf16.msra.mxu0 %v8630
        %8843 = vmatprep.subr.bf16.mxu0 0
        %8844 = vmatpush2.bf16.msra.mxu0 %v8629
        %8845 = vmatprep.subr.bf16.mxu0 0
        %8846 = vmatpush2.bf16.msra.mxu0 %v8628
        %8847 = vmatprep.subr.bf16.mxu0 0
        %8848 = vmatpush2.bf16.msra.mxu0 %v8627
        %8849 = vmatprep.subr.bf16.mxu0 0
        %8850 = vmatpush2.bf16.msra.mxu0 %v8626
        %8851 = vmatprep.subr.bf16.mxu0 0
        %8852 = vmatpush2.bf16.msra.mxu0 %v8625
        %8853 = vmatprep.subr.bf16.mxu0 0
        %8854 = vmatpush2.bf16.msra.mxu0 %v8624
        %8855 = vmatprep.subr.bf16.mxu0 0
        %8856 = vmatpush2.bf16.msra.mxu0 %v8623
        %8857 = vmatprep.mubr.bf16.mxu0 %v8264
        %8858 = vmatmul.mubr.bf16.gmra.mxu0 %v8263
        %v8859 = vpop.f32.mrf.mxu0
        %v8860 = vadd.f32 %v8811, %v8859
        %v8861 = vpop.f32.mrf.mxu0
        %v8862 = vpop.f32.mrf.mxu0
        %v8863 = vadd.f32 %v8814, %v8862
        %v8864 = vpop.f32.mrf.mxu0
        %8865 = vmatprep.mubr.bf16.mxu0 %v8273
        %8866 = vmatmul.mubr.bf16.gmra.mxu0 %v8272
        %v8867 = vpop.f32.mrf.mxu0
        %v8868 = vadd.f32 %v8819, %v8867
        %v8869 = vpop.f32.mrf.mxu0
        %v8870 = vpop.f32.mrf.mxu0
        %v8871 = vadd.f32 %v8822, %v8870
        %v8872 = vpop.f32.mrf.mxu0
        %8873 = vdwg.mxu0
        %8874 = vmatprep.subr.bf16.mxu0 0
        %8875 = vmatpush1.bf16.msra.mxu0 %v8638
        %8876 = vmatprep.subr.bf16.mxu0 0
        %8877 = vmatpush1.bf16.msra.mxu0 %v8637
        %8878 = vmatprep.subr.bf16.mxu0 0
        %8879 = vmatpush1.bf16.msra.mxu0 %v8636
        %8880 = vmatprep.subr.bf16.mxu0 0
        %8881 = vmatpush1.bf16.msra.mxu0 %v8635
        %8882 = vmatprep.subr.bf16.mxu0 0
        %8883 = vmatpush1.bf16.msra.mxu0 %v8634
        %8884 = vmatprep.subr.bf16.mxu0 0
        %8885 = vmatpush1.bf16.msra.mxu0 %v8633
        %8886 = vmatprep.subr.bf16.mxu0 0
        %8887 = vmatpush1.bf16.msra.mxu0 %v8632
        %8888 = vmatprep.subr.bf16.mxu0 0
        %8889 = vmatpush1.bf16.msra.mxu0 %v8631
        %8890 = vmatprep.subr.bf16.mxu0 0
        %8891 = vmatpush2.bf16.msra.mxu0 %v8646
        %8892 = vmatprep.subr.bf16.mxu0 0
        %8893 = vmatpush2.bf16.msra.mxu0 %v8645
        %8894 = vmatprep.subr.bf16.mxu0 0
        %8895 = vmatpush2.bf16.msra.mxu0 %v8644
        %8896 = vmatprep.subr.bf16.mxu0 0
        %8897 = vmatpush2.bf16.msra.mxu0 %v8643
        %8898 = vmatprep.subr.bf16.mxu0 0
        %8899 = vmatpush2.bf16.msra.mxu0 %v8642
        %8900 = vmatprep.subr.bf16.mxu0 0
        %8901 = vmatpush2.bf16.msra.mxu0 %v8641
        %8902 = vmatprep.subr.bf16.mxu0 0
        %8903 = vmatpush2.bf16.msra.mxu0 %v8640
        %8904 = vmatprep.subr.bf16.mxu0 0
        %8905 = vmatpush2.bf16.msra.mxu0 %v8639
        %8906 = vmatprep.mubr.bf16.mxu0 %v8266
        %8907 = vmatmul.mubr.bf16.gmra.mxu0 %v8265
        %v8908 = vpop.f32.mrf.mxu0
        %v8909 = vadd.f32 %v8860, %v8908
        %v8910 = vpop.f32.mrf.mxu0
        %v8911 = vpop.f32.mrf.mxu0
        %v8912 = vadd.f32 %v8863, %v8911
        %v8913 = vpop.f32.mrf.mxu0
        %8914 = vmatprep.mubr.bf16.mxu0 %v8275
        %8915 = vmatmul.mubr.bf16.gmra.mxu0 %v8274
        %v8916 = vpop.f32.mrf.mxu0
        %v8917 = vadd.f32 %v8868, %v8916
        %v8918 = vpop.f32.mrf.mxu0
        %v8919 = vpop.f32.mrf.mxu0
        %v8920 = vadd.f32 %v8871, %v8919
        %v8921 = vpop.f32.mrf.mxu0
        %8922 = vdwg.mxu0
        %8923 = vmatprep.subr.bf16.mxu0 0
        %8924 = vmatpush1.bf16.msra.mxu0 %v8654
        %8925 = vmatprep.subr.bf16.mxu0 0
        %8926 = vmatpush1.bf16.msra.mxu0 %v8653
        %8927 = vmatprep.subr.bf16.mxu0 0
        %8928 = vmatpush1.bf16.msra.mxu0 %v8652
        %8929 = vmatprep.subr.bf16.mxu0 0
        %8930 = vmatpush1.bf16.msra.mxu0 %v8651
        %8931 = vmatprep.subr.bf16.mxu0 0
        %8932 = vmatpush1.bf16.msra.mxu0 %v8650
        %8933 = vmatprep.subr.bf16.mxu0 0
        %8934 = vmatpush1.bf16.msra.mxu0 %v8649
        %8935 = vmatprep.subr.bf16.mxu0 0
        %8936 = vmatpush1.bf16.msra.mxu0 %v8648
        %8937 = vmatprep.subr.bf16.mxu0 0
        %8938 = vmatpush1.bf16.msra.mxu0 %v8647
        %8939 = vmatprep.subr.bf16.mxu0 0
        %8940 = vmatpush2.bf16.msra.mxu0 0
        %8941 = vmatprep.subr.bf16.mxu0 0
        %8942 = vmatpush2.bf16.msra.mxu0 0
        %8943 = vmatprep.subr.bf16.mxu0 0
        %8944 = vmatpush2.bf16.msra.mxu0 0
        %8945 = vmatprep.subr.bf16.mxu0 0
        %8946 = vmatpush2.bf16.msra.mxu0 0
        %8947 = vmatprep.subr.bf16.mxu0 0
        %8948 = vmatpush2.bf16.msra.mxu0 0
        %8949 = vmatprep.subr.bf16.mxu0 0
        %8950 = vmatpush2.bf16.msra.mxu0 0
        %8951 = vmatprep.subr.bf16.mxu0 0
        %8952 = vmatpush2.bf16.msra.mxu0 0
        %8953 = vmatprep.subr.bf16.mxu0 0
        %8954 = vmatpush2.bf16.msra.mxu0 0
        %8955 = vmatprep.mubr.bf16.mxu0 0
        %8956 = vmatmul.mubr.bf16.gmra.mxu0 %v8267
        %v8957 = vpop.f32.mrf.mxu0
        %v8958 = vadd.f32 %v8909, %v8957
        %v8959 = vpop.f32.mrf.mxu0
        %v8960 = vpop.f32.mrf.mxu0
        %v8961 = vadd.f32 %v8912, %v8960
        %v8962 = vpop.f32.mrf.mxu0
        %8963 = vmatprep.mubr.bf16.mxu0 0
        %8964 = vmatmul.mubr.bf16.gmra.mxu0 %v8276
        %v8965 = vpop.f32.mrf.mxu0
        %v8966 = vadd.f32 %v8917, %v8965
        %v8967 = vpop.f32.mrf.mxu0
        %v8968 = vpop.f32.mrf.mxu0
        %v8969 = vadd.f32 %v8920, %v8968
        %v8970 = vpop.f32.mrf.mxu0
        %8971 = vdwg.mxu0
        %v8972 = vmin.f32 %v8958, 20.0
        %v8973 = vmin.f32 %v8961, 20.0
        %v8974 = vmin.f32 %v8966, 20.0
        %v8975 = vmin.f32 %v8969, 20.0
        %v8976 = vmul.f32 %v8972, 1.442695
        %v8977 = vpow.pop %v8976
        %v8978 = vmul.f32 %v8973, 1.442695
        %v8979 = vpow.pop %v8978
        %v8980 = vmul.f32 %v8974, 1.442695
        %v8981 = vpow.pop %v8980
        %v8982 = vmul.f32 %v8975, 1.442695
        %v8983 = vpow.pop %v8982
        %v8984 = vadd.f32 %v8977, 1.0
        %v8985 = vadd.f32 %v8979, 1.0
        %v8986 = vadd.f32 %v8981, 1.0
        %v8987 = vadd.f32 %v8983, 1.0
        %v8988 = vlog2.pop %v8984
        %v8989 = vmul.f32 %v8988, 0.6931472
        %v8990 = vlog2.pop %v8985
        %v8991 = vmul.f32 %v8990, 0.6931472
        %v8992 = vlog2.pop %v8986
        %v8993 = vmul.f32 %v8992, 0.6931472
        %v8994 = vlog2.pop %v8987
        %v8995 = vmul.f32 %v8994, 0.6931472
        %v8996 = vtanh.pop %v8989
        %v8997 = vtanh.pop %v8991
        %v8998 = vtanh.pop %v8993
        %v8999 = vtanh.pop %v8995
        %v9000 = vmul.f32 %v8958, %v8996
        %v9001 = vmul.f32 %v8961, %v8997
        %v9002 = vmul.f32 %v8966, %v8998
        %v9003 = vmul.f32 %v8969, %v8999
        %v9004 = vpack.c.bf16 %v9000, %v9000
        %v9005 = vpack.c.bf16 %v9001, %v9001
        %v9006 = vpack.c.bf16 %v9002, %v9002
        %v9007 = vpack.c.bf16 %v9003, %v9003
        %v9012 = vunpack.c.l.b16 %v9004
        %v9013 = vunpack.c.l.b16 %v9005
        %v9014 = vunpack.c.l.b16 %v9006
        %v9015 = vunpack.c.l.b16 %v9007
        %v9016 = vpack.c.b16 %v9012, %v9012
        %v9017 = vpack.c.b16 %v9013, %v9013
        %v9018 = vpack.c.b16 %v9014, %v9014
        %v9019 = vpack.c.b16 %v9015, %v9015
        %v9021 = vshrl.u32 %v9016, 16
        %v9023 = vrot.slane %v9021, 7
        %v9024 = vshll.u32 %v9016, 16
        %v9026 = vor.u32 %v9023, %v9024
        %v9028 = vshrl.u32 %v9017, 16
        %v9030 = vrot.slane %v9028, 7
        %v9031 = vshll.u32 %v9017, 16
        %v9033 = vor.u32 %v9030, %v9031
        %v9035 = vshrl.u32 %v9018, 16
        %v9037 = vrot.slane %v9035, 7
        %v9038 = vshll.u32 %v9018, 16
        %v9040 = vor.u32 %v9037, %v9038
        %v9042 = vshrl.u32 %v9019, 16
        %v9044 = vrot.slane %v9042, 7
        %v9045 = vshll.u32 %v9019, 16
        %v9047 = vor.u32 %v9044, %v9045
        %vm9052 = vcmask 518144
        %vm9053 = vmand %vm9052, %vm6633
        %v9054 = vld [vmem:[%s6631] sm:$0x7]
        %v9055 = vsel %vm9053, %v9026, %v9054
        %9056 = vst [vmem:[%s6631] sm:$0x7] %v9055
        %v9057 = vld [vmem:[%s6631 + $0x8] sm:$0x7]
        %v9058 = vsel %vm9053, %v9033, %v9057
        %9059 = vst [vmem:[%s6631 + $0x8] sm:$0x7] %v9058
        %v9060 = vld [vmem:[%s6631 + $0x10] sm:$0x7]
        %v9061 = vsel %vm9053, %v9040, %v9060
        %9062 = vst [vmem:[%s6631 + $0x10] sm:$0x7] %v9061
        %v9063 = vld [vmem:[%s6631 + $0x18] sm:$0x7]
        %v9064 = vsel %vm9053, %v9047, %v9063
        %9065 = vst [vmem:[%s6631 + $0x18] sm:$0x7] %v9064
        %v9066 = vld [vmem:[#allocation4] sm:$0xf]
        %v9067 = vld [vmem:[#allocation4 + $0x8] sm:$0xf]
        %v9068 = vld [vmem:[#allocation4 + $0x10] sm:$0xf]
        %v9069 = vld [vmem:[#allocation4 + $0x18] sm:$0xf]
        %v9070 = vld [vmem:[#allocation4 + $0x4] sm:$0x1]
        %v9071 = vld [vmem:[#allocation4 + $0xc] sm:$0x1]
        %v9072 = vld [vmem:[#allocation4 + $0x14] sm:$0x1]
        %v9073 = vld [vmem:[#allocation4 + $0x1c] sm:$0x1]
        %v9074 = vld [vmem:[#allocation4] sm:$0xe]
        %v9075 = vld [vmem:[#allocation4 + $0x8] sm:$0xe]
        %v9076 = vld [vmem:[#allocation4 + $0x10] sm:$0xe]
        %v9077 = vld [vmem:[#allocation4 + $0x18] sm:$0xe]
        %v9078 = vld [vmem:[%s6631] sm:$0xf]
        %v9079 = vld [vmem:[%s6631 + $0x8] sm:$0xf]
        %v9080 = vld [vmem:[%s6631 + $0x10] sm:$0xf]
        %v9081 = vld [vmem:[%s6631 + $0x18] sm:$0xf]
        %v9082 = vld [vmem:[%s6631 + $0x4] sm:$0x1]
        %v9083 = vld [vmem:[%s6631 + $0xc] sm:$0x1]
        %v9084 = vld [vmem:[%s6631 + $0x14] sm:$0x1]
        %v9085 = vld [vmem:[%s6631 + $0x1c] sm:$0x1]
        %v9086 = vld [vmem:[%s6631] sm:$0xe]
        %v9087 = vld [vmem:[%s6631 + $0x8] sm:$0xe]
        %v9088 = vld [vmem:[%s6631 + $0x10] sm:$0xe]
        %v9089 = vld [vmem:[%s6631 + $0x18] sm:$0xe]
        %v9090 = vld [vmem:[%s6671] sm:$0xf]
        %v9091 = vld [vmem:[%s6671 + $0x8] sm:$0xf]
        %v9092 = vld [vmem:[%s6671 + $0x10] sm:$0xf]
        %v9093 = vld [vmem:[%s6671 + $0x18] sm:$0xf]
        %v9094 = vld [vmem:[%s6671 + $0x4] sm:$0x1]
        %v9095 = vld [vmem:[%s6671 + $0xc] sm:$0x1]
        %v9096 = vld [vmem:[%s6671 + $0x14] sm:$0x1]
        %v9097 = vld [vmem:[%s6671 + $0x1c] sm:$0x1]
        %v9098 = vld [vmem:[%s6671] sm:$0xe]
        %v9099 = vld [vmem:[%s6671 + $0x8] sm:$0xe]
        %v9100 = vld [vmem:[%s6671 + $0x10] sm:$0xe]
        %v9101 = vld [vmem:[%s6671 + $0x18] sm:$0xe]
        %v9110 = vunpack.c.l.b16 %v9066
        %v9111 = vunpack.c.l.b16 %v9070
        %v9112 = vunpack.c.l.b16 %v9067
        %v9113 = vunpack.c.l.b16 %v9071
        %v9114 = vunpack.c.l.b16 %v9068
        %v9115 = vunpack.c.l.b16 %v9072
        %v9116 = vunpack.c.l.b16 %v9069
        %v9117 = vunpack.c.l.b16 %v9073
        %v9118 = vpack.c.b16 %v9111, %v9110
        %v9119 = vpack.c.b16 %v9113, %v9112
        %v9120 = vpack.c.b16 %v9115, %v9114
        %v9121 = vpack.c.b16 %v9117, %v9116
        %v9123 = vshrl.u32 %v9118, 16
        %v9125 = vshll.u32 %v9118, 16
        %v9127 = vrot.slane %v9125, 1
        %v9128 = vor.u32 %v9123, %v9127
        %v9130 = vshrl.u32 %v9119, 16
        %v9132 = vshll.u32 %v9119, 16
        %v9134 = vrot.slane %v9132, 1
        %v9135 = vor.u32 %v9130, %v9134
        %v9137 = vshrl.u32 %v9120, 16
        %v9139 = vshll.u32 %v9120, 16
        %v9141 = vrot.slane %v9139, 1
        %v9142 = vor.u32 %v9137, %v9141
        %v9144 = vshrl.u32 %v9121, 16
        %v9146 = vshll.u32 %v9121, 16
        %v9148 = vrot.slane %v9146, 1
        %v9149 = vor.u32 %v9144, %v9148
        %9150 = vrot.lane.b32.xlu0 %v9128, 64
        %v9151 = vpop.permute.xlu0 %9150
        %9152 = vrot.lane.b32.xlu0 %v9135, 64
        %v9153 = vpop.permute.xlu0 %9152
        %9154 = vrot.lane.b32.xlu0 %v9142, 64
        %v9155 = vpop.permute.xlu0 %9154
        %9156 = vrot.lane.b32.xlu0 %v9149, 64
        %v9157 = vpop.permute.xlu0 %9156
        %v9162 = vunpack.c.l.b16 %v9074
        %v9163 = vunpack.c.l.b16 %v9075
        %v9164 = vunpack.c.l.b16 %v9076
        %v9165 = vunpack.c.l.b16 %v9077
        %v9166 = vpack.c.b16 %v9111, %v9162
        %v9167 = vpack.c.b16 %v9113, %v9163
        %v9168 = vpack.c.b16 %v9115, %v9164
        %v9169 = vpack.c.b16 %v9117, %v9165
        %v9170 = vrot.slane %v9166, 1
        %v9171 = vrot.slane %v9167, 1
        %v9172 = vrot.slane %v9168, 1
        %v9173 = vrot.slane %v9169, 1
        %v9178 = vunpack.c.l.b16 %v9078
        %v9179 = vunpack.c.l.b16 %v9079
        %v9180 = vunpack.c.l.b16 %v9080
        %v9181 = vunpack.c.l.b16 %v9081
        %v9182 = vpack.c.b16 %v9178, %v9178
        %v9183 = vpack.c.b16 %v9179, %v9179
        %v9184 = vpack.c.b16 %v9180, %v9180
        %v9185 = vpack.c.b16 %v9181, %v9181
        %9186 = vrot.lane.b32.xlu0 %v9182, 64
        %v9187 = vpop.permute.xlu0 %9186
        %9188 = vrot.lane.b32.xlu0 %v9183, 64
        %v9189 = vpop.permute.xlu0 %9188
        %9190 = vrot.lane.b32.xlu0 %v9184, 64
        %v9191 = vpop.permute.xlu0 %9190
        %9192 = vrot.lane.b32.xlu0 %v9185, 64
        %v9193 = vpop.permute.xlu0 %9192
        %v9198 = vunpack.c.l.b16 %v9082
        %v9199 = vunpack.c.l.b16 %v9083
        %v9200 = vunpack.c.l.b16 %v9084
        %v9201 = vunpack.c.l.b16 %v9085
        %v9202 = vpack.c.b16 %v9198, %v9178
        %v9203 = vpack.c.b16 %v9199, %v9179
        %v9204 = vpack.c.b16 %v9200, %v9180
        %v9205 = vpack.c.b16 %v9201, %v9181
        %v9207 = vshrl.u32 %v9202, 16
        %v9209 = vshll.u32 %v9202, 16
        %v9211 = vrot.slane %v9209, 1
        %v9212 = vor.u32 %v9207, %v9211
        %v9214 = vshrl.u32 %v9203, 16
        %v9216 = vshll.u32 %v9203, 16
        %v9218 = vrot.slane %v9216, 1
        %v9219 = vor.u32 %v9214, %v9218
        %v9221 = vshrl.u32 %v9204, 16
        %v9223 = vshll.u32 %v9204, 16
        %v9225 = vrot.slane %v9223, 1
        %v9226 = vor.u32 %v9221, %v9225
        %v9228 = vshrl.u32 %v9205, 16
        %v9230 = vshll.u32 %v9205, 16
        %v9232 = vrot.slane %v9230, 1
        %v9233 = vor.u32 %v9228, %v9232
        %v9238 = vunpack.c.l.b16 %v9086
        %v9239 = vunpack.c.l.b16 %v9087
        %v9240 = vunpack.c.l.b16 %v9088
        %v9241 = vunpack.c.l.b16 %v9089
        %v9242 = vpack.c.b16 %v9198, %v9238
        %v9243 = vpack.c.b16 %v9199, %v9239
        %v9244 = vpack.c.b16 %v9200, %v9240
        %v9245 = vpack.c.b16 %v9201, %v9241
        %v9246 = vrot.slane %v9242, 1
        %v9247 = vrot.slane %v9243, 1
        %v9248 = vrot.slane %v9244, 1
        %v9249 = vrot.slane %v9245, 1
        %9250 = vrot.lane.b32.xlu0 %v9246, 64
        %v9251 = vpop.permute.xlu0 %9250
        %9252 = vrot.lane.b32.xlu0 %v9247, 64
        %v9253 = vpop.permute.xlu0 %9252
        %9254 = vrot.lane.b32.xlu0 %v9248, 64
        %v9255 = vpop.permute.xlu0 %9254
        %9256 = vrot.lane.b32.xlu0 %v9249, 64
        %v9257 = vpop.permute.xlu0 %9256
        %v9266 = vunpack.c.l.b16 %v9090
        %v9267 = vunpack.c.l.b16 %v9094
        %v9268 = vunpack.c.l.b16 %v9091
        %v9269 = vunpack.c.l.b16 %v9095
        %v9270 = vunpack.c.l.b16 %v9092
        %v9271 = vunpack.c.l.b16 %v9096
        %v9272 = vunpack.c.l.b16 %v9093
        %v9273 = vunpack.c.l.b16 %v9097
        %v9274 = vpack.c.b16 %v9267, %v9266
        %v9275 = vpack.c.b16 %v9269, %v9268
        %v9276 = vpack.c.b16 %v9271, %v9270
        %v9277 = vpack.c.b16 %v9273, %v9272
        %v9279 = vshrl.u32 %v9274, 16
        %v9281 = vshll.u32 %v9274, 16
        %v9283 = vrot.slane %v9281, 1
        %v9284 = vor.u32 %v9279, %v9283
        %v9286 = vshrl.u32 %v9275, 16
        %v9288 = vshll.u32 %v9275, 16
        %v9290 = vrot.slane %v9288, 1
        %v9291 = vor.u32 %v9286, %v9290
        %v9293 = vshrl.u32 %v9276, 16
        %v9295 = vshll.u32 %v9276, 16
        %v9297 = vrot.slane %v9295, 1
        %v9298 = vor.u32 %v9293, %v9297
        %v9300 = vshrl.u32 %v9277, 16
        %v9302 = vshll.u32 %v9277, 16
        %v9304 = vrot.slane %v9302, 1
        %v9305 = vor.u32 %v9300, %v9304
        %9306 = vrot.lane.b32.xlu0 %v9284, 64
        %v9307 = vpop.permute.xlu0 %9306
        %9308 = vrot.lane.b32.xlu0 %v9291, 64
        %v9309 = vpop.permute.xlu0 %9308
        %9310 = vrot.lane.b32.xlu0 %v9298, 64
        %v9311 = vpop.permute.xlu0 %9310
        %9312 = vrot.lane.b32.xlu0 %v9305, 64
        %v9313 = vpop.permute.xlu0 %9312
        %v9318 = vunpack.c.l.b16 %v9098
        %v9319 = vunpack.c.l.b16 %v9099
        %v9320 = vunpack.c.l.b16 %v9100
        %v9321 = vunpack.c.l.b16 %v9101
        %v9322 = vpack.c.b16 %v9267, %v9318
        %v9323 = vpack.c.b16 %v9269, %v9319
        %v9324 = vpack.c.b16 %v9271, %v9320
        %v9325 = vpack.c.b16 %v9273, %v9321
        %v9326 = vrot.slane %v9322, 1
        %v9327 = vrot.slane %v9323, 1
        %v9328 = vrot.slane %v9324, 1
        %v9329 = vrot.slane %v9325, 1
        %v9332 = vsel %vm1618, %v9066, %v9151
        %v9335 = vsel %vm1618, %v9067, %v9153
        %v9338 = vsel %vm1618, %v9068, %v9155
        %v9341 = vsel %vm1618, %v9069, %v9157
        %v9344 = vsel %vm1618, %v9170, %v9187
        %v9347 = vsel %vm1618, %v9171, %v9189
        %v9350 = vsel %vm1618, %v9172, %v9191
        %v9353 = vsel %vm1618, %v9173, %v9193
        %v9356 = vsel %vm1618, %v9212, %v9251
        %v9359 = vsel %vm1618, %v9219, %v9253
        %v9362 = vsel %vm1618, %v9226, %v9255
        %v9365 = vsel %vm1618, %v9233, %v9257
        %v9368 = vsel %vm1618, %v9090, %v9307
        %v9371 = vsel %vm1618, %v9091, %v9309
        %v9374 = vsel %vm1618, %v9092, %v9311
        %v9377 = vsel %vm1618, %v9093, %v9313
        %v9394 = vunpack.c.l.b16 %v9332
        %v9395 = vunpack.c.l.b16 %v9344
        %v9396 = vunpack.c.l.b16 %v9356
        %v9397 = vunpack.c.l.b16 %v9368
        %v9398 = vunpack.c.l.b16 %v9326
        %v9399 = vunpack.c.l.b16 %v9335
        %v9400 = vunpack.c.l.b16 %v9347
        %v9401 = vunpack.c.l.b16 %v9359
        %v9402 = vunpack.c.l.b16 %v9371
        %v9403 = vunpack.c.l.b16 %v9327
        %v9404 = vunpack.c.l.b16 %v9338
        %v9405 = vunpack.c.l.b16 %v9350
        %v9406 = vunpack.c.l.b16 %v9362
        %v9407 = vunpack.c.l.b16 %v9374
        %v9408 = vunpack.c.l.b16 %v9328
        %v9409 = vunpack.c.l.b16 %v9341
        %v9410 = vunpack.c.l.b16 %v9353
        %v9411 = vunpack.c.l.b16 %v9365
        %v9412 = vunpack.c.l.b16 %v9377
        %v9413 = vunpack.c.l.b16 %v9329
        %v9414 = vld [vmem:[%s17] sm:$0xf]
        %v9415 = vld [vmem:[%s17 + $0x4] sm:$0xf]
        %v9416 = vld [vmem:[%s17 + $0x8] sm:$0xf]
        %v9417 = vld [vmem:[%s17 + $0xc] sm:$0xf]
        %v9418 = vld [vmem:[%s17 + $0x10] sm:$0xf]
        %v9419 = vld [vmem:[%s17 + $0x14] sm:$0xf]
        %v9420 = vld [vmem:[%s17 + $0x18] sm:$0xf]
        %v9421 = vld [vmem:[%s17 + $0x1c] sm:$0xf]
        %v9422 = vld [vmem:[%s17 + $0x20] sm:$0xf]
        %v9423 = vld [vmem:[%s17 + $0x24] sm:$0xf]
        %v9424 = vld [vmem:[%s17 + $0x28] sm:$0xf]
        %v9425 = vld [vmem:[%s17 + $0x2c] sm:$0xf]
        %v9426 = vld [vmem:[%s17 + $0x30] sm:$0xf]
        %v9427 = vld [vmem:[%s17 + $0x34] sm:$0xf]
        %v9428 = vld [vmem:[%s17 + $0x38] sm:$0xf]
        %v9429 = vld [vmem:[%s17 + $0x3c] sm:$0xf]
        %v9430 = vld [vmem:[%s17 + $0x40] sm:$0xf]
        %v9431 = vld [vmem:[%s17 + $0x44] sm:$0xf]
        %v9432 = vld [vmem:[%s17 + $0x48] sm:$0xf]
        %v9433 = vld [vmem:[%s17 + $0x4c] sm:$0xf]
        %v9434 = vld [vmem:[%s17 + $0x50] sm:$0xf]
        %v9435 = vld [vmem:[%s17 + $0x54] sm:$0xf]
        %v9436 = vld [vmem:[%s17 + $0x58] sm:$0xf]
        %v9437 = vld [vmem:[%s17 + $0x5c] sm:$0xf]
        %v9438 = vld [vmem:[%s17 + $0x60] sm:$0xf]
        %v9439 = vld [vmem:[%s17 + $0x64] sm:$0xf]
        %v9440 = vld [vmem:[%s17 + $0x68] sm:$0xf]
        %v9441 = vld [vmem:[%s17 + $0x6c] sm:$0xf]
        %v9442 = vld [vmem:[%s17 + $0x70] sm:$0xf]
        %v9443 = vld [vmem:[%s17 + $0x74] sm:$0xf]
        %v9444 = vld [vmem:[%s17 + $0x78] sm:$0xf]
        %v9445 = vld [vmem:[%s17 + $0x7c] sm:$0xf]
        %v9446 = vld [vmem:[%s17 + $0x80] sm:$0xf]
        %v9447 = vld [vmem:[%s17 + $0x84] sm:$0xf]
        %v9448 = vld [vmem:[%s17 + $0x88] sm:$0xf]
        %v9449 = vld [vmem:[%s17 + $0x8c] sm:$0xf]
        %v9450 = vld [vmem:[%s17 + $0x90] sm:$0xf]
        %v9451 = vld [vmem:[%s17 + $0x94] sm:$0xf]
        %v9452 = vld [vmem:[%s17 + $0x98] sm:$0xf]
        %v9453 = vld [vmem:[%s17 + $0x9c] sm:$0xf]
        %v9454 = vld [vmem:[%s17 + $0xa0] sm:$0xf]
        %v9455 = vld [vmem:[%s17 + $0xa4] sm:$0xf]
        %v9456 = vld [vmem:[%s17 + $0xa8] sm:$0xf]
        %v9457 = vld [vmem:[%s17 + $0xac] sm:$0xf]
        %v9458 = vld [vmem:[%s17 + $0xb0] sm:$0xf]
        %v9459 = vld [vmem:[%s17 + $0xb4] sm:$0xf]
        %v9460 = vld [vmem:[%s17 + $0xb8] sm:$0xf]
        %v9461 = vld [vmem:[%s17 + $0xbc] sm:$0xf]
        %v9462 = vld [vmem:[%s17 + $0xc0] sm:$0xf]
        %v9463 = vld [vmem:[%s17 + $0xc4] sm:$0xf]
        %v9464 = vld [vmem:[%s17 + $0xc8] sm:$0xf]
        %v9465 = vld [vmem:[%s17 + $0xcc] sm:$0xf]
        %v9466 = vld [vmem:[%s17 + $0xd0] sm:$0xf]
        %v9467 = vld [vmem:[%s17 + $0xd4] sm:$0xf]
        %v9468 = vld [vmem:[%s17 + $0xd8] sm:$0xf]
        %v9469 = vld [vmem:[%s17 + $0xdc] sm:$0xf]
        %v9470 = vld [vmem:[%s17 + $0xe0] sm:$0xf]
        %v9471 = vld [vmem:[%s17 + $0xe4] sm:$0xf]
        %v9472 = vld [vmem:[%s17 + $0xe8] sm:$0xf]
        %v9473 = vld [vmem:[%s17 + $0xec] sm:$0xf]
        %v9474 = vld [vmem:[%s17 + $0xf0] sm:$0xf]
        %v9475 = vld [vmem:[%s17 + $0xf4] sm:$0xf]
        %v9476 = vld [vmem:[%s17 + $0xf8] sm:$0xf]
        %v9477 = vld [vmem:[%s17 + $0xfc] sm:$0xf]
        %v9478 = vld [vmem:[%s17 + $0x100] sm:$0xf]
        %v9479 = vld [vmem:[%s17 + $0x104] sm:$0xf]
        %v9480 = vld [vmem:[%s17 + $0x108] sm:$0xf]
        %v9481 = vld [vmem:[%s17 + $0x10c] sm:$0xf]
        %v9482 = vld [vmem:[%s17 + $0x110] sm:$0xf]
        %v9483 = vld [vmem:[%s17 + $0x114] sm:$0xf]
        %v9484 = vld [vmem:[%s17 + $0x118] sm:$0xf]
        %v9485 = vld [vmem:[%s17 + $0x11c] sm:$0xf]
        %v9486 = vld [vmem:[%s18] sm:$0x1]
        %v9488 = vlaneseq
        %v9489 = vshrl.u32 %v9488, 7
        %v9490 = vsub.s32 0, %v9489
        %v9491 = vrot.slane %v9486, %v9490
        %v9493 = vpack.c.b16 %v9399, %v9394
        %v9494 = vpack.c.b16 %v9400, %v9395
        %v9495 = vpack.c.b16 %v9401, %v9396
        %v9496 = vpack.c.b16 %v9402, %v9397
        %v9497 = vpack.c.b16 %v9403, %v9398
        %v9498 = vpack.c.b16 %v9409, %v9404
        %v9499 = vpack.c.b16 %v9410, %v9405
        %v9500 = vpack.c.b16 %v9411, %v9406
        %v9501 = vpack.c.b16 %v9412, %v9407
        %v9502 = vpack.c.b16 %v9413, %v9408
        %v9583 = vunpack.c.l.b16 %v9414
        %v9584 = vunpack.c.l.b16 %v9415
        %v9585 = vunpack.c.l.b16 %v9416
        %v9586 = vunpack.c.l.b16 %v9417
        %v9587 = vunpack.c.l.b16 %v9418
        %v9588 = vunpack.c.l.b16 %v9419
        %v9589 = vunpack.c.l.b16 %v9420
        %v9590 = vunpack.c.l.b16 %v9421
        %v9591 = vunpack.c.l.b16 %v9422
        %v9592 = vunpack.c.l.b16 %v9423
        %v9593 = vunpack.c.l.b16 %v9424
        %v9594 = vunpack.c.l.b16 %v9425
        %v9595 = vunpack.c.l.b16 %v9426
        %v9596 = vunpack.c.l.b16 %v9427
        %v9597 = vunpack.c.l.b16 %v9428
        %v9598 = vunpack.c.l.b16 %v9429
        %v9599 = vunpack.c.l.b16 %v9430
        %v9600 = vunpack.c.l.b16 %v9431
        %v9601 = vunpack.c.l.b16 %v9432
        %v9602 = vunpack.c.l.b16 %v9433
        %v9603 = vunpack.c.l.b16 %v9434
        %v9604 = vunpack.c.l.b16 %v9435
        %v9605 = vunpack.c.l.b16 %v9436
        %v9606 = vunpack.c.l.b16 %v9437
        %v9607 = vunpack.c.l.b16 %v9438
        %v9608 = vunpack.c.l.b16 %v9439
        %v9609 = vunpack.c.l.b16 %v9440
        %v9610 = vunpack.c.l.b16 %v9441
        %v9611 = vunpack.c.l.b16 %v9442
        %v9612 = vunpack.c.l.b16 %v9443
        %v9613 = vunpack.c.l.b16 %v9444
        %v9614 = vunpack.c.l.b16 %v9445
        %v9615 = vunpack.c.l.b16 %v9446
        %v9616 = vunpack.c.l.b16 %v9447
        %v9617 = vunpack.c.l.b16 %v9448
        %v9618 = vunpack.c.l.b16 %v9449
        %v9619 = vunpack.c.l.b16 %v9450
        %v9620 = vunpack.c.l.b16 %v9451
        %v9621 = vunpack.c.l.b16 %v9452
        %v9622 = vunpack.c.l.b16 %v9453
        %v9623 = vunpack.c.l.b16 %v9454
        %v9624 = vunpack.c.l.b16 %v9455
        %v9625 = vunpack.c.l.b16 %v9456
        %v9626 = vunpack.c.l.b16 %v9457
        %v9627 = vunpack.c.l.b16 %v9458
        %v9628 = vunpack.c.l.b16 %v9459
        %v9629 = vunpack.c.l.b16 %v9460
        %v9630 = vunpack.c.l.b16 %v9461
        %v9631 = vunpack.c.l.b16 %v9462
        %v9632 = vunpack.c.l.b16 %v9463
        %v9633 = vunpack.c.l.b16 %v9464
        %v9634 = vunpack.c.l.b16 %v9465
        %v9635 = vunpack.c.l.b16 %v9466
        %v9636 = vunpack.c.l.b16 %v9467
        %v9637 = vunpack.c.l.b16 %v9468
        %v9638 = vunpack.c.l.b16 %v9469
        %v9639 = vunpack.c.l.b16 %v9470
        %v9640 = vunpack.c.l.b16 %v9471
        %v9641 = vunpack.c.l.b16 %v9472
        %v9642 = vunpack.c.l.b16 %v9473
        %v9643 = vunpack.c.l.b16 %v9474
        %v9644 = vunpack.c.l.b16 %v9475
        %v9645 = vunpack.c.l.b16 %v9476
        %v9646 = vunpack.c.l.b16 %v9477
        %v9647 = vunpack.c.l.b16 %v9478
        %v9648 = vunpack.c.l.b16 %v9479
        %v9649 = vunpack.c.l.b16 %v9480
        %v9650 = vunpack.c.l.b16 %v9481
        %v9651 = vunpack.c.l.b16 %v9482
        %v9652 = vunpack.c.l.b16 %v9483
        %v9653 = vunpack.c.l.b16 %v9484
        %v9654 = vunpack.c.l.b16 %v9485
        %v9655 = vpack.c.b16 %v9584, %v9583
        %v9656 = vpack.c.b16 %v9586, %v9585
        %v9657 = vpack.c.b16 %v9588, %v9587
        %v9658 = vpack.c.b16 %v9590, %v9589
        %v9659 = vpack.c.b16 %v9592, %v9591
        %v9660 = vpack.c.b16 %v9594, %v9593
        %v9661 = vpack.c.b16 %v9596, %v9595
        %v9662 = vpack.c.b16 %v9598, %v9597
        %v9663 = vpack.c.b16 %v9600, %v9599
        %v9664 = vpack.c.b16 %v9602, %v9601
        %v9665 = vpack.c.b16 %v9604, %v9603
        %v9666 = vpack.c.b16 %v9606, %v9605
        %v9667 = vpack.c.b16 %v9608, %v9607
        %v9668 = vpack.c.b16 %v9610, %v9609
        %v9669 = vpack.c.b16 %v9612, %v9611
        %v9670 = vpack.c.b16 %v9614, %v9613
        %v9671 = vpack.c.b16 %v9616, %v9615
        %v9672 = vpack.c.b16 %v9618, %v9617
        %v9673 = vpack.c.b16 %v9620, %v9619
        %v9674 = vpack.c.b16 %v9622, %v9621
        %v9675 = vpack.c.b16 %v9624, %v9623
        %v9676 = vpack.c.b16 %v9626, %v9625
        %v9677 = vpack.c.b16 %v9628, %v9627
        %v9678 = vpack.c.b16 %v9630, %v9629
        %v9679 = vpack.c.b16 %v9632, %v9631
        %v9680 = vpack.c.b16 %v9634, %v9633
        %v9681 = vpack.c.b16 %v9636, %v9635
        %v9682 = vpack.c.b16 %v9638, %v9637
        %v9683 = vpack.c.b16 %v9640, %v9639
        %v9684 = vpack.c.b16 %v9642, %v9641
        %v9685 = vpack.c.b16 %v9644, %v9643
        %v9686 = vpack.c.b16 %v9646, %v9645
        %v9687 = vpack.c.b16 %v9648, %v9647
        %v9688 = vpack.c.b16 %v9650, %v9649
        %v9689 = vpack.c.b16 %v9652, %v9651
        %v9690 = vpack.c.b16 %v9654, %v9653
        %v9728 = vsel %vm1618, %v9497, 0
        %v9731 = vsel %vm1618, %v9502, 0
        %9733 = vmatprep.subr.bf16.mxu0 0
        %9734 = vmatpush1.bf16.msra.mxu0 %v9662
        %9735 = vmatprep.subr.bf16.mxu0 0
        %9736 = vmatpush1.bf16.msra.mxu0 %v9661
        %9737 = vmatprep.subr.bf16.mxu0 0
        %9738 = vmatpush1.bf16.msra.mxu0 %v9660
        %9739 = vmatprep.subr.bf16.mxu0 0
        %9740 = vmatpush1.bf16.msra.mxu0 %v9659
        %9741 = vmatprep.subr.bf16.mxu0 0
        %9742 = vmatpush1.bf16.msra.mxu0 %v9658
        %9743 = vmatprep.subr.bf16.mxu0 0
        %9744 = vmatpush1.bf16.msra.mxu0 %v9657
        %9745 = vmatprep.subr.bf16.mxu0 0
        %9746 = vmatpush1.bf16.msra.mxu0 %v9656
        %9747 = vmatprep.subr.bf16.mxu0 0
        %9748 = vmatpush1.bf16.msra.mxu0 %v9655
        %9749 = vmatprep.subr.bf16.mxu0 0
        %9750 = vmatpush2.bf16.msra.mxu0 %v9670
        %9751 = vmatprep.subr.bf16.mxu0 0
        %9752 = vmatpush2.bf16.msra.mxu0 %v9669
        %9753 = vmatprep.subr.bf16.mxu0 0
        %9754 = vmatpush2.bf16.msra.mxu0 %v9668
        %9755 = vmatprep.subr.bf16.mxu0 0
        %9756 = vmatpush2.bf16.msra.mxu0 %v9667
        %9757 = vmatprep.subr.bf16.mxu0 0
        %9758 = vmatpush2.bf16.msra.mxu0 %v9666
        %9759 = vmatprep.subr.bf16.mxu0 0
        %9760 = vmatpush2.bf16.msra.mxu0 %v9665
        %9761 = vmatprep.subr.bf16.mxu0 0
        %9762 = vmatpush2.bf16.msra.mxu0 %v9664
        %9763 = vmatprep.subr.bf16.mxu0 0
        %9764 = vmatpush2.bf16.msra.mxu0 %v9663
        %9765 = vmatprep.mubr.bf16.mxu0 %v9494
        %9766 = vmatmul.mubr.bf16.gmra.mxu0 %v9493
        %v9767 = vpop.f32.mrf.mxu0
        %v9768 = vadd.f32 %v9491, %v9767
        %v9769 = vpop.f32.mrf.mxu0
        %v9770 = vpop.f32.mrf.mxu0
        %v9771 = vadd.f32 %v9491, %v9770
        %v9772 = vpop.f32.mrf.mxu0
        %9773 = vmatprep.mubr.bf16.mxu0 %v9499
        %9774 = vmatmul.mubr.bf16.gmra.mxu0 %v9498
        %v9775 = vpop.f32.mrf.mxu0
        %v9776 = vadd.f32 %v9491, %v9775
        %v9777 = vpop.f32.mrf.mxu0
        %v9778 = vpop.f32.mrf.mxu0
        %v9779 = vadd.f32 %v9491, %v9778
        %v9780 = vpop.f32.mrf.mxu0
        %9781 = vdwg.mxu0
        %9782 = vmatprep.subr.bf16.mxu0 0
        %9783 = vmatpush1.bf16.msra.mxu0 %v9678
        %9784 = vmatprep.subr.bf16.mxu0 0
        %9785 = vmatpush1.bf16.msra.mxu0 %v9677
        %9786 = vmatprep.subr.bf16.mxu0 0
        %9787 = vmatpush1.bf16.msra.mxu0 %v9676
        %9788 = vmatprep.subr.bf16.mxu0 0
        %9789 = vmatpush1.bf16.msra.mxu0 %v9675
        %9790 = vmatprep.subr.bf16.mxu0 0
        %9791 = vmatpush1.bf16.msra.mxu0 %v9674
        %9792 = vmatprep.subr.bf16.mxu0 0
        %9793 = vmatpush1.bf16.msra.mxu0 %v9673
        %9794 = vmatprep.subr.bf16.mxu0 0
        %9795 = vmatpush1.bf16.msra.mxu0 %v9672
        %9796 = vmatprep.subr.bf16.mxu0 0
        %9797 = vmatpush1.bf16.msra.mxu0 %v9671
        %9798 = vmatprep.subr.bf16.mxu0 0
        %9799 = vmatpush2.bf16.msra.mxu0 %v9686
        %9800 = vmatprep.subr.bf16.mxu0 0
        %9801 = vmatpush2.bf16.msra.mxu0 %v9685
        %9802 = vmatprep.subr.bf16.mxu0 0
        %9803 = vmatpush2.bf16.msra.mxu0 %v9684
        %9804 = vmatprep.subr.bf16.mxu0 0
        %9805 = vmatpush2.bf16.msra.mxu0 %v9683
        %9806 = vmatprep.subr.bf16.mxu0 0
        %9807 = vmatpush2.bf16.msra.mxu0 %v9682
        %9808 = vmatprep.subr.bf16.mxu0 0
        %9809 = vmatpush2.bf16.msra.mxu0 %v9681
        %9810 = vmatprep.subr.bf16.mxu0 0
        %9811 = vmatpush2.bf16.msra.mxu0 %v9680
        %9812 = vmatprep.subr.bf16.mxu0 0
        %9813 = vmatpush2.bf16.msra.mxu0 %v9679
        %9814 = vmatprep.mubr.bf16.mxu0 %v9496
        %9815 = vmatmul.mubr.bf16.gmra.mxu0 %v9495
        %v9816 = vpop.f32.mrf.mxu0
        %v9817 = vadd.f32 %v9768, %v9816
        %v9818 = vpop.f32.mrf.mxu0
        %v9819 = vpop.f32.mrf.mxu0
        %v9820 = vadd.f32 %v9771, %v9819
        %v9821 = vpop.f32.mrf.mxu0
        %9822 = vmatprep.mubr.bf16.mxu0 %v9501
        %9823 = vmatmul.mubr.bf16.gmra.mxu0 %v9500
        %v9824 = vpop.f32.mrf.mxu0
        %v9825 = vadd.f32 %v9776, %v9824
        %v9826 = vpop.f32.mrf.mxu0
        %v9827 = vpop.f32.mrf.mxu0
        %v9828 = vadd.f32 %v9779, %v9827
        %v9829 = vpop.f32.mrf.mxu0
        %9830 = vdwg.mxu0
        %9831 = vmatprep.subr.bf16.mxu0 0
        %9832 = vmatpush1.bf16.msra.mxu0 0
        %9833 = vmatprep.subr.bf16.mxu0 0
        %9834 = vmatpush1.bf16.msra.mxu0 0
        %9835 = vmatprep.subr.bf16.mxu0 0
        %9836 = vmatpush1.bf16.msra.mxu0 0
        %9837 = vmatprep.subr.bf16.mxu0 0
        %9838 = vmatpush1.bf16.msra.mxu0 0
        %9839 = vmatprep.subr.bf16.mxu0 0
        %9840 = vmatpush1.bf16.msra.mxu0 %v9690
        %9841 = vmatprep.subr.bf16.mxu0 0
        %9842 = vmatpush1.bf16.msra.mxu0 %v9689
        %9843 = vmatprep.subr.bf16.mxu0 0
        %9844 = vmatpush1.bf16.msra.mxu0 %v9688
        %9845 = vmatprep.subr.bf16.mxu0 0
        %9846 = vmatpush1.bf16.msra.mxu0 %v9687
        %9847 = vmatprep.subr.bf16.mxu0 0
        %9848 = vmatpush2.bf16.msra.mxu0 0
        %9849 = vmatprep.subr.bf16.mxu0 0
        %9850 = vmatpush2.bf16.msra.mxu0 0
        %9851 = vmatprep.subr.bf16.mxu0 0
        %9852 = vmatpush2.bf16.msra.mxu0 0
        %9853 = vmatprep.subr.bf16.mxu0 0
        %9854 = vmatpush2.bf16.msra.mxu0 0
        %9855 = vmatprep.subr.bf16.mxu0 0
        %9856 = vmatpush2.bf16.msra.mxu0 0
        %9857 = vmatprep.subr.bf16.mxu0 0
        %9858 = vmatpush2.bf16.msra.mxu0 0
        %9859 = vmatprep.subr.bf16.mxu0 0
        %9860 = vmatpush2.bf16.msra.mxu0 0
        %9861 = vmatprep.subr.bf16.mxu0 0
        %9862 = vmatpush2.bf16.msra.mxu0 0
        %9863 = vmatprep.mubr.bf16.mxu0 0
        %9864 = vmatmul.mubr.bf16.gmra.mxu0 %v9728
        %v9865 = vpop.f32.mrf.mxu0
        %v9866 = vadd.f32 %v9817, %v9865
        %v9867 = vpop.f32.mrf.mxu0
        %v9868 = vpop.f32.mrf.mxu0
        %v9869 = vadd.f32 %v9820, %v9868
        %v9870 = vpop.f32.mrf.mxu0
        %9871 = vmatprep.mubr.bf16.mxu0 0
        %9872 = vmatmul.mubr.bf16.gmra.mxu0 %v9731
        %v9873 = vpop.f32.mrf.mxu0
        %v9874 = vadd.f32 %v9825, %v9873
        %v9875 = vpop.f32.mrf.mxu0
        %v9876 = vpop.f32.mrf.mxu0
        %v9877 = vadd.f32 %v9828, %v9876
        %v9878 = vpop.f32.mrf.mxu0
        %9879 = vdwg.mxu0
        %v9880 = vmin.f32 %v9866, 20.0
        %v9881 = vmin.f32 %v9869, 20.0
        %v9882 = vmin.f32 %v9874, 20.0
        %v9883 = vmin.f32 %v9877, 20.0
        %v9884 = vmul.f32 %v9880, 1.442695
        %v9885 = vpow.pop %v9884
        %v9886 = vmul.f32 %v9881, 1.442695
        %v9887 = vpow.pop %v9886
        %v9888 = vmul.f32 %v9882, 1.442695
        %v9889 = vpow.pop %v9888
        %v9890 = vmul.f32 %v9883, 1.442695
        %v9891 = vpow.pop %v9890
        %v9892 = vadd.f32 %v9885, 1.0
        %v9893 = vadd.f32 %v9887, 1.0
        %v9894 = vadd.f32 %v9889, 1.0
        %v9895 = vadd.f32 %v9891, 1.0
        %v9896 = vlog2.pop %v9892
        %v9897 = vmul.f32 %v9896, 0.6931472
        %v9898 = vlog2.pop %v9893
        %v9899 = vmul.f32 %v9898, 0.6931472
        %v9900 = vlog2.pop %v9894
        %v9901 = vmul.f32 %v9900, 0.6931472
        %v9902 = vlog2.pop %v9895
        %v9903 = vmul.f32 %v9902, 0.6931472
        %v9904 = vtanh.pop %v9897
        %v9905 = vtanh.pop %v9899
        %v9906 = vtanh.pop %v9901
        %v9907 = vtanh.pop %v9903
        %v9908 = vmul.f32 %v9866, %v9904
        %v9909 = vmul.f32 %v9869, %v9905
        %v9910 = vmul.f32 %v9874, %v9906
        %v9911 = vmul.f32 %v9877, %v9907
        %9916 = vrot.lane.b32.xlu0 %v9000, 64
        %v9917 = vpop.permute.xlu0 %9916
        %9918 = vrot.lane.b32.xlu0 %v9001, 64
        %v9919 = vpop.permute.xlu0 %9918
        %9920 = vrot.lane.b32.xlu0 %v9002, 64
        %v9921 = vpop.permute.xlu0 %9920
        %9922 = vrot.lane.b32.xlu0 %v9003, 64
        %v9923 = vpop.permute.xlu0 %9922
        %v9928 = vsel %vm1618, %v9908, %v9917
        %v9929 = vsel %vm1618, %v9909, %v9919
        %v9930 = vsel %vm1618, %v9910, %v9921
        %v9931 = vsel %vm1618, %v9911, %v9923
        %v9932 = vpack.c.bf16 %v9929, %v9928
        %v9933 = vpack.c.bf16 %v9931, %v9930
        %v9934 = vld [vmem:[%s19] sm:$0xf]
        %v9935 = vld [vmem:[%s19 + $0x4] sm:$0xf]
        %v9936 = vld [vmem:[%s19 + $0x8] sm:$0xf]
        %v9937 = vld [vmem:[%s19 + $0xc] sm:$0xf]
        %v9938 = vld [vmem:[%s19 + $0x10] sm:$0xf]
        %v9939 = vld [vmem:[%s19 + $0x14] sm:$0xf]
        %v9940 = vld [vmem:[%s19 + $0x18] sm:$0xf]
        %v9941 = vld [vmem:[%s19 + $0x1c] sm:$0xf]
        %v9942 = vld [vmem:[%s19 + $0x20] sm:$0xf]
        %v9943 = vld [vmem:[%s19 + $0x24] sm:$0xf]
        %v9944 = vld [vmem:[%s19 + $0x28] sm:$0xf]
        %v9945 = vld [vmem:[%s19 + $0x2c] sm:$0xf]
        %v9946 = vld [vmem:[%s19 + $0x30] sm:$0xf]
        %v9947 = vld [vmem:[%s19 + $0x34] sm:$0xf]
        %v9948 = vld [vmem:[%s19 + $0x38] sm:$0xf]
        %v9949 = vld [vmem:[%s19 + $0x3c] sm:$0xf]
        %v9950 = vld [vmem:[%s20] sm:$0x1]
        %v9952 = vlaneseq
        %v9953 = vshrl.u32 %v9952, 7
        %v9954 = vsub.s32 0, %v9953
        %v9955 = vrot.slane %v9950, %v9954
        %v9973 = vunpack.c.l.b16 %v9934
        %v9974 = vunpack.c.l.b16 %v9935
        %v9975 = vunpack.c.l.b16 %v9936
        %v9976 = vunpack.c.l.b16 %v9937
        %v9977 = vunpack.c.l.b16 %v9938
        %v9978 = vunpack.c.l.b16 %v9939
        %v9979 = vunpack.c.l.b16 %v9940
        %v9980 = vunpack.c.l.b16 %v9941
        %v9981 = vunpack.c.l.b16 %v9942
        %v9982 = vunpack.c.l.b16 %v9943
        %v9983 = vunpack.c.l.b16 %v9944
        %v9984 = vunpack.c.l.b16 %v9945
        %v9985 = vunpack.c.l.b16 %v9946
        %v9986 = vunpack.c.l.b16 %v9947
        %v9987 = vunpack.c.l.b16 %v9948
        %v9988 = vunpack.c.l.b16 %v9949
        %v9989 = vpack.c.b16 %v9974, %v9973
        %v9990 = vpack.c.b16 %v9976, %v9975
        %v9991 = vpack.c.b16 %v9978, %v9977
        %v9992 = vpack.c.b16 %v9980, %v9979
        %v9993 = vpack.c.b16 %v9982, %v9981
        %v9994 = vpack.c.b16 %v9984, %v9983
        %v9995 = vpack.c.b16 %v9986, %v9985
        %v9996 = vpack.c.b16 %v9988, %v9987
        %10005 = vmatprep.subr.bf16.mxu0 0
        %10006 = vmatpush1.bf16.msra.mxu0 %v9996
        %10007 = vmatprep.subr.bf16.mxu0 0
        %10008 = vmatpush1.bf16.msra.mxu0 %v9995
        %10009 = vmatprep.subr.bf16.mxu0 0
        %10010 = vmatpush1.bf16.msra.mxu0 %v9994
        %10011 = vmatprep.subr.bf16.mxu0 0
        %10012 = vmatpush1.bf16.msra.mxu0 %v9993
        %10013 = vmatprep.subr.bf16.mxu0 0
        %10014 = vmatpush1.bf16.msra.mxu0 %v9992
        %10015 = vmatprep.subr.bf16.mxu0 0
        %10016 = vmatpush1.bf16.msra.mxu0 %v9991
        %10017 = vmatprep.subr.bf16.mxu0 0
        %10018 = vmatpush1.bf16.msra.mxu0 %v9990
        %10019 = vmatprep.subr.bf16.mxu0 0
        %10020 = vmatpush1.bf16.msra.mxu0 %v9989
        %10021 = vmatprep.subr.bf16.mxu0 0
        %10022 = vmatpush2.bf16.msra.mxu0 0
        %10023 = vmatprep.subr.bf16.mxu0 0
        %10024 = vmatpush2.bf16.msra.mxu0 0
        %10025 = vmatprep.subr.bf16.mxu0 0
        %10026 = vmatpush2.bf16.msra.mxu0 0
        %10027 = vmatprep.subr.bf16.mxu0 0
        %10028 = vmatpush2.bf16.msra.mxu0 0
        %10029 = vmatprep.subr.bf16.mxu0 0
        %10030 = vmatpush2.bf16.msra.mxu0 0
        %10031 = vmatprep.subr.bf16.mxu0 0
        %10032 = vmatpush2.bf16.msra.mxu0 0
        %10033 = vmatprep.subr.bf16.mxu0 0
        %10034 = vmatpush2.bf16.msra.mxu0 0
        %10035 = vmatprep.subr.bf16.mxu0 0
        %10036 = vmatpush2.bf16.msra.mxu0 0
        %10037 = vmatprep.mubr.bf16.mxu0 0
        %10038 = vmatmul.mubr.bf16.gmra.mxu0 %v9932
        %v10039 = vpop.f32.mrf.mxu0
        %v10040 = vadd.f32 %v9955, %v10039
        %v10041 = vpop.f32.mrf.mxu0
        %v10042 = vpop.f32.mrf.mxu0
        %v10043 = vadd.f32 %v9955, %v10042
        %v10044 = vpop.f32.mrf.mxu0
        %10045 = vmatprep.mubr.bf16.mxu0 0
        %10046 = vmatmul.mubr.bf16.gmra.mxu0 %v9933
        %v10047 = vpop.f32.mrf.mxu0
        %v10048 = vadd.f32 %v9955, %v10047
        %v10049 = vpop.f32.mrf.mxu0
        %v10050 = vpop.f32.mrf.mxu0
        %v10051 = vadd.f32 %v9955, %v10050
        %v10052 = vpop.f32.mrf.mxu0
        %10053 = vdwg.mxu0
        %v10054 = vmin.f32 %v10040, 20.0
        %v10055 = vmin.f32 %v10043, 20.0
        %v10056 = vmin.f32 %v10048, 20.0
        %v10057 = vmin.f32 %v10051, 20.0
        %v10058 = vmul.f32 %v10054, 1.442695
        %v10059 = vpow.pop %v10058
        %v10060 = vmul.f32 %v10055, 1.442695
        %v10061 = vpow.pop %v10060
        %v10062 = vmul.f32 %v10056, 1.442695
        %v10063 = vpow.pop %v10062
        %v10064 = vmul.f32 %v10057, 1.442695
        %v10065 = vpow.pop %v10064
        %v10066 = vadd.f32 %v10059, 1.0
        %v10067 = vadd.f32 %v10061, 1.0
        %v10068 = vadd.f32 %v10063, 1.0
        %v10069 = vadd.f32 %v10065, 1.0
        %v10070 = vlog2.pop %v10066
        %v10071 = vmul.f32 %v10070, 0.6931472
        %v10072 = vlog2.pop %v10067
        %v10073 = vmul.f32 %v10072, 0.6931472
        %v10074 = vlog2.pop %v10068
        %v10075 = vmul.f32 %v10074, 0.6931472
        %v10076 = vlog2.pop %v10069
        %v10077 = vmul.f32 %v10076, 0.6931472
        %v10078 = vtanh.pop %v10071
        %v10079 = vtanh.pop %v10073
        %v10080 = vtanh.pop %v10075
        %v10081 = vtanh.pop %v10077
        %v10082 = vmul.f32 %v10040, %v10078
        %v10083 = vmul.f32 %v10043, %v10079
        %v10084 = vmul.f32 %v10048, %v10080
        %v10085 = vmul.f32 %v10051, %v10081
        %v10086 = vmax.f32 %v10082, %v10083
        %v10087 = vmax.f32 %v10084, %v10085
        %10088 = vst [vmem:[#allocation5] sm:$0xf] %v10086
        %10089 = vst [vmem:[#allocation5 + $0x8] sm:$0xf] %v10087
        %v10090 = vld [vmem:[#allocation5] ss:$2 sm:$0x3]
        %s10091 = scalar_lea.vmem [#allocation5], 8
        %v10092 = vld [vmem:[%s10091] ss:$2 sm:$0x3]
        %v10093 = vld [vmem:[%s6531] ss:$2 sm:$0x3]
        %v10094 = vld [vmem:[%s6533] ss:$2 sm:$0x3]
        %v10095 = vmax.f32 %v10090, %v10093
        %v10096 = vmax.f32 %v10092, %v10094
        %10097 = vst [vmem:[%s649] sm:$0x3] %v10095
        %10098 = vst [vmem:[%s649 + $0x4] sm:$0x3] %v10096
        %v10099 = vmax.f32 %v7792, %v7793
        %v10100 = vmax.f32 %v7794, %v7795
        %10101 = vst [vmem:[#allocation5] sm:$0xf] %v10099
        %10102 = vst [vmem:[#allocation5 + $0x8] sm:$0xf] %v10100
        %v10103 = vld [vmem:[#allocation5] ss:$2 sm:$0x3]
        %v10104 = vld [vmem:[%s10091] ss:$2 sm:$0x3]
        %v10105 = vld [vmem:[%s6531] ss:$2 sm:$0x3]
        %v10106 = vld [vmem:[%s6533] ss:$2 sm:$0x3]
        %v10107 = vmax.f32 %v10103, %v10105
        %v10108 = vmax.f32 %v10104, %v10106
        %10109 = vst [vmem:[%s649 + $0x2] sm:$0x3] %v10107
        %10110 = vst [vmem:[%s649 + $0x6] sm:$0x3] %v10108
        %s10111 = sand.u32 %s489, 1
        %s10112 = scalar_lea.sflag [#allocation7], %s10111
        %s10113 = sand.u32 %s489, 1
        %s10114 = smul.addr %s10113, 8
        %s10115 = scalar_lea.vmem [#allocation6], %s10114
        // Predicated region
        $region105: #{tinybone_forward.1} parent=103 // pred_check
          %p10116 = pneg %p499
        $region106: #{tinybone_forward.1} parent=103 // pred_check_branch
          %10118 = sbr.rel (%p10116) target = $region108
        $region107: #{tinybone_forward.1} parent=103 // pred_region
          %s10120 = ssub.s32 128, 128
          %10121 = vsyncadd %s10112, %s10120
          %s10122 = smul.addr %s35, 4
          %s10123 = smul.addr %s10122, 32
          %s10124 = scalar_lea.hbm %s21, %s10123
          %s10125 = sshll.u32 %s10115, 4
          %s10126 = int_to_ptr.vmem [resolvable:$true] %s10125
          %10131 = dma.vmem_to_hbm [thread:$0]  %s10126, 128, %s10124, %s10112, 64, 64, 4
        $region108: #{tinybone_forward.1} parent=103 // pred_fallthru
          _
      $region104: #{tinybone_forward.1} parent=5 // pred_fallthru
        _
      %p10132 = scmp.le.s32.totalorder 2, %s30
      // Predicated region
      $region109: #{tinybone_forward.1} parent=5 // pred_check
        %p10133 = pneg %p10132
      $region110: #{tinybone_forward.1} parent=5 // pred_check_branch
        %10135 = sbr.rel (%p10133) target = $region112
      $region111: #{tinybone_forward.1} parent=5 // pred_region
        %s10136 = ssub.s32 %s30, 2
        // Predicated region
        $region113: #{tinybone_forward.1} parent=111 // pred_check
          %p10137 = pneg %p505
        $region114: #{tinybone_forward.1} parent=111 // pred_check_branch
          %10139 = sbr.rel (%p10137) target = $region116
        $region115: #{tinybone_forward.1} parent=111 // pred_region
          %s10140 = sand.u32 %s490, 1
          %s10141 = scalar_lea.sflag [#allocation7], %s10140
          %s10142 = sand.u32 %s490, 1
          %s10143 = smul.addr %s10142, 8
          %s10144 = scalar_lea.vmem [#allocation6], %s10143
          %10145 = dma.done %s10141, 128
        $region116: #{tinybone_forward.1} parent=111 // pred_fallthru
          _
      $region112: #{tinybone_forward.1} parent=5 // pred_fallthru
        _
    $region6: #{tinybone_forward.1} parent=1 // loop_footer
      %s34 = sadd.s32 1, %s30
    $region7: #{tinybone_forward.1} parent=1 // loop_footer_branch
      %29 = sbr.rel target = $region3
    $region8: #{tinybone_forward.1} parent=1 // loop_exit
      _
    %10146 = vsyncpa [#allocation7], 1
    %s10147 = scalar_lea.sflag [#allocation7], 1
    %10148 = vsyncpa %s10147, 1

</llo_original>
